<compile_context>
chip_gen: v7x
topology: tpu7x:2x2x1
jax: 0.10.0
libtpu: 0.0.40
codegen_flags: <defaults>
</compile_context>

<pallas_src>
import jax
import jax.numpy as jnp
from jax import lax
from jax.experimental import pallas as pl
from jax.experimental.pallas import tpu as pltpu


def basic_block_kernel(x_ref, w1_ref, s1_ref, b1_ref, w2_ref, s2_ref, b2_ref,
                       out_ref, pad_ref, col_ref):
    """One image (one grid step) of the fused BasicBlock forward.

    x_ref  : (1, H, W, C)  f32   NHWC input tile (also the residual branch)
    w1_ref : (9*C, C)      bf16  conv1 weights, im2col row order (ki, kj, ci)
    s1_ref : (1, C)        f32   fused BN1 scale
    b1_ref : (1, C)        f32   fused BN1 bias
    w2_ref : (9*C, C)      bf16  conv2 weights, im2col row order
    s2_ref : (1, C)        f32   fused BN2 scale
    b2_ref : (1, C)        f32   fused BN2 bias
    out_ref: (1, H*W, C)   f32   output tile
    pad_ref: VMEM (H+2, W+2, C) bf16  shared zero-halo scratch (x, then h)
    col_ref: VMEM (H*W, 9*C)    bf16  im2col patch matrix
    """
    _, H, W, C = x_ref.shape
    Hp, Wp = H + 2, W + 2
    M = H * W

    # Zero ONLY the 1-pixel halo frame, and only once for the whole batch grid
    # (scratch persists across grid steps; the interior is fully overwritten
    # every step, so the frame stays zero).
    @pl.when(pl.program_id(0) == 0)
    def _zero_halo():
        zrow = jnp.zeros((1, Wp, C), pad_ref.dtype)
        zcol = jnp.zeros((Hp, 1, C), pad_ref.dtype)
        pad_ref[0:1, :, :] = zrow
        pad_ref[Hp - 1:Hp, :, :] = zrow
        pad_ref[:, 0:1, :] = zcol
        pad_ref[:, Wp - 1:Wp, :] = zcol

    x = x_ref[0]                                         # (H, W, C) f32 residual
    pad_ref[1:H + 1, 1:W + 1, :] = x.astype(pad_ref.dtype)

    def build_im2col():
        # 9 shifted windows of the padded buffer -> one (M, 9*C) patch matrix.
        for t in range(9):
            ki, kj = t // 3, t % 3
            col_ref[:, t * C:(t + 1) * C] = (
                pad_ref[ki:ki + H, kj:kj + W, :].reshape(M, C))

    # ---- conv1: single MXU matmul, K = 9*C, bf16 x bf16 -> f32 accumulate ----
    build_im2col()
    acc1 = jnp.dot(col_ref[...], w1_ref[...],
                   preferred_element_type=jnp.float32)   # (M, C) f32

    # ---- bn1 + relu (f32 elementwise) ----
    h = jnp.maximum(acc1 * s1_ref[...] + b1_ref[...], 0.0)

    # ---- re-pad the intermediate (bf16) into the same halo scratch ----
    pad_ref[1:H + 1, 1:W + 1, :] = h.astype(pad_ref.dtype).reshape(H, W, C)

    # ---- conv2: single MXU matmul ----
    build_im2col()
    acc2 = jnp.dot(col_ref[...], w2_ref[...],
                   preferred_element_type=jnp.float32)   # (M, C) f32

    # ---- bn2 + residual add + relu (f32), store ----
    out = acc2 * s2_ref[...] + b2_ref[...] + x.reshape(M, C)
    out_ref[...] = jnp.maximum(out, 0.0).reshape(1, M, C)


@jax.jit
def basic_block_forward(x_nchw, w1, s1, b1, w2, s2, b2):
    """Wrapper: NCHW in / NCHW out, matching the PyTorch module.

    w1, w2 are HWIO (3, 3, C, C); s*, b* are fused BatchNorm scale/bias vectors (C,).
    """
    x = jnp.transpose(x_nchw, (0, 2, 3, 1)).astype(jnp.float32)   # -> NHWC
    N, H, W, C = x.shape
    M = H * W

    # im2col weight matrices (bf16 operands for the MXU; accumulation stays f32).
    w1_mat = w1.reshape(9 * C, C).astype(jnp.bfloat16)
    w2_mat = w2.reshape(9 * C, C).astype(jnp.bfloat16)
    s1_r = s1.reshape(1, C).astype(jnp.float32)
    b1_r = b1.reshape(1, C).astype(jnp.float32)
    s2_r = s2.reshape(1, C).astype(jnp.float32)
    b2_r = b2.reshape(1, C).astype(jnp.float32)

    # Per-step VMEM footprint (double-buffered pipelined operands + scratch),
    # with headroom; clamped well under v7x's 64 MiB physical VMEM.
    tile_bytes = (
        2 * (H * W * C * 4                      # x block (f32), double buffered
             + M * C * 4                        # out block (f32), double buffered
             + 2 * (9 * C) * C * 2              # both weight matrices (bf16)
             + 4 * C * 4)                       # BN scale/bias vectors (f32)
        + (H + 2) * (W + 2) * C * 2             # shared halo scratch (bf16)
        + M * 9 * C * 2)                        # im2col scratch (bf16)
    vmem_limit = int(min(max(4 * tile_bytes, 8 * 1024 * 1024), 48 * 1024 * 1024))

    out_flat = pl.pallas_call(
        basic_block_kernel,
        out_shape=jax.ShapeDtypeStruct((N, M, C), jnp.float32),
        grid_spec=pltpu.PrefetchScalarGridSpec(
            num_scalar_prefetch=0,
            grid=(N,),
            in_specs=[
                pl.BlockSpec((1, H, W, C), lambda n: (n, 0, 0, 0)),   # x (per image)
                pl.BlockSpec((9 * C, C), lambda n: (0, 0)),           # w1 (resident)
                pl.BlockSpec((1, C), lambda n: (0, 0)),               # s1
                pl.BlockSpec((1, C), lambda n: (0, 0)),               # b1
                pl.BlockSpec((9 * C, C), lambda n: (0, 0)),           # w2
                pl.BlockSpec((1, C), lambda n: (0, 0)),               # s2
                pl.BlockSpec((1, C), lambda n: (0, 0)),               # b2
            ],
            out_specs=pl.BlockSpec((1, M, C), lambda n: (n, 0, 0)),
            scratch_shapes=[
                pltpu.VMEM((H + 2, W + 2, C), jnp.bfloat16),   # shared halo scratch
                pltpu.VMEM((M, 9 * C), jnp.bfloat16),          # im2col patch
            ],
        ),
        compiler_params=pltpu.CompilerParams(
            dimension_semantics=("parallel",),      # batch axis -> megacore on v7x
            vmem_limit_bytes=vmem_limit,
        ),
    )(x, w1_mat, s1_r, b1_r, w2_mat, s2_r, b2_r)

    out = out_flat.reshape(N, H, W, C)
    return jnp.transpose(out, (0, 3, 1, 2))                        # -> NCHW


def _reference_forward(x_nchw, w1, s1, b1, w2, s2, b2):
    """Pure-JAX reference mirroring the kernel's bf16-operand / f32-accumulate math."""
    x = jnp.transpose(x_nchw, (0, 2, 3, 1)).astype(jnp.float32)
    dn = ('NHWC', 'HWIO', 'NHWC')
    h = lax.conv_general_dilated(
        x.astype(jnp.bfloat16), w1.astype(jnp.bfloat16), (1, 1),
        ((1, 1), (1, 1)), dimension_numbers=dn,
        preferred_element_type=jnp.float32)
    h = jnp.maximum(h * s1 + b1, 0.0)
    o = lax.conv_general_dilated(
        h.astype(jnp.bfloat16), w2.astype(jnp.bfloat16), (1, 1),
        ((1, 1), (1, 1)), dimension_numbers=dn,
        preferred_element_type=jnp.float32)
    o = jnp.maximum(o * s2 + b2 + x, 0.0)
    return jnp.transpose(o, (0, 3, 1, 2))


def _fuse_bn(gamma, beta, mean, var, eps=1e-5):
    scale = gamma / jnp.sqrt(var + eps)
    bias = beta - mean * scale
    return scale, bias


if __name__ == "__main__":
    # BasicBlock(inplanes=4, planes=4, stride=1, downsample=None)
    N, C, H, W = 2, 4, 16, 16
    key = jax.random.PRNGKey(0)
    k_x, k_w1, k_w2 = jax.random.split(key, 3)

    x = jax.random.normal(k_x, (N, C, H, W), jnp.float32)

    # Conv weights: PyTorch layout (Cout, Cin, 3, 3) -> HWIO (3, 3, Cin, Cout)
    w1_oihw = jax.random.normal(k_w1, (C, C, 3, 3), jnp.float32) * 0.1
    w2_oihw = jax.random.normal(k_w2, (C, C, 3, 3), jnp.float32) * 0.1
    w1 = jnp.transpose(w1_oihw, (2, 3, 1, 0))
    w2 = jnp.transpose(w2_oihw, (2, 3, 1, 0))

    # Deterministic inference-mode BatchNorm parameters, fused to scale/bias.
    c_idx = jnp.arange(C, dtype=jnp.float32)
    g1, be1 = 1.0 + 0.10 * c_idx, 0.05 * c_idx
    m1, v1 = 0.02 * c_idx, 1.0 + 0.05 * c_idx
    g2, be2 = 1.0 - 0.05 * c_idx, -0.03 * c_idx
    m2, v2 = -0.01 * c_idx, 1.0 + 0.10 * c_idx
    s1, b1 = _fuse_bn(g1, be1, m1, v1)
    s2, b2 = _fuse_bn(g2, be2, m2, v2)

    out = basic_block_forward(x, w1, s1, b1, w2, s2, b2)
    out = jax.block_until_ready(out)

    ref = _reference_forward(x, w1, s1, b1, w2, s2, b2)
    assert out.shape == (N, C, H, W)
    max_err = jnp.max(jnp.abs(out - ref))
    assert jnp.allclose(out, ref, atol=2e-2, rtol=2e-2), f"max err {max_err}"

    print("KERNEL_OK")
</pallas_src>

<mosaic_0001>
module attributes {stable_mosaic.version = 11 : i64} {
  func.func @basic_block_kernel(%arg0: i32, %arg1: memref<1x16x16x4xf32, #tpu.memory_space<vmem>>, %arg2: memref<36x4xbf16, #tpu.memory_space<vmem>>, %arg3: memref<1x4xf32, #tpu.memory_space<vmem>>, %arg4: memref<1x4xf32, #tpu.memory_space<vmem>>, %arg5: memref<36x4xbf16, #tpu.memory_space<vmem>>, %arg6: memref<1x4xf32, #tpu.memory_space<vmem>>, %arg7: memref<1x4xf32, #tpu.memory_space<vmem>>, %arg8: memref<1x256x4xf32, #tpu.memory_space<vmem>>, %arg9: memref<18x18x4xbf16, #tpu.memory_space<vmem>>, %arg10: memref<256x36xbf16, #tpu.memory_space<vmem>>) attributes {dimension_semantics = [#tpu.dimension_semantics<parallel>], iteration_bounds = array<i64: 2>, scalar_prefetch = 0 : i64, scratch_operands = 2 : i64, tpu.core_type = #tpu.core_type<tc>, window_params = [{transform_indices = @transform_0, window_bounds = array<i64: 1, 16, 16, 4>}, {pipeline_mode = #tpu.pipeline_mode<synchronous>, transform_indices = @transform_1, window_bounds = array<i64: 36, 4>}, {pipeline_mode = #tpu.pipeline_mode<synchronous>, transform_indices = @transform_2, window_bounds = array<i64: 1, 4>}, {pipeline_mode = #tpu.pipeline_mode<synchronous>, transform_indices = @transform_3, window_bounds = array<i64: 1, 4>}, {pipeline_mode = #tpu.pipeline_mode<synchronous>, transform_indices = @transform_4, window_bounds = array<i64: 36, 4>}, {pipeline_mode = #tpu.pipeline_mode<synchronous>, transform_indices = @transform_5, window_bounds = array<i64: 1, 4>}, {pipeline_mode = #tpu.pipeline_mode<synchronous>, transform_indices = @transform_6, window_bounds = array<i64: 1, 4>}, {transform_indices = @transform_7, window_bounds = array<i64: 1, 256, 4>}]} {
    %c0_i32 = arith.constant 0 : i32
    %0 = arith.cmpi eq, %arg0, %c0_i32 : i32
    %1 = arith.extui %0 : i1 to i32
    %c0_i32_0 = arith.constant 0 : i32
    %2 = arith.cmpi ne, %1, %c0_i32_0 : i32
    scf.if %2 {
      %cst_112 = arith.constant 0.000000e+00 : bf16
      %90 = vector.broadcast %cst_112 : bf16 to vector<1x18x4xbf16>
      %cst_113 = arith.constant 0.000000e+00 : bf16
      %91 = vector.broadcast %cst_113 : bf16 to vector<18x1x4xbf16>
      %c0_114 = arith.constant 0 : index
      %c0_115 = arith.constant 0 : index
      %c0_116 = arith.constant 0 : index
      %92 = vector.load %arg9[%c0_114, %c0_115, %c0_116] : memref<18x18x4xbf16, #tpu.memory_space<vmem>>, vector<1x18x4xbf16>
      tpu.vector_store %arg9[%c0_114, %c0_115, %c0_116], %90 {strides = array<i32>} : memref<18x18x4xbf16, #tpu.memory_space<vmem>>, vector<1x18x4xbf16>,
      %c17 = arith.constant 17 : index
      %c0_117 = arith.constant 0 : index
      %c0_118 = arith.constant 0 : index
      %93 = vector.load %arg9[%c17, %c0_117, %c0_118] : memref<18x18x4xbf16, #tpu.memory_space<vmem>>, vector<1x18x4xbf16>
      tpu.vector_store %arg9[%c17, %c0_117, %c0_118], %90 {strides = array<i32>} : memref<18x18x4xbf16, #tpu.memory_space<vmem>>, vector<1x18x4xbf16>,
      %c0_119 = arith.constant 0 : index
      %c0_120 = arith.constant 0 : index
      %c0_121 = arith.constant 0 : index
      %94 = vector.load %arg9[%c0_119, %c0_120, %c0_121] : memref<18x18x4xbf16, #tpu.memory_space<vmem>>, vector<18x1x4xbf16>
      tpu.vector_store %arg9[%c0_119, %c0_120, %c0_121], %91 {strides = array<i32>} : memref<18x18x4xbf16, #tpu.memory_space<vmem>>, vector<18x1x4xbf16>,
      %c0_122 = arith.constant 0 : index
      %c17_123 = arith.constant 17 : index
      %c0_124 = arith.constant 0 : index
      %95 = vector.load %arg9[%c0_122, %c17_123, %c0_124] : memref<18x18x4xbf16, #tpu.memory_space<vmem>>, vector<18x1x4xbf16>
      tpu.vector_store %arg9[%c0_122, %c17_123, %c0_124], %91 {strides = array<i32>} : memref<18x18x4xbf16, #tpu.memory_space<vmem>>, vector<18x1x4xbf16>,
    } else {
    }
    %c0 = arith.constant 0 : index
    %c0_1 = arith.constant 0 : index
    %c0_2 = arith.constant 0 : index
    %c0_3 = arith.constant 0 : index
    %3 = vector.load %arg1[%c0, %c0_1, %c0_2, %c0_3] : memref<1x16x16x4xf32, #tpu.memory_space<vmem>>, vector<1x16x16x4xf32>
    %4 = vector.shape_cast %3 : vector<1x16x16x4xf32> to vector<16x16x4xf32>
    %5 = arith.truncf %4 : vector<16x16x4xf32> to vector<16x16x4xbf16>
    %c1 = arith.constant 1 : index
    %c1_4 = arith.constant 1 : index
    %c0_5 = arith.constant 0 : index
    %6 = vector.load %arg9[%c1, %c1_4, %c0_5] : memref<18x18x4xbf16, #tpu.memory_space<vmem>>, vector<16x16x4xbf16>
    tpu.vector_store %arg9[%c1, %c1_4, %c0_5], %5 {strides = array<i32>} : memref<18x18x4xbf16, #tpu.memory_space<vmem>>, vector<16x16x4xbf16>,
    %c0_6 = arith.constant 0 : index
    %c0_7 = arith.constant 0 : index
    %c0_8 = arith.constant 0 : index
    %7 = vector.load %arg9[%c0_6, %c0_7, %c0_8] : memref<18x18x4xbf16, #tpu.memory_space<vmem>>, vector<16x16x4xbf16>
    %8 = vector.shape_cast %7 : vector<16x16x4xbf16> to vector<256x4xbf16>
    %c0_9 = arith.constant 0 : index
    %c0_10 = arith.constant 0 : index
    %9 = vector.load %arg10[%c0_9, %c0_10] : memref<256x36xbf16, #tpu.memory_space<vmem>>, vector<256x4xbf16>
    tpu.vector_store %arg10[%c0_9, %c0_10], %8 {strides = array<i32>} : memref<256x36xbf16, #tpu.memory_space<vmem>>, vector<256x4xbf16>,
    %c0_11 = arith.constant 0 : index
    %c1_12 = arith.constant 1 : index
    %c0_13 = arith.constant 0 : index
    %10 = vector.load %arg9[%c0_11, %c1_12, %c0_13] : memref<18x18x4xbf16, #tpu.memory_space<vmem>>, vector<16x16x4xbf16>
    %11 = vector.shape_cast %10 : vector<16x16x4xbf16> to vector<256x4xbf16>
    %c0_14 = arith.constant 0 : index
    %c4 = arith.constant 4 : index
    %12 = vector.load %arg10[%c0_14, %c4] : memref<256x36xbf16, #tpu.memory_space<vmem>>, vector<256x4xbf16>
    tpu.vector_store %arg10[%c0_14, %c4], %11 {strides = array<i32>} : memref<256x36xbf16, #tpu.memory_space<vmem>>, vector<256x4xbf16>,
    %c0_15 = arith.constant 0 : index
    %c2 = arith.constant 2 : index
    %c0_16 = arith.constant 0 : index
    %13 = vector.load %arg9[%c0_15, %c2, %c0_16] : memref<18x18x4xbf16, #tpu.memory_space<vmem>>, vector<16x16x4xbf16>
    %14 = vector.shape_cast %13 : vector<16x16x4xbf16> to vector<256x4xbf16>
    %c0_17 = arith.constant 0 : index
    %c8 = arith.constant 8 : index
    %15 = vector.load %arg10[%c0_17, %c8] : memref<256x36xbf16, #tpu.memory_space<vmem>>, vector<256x4xbf16>
    tpu.vector_store %arg10[%c0_17, %c8], %14 {strides = array<i32>} : memref<256x36xbf16, #tpu.memory_space<vmem>>, vector<256x4xbf16>,
    %c1_18 = arith.constant 1 : index
    %c0_19 = arith.constant 0 : index
    %c0_20 = arith.constant 0 : index
    %16 = vector.load %arg9[%c1_18, %c0_19, %c0_20] : memref<18x18x4xbf16, #tpu.memory_space<vmem>>, vector<16x16x4xbf16>
    %17 = vector.shape_cast %16 : vector<16x16x4xbf16> to vector<256x4xbf16>
    %c0_21 = arith.constant 0 : index
    %c12 = arith.constant 12 : index
    %18 = vector.load %arg10[%c0_21, %c12] : memref<256x36xbf16, #tpu.memory_space<vmem>>, vector<256x4xbf16>
    tpu.vector_store %arg10[%c0_21, %c12], %17 {strides = array<i32>} : memref<256x36xbf16, #tpu.memory_space<vmem>>, vector<256x4xbf16>,
    %c1_22 = arith.constant 1 : index
    %c1_23 = arith.constant 1 : index
    %c0_24 = arith.constant 0 : index
    %19 = vector.load %arg9[%c1_22, %c1_23, %c0_24] : memref<18x18x4xbf16, #tpu.memory_space<vmem>>, vector<16x16x4xbf16>
    %20 = vector.shape_cast %19 : vector<16x16x4xbf16> to vector<256x4xbf16>
    %c0_25 = arith.constant 0 : index
    %c16 = arith.constant 16 : index
    %21 = vector.load %arg10[%c0_25, %c16] : memref<256x36xbf16, #tpu.memory_space<vmem>>, vector<256x4xbf16>
    tpu.vector_store %arg10[%c0_25, %c16], %20 {strides = array<i32>} : memref<256x36xbf16, #tpu.memory_space<vmem>>, vector<256x4xbf16>,
    %c1_26 = arith.constant 1 : index
    %c2_27 = arith.constant 2 : index
    %c0_28 = arith.constant 0 : index
    %22 = vector.load %arg9[%c1_26, %c2_27, %c0_28] : memref<18x18x4xbf16, #tpu.memory_space<vmem>>, vector<16x16x4xbf16>
    %23 = vector.shape_cast %22 : vector<16x16x4xbf16> to vector<256x4xbf16>
    %c0_29 = arith.constant 0 : index
    %c20 = arith.constant 20 : index
    %24 = vector.load %arg10[%c0_29, %c20] : memref<256x36xbf16, #tpu.memory_space<vmem>>, vector<256x4xbf16>
    tpu.vector_store %arg10[%c0_29, %c20], %23 {strides = array<i32>} : memref<256x36xbf16, #tpu.memory_space<vmem>>, vector<256x4xbf16>,
    %c2_30 = arith.constant 2 : index
    %c0_31 = arith.constant 0 : index
    %c0_32 = arith.constant 0 : index
    %25 = vector.load %arg9[%c2_30, %c0_31, %c0_32] : memref<18x18x4xbf16, #tpu.memory_space<vmem>>, vector<16x16x4xbf16>
    %26 = vector.shape_cast %25 : vector<16x16x4xbf16> to vector<256x4xbf16>
    %c0_33 = arith.constant 0 : index
    %c24 = arith.constant 24 : index
    %27 = vector.load %arg10[%c0_33, %c24] : memref<256x36xbf16, #tpu.memory_space<vmem>>, vector<256x4xbf16>
    tpu.vector_store %arg10[%c0_33, %c24], %26 {strides = array<i32>} : memref<256x36xbf16, #tpu.memory_space<vmem>>, vector<256x4xbf16>,
    %c2_34 = arith.constant 2 : index
    %c1_35 = arith.constant 1 : index
    %c0_36 = arith.constant 0 : index
    %28 = vector.load %arg9[%c2_34, %c1_35, %c0_36] : memref<18x18x4xbf16, #tpu.memory_space<vmem>>, vector<16x16x4xbf16>
    %29 = vector.shape_cast %28 : vector<16x16x4xbf16> to vector<256x4xbf16>
    %c0_37 = arith.constant 0 : index
    %c28 = arith.constant 28 : index
    %30 = vector.load %arg10[%c0_37, %c28] : memref<256x36xbf16, #tpu.memory_space<vmem>>, vector<256x4xbf16>
    tpu.vector_store %arg10[%c0_37, %c28], %29 {strides = array<i32>} : memref<256x36xbf16, #tpu.memory_space<vmem>>, vector<256x4xbf16>,
    %c2_38 = arith.constant 2 : index
    %c2_39 = arith.constant 2 : index
    %c0_40 = arith.constant 0 : index
    %31 = vector.load %arg9[%c2_38, %c2_39, %c0_40] : memref<18x18x4xbf16, #tpu.memory_space<vmem>>, vector<16x16x4xbf16>
    %32 = vector.shape_cast %31 : vector<16x16x4xbf16> to vector<256x4xbf16>
    %c0_41 = arith.constant 0 : index
    %c32 = arith.constant 32 : index
    %33 = vector.load %arg10[%c0_41, %c32] : memref<256x36xbf16, #tpu.memory_space<vmem>>, vector<256x4xbf16>
    tpu.vector_store %arg10[%c0_41, %c32], %32 {strides = array<i32>} : memref<256x36xbf16, #tpu.memory_space<vmem>>, vector<256x4xbf16>,
    %c0_42 = arith.constant 0 : index
    %c0_43 = arith.constant 0 : index
    %34 = vector.load %arg10[%c0_42, %c0_43] : memref<256x36xbf16, #tpu.memory_space<vmem>>, vector<256x36xbf16>
    %c0_44 = arith.constant 0 : index
    %c0_45 = arith.constant 0 : index
    %35 = vector.load %arg2[%c0_44, %c0_45] : memref<36x4xbf16, #tpu.memory_space<vmem>>, vector<36x4xbf16>
    %cst = arith.constant dense<0.000000e+00> : vector<256x4xf32>
    %36 = tpu.matmul %34, %35, %cst {dimension_numbers = #tpu.dot_dimension_numbers<[1], [0], [0], [1], [0, 0, 1, 1], [], []>} : vector<256x36xbf16>, vector<36x4xbf16>, vector<256x4xf32> -> vector<256x4xf32>
    %c0_46 = arith.constant 0 : index
    %c0_47 = arith.constant 0 : index
    %37 = vector.load %arg3[%c0_46, %c0_47] : memref<1x4xf32, #tpu.memory_space<vmem>>, vector<1x4xf32>
    %38 = vector.broadcast %37 : vector<1x4xf32> to vector<256x4xf32>
    %39 = arith.mulf %36, %38 : vector<256x4xf32>
    %c0_48 = arith.constant 0 : index
    %c0_49 = arith.constant 0 : index
    %40 = vector.load %arg4[%c0_48, %c0_49] : memref<1x4xf32, #tpu.memory_space<vmem>>, vector<1x4xf32>
    %41 = vector.broadcast %40 : vector<1x4xf32> to vector<256x4xf32>
    %42 = arith.addf %39, %41 : vector<256x4xf32>
    %cst_50 = arith.constant 0.000000e+00 : f32
    %43 = vector.broadcast %cst_50 : f32 to vector<256x4xf32>
    %44 = arith.maximumf %42, %43 : vector<256x4xf32>
    %45 = arith.truncf %44 : vector<256x4xf32> to vector<256x4xbf16>
    %46 = vector.shape_cast %45 : vector<256x4xbf16> to vector<16x16x4xbf16>
    %c1_51 = arith.constant 1 : index
    %c1_52 = arith.constant 1 : index
    %c0_53 = arith.constant 0 : index
    %47 = vector.load %arg9[%c1_51, %c1_52, %c0_53] : memref<18x18x4xbf16, #tpu.memory_space<vmem>>, vector<16x16x4xbf16>
    tpu.vector_store %arg9[%c1_51, %c1_52, %c0_53], %46 {strides = array<i32>} : memref<18x18x4xbf16, #tpu.memory_space<vmem>>, vector<16x16x4xbf16>,
    %c0_54 = arith.constant 0 : index
    %c0_55 = arith.constant 0 : index
    %c0_56 = arith.constant 0 : index
    %48 = vector.load %arg9[%c0_54, %c0_55, %c0_56] : memref<18x18x4xbf16, #tpu.memory_space<vmem>>, vector<16x16x4xbf16>
    %49 = vector.shape_cast %48 : vector<16x16x4xbf16> to vector<256x4xbf16>
    %c0_57 = arith.constant 0 : index
    %c0_58 = arith.constant 0 : index
    %50 = vector.load %arg10[%c0_57, %c0_58] : memref<256x36xbf16, #tpu.memory_space<vmem>>, vector<256x4xbf16>
    tpu.vector_store %arg10[%c0_57, %c0_58], %49 {strides = array<i32>} : memref<256x36xbf16, #tpu.memory_space<vmem>>, vector<256x4xbf16>,
    %c0_59 = arith.constant 0 : index
    %c1_60 = arith.constant 1 : index
    %c0_61 = arith.constant 0 : index
    %51 = vector.load %arg9[%c0_59, %c1_60, %c0_61] : memref<18x18x4xbf16, #tpu.memory_space<vmem>>, vector<16x16x4xbf16>
    %52 = vector.shape_cast %51 : vector<16x16x4xbf16> to vector<256x4xbf16>
    %c0_62 = arith.constant 0 : index
    %c4_63 = arith.constant 4 : index
    %53 = vector.load %arg10[%c0_62, %c4_63] : memref<256x36xbf16, #tpu.memory_space<vmem>>, vector<256x4xbf16>
    tpu.vector_store %arg10[%c0_62, %c4_63], %52 {strides = array<i32>} : memref<256x36xbf16, #tpu.memory_space<vmem>>, vector<256x4xbf16>,
    %c0_64 = arith.constant 0 : index
    %c2_65 = arith.constant 2 : index
    %c0_66 = arith.constant 0 : index
    %54 = vector.load %arg9[%c0_64, %c2_65, %c0_66] : memref<18x18x4xbf16, #tpu.memory_space<vmem>>, vector<16x16x4xbf16>
    %55 = vector.shape_cast %54 : vector<16x16x4xbf16> to vector<256x4xbf16>
    %c0_67 = arith.constant 0 : index
    %c8_68 = arith.constant 8 : index
    %56 = vector.load %arg10[%c0_67, %c8_68] : memref<256x36xbf16, #tpu.memory_space<vmem>>, vector<256x4xbf16>
    tpu.vector_store %arg10[%c0_67, %c8_68], %55 {strides = array<i32>} : memref<256x36xbf16, #tpu.memory_space<vmem>>, vector<256x4xbf16>,
    %c1_69 = arith.constant 1 : index
    %c0_70 = arith.constant 0 : index
    %c0_71 = arith.constant 0 : index
    %57 = vector.load %arg9[%c1_69, %c0_70, %c0_71] : memref<18x18x4xbf16, #tpu.memory_space<vmem>>, vector<16x16x4xbf16>
    %58 = vector.shape_cast %57 : vector<16x16x4xbf16> to vector<256x4xbf16>
    %c0_72 = arith.constant 0 : index
    %c12_73 = arith.constant 12 : index
    %59 = vector.load %arg10[%c0_72, %c12_73] : memref<256x36xbf16, #tpu.memory_space<vmem>>, vector<256x4xbf16>
    tpu.vector_store %arg10[%c0_72, %c12_73], %58 {strides = array<i32>} : memref<256x36xbf16, #tpu.memory_space<vmem>>, vector<256x4xbf16>,
    %c1_74 = arith.constant 1 : index
    %c1_75 = arith.constant 1 : index
    %c0_76 = arith.constant 0 : index
    %60 = vector.load %arg9[%c1_74, %c1_75, %c0_76] : memref<18x18x4xbf16, #tpu.memory_space<vmem>>, vector<16x16x4xbf16>
    %61 = vector.shape_cast %60 : vector<16x16x4xbf16> to vector<256x4xbf16>
    %c0_77 = arith.constant 0 : index
    %c16_78 = arith.constant 16 : index
    %62 = vector.load %arg10[%c0_77, %c16_78] : memref<256x36xbf16, #tpu.memory_space<vmem>>, vector<256x4xbf16>
    tpu.vector_store %arg10[%c0_77, %c16_78], %61 {strides = array<i32>} : memref<256x36xbf16, #tpu.memory_space<vmem>>, vector<256x4xbf16>,
    %c1_79 = arith.constant 1 : index
    %c2_80 = arith.constant 2 : index
    %c0_81 = arith.constant 0 : index
    %63 = vector.load %arg9[%c1_79, %c2_80, %c0_81] : memref<18x18x4xbf16, #tpu.memory_space<vmem>>, vector<16x16x4xbf16>
    %64 = vector.shape_cast %63 : vector<16x16x4xbf16> to vector<256x4xbf16>
    %c0_82 = arith.constant 0 : index
    %c20_83 = arith.constant 20 : index
    %65 = vector.load %arg10[%c0_82, %c20_83] : memref<256x36xbf16, #tpu.memory_space<vmem>>, vector<256x4xbf16>
    tpu.vector_store %arg10[%c0_82, %c20_83], %64 {strides = array<i32>} : memref<256x36xbf16, #tpu.memory_space<vmem>>, vector<256x4xbf16>,
    %c2_84 = arith.constant 2 : index
    %c0_85 = arith.constant 0 : index
    %c0_86 = arith.constant 0 : index
    %66 = vector.load %arg9[%c2_84, %c0_85, %c0_86] : memref<18x18x4xbf16, #tpu.memory_space<vmem>>, vector<16x16x4xbf16>
    %67 = vector.shape_cast %66 : vector<16x16x4xbf16> to vector<256x4xbf16>
    %c0_87 = arith.constant 0 : index
    %c24_88 = arith.constant 24 : index
    %68 = vector.load %arg10[%c0_87, %c24_88] : memref<256x36xbf16, #tpu.memory_space<vmem>>, vector<256x4xbf16>
    tpu.vector_store %arg10[%c0_87, %c24_88], %67 {strides = array<i32>} : memref<256x36xbf16, #tpu.memory_space<vmem>>, vector<256x4xbf16>,
    %c2_89 = arith.constant 2 : index
    %c1_90 = arith.constant 1 : index
    %c0_91 = arith.constant 0 : index
    %69 = vector.load %arg9[%c2_89, %c1_90, %c0_91] : memref<18x18x4xbf16, #tpu.memory_space<vmem>>, vector<16x16x4xbf16>
    %70 = vector.shape_cast %69 : vector<16x16x4xbf16> to vector<256x4xbf16>
    %c0_92 = arith.constant 0 : index
    %c28_93 = arith.constant 28 : index
    %71 = vector.load %arg10[%c0_92, %c28_93] : memref<256x36xbf16, #tpu.memory_space<vmem>>, vector<256x4xbf16>
    tpu.vector_store %arg10[%c0_92, %c28_93], %70 {strides = array<i32>} : memref<256x36xbf16, #tpu.memory_space<vmem>>, vector<256x4xbf16>,
    %c2_94 = arith.constant 2 : index
    %c2_95 = arith.constant 2 : index
    %c0_96 = arith.constant 0 : index
    %72 = vector.load %arg9[%c2_94, %c2_95, %c0_96] : memref<18x18x4xbf16, #tpu.memory_space<vmem>>, vector<16x16x4xbf16>
    %73 = vector.shape_cast %72 : vector<16x16x4xbf16> to vector<256x4xbf16>
    %c0_97 = arith.constant 0 : index
    %c32_98 = arith.constant 32 : index
    %74 = vector.load %arg10[%c0_97, %c32_98] : memref<256x36xbf16, #tpu.memory_space<vmem>>, vector<256x4xbf16>
    tpu.vector_store %arg10[%c0_97, %c32_98], %73 {strides = array<i32>} : memref<256x36xbf16, #tpu.memory_space<vmem>>, vector<256x4xbf16>,
    %c0_99 = arith.constant 0 : index
    %c0_100 = arith.constant 0 : index
    %75 = vector.load %arg10[%c0_99, %c0_100] : memref<256x36xbf16, #tpu.memory_space<vmem>>, vector<256x36xbf16>
    %c0_101 = arith.constant 0 : index
    %c0_102 = arith.constant 0 : index
    %76 = vector.load %arg5[%c0_101, %c0_102] : memref<36x4xbf16, #tpu.memory_space<vmem>>, vector<36x4xbf16>
    %cst_103 = arith.constant dense<0.000000e+00> : vector<256x4xf32>
    %77 = tpu.matmul %75, %76, %cst_103 {dimension_numbers = #tpu.dot_dimension_numbers<[1], [0], [0], [1], [0, 0, 1, 1], [], []>} : vector<256x36xbf16>, vector<36x4xbf16>, vector<256x4xf32> -> vector<256x4xf32>
    %c0_104 = arith.constant 0 : index
    %c0_105 = arith.constant 0 : index
    %78 = vector.load %arg6[%c0_104, %c0_105] : memref<1x4xf32, #tpu.memory_space<vmem>>, vector<1x4xf32>
    %79 = vector.broadcast %78 : vector<1x4xf32> to vector<256x4xf32>
    %80 = arith.mulf %77, %79 : vector<256x4xf32>
    %c0_106 = arith.constant 0 : index
    %c0_107 = arith.constant 0 : index
    %81 = vector.load %arg7[%c0_106, %c0_107] : memref<1x4xf32, #tpu.memory_space<vmem>>, vector<1x4xf32>
    %82 = vector.broadcast %81 : vector<1x4xf32> to vector<256x4xf32>
    %83 = arith.addf %80, %82 : vector<256x4xf32>
    %84 = vector.shape_cast %4 : vector<16x16x4xf32> to vector<256x4xf32>
    %85 = arith.addf %83, %84 : vector<256x4xf32>
    %cst_108 = arith.constant 0.000000e+00 : f32
    %86 = vector.broadcast %cst_108 : f32 to vector<256x4xf32>
    %87 = arith.maximumf %85, %86 : vector<256x4xf32>
    %88 = vector.shape_cast %87 : vector<256x4xf32> to vector<1x256x4xf32>
    %c0_109 = arith.constant 0 : index
    %c0_110 = arith.constant 0 : index
    %c0_111 = arith.constant 0 : index
    %89 = vector.load %arg8[%c0_109, %c0_110, %c0_111] : memref<1x256x4xf32, #tpu.memory_space<vmem>>, vector<1x256x4xf32>
    tpu.vector_store %arg8[%c0_109, %c0_110, %c0_111], %88 {strides = array<i32>} : memref<1x256x4xf32, #tpu.memory_space<vmem>>, vector<1x256x4xf32>,
    return
  }
  func.func @transform_0(%arg0: i32) -> (i32, i32, i32, i32) {
    %c0_i32 = arith.constant 0 : i32
    %c0_i32_0 = arith.constant 0 : i32
    %c0_i32_1 = arith.constant 0 : i32
    %c0_i32_2 = arith.constant 0 : i32
    return %arg0, %c0_i32, %c0_i32_0, %c0_i32_1 : i32, i32, i32, i32
  }
  func.func @transform_1(%arg0: i32) -> (i32, i32) {
    %c0_i32 = arith.constant 0 : i32
    %c0_i32_0 = arith.constant 0 : i32
    %c0_i32_1 = arith.constant 0 : i32
    return %c0_i32, %c0_i32_0 : i32, i32
  }
  func.func @transform_2(%arg0: i32) -> (i32, i32) {
    %c0_i32 = arith.constant 0 : i32
    %c0_i32_0 = arith.constant 0 : i32
    %c0_i32_1 = arith.constant 0 : i32
    return %c0_i32, %c0_i32_0 : i32, i32
  }
  func.func @transform_3(%arg0: i32) -> (i32, i32) {
    %c0_i32 = arith.constant 0 : i32
    %c0_i32_0 = arith.constant 0 : i32
    %c0_i32_1 = arith.constant 0 : i32
    return %c0_i32, %c0_i32_0 : i32, i32
  }
  func.func @transform_4(%arg0: i32) -> (i32, i32) {
    %c0_i32 = arith.constant 0 : i32
    %c0_i32_0 = arith.constant 0 : i32
    %c0_i32_1 = arith.constant 0 : i32
    return %c0_i32, %c0_i32_0 : i32, i32
  }
  func.func @transform_5(%arg0: i32) -> (i32, i32) {
    %c0_i32 = arith.constant 0 : i32
    %c0_i32_0 = arith.constant 0 : i32
    %c0_i32_1 = arith.constant 0 : i32
    return %c0_i32, %c0_i32_0 : i32, i32
  }
  func.func @transform_6(%arg0: i32) -> (i32, i32) {
    %c0_i32 = arith.constant 0 : i32
    %c0_i32_0 = arith.constant 0 : i32
    %c0_i32_1 = arith.constant 0 : i32
    return %c0_i32, %c0_i32_0 : i32, i32
  }
  func.func @transform_7(%arg0: i32) -> (i32, i32, i32) {
    %c0_i32 = arith.constant 0 : i32
    %c0_i32_0 = arith.constant 0 : i32
    %c0_i32_1 = arith.constant 0 : i32
    return %arg0, %c0_i32, %c0_i32_0 : i32, i32, i32
  }
}

</mosaic_0001>

<llo_original>
// kernel: basic_block_forward.1
$region0: #{basic_block_forward.1}
  #allocation0 [shape = 'u32[]', space=smem, size = 0x4, offset = 0x4, fixed_abs, tag = 'smem constant byte address 0x4 - core index']
  #allocation1 [shape = 'u32[144,128]{1,0:T(1,128)}', space=vmem, size = 0x12000, scoped, tag = 'internal scratch']
  #allocation2 [shape = 'bf16[18,18,4]{2,1,0:T(8,128)(2,1)}', space=vmem, size = 0x1b000, scoped, tag = 'scratch operand']
  #allocation3 [shape = 'bf16[256,36]{1,0:T(16,128)(2,1)}', space=vmem, size = 0x10000, scoped, tag = 'scratch operand']
  %s0 = inlined_call_operand.vmem [shape: f32[2,16,16,4], index: 0, kind: input, shape index: {}]
  %s1 = inlined_call_operand.vmem [shape: bf16[36,4], index: 1, kind: input, shape index: {}]
  %s2 = inlined_call_operand.vmem [shape: f32[1,4], index: 2, kind: input, shape index: {}]
  %s3 = inlined_call_operand.vmem [shape: f32[1,4], index: 3, kind: input, shape index: {}]
  %s4 = inlined_call_operand.vmem [shape: bf16[36,4], index: 4, kind: input, shape index: {}]
  %s5 = inlined_call_operand.vmem [shape: f32[1,4], index: 5, kind: input, shape index: {}]
  %s6 = inlined_call_operand.vmem [shape: f32[1,4], index: 6, kind: input, shape index: {}]
  %s7 = inlined_call_operand.vmem [shape: f32[2,256,4], index: 7, kind: output, shape index: {}]
  %s8 = sld [smem:[#allocation0]]
  $region65: #{basic_block_forward.1} parent=0
    _
  %s10 = ssub.s32 1, %s8
  %s11 = scalar_select 0, %s10, %s8
  loop: start=0, step=1, limit=4
  $region2: #{basic_block_forward.1} parent=0 // loop_pre_header
    _
  $region3: #{basic_block_forward.1} parent=0 // loop_header
    %s13 = sphi 0, %s17
    %p14 = scmp.ge.s32.totalorder %s13, 4
    %s23 = sphi 0, %s25
    %s26 = sphi 0, %s23
    %s27 = sphi 0, %s26
    %s43 = sphi 0, %s27
    %s47 = sphi 0, %s47
    %s49 = sphi 0, %s47
    %s50 = sphi 0, %s49
    %s64 = sphi 0, %s50
    %s68 = sphi 0, %s68
    %s70 = sphi 0, %s68
    %s71 = sphi 0, %s70
    %s85 = sphi 0, %s71
    %s89 = sphi 0, %s89
    %s91 = sphi 0, %s89
    %s92 = sphi 0, %s91
    %s106 = sphi 0, %s92
    %s110 = sphi 0, %s110
    %s112 = sphi 0, %s110
    %s113 = sphi 0, %s112
    %s127 = sphi 0, %s113
    %s131 = sphi 0, %s131
    %s133 = sphi 0, %s131
    %s134 = sphi 0, %s133
    %s148 = sphi 0, %s134
    %s152 = sphi 0, %s152
    %s154 = sphi 0, %s152
    %s155 = sphi 0, %s154
    %s169 = sphi 0, %s155
    %s175 = sphi 0, %s177
    %s178 = sphi 0, %s175
    %s179 = sphi 0, %s178
    %s195 = sphi 0, %s179
  $region4: #{basic_block_forward.1} parent=0 // loop_header_branch
    %16 = sbr.rel (%p14) target = $region8
  $region5: #{basic_block_forward.1} parent=0 // loop_body
    %s18 = ssub.s32 %s13, 1
    %s19 = ssub.s32 %s13, 2
    %s20 = sadd.s32 %s13, 1
    %s21 = ssub.s32 %s13, %s20
    %p22 = scmp.eq.s32.totalorder %s21, 0
    %s24 = sadd.s32 %s23, 1
    %s25 = scalar_select %p22, %s23, %s24
    %p28 = pneg %p22
    %p29 = scmp.eq.s32.totalorder %s13, 1
    %p30 = por %p28, %p29
    %p31 = scmp.ne.s32.totalorder %s23, %s26
    %p32 = scmp.eq.s32.totalorder %s13, 0
    %p33 = por %p31, %p32
    %p34 = scmp.ne.s32.totalorder %s23, %s26
    %p35 = scmp.eq.s32.totalorder %s18, 1
    %p36 = por %p34, %p35
    %p37 = scmp.ne.s32.totalorder %s26, %s27
    %p38 = scmp.eq.s32.totalorder %s18, 0
    %p39 = por %p37, %p38
    %p40 = scmp.ne.s32.totalorder %s26, %s27
    %p41 = scmp.eq.s32.totalorder %s19, 1
    %p42 = por %p40, %p41
    %p44 = scmp.ne.s32.totalorder %s27, %s43
    %p45 = scmp.eq.s32.totalorder %s19, 0
    %p46 = por %p44, %p45
    %s48 = sadd.s32 %s47, 1
    %p51 = scmp.eq.s32.totalorder %s13, 1
    %p52 = scmp.ne.s32.totalorder %s47, %s49
    %p53 = scmp.eq.s32.totalorder %s13, 0
    %p54 = por %p52, %p53
    %p55 = scmp.ne.s32.totalorder %s47, %s49
    %p56 = scmp.eq.s32.totalorder %s18, 1
    %p57 = por %p55, %p56
    %p58 = scmp.ne.s32.totalorder %s49, %s50
    %p59 = scmp.eq.s32.totalorder %s18, 0
    %p60 = por %p58, %p59
    %p61 = scmp.ne.s32.totalorder %s49, %s50
    %p62 = scmp.eq.s32.totalorder %s19, 1
    %p63 = por %p61, %p62
    %p65 = scmp.ne.s32.totalorder %s50, %s64
    %p66 = scmp.eq.s32.totalorder %s19, 0
    %p67 = por %p65, %p66
    %s69 = sadd.s32 %s68, 1
    %p72 = scmp.eq.s32.totalorder %s13, 1
    %p73 = scmp.ne.s32.totalorder %s68, %s70
    %p74 = scmp.eq.s32.totalorder %s13, 0
    %p75 = por %p73, %p74
    %p76 = scmp.ne.s32.totalorder %s68, %s70
    %p77 = scmp.eq.s32.totalorder %s18, 1
    %p78 = por %p76, %p77
    %p79 = scmp.ne.s32.totalorder %s70, %s71
    %p80 = scmp.eq.s32.totalorder %s18, 0
    %p81 = por %p79, %p80
    %p82 = scmp.ne.s32.totalorder %s70, %s71
    %p83 = scmp.eq.s32.totalorder %s19, 1
    %p84 = por %p82, %p83
    %p86 = scmp.ne.s32.totalorder %s71, %s85
    %p87 = scmp.eq.s32.totalorder %s19, 0
    %p88 = por %p86, %p87
    %s90 = sadd.s32 %s89, 1
    %p93 = scmp.eq.s32.totalorder %s13, 1
    %p94 = scmp.ne.s32.totalorder %s89, %s91
    %p95 = scmp.eq.s32.totalorder %s13, 0
    %p96 = por %p94, %p95
    %p97 = scmp.ne.s32.totalorder %s89, %s91
    %p98 = scmp.eq.s32.totalorder %s18, 1
    %p99 = por %p97, %p98
    %p100 = scmp.ne.s32.totalorder %s91, %s92
    %p101 = scmp.eq.s32.totalorder %s18, 0
    %p102 = por %p100, %p101
    %p103 = scmp.ne.s32.totalorder %s91, %s92
    %p104 = scmp.eq.s32.totalorder %s19, 1
    %p105 = por %p103, %p104
    %p107 = scmp.ne.s32.totalorder %s92, %s106
    %p108 = scmp.eq.s32.totalorder %s19, 0
    %p109 = por %p107, %p108
    %s111 = sadd.s32 %s110, 1
    %p114 = scmp.eq.s32.totalorder %s13, 1
    %p115 = scmp.ne.s32.totalorder %s110, %s112
    %p116 = scmp.eq.s32.totalorder %s13, 0
    %p117 = por %p115, %p116
    %p118 = scmp.ne.s32.totalorder %s110, %s112
    %p119 = scmp.eq.s32.totalorder %s18, 1
    %p120 = por %p118, %p119
    %p121 = scmp.ne.s32.totalorder %s112, %s113
    %p122 = scmp.eq.s32.totalorder %s18, 0
    %p123 = por %p121, %p122
    %p124 = scmp.ne.s32.totalorder %s112, %s113
    %p125 = scmp.eq.s32.totalorder %s19, 1
    %p126 = por %p124, %p125
    %p128 = scmp.ne.s32.totalorder %s113, %s127
    %p129 = scmp.eq.s32.totalorder %s19, 0
    %p130 = por %p128, %p129
    %s132 = sadd.s32 %s131, 1
    %p135 = scmp.eq.s32.totalorder %s13, 1
    %p136 = scmp.ne.s32.totalorder %s131, %s133
    %p137 = scmp.eq.s32.totalorder %s13, 0
    %p138 = por %p136, %p137
    %p139 = scmp.ne.s32.totalorder %s131, %s133
    %p140 = scmp.eq.s32.totalorder %s18, 1
    %p141 = por %p139, %p140
    %p142 = scmp.ne.s32.totalorder %s133, %s134
    %p143 = scmp.eq.s32.totalorder %s18, 0
    %p144 = por %p142, %p143
    %p145 = scmp.ne.s32.totalorder %s133, %s134
    %p146 = scmp.eq.s32.totalorder %s19, 1
    %p147 = por %p145, %p146
    %p149 = scmp.ne.s32.totalorder %s134, %s148
    %p150 = scmp.eq.s32.totalorder %s19, 0
    %p151 = por %p149, %p150
    %s153 = sadd.s32 %s152, 1
    %p156 = scmp.eq.s32.totalorder %s13, 1
    %p157 = scmp.ne.s32.totalorder %s152, %s154
    %p158 = scmp.eq.s32.totalorder %s13, 0
    %p159 = por %p157, %p158
    %p160 = scmp.ne.s32.totalorder %s152, %s154
    %p161 = scmp.eq.s32.totalorder %s18, 1
    %p162 = por %p160, %p161
    %p163 = scmp.ne.s32.totalorder %s154, %s155
    %p164 = scmp.eq.s32.totalorder %s18, 0
    %p165 = por %p163, %p164
    %p166 = scmp.ne.s32.totalorder %s154, %s155
    %p167 = scmp.eq.s32.totalorder %s19, 1
    %p168 = por %p166, %p167
    %p170 = scmp.ne.s32.totalorder %s155, %s169
    %p171 = scmp.eq.s32.totalorder %s19, 0
    %p172 = por %p170, %p171
    %s173 = ssub.s32 %s13, %s20
    %p174 = scmp.eq.s32.totalorder %s173, 0
    %s176 = sadd.s32 %s175, 1
    %s177 = scalar_select %p174, %s175, %s176
    %p180 = pneg %p174
    %p181 = scmp.eq.s32.totalorder %s13, 1
    %p182 = por %p180, %p181
    %p183 = scmp.ne.s32.totalorder %s175, %s178
    %p184 = scmp.eq.s32.totalorder %s13, 0
    %p185 = por %p183, %p184
    %p186 = scmp.ne.s32.totalorder %s175, %s178
    %p187 = scmp.eq.s32.totalorder %s18, 1
    %p188 = por %p186, %p187
    %p189 = scmp.ne.s32.totalorder %s178, %s179
    %p190 = scmp.eq.s32.totalorder %s18, 0
    %p191 = por %p189, %p190
    %p192 = scmp.ne.s32.totalorder %s178, %s179
    %p193 = scmp.eq.s32.totalorder %s19, 1
    %p194 = por %p192, %p193
    %p196 = scmp.ne.s32.totalorder %s179, %s195
    %p197 = scmp.eq.s32.totalorder %s19, 0
    %p198 = por %p196, %p197
    %p199 = scmp.le.s32.totalorder 1, %s13
    %p200 = scmp.lt.s32.totalorder %s13, 3
    %p201 = pnand %p199, %p200
    %p202 = pneg %p201
    // Predicated region
    $region9: #{basic_block_forward.1} parent=5 // pred_check
      _
    $region10: #{basic_block_forward.1} parent=5 // pred_check_branch
      %204 = sbr.rel (%p201) target = $region12
    $region11: #{basic_block_forward.1} parent=5 // pred_region
      %s205 = ssub.s32 %s13, 1
      // Predicated region
      $region13: #{basic_block_forward.1} parent=11 // pred_check
        %p206 = pneg %p60
      $region14: #{basic_block_forward.1} parent=11 // pred_check_branch
        %208 = sbr.rel (%p206) target = $region16
      $region15: #{basic_block_forward.1} parent=11 // pred_region
        _
      $region16: #{basic_block_forward.1} parent=11 // pred_fallthru
        _
      // Predicated region
      $region17: #{basic_block_forward.1} parent=11 // pred_check
        %p209 = pneg %p81
      $region18: #{basic_block_forward.1} parent=11 // pred_check_branch
        %211 = sbr.rel (%p209) target = $region20
      $region19: #{basic_block_forward.1} parent=11 // pred_region
        _
      $region20: #{basic_block_forward.1} parent=11 // pred_fallthru
        _
      // Predicated region
      $region21: #{basic_block_forward.1} parent=11 // pred_check
        %p212 = pneg %p102
      $region22: #{basic_block_forward.1} parent=11 // pred_check_branch
        %214 = sbr.rel (%p212) target = $region24
      $region23: #{basic_block_forward.1} parent=11 // pred_region
        _
      $region24: #{basic_block_forward.1} parent=11 // pred_fallthru
        _
      // Predicated region
      $region25: #{basic_block_forward.1} parent=11 // pred_check
        %p215 = pneg %p123
      $region26: #{basic_block_forward.1} parent=11 // pred_check_branch
        %217 = sbr.rel (%p215) target = $region28
      $region27: #{basic_block_forward.1} parent=11 // pred_region
        _
      $region28: #{basic_block_forward.1} parent=11 // pred_fallthru
        _
      // Predicated region
      $region29: #{basic_block_forward.1} parent=11 // pred_check
        %p218 = pneg %p144
      $region30: #{basic_block_forward.1} parent=11 // pred_check_branch
        %220 = sbr.rel (%p218) target = $region32
      $region31: #{basic_block_forward.1} parent=11 // pred_region
        _
      $region32: #{basic_block_forward.1} parent=11 // pred_fallthru
        _
      // Predicated region
      $region33: #{basic_block_forward.1} parent=11 // pred_check
        %p221 = pneg %p165
      $region34: #{basic_block_forward.1} parent=11 // pred_check_branch
        %223 = sbr.rel (%p221) target = $region36
      $region35: #{basic_block_forward.1} parent=11 // pred_region
        _
      $region36: #{basic_block_forward.1} parent=11 // pred_fallthru
        _
    $region12: #{basic_block_forward.1} parent=5 // pred_fallthru
      _
    %p224 = scmp.lt.s32.totalorder %s13, 2
    // Predicated region
    $region37: #{basic_block_forward.1} parent=5 // pred_check
      %p225 = pneg %p224
    $region38: #{basic_block_forward.1} parent=5 // pred_check_branch
      %227 = sbr.rel (%p225) target = $region40
    $region39: #{basic_block_forward.1} parent=5 // pred_region
      // Predicated region
      $region41: #{basic_block_forward.1} parent=39 // pred_check
        %p228 = pneg %p33
      $region42: #{basic_block_forward.1} parent=39 // pred_check_branch
        %230 = sbr.rel (%p228) target = $region44
      $region43: #{basic_block_forward.1} parent=39 // pred_region
        %p231 = scmp.lt.s32.totalorder %s13, 1
        %s232 = scalar_select %p231, %s13, 1
        %s233 = smul.addr %s232, 32
        %s234 = smul.addr %s233, 8
        %s235 = scalar_lea.vmem %s0, %s234
      $region44: #{basic_block_forward.1} parent=39 // pred_fallthru
        _
    $region40: #{basic_block_forward.1} parent=5 // pred_fallthru
      _
    %p236 = scmp.le.s32.totalorder 1, %s13
    %p237 = scmp.lt.s32.totalorder %s13, 3
    %p238 = pnand %p236, %p237
    %p239 = pneg %p238
    // Predicated region
    $region45: #{basic_block_forward.1} parent=5 // pred_check
      _
    $region46: #{basic_block_forward.1} parent=5 // pred_check_branch
      %241 = sbr.rel (%p238) target = $region48
    $region47: #{basic_block_forward.1} parent=5 // pred_region
      %s242 = ssub.s32 %s13, 1
      %p243 = scmp.lt.s32.totalorder %s18, 1
      %s244 = scalar_select %p243, %s18, 1
      %s245 = smul.addr %s244, 32
      %s246 = smul.addr %s245, 8
      %s247 = scalar_lea.vmem %s0, %s246
      %p248 = pneg %p39
      %p249 = pneg %p36
      %p250 = pneg %p60
      %p251 = pneg %p57
      %p252 = pneg %p81
      %p253 = pneg %p78
      %p254 = pneg %p102
      %p255 = pneg %p99
      %p256 = pneg %p123
      %p257 = pneg %p120
      %p258 = pneg %p144
      %p259 = pneg %p141
      %p260 = pneg %p165
      %p261 = pneg %p162
      %p262 = pneg %p191
      %p263 = pneg %p188
      %p264 = scmp.lt.s32.totalorder %s18, 1
      %s265 = scalar_select %p264, %s18, 1
      %s266 = smul.addr %s265, 32
      %s267 = smul.addr %s266, 8
      %s268 = scalar_lea.vmem %s7, %s267
      %p269 = scmp.lt.s32.totalorder %s18, 1
      %s270 = scalar_select %p269, %s18, 1
      %s271 = smul.addr %s270, 32
      %s272 = smul.addr %s271, 8
      %s273 = scalar_lea.vmem %s0, %s272
      %p274 = scmp.lt.s32.totalorder %s18, 1
      %s275 = scalar_select %p274, %s18, 1
      %s276 = smul.addr %s275, 32
      %s277 = smul.addr %s276, 8
      %s278 = scalar_lea.vmem %s7, %s277
      %p280 = scmp.eq.s32.totalorder %s18, 0
      // Predicated region
      $region49: #{basic_block_forward.1} parent=47 // pred_check
        %p281 = pneg %p280
      $region50: #{basic_block_forward.1} parent=47 // pred_check_branch
        %283 = sbr.rel (%p281) target = $region52
      $region51: #{basic_block_forward.1} parent=47 // pred_region
        %vm284 = vcmask 27648
        %285 = vst.msk [vmem:[#allocation2] sm:$0xf] %vm284, 0
        %286 = vst.msk [vmem:[#allocation2 + $0x4] sm:$0xf] %vm284, 0
        %vm287 = vcmask 24576
        %288 = vst.msk [vmem:[#allocation2 + $0x8] sm:$0x1] %vm287, 0
        %s289 = scalar_lea.vmem [#allocation2], 204
        %290 = vst.msk [vmem:[%s289] sm:$0xf] %vm284, 0
        %291 = vst.msk [vmem:[%s289 + $0x4] sm:$0xf] %vm284, 0
        %292 = vst.msk [vmem:[%s289 + $0x8] sm:$0x1] %vm287, 0
        %vm293 = vcmask 24576
        %vm294 = vsmask.f32 256
        %vm295 = vmand %vm293, %vm294
        %v296 = vld [vmem:[#allocation2] sm:$0x1]
        %v297 = vsel %vm295, 0, %v296
        %298 = vst [vmem:[#allocation2] sm:$0x1] %v297
        %v299 = vld [vmem:[#allocation2 + $0xc] sm:$0x1]
        %v300 = vsel %vm295, 0, %v299
        %301 = vst [vmem:[#allocation2 + $0xc] sm:$0x1] %v300
        %v302 = vld [vmem:[#allocation2 + $0x18] sm:$0x1]
        %v303 = vsel %vm295, 0, %v302
        %304 = vst [vmem:[#allocation2 + $0x18] sm:$0x1] %v303
        %v305 = vld [vmem:[#allocation2 + $0x24] sm:$0x1]
        %v306 = vsel %vm295, 0, %v305
        %307 = vst [vmem:[#allocation2 + $0x24] sm:$0x1] %v306
        %v308 = vld [vmem:[#allocation2 + $0x30] sm:$0x1]
        %v309 = vsel %vm295, 0, %v308
        %310 = vst [vmem:[#allocation2 + $0x30] sm:$0x1] %v309
        %v311 = vld [vmem:[#allocation2 + $0x3c] sm:$0x1]
        %v312 = vsel %vm295, 0, %v311
        %313 = vst [vmem:[#allocation2 + $0x3c] sm:$0x1] %v312
        %v314 = vld [vmem:[#allocation2 + $0x48] sm:$0x1]
        %v315 = vsel %vm295, 0, %v314
        %316 = vst [vmem:[#allocation2 + $0x48] sm:$0x1] %v315
        %v317 = vld [vmem:[#allocation2 + $0x54] sm:$0x1]
        %v318 = vsel %vm295, 0, %v317
        %319 = vst [vmem:[#allocation2 + $0x54] sm:$0x1] %v318
        %v320 = vld [vmem:[#allocation2 + $0x60] sm:$0x1]
        %v321 = vsel %vm295, 0, %v320
        %322 = vst [vmem:[#allocation2 + $0x60] sm:$0x1] %v321
        %v323 = vld [vmem:[#allocation2 + $0x6c] sm:$0x1]
        %v324 = vsel %vm295, 0, %v323
        %325 = vst [vmem:[#allocation2 + $0x6c] sm:$0x1] %v324
        %v326 = vld [vmem:[#allocation2 + $0x78] sm:$0x1]
        %v327 = vsel %vm295, 0, %v326
        %328 = vst [vmem:[#allocation2 + $0x78] sm:$0x1] %v327
        %v329 = vld [vmem:[#allocation2 + $0x84] sm:$0x1]
        %v330 = vsel %vm295, 0, %v329
        %331 = vst [vmem:[#allocation2 + $0x84] sm:$0x1] %v330
        %v332 = vld [vmem:[#allocation2 + $0x90] sm:$0x1]
        %v333 = vsel %vm295, 0, %v332
        %334 = vst [vmem:[#allocation2 + $0x90] sm:$0x1] %v333
        %v335 = vld [vmem:[#allocation2 + $0x9c] sm:$0x1]
        %v336 = vsel %vm295, 0, %v335
        %337 = vst [vmem:[#allocation2 + $0x9c] sm:$0x1] %v336
        %v338 = vld [vmem:[#allocation2 + $0xa8] sm:$0x1]
        %v339 = vsel %vm295, 0, %v338
        %340 = vst [vmem:[#allocation2 + $0xa8] sm:$0x1] %v339
        %v341 = vld [vmem:[#allocation2 + $0xb4] sm:$0x1]
        %v342 = vsel %vm295, 0, %v341
        %343 = vst [vmem:[#allocation2 + $0xb4] sm:$0x1] %v342
        %v344 = vld [vmem:[#allocation2 + $0xc0] sm:$0x1]
        %v345 = vsel %vm295, 0, %v344
        %346 = vst [vmem:[#allocation2 + $0xc0] sm:$0x1] %v345
        %v347 = vld [vmem:[#allocation2 + $0xcc] sm:$0x1]
        %v348 = vsel %vm295, 0, %v347
        %349 = vst [vmem:[#allocation2 + $0xcc] sm:$0x1] %v348
        %vm350 = vsmask.f32 7938
        %vm351 = vmand %vm293, %vm350
        %v352 = vld [vmem:[#allocation2 + $0x8] sm:$0x1]
        %v353 = vsel %vm351, 0, %v352
        %354 = vst [vmem:[#allocation2 + $0x8] sm:$0x1] %v353
        %v355 = vld [vmem:[#allocation2 + $0x14] sm:$0x1]
        %v356 = vsel %vm351, 0, %v355
        %357 = vst [vmem:[#allocation2 + $0x14] sm:$0x1] %v356
        %v358 = vld [vmem:[#allocation2 + $0x20] sm:$0x1]
        %v359 = vsel %vm351, 0, %v358
        %360 = vst [vmem:[#allocation2 + $0x20] sm:$0x1] %v359
        %v361 = vld [vmem:[#allocation2 + $0x2c] sm:$0x1]
        %v362 = vsel %vm351, 0, %v361
        %363 = vst [vmem:[#allocation2 + $0x2c] sm:$0x1] %v362
        %v364 = vld [vmem:[#allocation2 + $0x38] sm:$0x1]
        %v365 = vsel %vm351, 0, %v364
        %366 = vst [vmem:[#allocation2 + $0x38] sm:$0x1] %v365
        %v367 = vld [vmem:[#allocation2 + $0x44] sm:$0x1]
        %v368 = vsel %vm351, 0, %v367
        %369 = vst [vmem:[#allocation2 + $0x44] sm:$0x1] %v368
        %v370 = vld [vmem:[#allocation2 + $0x50] sm:$0x1]
        %v371 = vsel %vm351, 0, %v370
        %372 = vst [vmem:[#allocation2 + $0x50] sm:$0x1] %v371
        %v373 = vld [vmem:[#allocation2 + $0x5c] sm:$0x1]
        %v374 = vsel %vm351, 0, %v373
        %375 = vst [vmem:[#allocation2 + $0x5c] sm:$0x1] %v374
        %v376 = vld [vmem:[#allocation2 + $0x68] sm:$0x1]
        %v377 = vsel %vm351, 0, %v376
        %378 = vst [vmem:[#allocation2 + $0x68] sm:$0x1] %v377
        %v379 = vld [vmem:[#allocation2 + $0x74] sm:$0x1]
        %v380 = vsel %vm351, 0, %v379
        %381 = vst [vmem:[#allocation2 + $0x74] sm:$0x1] %v380
        %v382 = vld [vmem:[#allocation2 + $0x80] sm:$0x1]
        %v383 = vsel %vm351, 0, %v382
        %384 = vst [vmem:[#allocation2 + $0x80] sm:$0x1] %v383
        %v385 = vld [vmem:[#allocation2 + $0x8c] sm:$0x1]
        %v386 = vsel %vm351, 0, %v385
        %387 = vst [vmem:[#allocation2 + $0x8c] sm:$0x1] %v386
        %v388 = vld [vmem:[#allocation2 + $0x98] sm:$0x1]
        %v389 = vsel %vm351, 0, %v388
        %390 = vst [vmem:[#allocation2 + $0x98] sm:$0x1] %v389
        %v391 = vld [vmem:[#allocation2 + $0xa4] sm:$0x1]
        %v392 = vsel %vm351, 0, %v391
        %393 = vst [vmem:[#allocation2 + $0xa4] sm:$0x1] %v392
        %v394 = vld [vmem:[#allocation2 + $0xb0] sm:$0x1]
        %v395 = vsel %vm351, 0, %v394
        %396 = vst [vmem:[#allocation2 + $0xb0] sm:$0x1] %v395
        %v397 = vld [vmem:[#allocation2 + $0xbc] sm:$0x1]
        %v398 = vsel %vm351, 0, %v397
        %399 = vst [vmem:[#allocation2 + $0xbc] sm:$0x1] %v398
        %v400 = vld [vmem:[#allocation2 + $0xc8] sm:$0x1]
        %v401 = vsel %vm351, 0, %v400
        %402 = vst [vmem:[#allocation2 + $0xc8] sm:$0x1] %v401
        %v403 = vld [vmem:[#allocation2 + $0xd4] sm:$0x1]
        %v404 = vsel %vm351, 0, %v403
        %405 = vst [vmem:[#allocation2 + $0xd4] sm:$0x1] %v404
      $region52: #{basic_block_forward.1} parent=47 // pred_fallthru
        _
      %v406 = vld [vmem:[%s273] sm:$0xff]
      %v407 = vld [vmem:[%s273 + $0x8] sm:$0xff]
      %v408 = vld [vmem:[%s273 + $0x10] sm:$0xff]
      %v409 = vld [vmem:[%s273 + $0x18] sm:$0xff]
      %v410 = vld [vmem:[%s273 + $0x20] sm:$0xff]
      %v411 = vld [vmem:[%s273 + $0x28] sm:$0xff]
      %v412 = vld [vmem:[%s273 + $0x30] sm:$0xff]
      %v413 = vld [vmem:[%s273 + $0x38] sm:$0xff]
      %v414 = vld [vmem:[%s273 + $0x40] sm:$0xff]
      %v415 = vld [vmem:[%s273 + $0x48] sm:$0xff]
      %v416 = vld [vmem:[%s273 + $0x50] sm:$0xff]
      %v417 = vld [vmem:[%s273 + $0x58] sm:$0xff]
      %v418 = vld [vmem:[%s273 + $0x60] sm:$0xff]
      %v419 = vld [vmem:[%s273 + $0x68] sm:$0xff]
      %v420 = vld [vmem:[%s273 + $0x70] sm:$0xff]
      %v421 = vld [vmem:[%s273 + $0x78] sm:$0xff]
      %v422 = vld [vmem:[%s273 + $0x80] sm:$0xff]
      %v423 = vld [vmem:[%s273 + $0x88] sm:$0xff]
      %v424 = vld [vmem:[%s273 + $0x90] sm:$0xff]
      %v425 = vld [vmem:[%s273 + $0x98] sm:$0xff]
      %v426 = vld [vmem:[%s273 + $0xa0] sm:$0xff]
      %v427 = vld [vmem:[%s273 + $0xa8] sm:$0xff]
      %v428 = vld [vmem:[%s273 + $0xb0] sm:$0xff]
      %v429 = vld [vmem:[%s273 + $0xb8] sm:$0xff]
      %v430 = vld [vmem:[%s273 + $0xc0] sm:$0xff]
      %v431 = vld [vmem:[%s273 + $0xc8] sm:$0xff]
      %v432 = vld [vmem:[%s273 + $0xd0] sm:$0xff]
      %v433 = vld [vmem:[%s273 + $0xd8] sm:$0xff]
      %v434 = vld [vmem:[%s273 + $0xe0] sm:$0xff]
      %v435 = vld [vmem:[%s273 + $0xe8] sm:$0xff]
      %v436 = vld [vmem:[%s273 + $0xf0] sm:$0xff]
      %v437 = vld [vmem:[%s273 + $0xf8] sm:$0xff]
      %v438 = vpack.c.bf16 %v407, %v406
      %v439 = vpack.c.bf16 %v409, %v408
      %v440 = vpack.c.bf16 %v411, %v410
      %v441 = vpack.c.bf16 %v413, %v412
      %v442 = vpack.c.bf16 %v415, %v414
      %v443 = vpack.c.bf16 %v417, %v416
      %v444 = vpack.c.bf16 %v419, %v418
      %v445 = vpack.c.bf16 %v421, %v420
      %v446 = vpack.c.bf16 %v423, %v422
      %v447 = vpack.c.bf16 %v425, %v424
      %v448 = vpack.c.bf16 %v427, %v426
      %v449 = vpack.c.bf16 %v429, %v428
      %v450 = vpack.c.bf16 %v431, %v430
      %v451 = vpack.c.bf16 %v433, %v432
      %v452 = vpack.c.bf16 %v435, %v434
      %v453 = vpack.c.bf16 %v437, %v436
      %v470 = vunpack.c.l.b16 %v438
      %v471 = vunpack.c.h.b16 %v438
      %v472 = vunpack.c.l.b16 %v439
      %v473 = vunpack.c.h.b16 %v439
      %v474 = vunpack.c.l.b16 %v440
      %v475 = vunpack.c.h.b16 %v440
      %v476 = vunpack.c.l.b16 %v441
      %v477 = vunpack.c.h.b16 %v441
      %v478 = vunpack.c.l.b16 %v442
      %v479 = vunpack.c.h.b16 %v442
      %v480 = vunpack.c.l.b16 %v443
      %v481 = vunpack.c.h.b16 %v443
      %v482 = vunpack.c.l.b16 %v444
      %v483 = vunpack.c.h.b16 %v444
      %v484 = vunpack.c.l.b16 %v445
      %v485 = vunpack.c.h.b16 %v445
      %v486 = vunpack.c.l.b16 %v446
      %v487 = vunpack.c.h.b16 %v446
      %v488 = vunpack.c.l.b16 %v447
      %v489 = vunpack.c.h.b16 %v447
      %v490 = vunpack.c.l.b16 %v448
      %v491 = vunpack.c.h.b16 %v448
      %v492 = vunpack.c.l.b16 %v449
      %v493 = vunpack.c.h.b16 %v449
      %v494 = vunpack.c.l.b16 %v450
      %v495 = vunpack.c.h.b16 %v450
      %v496 = vunpack.c.l.b16 %v451
      %v497 = vunpack.c.h.b16 %v451
      %v498 = vunpack.c.l.b16 %v452
      %v499 = vunpack.c.h.b16 %v452
      %v500 = vunpack.c.l.b16 %v453
      %v501 = vunpack.c.h.b16 %v453
      %v502 = vpack.c.b16 %v470, %v470
      %v503 = vpack.c.b16 %v471, %v471
      %v504 = vpack.c.b16 %v472, %v472
      %v505 = vpack.c.b16 %v473, %v473
      %v506 = vpack.c.b16 %v474, %v474
      %v507 = vpack.c.b16 %v475, %v475
      %v508 = vpack.c.b16 %v476, %v476
      %v509 = vpack.c.b16 %v477, %v477
      %v510 = vpack.c.b16 %v478, %v478
      %v511 = vpack.c.b16 %v479, %v479
      %v512 = vpack.c.b16 %v480, %v480
      %v513 = vpack.c.b16 %v481, %v481
      %v514 = vpack.c.b16 %v482, %v482
      %v515 = vpack.c.b16 %v483, %v483
      %v516 = vpack.c.b16 %v484, %v484
      %v517 = vpack.c.b16 %v485, %v485
      %v518 = vpack.c.b16 %v486, %v486
      %v519 = vpack.c.b16 %v487, %v487
      %v520 = vpack.c.b16 %v488, %v488
      %v521 = vpack.c.b16 %v489, %v489
      %v522 = vpack.c.b16 %v490, %v490
      %v523 = vpack.c.b16 %v491, %v491
      %v524 = vpack.c.b16 %v492, %v492
      %v525 = vpack.c.b16 %v493, %v493
      %v526 = vpack.c.b16 %v494, %v494
      %v527 = vpack.c.b16 %v495, %v495
      %v528 = vpack.c.b16 %v496, %v496
      %v529 = vpack.c.b16 %v497, %v497
      %v530 = vpack.c.b16 %v498, %v498
      %v531 = vpack.c.b16 %v499, %v499
      %v532 = vpack.c.b16 %v500, %v500
      %v533 = vpack.c.b16 %v501, %v501
      %vm534 = vsmask.f32 256
      %vm535 = vsmask.f32 4368
      %vm536 = vmor %vm534, %vm535
      %v538 = vshrl.u32 %v502, 16
      %v540 = vrot.slane %v538, 7
      %v541 = vshll.u32 %v502, 16
      %v543 = vor.u32 %v540, %v541
      %v544 = vrot.slane %v540, 4
      %v546 = vshrl.u32 %v503, 16
      %v548 = vrot.slane %v546, 7
      %v549 = vshll.u32 %v503, 16
      %v551 = vor.u32 %v548, %v549
      %v552 = vsel %vm536, %v544, %v551
      %v553 = vrot.slane %v548, 4
      %v555 = vshrl.u32 %v504, 16
      %v557 = vrot.slane %v555, 7
      %v558 = vshll.u32 %v504, 16
      %v560 = vor.u32 %v557, %v558
      %v561 = vrot.slane %v557, 4
      %v563 = vshrl.u32 %v505, 16
      %v565 = vrot.slane %v563, 7
      %v566 = vshll.u32 %v505, 16
      %v568 = vor.u32 %v565, %v566
      %v569 = vsel %vm536, %v561, %v568
      %v570 = vrot.slane %v565, 4
      %v572 = vshrl.u32 %v506, 16
      %v574 = vrot.slane %v572, 7
      %v575 = vshll.u32 %v506, 16
      %v577 = vor.u32 %v574, %v575
      %v578 = vrot.slane %v574, 4
      %v580 = vshrl.u32 %v507, 16
      %v582 = vrot.slane %v580, 7
      %v583 = vshll.u32 %v507, 16
      %v585 = vor.u32 %v582, %v583
      %v586 = vsel %vm536, %v578, %v585
      %v587 = vrot.slane %v582, 4
      %v589 = vshrl.u32 %v508, 16
      %v591 = vrot.slane %v589, 7
      %v592 = vshll.u32 %v508, 16
      %v594 = vor.u32 %v591, %v592
      %v595 = vrot.slane %v591, 4
      %v597 = vshrl.u32 %v509, 16
      %v599 = vrot.slane %v597, 7
      %v600 = vshll.u32 %v509, 16
      %v602 = vor.u32 %v599, %v600
      %v603 = vsel %vm536, %v595, %v602
      %v604 = vrot.slane %v599, 4
      %v606 = vshrl.u32 %v510, 16
      %v608 = vrot.slane %v606, 7
      %v609 = vshll.u32 %v510, 16
      %v611 = vor.u32 %v608, %v609
      %v612 = vrot.slane %v608, 4
      %v614 = vshrl.u32 %v511, 16
      %v616 = vrot.slane %v614, 7
      %v617 = vshll.u32 %v511, 16
      %v619 = vor.u32 %v616, %v617
      %v620 = vsel %vm536, %v612, %v619
      %v621 = vrot.slane %v616, 4
      %v623 = vshrl.u32 %v512, 16
      %v625 = vrot.slane %v623, 7
      %v626 = vshll.u32 %v512, 16
      %v628 = vor.u32 %v625, %v626
      %v629 = vrot.slane %v625, 4
      %v631 = vshrl.u32 %v513, 16
      %v633 = vrot.slane %v631, 7
      %v634 = vshll.u32 %v513, 16
      %v636 = vor.u32 %v633, %v634
      %v637 = vsel %vm536, %v629, %v636
      %v638 = vrot.slane %v633, 4
      %v640 = vshrl.u32 %v514, 16
      %v642 = vrot.slane %v640, 7
      %v643 = vshll.u32 %v514, 16
      %v645 = vor.u32 %v642, %v643
      %v646 = vrot.slane %v642, 4
      %v648 = vshrl.u32 %v515, 16
      %v650 = vrot.slane %v648, 7
      %v651 = vshll.u32 %v515, 16
      %v653 = vor.u32 %v650, %v651
      %v654 = vsel %vm536, %v646, %v653
      %v655 = vrot.slane %v650, 4
      %v657 = vshrl.u32 %v516, 16
      %v659 = vrot.slane %v657, 7
      %v660 = vshll.u32 %v516, 16
      %v662 = vor.u32 %v659, %v660
      %v663 = vrot.slane %v659, 4
      %v665 = vshrl.u32 %v517, 16
      %v667 = vrot.slane %v665, 7
      %v668 = vshll.u32 %v517, 16
      %v670 = vor.u32 %v667, %v668
      %v671 = vsel %vm536, %v663, %v670
      %v672 = vrot.slane %v667, 4
      %v674 = vshrl.u32 %v518, 16
      %v676 = vrot.slane %v674, 7
      %v677 = vshll.u32 %v518, 16
      %v679 = vor.u32 %v676, %v677
      %v680 = vrot.slane %v676, 4
      %v682 = vshrl.u32 %v519, 16
      %v684 = vrot.slane %v682, 7
      %v685 = vshll.u32 %v519, 16
      %v687 = vor.u32 %v684, %v685
      %v688 = vsel %vm536, %v680, %v687
      %v689 = vrot.slane %v684, 4
      %v691 = vshrl.u32 %v520, 16
      %v693 = vrot.slane %v691, 7
      %v694 = vshll.u32 %v520, 16
      %v696 = vor.u32 %v693, %v694
      %v697 = vrot.slane %v693, 4
      %v699 = vshrl.u32 %v521, 16
      %v701 = vrot.slane %v699, 7
      %v702 = vshll.u32 %v521, 16
      %v704 = vor.u32 %v701, %v702
      %v705 = vsel %vm536, %v697, %v704
      %v706 = vrot.slane %v701, 4
      %v708 = vshrl.u32 %v522, 16
      %v710 = vrot.slane %v708, 7
      %v711 = vshll.u32 %v522, 16
      %v713 = vor.u32 %v710, %v711
      %v714 = vrot.slane %v710, 4
      %v716 = vshrl.u32 %v523, 16
      %v718 = vrot.slane %v716, 7
      %v719 = vshll.u32 %v523, 16
      %v721 = vor.u32 %v718, %v719
      %v722 = vsel %vm536, %v714, %v721
      %v723 = vrot.slane %v718, 4
      %v725 = vshrl.u32 %v524, 16
      %v727 = vrot.slane %v725, 7
      %v728 = vshll.u32 %v524, 16
      %v730 = vor.u32 %v727, %v728
      %v731 = vrot.slane %v727, 4
      %v733 = vshrl.u32 %v525, 16
      %v735 = vrot.slane %v733, 7
      %v736 = vshll.u32 %v525, 16
      %v738 = vor.u32 %v735, %v736
      %v739 = vsel %vm536, %v731, %v738
      %v740 = vrot.slane %v735, 4
      %v742 = vshrl.u32 %v526, 16
      %v744 = vrot.slane %v742, 7
      %v745 = vshll.u32 %v526, 16
      %v747 = vor.u32 %v744, %v745
      %v748 = vrot.slane %v744, 4
      %v750 = vshrl.u32 %v527, 16
      %v752 = vrot.slane %v750, 7
      %v753 = vshll.u32 %v527, 16
      %v755 = vor.u32 %v752, %v753
      %v756 = vsel %vm536, %v748, %v755
      %v757 = vrot.slane %v752, 4
      %v759 = vshrl.u32 %v528, 16
      %v761 = vrot.slane %v759, 7
      %v762 = vshll.u32 %v528, 16
      %v764 = vor.u32 %v761, %v762
      %v765 = vrot.slane %v761, 4
      %v767 = vshrl.u32 %v529, 16
      %v769 = vrot.slane %v767, 7
      %v770 = vshll.u32 %v529, 16
      %v772 = vor.u32 %v769, %v770
      %v773 = vsel %vm536, %v765, %v772
      %v774 = vrot.slane %v769, 4
      %v776 = vshrl.u32 %v530, 16
      %v778 = vrot.slane %v776, 7
      %v779 = vshll.u32 %v530, 16
      %v781 = vor.u32 %v778, %v779
      %v782 = vrot.slane %v778, 4
      %v784 = vshrl.u32 %v531, 16
      %v786 = vrot.slane %v784, 7
      %v787 = vshll.u32 %v531, 16
      %v789 = vor.u32 %v786, %v787
      %v790 = vsel %vm536, %v782, %v789
      %v791 = vrot.slane %v786, 4
      %v793 = vshrl.u32 %v532, 16
      %v795 = vrot.slane %v793, 7
      %v796 = vshll.u32 %v532, 16
      %v798 = vor.u32 %v795, %v796
      %v799 = vrot.slane %v795, 4
      %v801 = vshrl.u32 %v533, 16
      %v803 = vrot.slane %v801, 7
      %v804 = vshll.u32 %v533, 16
      %v806 = vor.u32 %v803, %v804
      %v807 = vsel %vm536, %v799, %v806
      %v808 = vrot.slane %v803, 4
      %s857 = scalar_lea.vmem [#allocation2], 12
      %vm858 = vcmask 27648
      %vm859 = vsmask.f32 7938
      %vm860 = vmand %vm858, %vm859
      %v861 = vld [vmem:[%s857] sm:$0xf]
      %v862 = vsel %vm860, %v543, %v861
      %863 = vst [vmem:[%s857] sm:$0xf] %v862
      %vm864 = vcmask 27648
      %865 = vst.msk [vmem:[%s857 + $0x4] sm:$0xf] %vm864, %v552
      %vm866 = vcmask 24576
      %vm867 = vmand %vm866, %vm534
      %v868 = vld [vmem:[%s857 + $0x8] sm:$0x1]
      %v869 = vsel %vm867, %v553, %v868
      %870 = vst [vmem:[%s857 + $0x8] sm:$0x1] %v869
      %v871 = vld [vmem:[%s857 + $0xc] sm:$0xf]
      %v872 = vsel %vm860, %v560, %v871
      %873 = vst [vmem:[%s857 + $0xc] sm:$0xf] %v872
      %874 = vst.msk [vmem:[%s857 + $0x10] sm:$0xf] %vm864, %v569
      %v875 = vld [vmem:[%s857 + $0x14] sm:$0x1]
      %v876 = vsel %vm867, %v570, %v875
      %877 = vst [vmem:[%s857 + $0x14] sm:$0x1] %v876
      %v878 = vld [vmem:[%s857 + $0x18] sm:$0xf]
      %v879 = vsel %vm860, %v577, %v878
      %880 = vst [vmem:[%s857 + $0x18] sm:$0xf] %v879
      %881 = vst.msk [vmem:[%s857 + $0x1c] sm:$0xf] %vm864, %v586
      %v882 = vld [vmem:[%s857 + $0x20] sm:$0x1]
      %v883 = vsel %vm867, %v587, %v882
      %884 = vst [vmem:[%s857 + $0x20] sm:$0x1] %v883
      %v885 = vld [vmem:[%s857 + $0x24] sm:$0xf]
      %v886 = vsel %vm860, %v594, %v885
      %887 = vst [vmem:[%s857 + $0x24] sm:$0xf] %v886
      %888 = vst.msk [vmem:[%s857 + $0x28] sm:$0xf] %vm864, %v603
      %v889 = vld [vmem:[%s857 + $0x2c] sm:$0x1]
      %v890 = vsel %vm867, %v604, %v889
      %891 = vst [vmem:[%s857 + $0x2c] sm:$0x1] %v890
      %v892 = vld [vmem:[%s857 + $0x30] sm:$0xf]
      %v893 = vsel %vm860, %v611, %v892
      %894 = vst [vmem:[%s857 + $0x30] sm:$0xf] %v893
      %895 = vst.msk [vmem:[%s857 + $0x34] sm:$0xf] %vm864, %v620
      %v896 = vld [vmem:[%s857 + $0x38] sm:$0x1]
      %v897 = vsel %vm867, %v621, %v896
      %898 = vst [vmem:[%s857 + $0x38] sm:$0x1] %v897
      %v899 = vld [vmem:[%s857 + $0x3c] sm:$0xf]
      %v900 = vsel %vm860, %v628, %v899
      %901 = vst [vmem:[%s857 + $0x3c] sm:$0xf] %v900
      %902 = vst.msk [vmem:[%s857 + $0x40] sm:$0xf] %vm864, %v637
      %v903 = vld [vmem:[%s857 + $0x44] sm:$0x1]
      %v904 = vsel %vm867, %v638, %v903
      %905 = vst [vmem:[%s857 + $0x44] sm:$0x1] %v904
      %v906 = vld [vmem:[%s857 + $0x48] sm:$0xf]
      %v907 = vsel %vm860, %v645, %v906
      %908 = vst [vmem:[%s857 + $0x48] sm:$0xf] %v907
      %909 = vst.msk [vmem:[%s857 + $0x4c] sm:$0xf] %vm864, %v654
      %v910 = vld [vmem:[%s857 + $0x50] sm:$0x1]
      %v911 = vsel %vm867, %v655, %v910
      %912 = vst [vmem:[%s857 + $0x50] sm:$0x1] %v911
      %v913 = vld [vmem:[%s857 + $0x54] sm:$0xf]
      %v914 = vsel %vm860, %v662, %v913
      %915 = vst [vmem:[%s857 + $0x54] sm:$0xf] %v914
      %916 = vst.msk [vmem:[%s857 + $0x58] sm:$0xf] %vm864, %v671
      %v917 = vld [vmem:[%s857 + $0x5c] sm:$0x1]
      %v918 = vsel %vm867, %v672, %v917
      %919 = vst [vmem:[%s857 + $0x5c] sm:$0x1] %v918
      %v920 = vld [vmem:[%s857 + $0x60] sm:$0xf]
      %v921 = vsel %vm860, %v679, %v920
      %922 = vst [vmem:[%s857 + $0x60] sm:$0xf] %v921
      %923 = vst.msk [vmem:[%s857 + $0x64] sm:$0xf] %vm864, %v688
      %v924 = vld [vmem:[%s857 + $0x68] sm:$0x1]
      %v925 = vsel %vm867, %v689, %v924
      %926 = vst [vmem:[%s857 + $0x68] sm:$0x1] %v925
      %v927 = vld [vmem:[%s857 + $0x6c] sm:$0xf]
      %v928 = vsel %vm860, %v696, %v927
      %929 = vst [vmem:[%s857 + $0x6c] sm:$0xf] %v928
      %930 = vst.msk [vmem:[%s857 + $0x70] sm:$0xf] %vm864, %v705
      %v931 = vld [vmem:[%s857 + $0x74] sm:$0x1]
      %v932 = vsel %vm867, %v706, %v931
      %933 = vst [vmem:[%s857 + $0x74] sm:$0x1] %v932
      %v934 = vld [vmem:[%s857 + $0x78] sm:$0xf]
      %v935 = vsel %vm860, %v713, %v934
      %936 = vst [vmem:[%s857 + $0x78] sm:$0xf] %v935
      %937 = vst.msk [vmem:[%s857 + $0x7c] sm:$0xf] %vm864, %v722
      %v938 = vld [vmem:[%s857 + $0x80] sm:$0x1]
      %v939 = vsel %vm867, %v723, %v938
      %940 = vst [vmem:[%s857 + $0x80] sm:$0x1] %v939
      %v941 = vld [vmem:[%s857 + $0x84] sm:$0xf]
      %v942 = vsel %vm860, %v730, %v941
      %943 = vst [vmem:[%s857 + $0x84] sm:$0xf] %v942
      %944 = vst.msk [vmem:[%s857 + $0x88] sm:$0xf] %vm864, %v739
      %v945 = vld [vmem:[%s857 + $0x8c] sm:$0x1]
      %v946 = vsel %vm867, %v740, %v945
      %947 = vst [vmem:[%s857 + $0x8c] sm:$0x1] %v946
      %v948 = vld [vmem:[%s857 + $0x90] sm:$0xf]
      %v949 = vsel %vm860, %v747, %v948
      %950 = vst [vmem:[%s857 + $0x90] sm:$0xf] %v949
      %951 = vst.msk [vmem:[%s857 + $0x94] sm:$0xf] %vm864, %v756
      %v952 = vld [vmem:[%s857 + $0x98] sm:$0x1]
      %v953 = vsel %vm867, %v757, %v952
      %954 = vst [vmem:[%s857 + $0x98] sm:$0x1] %v953
      %v955 = vld [vmem:[%s857 + $0x9c] sm:$0xf]
      %v956 = vsel %vm860, %v764, %v955
      %957 = vst [vmem:[%s857 + $0x9c] sm:$0xf] %v956
      %958 = vst.msk [vmem:[%s857 + $0xa0] sm:$0xf] %vm864, %v773
      %v959 = vld [vmem:[%s857 + $0xa4] sm:$0x1]
      %v960 = vsel %vm867, %v774, %v959
      %961 = vst [vmem:[%s857 + $0xa4] sm:$0x1] %v960
      %v962 = vld [vmem:[%s857 + $0xa8] sm:$0xf]
      %v963 = vsel %vm860, %v781, %v962
      %964 = vst [vmem:[%s857 + $0xa8] sm:$0xf] %v963
      %965 = vst.msk [vmem:[%s857 + $0xac] sm:$0xf] %vm864, %v790
      %v966 = vld [vmem:[%s857 + $0xb0] sm:$0x1]
      %v967 = vsel %vm867, %v791, %v966
      %968 = vst [vmem:[%s857 + $0xb0] sm:$0x1] %v967
      %v969 = vld [vmem:[%s857 + $0xb4] sm:$0xf]
      %v970 = vsel %vm860, %v798, %v969
      %971 = vst [vmem:[%s857 + $0xb4] sm:$0xf] %v970
      %972 = vst.msk [vmem:[%s857 + $0xb8] sm:$0xf] %vm864, %v807
      %v973 = vld [vmem:[%s857 + $0xbc] sm:$0x1]
      %v974 = vsel %vm867, %v808, %v973
      %975 = vst [vmem:[%s857 + $0xbc] sm:$0x1] %v974
      %v976 = vld [vmem:[#allocation2] sm:$0xf]
      %v977 = vld [vmem:[#allocation2 + $0x4] sm:$0xf]
      %v978 = vld [vmem:[#allocation2 + $0xc] sm:$0xf]
      %v979 = vld [vmem:[#allocation2 + $0x10] sm:$0xf]
      %v980 = vld [vmem:[#allocation2 + $0x18] sm:$0xf]
      %v981 = vld [vmem:[#allocation2 + $0x1c] sm:$0xf]
      %v982 = vld [vmem:[#allocation2 + $0x24] sm:$0xf]
      %v983 = vld [vmem:[#allocation2 + $0x28] sm:$0xf]
      %v984 = vld [vmem:[#allocation2 + $0x30] sm:$0xf]
      %v985 = vld [vmem:[#allocation2 + $0x34] sm:$0xf]
      %v986 = vld [vmem:[#allocation2 + $0x3c] sm:$0xf]
      %v987 = vld [vmem:[#allocation2 + $0x40] sm:$0xf]
      %v988 = vld [vmem:[#allocation2 + $0x48] sm:$0xf]
      %v989 = vld [vmem:[#allocation2 + $0x4c] sm:$0xf]
      %v990 = vld [vmem:[#allocation2 + $0x54] sm:$0xf]
      %v991 = vld [vmem:[#allocation2 + $0x58] sm:$0xf]
      %v992 = vld [vmem:[#allocation2 + $0x60] sm:$0xf]
      %v993 = vld [vmem:[#allocation2 + $0x64] sm:$0xf]
      %v994 = vld [vmem:[#allocation2 + $0x6c] sm:$0xf]
      %v995 = vld [vmem:[#allocation2 + $0x70] sm:$0xf]
      %v996 = vld [vmem:[#allocation2 + $0x78] sm:$0xf]
      %v997 = vld [vmem:[#allocation2 + $0x7c] sm:$0xf]
      %v998 = vld [vmem:[#allocation2 + $0x84] sm:$0xf]
      %v999 = vld [vmem:[#allocation2 + $0x88] sm:$0xf]
      %v1000 = vld [vmem:[#allocation2 + $0x90] sm:$0xf]
      %v1001 = vld [vmem:[#allocation2 + $0x94] sm:$0xf]
      %v1002 = vld [vmem:[#allocation2 + $0x9c] sm:$0xf]
      %v1003 = vld [vmem:[#allocation2 + $0xa0] sm:$0xf]
      %v1004 = vld [vmem:[#allocation2 + $0xa8] sm:$0xf]
      %v1005 = vld [vmem:[#allocation2 + $0xac] sm:$0xf]
      %v1006 = vld [vmem:[#allocation2 + $0xb4] sm:$0xf]
      %v1007 = vld [vmem:[#allocation2 + $0xb8] sm:$0xf]
      %v1040 = vunpack.c.l.b16 %v976
      %v1041 = vunpack.c.l.b16 %v977
      %v1042 = vunpack.c.l.b16 %v978
      %v1043 = vunpack.c.l.b16 %v979
      %v1044 = vunpack.c.l.b16 %v980
      %v1045 = vunpack.c.l.b16 %v981
      %v1046 = vunpack.c.l.b16 %v982
      %v1047 = vunpack.c.l.b16 %v983
      %v1048 = vunpack.c.l.b16 %v984
      %v1049 = vunpack.c.l.b16 %v985
      %v1050 = vunpack.c.l.b16 %v986
      %v1051 = vunpack.c.l.b16 %v987
      %v1052 = vunpack.c.l.b16 %v988
      %v1053 = vunpack.c.l.b16 %v989
      %v1054 = vunpack.c.l.b16 %v990
      %v1055 = vunpack.c.l.b16 %v991
      %v1056 = vunpack.c.l.b16 %v992
      %v1057 = vunpack.c.l.b16 %v993
      %v1058 = vunpack.c.l.b16 %v994
      %v1059 = vunpack.c.l.b16 %v995
      %v1060 = vunpack.c.l.b16 %v996
      %v1061 = vunpack.c.l.b16 %v997
      %v1062 = vunpack.c.l.b16 %v998
      %v1063 = vunpack.c.l.b16 %v999
      %v1064 = vunpack.c.l.b16 %v1000
      %v1065 = vunpack.c.l.b16 %v1001
      %v1066 = vunpack.c.l.b16 %v1002
      %v1067 = vunpack.c.l.b16 %v1003
      %v1068 = vunpack.c.l.b16 %v1004
      %v1069 = vunpack.c.l.b16 %v1005
      %v1070 = vunpack.c.l.b16 %v1006
      %v1071 = vunpack.c.l.b16 %v1007
      %v1072 = vpack.c.b16 %v1041, %v1040
      %v1073 = vpack.c.b16 %v1043, %v1042
      %v1074 = vpack.c.b16 %v1045, %v1044
      %v1075 = vpack.c.b16 %v1047, %v1046
      %v1076 = vpack.c.b16 %v1049, %v1048
      %v1077 = vpack.c.b16 %v1051, %v1050
      %v1078 = vpack.c.b16 %v1053, %v1052
      %v1079 = vpack.c.b16 %v1055, %v1054
      %v1080 = vpack.c.b16 %v1057, %v1056
      %v1081 = vpack.c.b16 %v1059, %v1058
      %v1082 = vpack.c.b16 %v1061, %v1060
      %v1083 = vpack.c.b16 %v1063, %v1062
      %v1084 = vpack.c.b16 %v1065, %v1064
      %v1085 = vpack.c.b16 %v1067, %v1066
      %v1086 = vpack.c.b16 %v1069, %v1068
      %v1087 = vpack.c.b16 %v1071, %v1070
      %vm1104 = vcmask 31744
      %1105 = vst.msk [vmem:[#allocation3] sm:$0xff] %vm1104, %v1072
      %1106 = vst.msk [vmem:[#allocation3 + $0x8] sm:$0xff] %vm1104, %v1073
      %1107 = vst.msk [vmem:[#allocation3 + $0x10] sm:$0xff] %vm1104, %v1074
      %1108 = vst.msk [vmem:[#allocation3 + $0x18] sm:$0xff] %vm1104, %v1075
      %1109 = vst.msk [vmem:[#allocation3 + $0x20] sm:$0xff] %vm1104, %v1076
      %1110 = vst.msk [vmem:[#allocation3 + $0x28] sm:$0xff] %vm1104, %v1077
      %1111 = vst.msk [vmem:[#allocation3 + $0x30] sm:$0xff] %vm1104, %v1078
      %1112 = vst.msk [vmem:[#allocation3 + $0x38] sm:$0xff] %vm1104, %v1079
      %1113 = vst.msk [vmem:[#allocation3 + $0x40] sm:$0xff] %vm1104, %v1080
      %1114 = vst.msk [vmem:[#allocation3 + $0x48] sm:$0xff] %vm1104, %v1081
      %1115 = vst.msk [vmem:[#allocation3 + $0x50] sm:$0xff] %vm1104, %v1082
      %1116 = vst.msk [vmem:[#allocation3 + $0x58] sm:$0xff] %vm1104, %v1083
      %1117 = vst.msk [vmem:[#allocation3 + $0x60] sm:$0xff] %vm1104, %v1084
      %1118 = vst.msk [vmem:[#allocation3 + $0x68] sm:$0xff] %vm1104, %v1085
      %1119 = vst.msk [vmem:[#allocation3 + $0x70] sm:$0xff] %vm1104, %v1086
      %1120 = vst.msk [vmem:[#allocation3 + $0x78] sm:$0xff] %vm1104, %v1087
      %v1121 = vld [vmem:[#allocation2] sm:$0xf]
      %v1122 = vld [vmem:[#allocation2 + $0x4] sm:$0xf]
      %v1123 = vld [vmem:[#allocation2 + $0x8] sm:$0x1]
      %v1124 = vld [vmem:[#allocation2 + $0xc] sm:$0xf]
      %v1125 = vld [vmem:[#allocation2 + $0x10] sm:$0xf]
      %v1126 = vld [vmem:[#allocation2 + $0x14] sm:$0x1]
      %v1127 = vld [vmem:[#allocation2 + $0x18] sm:$0xf]
      %v1128 = vld [vmem:[#allocation2 + $0x1c] sm:$0xf]
      %v1129 = vld [vmem:[#allocation2 + $0x20] sm:$0x1]
      %v1130 = vld [vmem:[#allocation2 + $0x24] sm:$0xf]
      %v1131 = vld [vmem:[#allocation2 + $0x28] sm:$0xf]
      %v1132 = vld [vmem:[#allocation2 + $0x2c] sm:$0x1]
      %v1133 = vld [vmem:[#allocation2 + $0x30] sm:$0xf]
      %v1134 = vld [vmem:[#allocation2 + $0x34] sm:$0xf]
      %v1135 = vld [vmem:[#allocation2 + $0x38] sm:$0x1]
      %v1136 = vld [vmem:[#allocation2 + $0x3c] sm:$0xf]
      %v1137 = vld [vmem:[#allocation2 + $0x40] sm:$0xf]
      %v1138 = vld [vmem:[#allocation2 + $0x44] sm:$0x1]
      %v1139 = vld [vmem:[#allocation2 + $0x48] sm:$0xf]
      %v1140 = vld [vmem:[#allocation2 + $0x4c] sm:$0xf]
      %v1141 = vld [vmem:[#allocation2 + $0x50] sm:$0x1]
      %v1142 = vld [vmem:[#allocation2 + $0x54] sm:$0xf]
      %v1143 = vld [vmem:[#allocation2 + $0x58] sm:$0xf]
      %v1144 = vld [vmem:[#allocation2 + $0x5c] sm:$0x1]
      %v1145 = vld [vmem:[#allocation2 + $0x60] sm:$0xf]
      %v1146 = vld [vmem:[#allocation2 + $0x64] sm:$0xf]
      %v1147 = vld [vmem:[#allocation2 + $0x68] sm:$0x1]
      %v1148 = vld [vmem:[#allocation2 + $0x6c] sm:$0xf]
      %v1149 = vld [vmem:[#allocation2 + $0x70] sm:$0xf]
      %v1150 = vld [vmem:[#allocation2 + $0x74] sm:$0x1]
      %v1151 = vld [vmem:[#allocation2 + $0x78] sm:$0xf]
      %v1152 = vld [vmem:[#allocation2 + $0x7c] sm:$0xf]
      %v1153 = vld [vmem:[#allocation2 + $0x80] sm:$0x1]
      %v1154 = vld [vmem:[#allocation2 + $0x84] sm:$0xf]
      %v1155 = vld [vmem:[#allocation2 + $0x88] sm:$0xf]
      %v1156 = vld [vmem:[#allocation2 + $0x8c] sm:$0x1]
      %v1157 = vld [vmem:[#allocation2 + $0x90] sm:$0xf]
      %v1158 = vld [vmem:[#allocation2 + $0x94] sm:$0xf]
      %v1159 = vld [vmem:[#allocation2 + $0x98] sm:$0x1]
      %v1160 = vld [vmem:[#allocation2 + $0x9c] sm:$0xf]
      %v1161 = vld [vmem:[#allocation2 + $0xa0] sm:$0xf]
      %v1162 = vld [vmem:[#allocation2 + $0xa4] sm:$0x1]
      %v1163 = vld [vmem:[#allocation2 + $0xa8] sm:$0xf]
      %v1164 = vld [vmem:[#allocation2 + $0xac] sm:$0xf]
      %v1165 = vld [vmem:[#allocation2 + $0xb0] sm:$0x1]
      %v1166 = vld [vmem:[#allocation2 + $0xb4] sm:$0xf]
      %v1167 = vld [vmem:[#allocation2 + $0xb8] sm:$0xf]
      %v1168 = vld [vmem:[#allocation2 + $0xbc] sm:$0x1]
      %vm1169 = vsmask.f32 3328
      %vm1170 = vsmask.f32 7440
      %vm1171 = vmor %vm1169, %vm1170
      %v1173 = vshrl.u32 %v1121, 16
      %v1175 = vrot.slane %v1173, 4
      %v1176 = vshll.u32 %v1121, 16
      %v1178 = vrot.slane %v1176, 5
      %v1179 = vor.u32 %v1175, %v1178
      %v1180 = vrot.slane %v1179, 4
      %v1182 = vshll.u32 %v1122, 16
      %v1184 = vrot.slane %v1182, 5
      %v1185 = vsel %vm1171, %v1180, %v1184
      %v1186 = vshrl.u32 %v1122, 16
      %v1188 = vrot.slane %v1186, 4
      %v1189 = vor.u32 %v1188, %v1184
      %v1190 = vrot.slane %v1189, 4
      %v1192 = vshll.u32 %v1123, 16
      %v1194 = vrot.slane %v1192, 5
      %v1195 = vsel %vm1171, %v1190, %v1194
      %v1197 = vshrl.u32 %v1124, 16
      %v1199 = vrot.slane %v1197, 4
      %v1200 = vshll.u32 %v1124, 16
      %v1202 = vrot.slane %v1200, 5
      %v1203 = vor.u32 %v1199, %v1202
      %v1204 = vrot.slane %v1203, 4
      %v1206 = vshll.u32 %v1125, 16
      %v1208 = vrot.slane %v1206, 5
      %v1209 = vsel %vm1171, %v1204, %v1208
      %v1210 = vshrl.u32 %v1125, 16
      %v1212 = vrot.slane %v1210, 4
      %v1213 = vor.u32 %v1212, %v1208
      %v1214 = vrot.slane %v1213, 4
      %v1216 = vshll.u32 %v1126, 16
      %v1218 = vrot.slane %v1216, 5
      %v1219 = vsel %vm1171, %v1214, %v1218
      %v1221 = vshrl.u32 %v1127, 16
      %v1223 = vrot.slane %v1221, 4
      %v1224 = vshll.u32 %v1127, 16
      %v1226 = vrot.slane %v1224, 5
      %v1227 = vor.u32 %v1223, %v1226
      %v1228 = vrot.slane %v1227, 4
      %v1230 = vshll.u32 %v1128, 16
      %v1232 = vrot.slane %v1230, 5
      %v1233 = vsel %vm1171, %v1228, %v1232
      %v1234 = vshrl.u32 %v1128, 16
      %v1236 = vrot.slane %v1234, 4
      %v1237 = vor.u32 %v1236, %v1232
      %v1238 = vrot.slane %v1237, 4
      %v1240 = vshll.u32 %v1129, 16
      %v1242 = vrot.slane %v1240, 5
      %v1243 = vsel %vm1171, %v1238, %v1242
      %v1245 = vshrl.u32 %v1130, 16
      %v1247 = vrot.slane %v1245, 4
      %v1248 = vshll.u32 %v1130, 16
      %v1250 = vrot.slane %v1248, 5
      %v1251 = vor.u32 %v1247, %v1250
      %v1252 = vrot.slane %v1251, 4
      %v1254 = vshll.u32 %v1131, 16
      %v1256 = vrot.slane %v1254, 5
      %v1257 = vsel %vm1171, %v1252, %v1256
      %v1258 = vshrl.u32 %v1131, 16
      %v1260 = vrot.slane %v1258, 4
      %v1261 = vor.u32 %v1260, %v1256
      %v1262 = vrot.slane %v1261, 4
      %v1264 = vshll.u32 %v1132, 16
      %v1266 = vrot.slane %v1264, 5
      %v1267 = vsel %vm1171, %v1262, %v1266
      %v1269 = vshrl.u32 %v1133, 16
      %v1271 = vrot.slane %v1269, 4
      %v1272 = vshll.u32 %v1133, 16
      %v1274 = vrot.slane %v1272, 5
      %v1275 = vor.u32 %v1271, %v1274
      %v1276 = vrot.slane %v1275, 4
      %v1278 = vshll.u32 %v1134, 16
      %v1280 = vrot.slane %v1278, 5
      %v1281 = vsel %vm1171, %v1276, %v1280
      %v1282 = vshrl.u32 %v1134, 16
      %v1284 = vrot.slane %v1282, 4
      %v1285 = vor.u32 %v1284, %v1280
      %v1286 = vrot.slane %v1285, 4
      %v1288 = vshll.u32 %v1135, 16
      %v1290 = vrot.slane %v1288, 5
      %v1291 = vsel %vm1171, %v1286, %v1290
      %v1293 = vshrl.u32 %v1136, 16
      %v1295 = vrot.slane %v1293, 4
      %v1296 = vshll.u32 %v1136, 16
      %v1298 = vrot.slane %v1296, 5
      %v1299 = vor.u32 %v1295, %v1298
      %v1300 = vrot.slane %v1299, 4
      %v1302 = vshll.u32 %v1137, 16
      %v1304 = vrot.slane %v1302, 5
      %v1305 = vsel %vm1171, %v1300, %v1304
      %v1306 = vshrl.u32 %v1137, 16
      %v1308 = vrot.slane %v1306, 4
      %v1309 = vor.u32 %v1308, %v1304
      %v1310 = vrot.slane %v1309, 4
      %v1312 = vshll.u32 %v1138, 16
      %v1314 = vrot.slane %v1312, 5
      %v1315 = vsel %vm1171, %v1310, %v1314
      %v1317 = vshrl.u32 %v1139, 16
      %v1319 = vrot.slane %v1317, 4
      %v1320 = vshll.u32 %v1139, 16
      %v1322 = vrot.slane %v1320, 5
      %v1323 = vor.u32 %v1319, %v1322
      %v1324 = vrot.slane %v1323, 4
      %v1326 = vshll.u32 %v1140, 16
      %v1328 = vrot.slane %v1326, 5
      %v1329 = vsel %vm1171, %v1324, %v1328
      %v1330 = vshrl.u32 %v1140, 16
      %v1332 = vrot.slane %v1330, 4
      %v1333 = vor.u32 %v1332, %v1328
      %v1334 = vrot.slane %v1333, 4
      %v1336 = vshll.u32 %v1141, 16
      %v1338 = vrot.slane %v1336, 5
      %v1339 = vsel %vm1171, %v1334, %v1338
      %v1341 = vshrl.u32 %v1142, 16
      %v1343 = vrot.slane %v1341, 4
      %v1344 = vshll.u32 %v1142, 16
      %v1346 = vrot.slane %v1344, 5
      %v1347 = vor.u32 %v1343, %v1346
      %v1348 = vrot.slane %v1347, 4
      %v1350 = vshll.u32 %v1143, 16
      %v1352 = vrot.slane %v1350, 5
      %v1353 = vsel %vm1171, %v1348, %v1352
      %v1354 = vshrl.u32 %v1143, 16
      %v1356 = vrot.slane %v1354, 4
      %v1357 = vor.u32 %v1356, %v1352
      %v1358 = vrot.slane %v1357, 4
      %v1360 = vshll.u32 %v1144, 16
      %v1362 = vrot.slane %v1360, 5
      %v1363 = vsel %vm1171, %v1358, %v1362
      %v1365 = vshrl.u32 %v1145, 16
      %v1367 = vrot.slane %v1365, 4
      %v1368 = vshll.u32 %v1145, 16
      %v1370 = vrot.slane %v1368, 5
      %v1371 = vor.u32 %v1367, %v1370
      %v1372 = vrot.slane %v1371, 4
      %v1374 = vshll.u32 %v1146, 16
      %v1376 = vrot.slane %v1374, 5
      %v1377 = vsel %vm1171, %v1372, %v1376
      %v1378 = vshrl.u32 %v1146, 16
      %v1380 = vrot.slane %v1378, 4
      %v1381 = vor.u32 %v1380, %v1376
      %v1382 = vrot.slane %v1381, 4
      %v1384 = vshll.u32 %v1147, 16
      %v1386 = vrot.slane %v1384, 5
      %v1387 = vsel %vm1171, %v1382, %v1386
      %v1389 = vshrl.u32 %v1148, 16
      %v1391 = vrot.slane %v1389, 4
      %v1392 = vshll.u32 %v1148, 16
      %v1394 = vrot.slane %v1392, 5
      %v1395 = vor.u32 %v1391, %v1394
      %v1396 = vrot.slane %v1395, 4
      %v1398 = vshll.u32 %v1149, 16
      %v1400 = vrot.slane %v1398, 5
      %v1401 = vsel %vm1171, %v1396, %v1400
      %v1402 = vshrl.u32 %v1149, 16
      %v1404 = vrot.slane %v1402, 4
      %v1405 = vor.u32 %v1404, %v1400
      %v1406 = vrot.slane %v1405, 4
      %v1408 = vshll.u32 %v1150, 16
      %v1410 = vrot.slane %v1408, 5
      %v1411 = vsel %vm1171, %v1406, %v1410
      %v1413 = vshrl.u32 %v1151, 16
      %v1415 = vrot.slane %v1413, 4
      %v1416 = vshll.u32 %v1151, 16
      %v1418 = vrot.slane %v1416, 5
      %v1419 = vor.u32 %v1415, %v1418
      %v1420 = vrot.slane %v1419, 4
      %v1422 = vshll.u32 %v1152, 16
      %v1424 = vrot.slane %v1422, 5
      %v1425 = vsel %vm1171, %v1420, %v1424
      %v1426 = vshrl.u32 %v1152, 16
      %v1428 = vrot.slane %v1426, 4
      %v1429 = vor.u32 %v1428, %v1424
      %v1430 = vrot.slane %v1429, 4
      %v1432 = vshll.u32 %v1153, 16
      %v1434 = vrot.slane %v1432, 5
      %v1435 = vsel %vm1171, %v1430, %v1434
      %v1437 = vshrl.u32 %v1154, 16
      %v1439 = vrot.slane %v1437, 4
      %v1440 = vshll.u32 %v1154, 16
      %v1442 = vrot.slane %v1440, 5
      %v1443 = vor.u32 %v1439, %v1442
      %v1444 = vrot.slane %v1443, 4
      %v1446 = vshll.u32 %v1155, 16
      %v1448 = vrot.slane %v1446, 5
      %v1449 = vsel %vm1171, %v1444, %v1448
      %v1450 = vshrl.u32 %v1155, 16
      %v1452 = vrot.slane %v1450, 4
      %v1453 = vor.u32 %v1452, %v1448
      %v1454 = vrot.slane %v1453, 4
      %v1456 = vshll.u32 %v1156, 16
      %v1458 = vrot.slane %v1456, 5
      %v1459 = vsel %vm1171, %v1454, %v1458
      %v1461 = vshrl.u32 %v1157, 16
      %v1463 = vrot.slane %v1461, 4
      %v1464 = vshll.u32 %v1157, 16
      %v1466 = vrot.slane %v1464, 5
      %v1467 = vor.u32 %v1463, %v1466
      %v1468 = vrot.slane %v1467, 4
      %v1470 = vshll.u32 %v1158, 16
      %v1472 = vrot.slane %v1470, 5
      %v1473 = vsel %vm1171, %v1468, %v1472
      %v1474 = vshrl.u32 %v1158, 16
      %v1476 = vrot.slane %v1474, 4
      %v1477 = vor.u32 %v1476, %v1472
      %v1478 = vrot.slane %v1477, 4
      %v1480 = vshll.u32 %v1159, 16
      %v1482 = vrot.slane %v1480, 5
      %v1483 = vsel %vm1171, %v1478, %v1482
      %v1485 = vshrl.u32 %v1160, 16
      %v1487 = vrot.slane %v1485, 4
      %v1488 = vshll.u32 %v1160, 16
      %v1490 = vrot.slane %v1488, 5
      %v1491 = vor.u32 %v1487, %v1490
      %v1492 = vrot.slane %v1491, 4
      %v1494 = vshll.u32 %v1161, 16
      %v1496 = vrot.slane %v1494, 5
      %v1497 = vsel %vm1171, %v1492, %v1496
      %v1498 = vshrl.u32 %v1161, 16
      %v1500 = vrot.slane %v1498, 4
      %v1501 = vor.u32 %v1500, %v1496
      %v1502 = vrot.slane %v1501, 4
      %v1504 = vshll.u32 %v1162, 16
      %v1506 = vrot.slane %v1504, 5
      %v1507 = vsel %vm1171, %v1502, %v1506
      %v1509 = vshrl.u32 %v1163, 16
      %v1511 = vrot.slane %v1509, 4
      %v1512 = vshll.u32 %v1163, 16
      %v1514 = vrot.slane %v1512, 5
      %v1515 = vor.u32 %v1511, %v1514
      %v1516 = vrot.slane %v1515, 4
      %v1518 = vshll.u32 %v1164, 16
      %v1520 = vrot.slane %v1518, 5
      %v1521 = vsel %vm1171, %v1516, %v1520
      %v1522 = vshrl.u32 %v1164, 16
      %v1524 = vrot.slane %v1522, 4
      %v1525 = vor.u32 %v1524, %v1520
      %v1526 = vrot.slane %v1525, 4
      %v1528 = vshll.u32 %v1165, 16
      %v1530 = vrot.slane %v1528, 5
      %v1531 = vsel %vm1171, %v1526, %v1530
      %v1533 = vshrl.u32 %v1166, 16
      %v1535 = vrot.slane %v1533, 4
      %v1536 = vshll.u32 %v1166, 16
      %v1538 = vrot.slane %v1536, 5
      %v1539 = vor.u32 %v1535, %v1538
      %v1540 = vrot.slane %v1539, 4
      %v1542 = vshll.u32 %v1167, 16
      %v1544 = vrot.slane %v1542, 5
      %v1545 = vsel %vm1171, %v1540, %v1544
      %v1546 = vshrl.u32 %v1167, 16
      %v1548 = vrot.slane %v1546, 4
      %v1549 = vor.u32 %v1548, %v1544
      %v1550 = vrot.slane %v1549, 4
      %v1552 = vshll.u32 %v1168, 16
      %v1554 = vrot.slane %v1552, 5
      %v1555 = vsel %vm1171, %v1550, %v1554
      %v1556 = vunpack.c.l.b16 %v1185
      %v1557 = vunpack.c.l.b16 %v1195
      %v1558 = vunpack.c.l.b16 %v1209
      %v1559 = vunpack.c.l.b16 %v1219
      %v1560 = vunpack.c.l.b16 %v1233
      %v1561 = vunpack.c.l.b16 %v1243
      %v1562 = vunpack.c.l.b16 %v1257
      %v1563 = vunpack.c.l.b16 %v1267
      %v1564 = vunpack.c.l.b16 %v1281
      %v1565 = vunpack.c.l.b16 %v1291
      %v1566 = vunpack.c.l.b16 %v1305
      %v1567 = vunpack.c.l.b16 %v1315
      %v1568 = vunpack.c.l.b16 %v1329
      %v1569 = vunpack.c.l.b16 %v1339
      %v1570 = vunpack.c.l.b16 %v1353
      %v1571 = vunpack.c.l.b16 %v1363
      %v1572 = vunpack.c.l.b16 %v1377
      %v1573 = vunpack.c.l.b16 %v1387
      %v1574 = vunpack.c.l.b16 %v1401
      %v1575 = vunpack.c.l.b16 %v1411
      %v1576 = vunpack.c.l.b16 %v1425
      %v1577 = vunpack.c.l.b16 %v1435
      %v1578 = vunpack.c.l.b16 %v1449
      %v1579 = vunpack.c.l.b16 %v1459
      %v1580 = vunpack.c.l.b16 %v1473
      %v1581 = vunpack.c.l.b16 %v1483
      %v1582 = vunpack.c.l.b16 %v1497
      %v1583 = vunpack.c.l.b16 %v1507
      %v1584 = vunpack.c.l.b16 %v1521
      %v1585 = vunpack.c.l.b16 %v1531
      %v1586 = vunpack.c.l.b16 %v1545
      %v1587 = vunpack.c.l.b16 %v1555
      %v1588 = vpack.c.b16 %v1557, %v1556
      %v1589 = vpack.c.b16 %v1559, %v1558
      %v1590 = vpack.c.b16 %v1561, %v1560
      %v1591 = vpack.c.b16 %v1563, %v1562
      %v1592 = vpack.c.b16 %v1565, %v1564
      %v1593 = vpack.c.b16 %v1567, %v1566
      %v1594 = vpack.c.b16 %v1569, %v1568
      %v1595 = vpack.c.b16 %v1571, %v1570
      %v1596 = vpack.c.b16 %v1573, %v1572
      %v1597 = vpack.c.b16 %v1575, %v1574
      %v1598 = vpack.c.b16 %v1577, %v1576
      %v1599 = vpack.c.b16 %v1579, %v1578
      %v1600 = vpack.c.b16 %v1581, %v1580
      %v1601 = vpack.c.b16 %v1583, %v1582
      %v1602 = vpack.c.b16 %v1585, %v1584
      %v1603 = vpack.c.b16 %v1587, %v1586
      %1604 = vrot.lane.b32.xlu0 %v1588, 4
      %v1605 = vpop.permute.xlu0 %1604
      %1606 = vrot.lane.b32.xlu0 %v1589, 4
      %v1607 = vpop.permute.xlu0 %1606
      %1608 = vrot.lane.b32.xlu0 %v1590, 4
      %v1609 = vpop.permute.xlu0 %1608
      %1610 = vrot.lane.b32.xlu0 %v1591, 4
      %v1611 = vpop.permute.xlu0 %1610
      %1612 = vrot.lane.b32.xlu0 %v1592, 4
      %v1613 = vpop.permute.xlu0 %1612
      %1614 = vrot.lane.b32.xlu0 %v1593, 4
      %v1615 = vpop.permute.xlu0 %1614
      %1616 = vrot.lane.b32.xlu0 %v1594, 4
      %v1617 = vpop.permute.xlu0 %1616
      %1618 = vrot.lane.b32.xlu0 %v1595, 4
      %v1619 = vpop.permute.xlu0 %1618
      %1620 = vrot.lane.b32.xlu0 %v1596, 4
      %v1621 = vpop.permute.xlu0 %1620
      %1622 = vrot.lane.b32.xlu0 %v1597, 4
      %v1623 = vpop.permute.xlu0 %1622
      %1624 = vrot.lane.b32.xlu0 %v1598, 4
      %v1625 = vpop.permute.xlu0 %1624
      %1626 = vrot.lane.b32.xlu0 %v1599, 4
      %v1627 = vpop.permute.xlu0 %1626
      %1628 = vrot.lane.b32.xlu0 %v1600, 4
      %v1629 = vpop.permute.xlu0 %1628
      %1630 = vrot.lane.b32.xlu0 %v1601, 4
      %v1631 = vpop.permute.xlu0 %1630
      %1632 = vrot.lane.b32.xlu0 %v1602, 4
      %v1633 = vpop.permute.xlu0 %1632
      %1634 = vrot.lane.b32.xlu0 %v1603, 4
      %v1635 = vpop.permute.xlu0 %1634
      %vm1652 = vcmask 64544
      %1653 = vst.msk [vmem:[#allocation3] sm:$0xff] %vm1652, %v1605
      %1654 = vst.msk [vmem:[#allocation3 + $0x8] sm:$0xff] %vm1652, %v1607
      %1655 = vst.msk [vmem:[#allocation3 + $0x10] sm:$0xff] %vm1652, %v1609
      %1656 = vst.msk [vmem:[#allocation3 + $0x18] sm:$0xff] %vm1652, %v1611
      %1657 = vst.msk [vmem:[#allocation3 + $0x20] sm:$0xff] %vm1652, %v1613
      %1658 = vst.msk [vmem:[#allocation3 + $0x28] sm:$0xff] %vm1652, %v1615
      %1659 = vst.msk [vmem:[#allocation3 + $0x30] sm:$0xff] %vm1652, %v1617
      %1660 = vst.msk [vmem:[#allocation3 + $0x38] sm:$0xff] %vm1652, %v1619
      %1661 = vst.msk [vmem:[#allocation3 + $0x40] sm:$0xff] %vm1652, %v1621
      %1662 = vst.msk [vmem:[#allocation3 + $0x48] sm:$0xff] %vm1652, %v1623
      %1663 = vst.msk [vmem:[#allocation3 + $0x50] sm:$0xff] %vm1652, %v1625
      %1664 = vst.msk [vmem:[#allocation3 + $0x58] sm:$0xff] %vm1652, %v1627
      %1665 = vst.msk [vmem:[#allocation3 + $0x60] sm:$0xff] %vm1652, %v1629
      %1666 = vst.msk [vmem:[#allocation3 + $0x68] sm:$0xff] %vm1652, %v1631
      %1667 = vst.msk [vmem:[#allocation3 + $0x70] sm:$0xff] %vm1652, %v1633
      %1668 = vst.msk [vmem:[#allocation3 + $0x78] sm:$0xff] %vm1652, %v1635
      %v1669 = vld [vmem:[#allocation2] sm:$0xe]
      %v1670 = vld [vmem:[#allocation2 + $0x4] sm:$0xf]
      %v1671 = vld [vmem:[#allocation2 + $0x8] sm:$0x1]
      %v1672 = vld [vmem:[#allocation2 + $0xc] sm:$0xe]
      %v1673 = vld [vmem:[#allocation2 + $0x10] sm:$0xf]
      %v1674 = vld [vmem:[#allocation2 + $0x14] sm:$0x1]
      %v1675 = vld [vmem:[#allocation2 + $0x18] sm:$0xe]
      %v1676 = vld [vmem:[#allocation2 + $0x1c] sm:$0xf]
      %v1677 = vld [vmem:[#allocation2 + $0x20] sm:$0x1]
      %v1678 = vld [vmem:[#allocation2 + $0x24] sm:$0xe]
      %v1679 = vld [vmem:[#allocation2 + $0x28] sm:$0xf]
      %v1680 = vld [vmem:[#allocation2 + $0x2c] sm:$0x1]
      %v1681 = vld [vmem:[#allocation2 + $0x30] sm:$0xe]
      %v1682 = vld [vmem:[#allocation2 + $0x34] sm:$0xf]
      %v1683 = vld [vmem:[#allocation2 + $0x38] sm:$0x1]
      %v1684 = vld [vmem:[#allocation2 + $0x3c] sm:$0xe]
      %v1685 = vld [vmem:[#allocation2 + $0x40] sm:$0xf]
      %v1686 = vld [vmem:[#allocation2 + $0x44] sm:$0x1]
      %v1687 = vld [vmem:[#allocation2 + $0x48] sm:$0xe]
      %v1688 = vld [vmem:[#allocation2 + $0x4c] sm:$0xf]
      %v1689 = vld [vmem:[#allocation2 + $0x50] sm:$0x1]
      %v1690 = vld [vmem:[#allocation2 + $0x54] sm:$0xe]
      %v1691 = vld [vmem:[#allocation2 + $0x58] sm:$0xf]
      %v1692 = vld [vmem:[#allocation2 + $0x5c] sm:$0x1]
      %v1693 = vld [vmem:[#allocation2 + $0x60] sm:$0xe]
      %v1694 = vld [vmem:[#allocation2 + $0x64] sm:$0xf]
      %v1695 = vld [vmem:[#allocation2 + $0x68] sm:$0x1]
      %v1696 = vld [vmem:[#allocation2 + $0x6c] sm:$0xe]
      %v1697 = vld [vmem:[#allocation2 + $0x70] sm:$0xf]
      %v1698 = vld [vmem:[#allocation2 + $0x74] sm:$0x1]
      %v1699 = vld [vmem:[#allocation2 + $0x78] sm:$0xe]
      %v1700 = vld [vmem:[#allocation2 + $0x7c] sm:$0xf]
      %v1701 = vld [vmem:[#allocation2 + $0x80] sm:$0x1]
      %v1702 = vld [vmem:[#allocation2 + $0x84] sm:$0xe]
      %v1703 = vld [vmem:[#allocation2 + $0x88] sm:$0xf]
      %v1704 = vld [vmem:[#allocation2 + $0x8c] sm:$0x1]
      %v1705 = vld [vmem:[#allocation2 + $0x90] sm:$0xe]
      %v1706 = vld [vmem:[#allocation2 + $0x94] sm:$0xf]
      %v1707 = vld [vmem:[#allocation2 + $0x98] sm:$0x1]
      %v1708 = vld [vmem:[#allocation2 + $0x9c] sm:$0xe]
      %v1709 = vld [vmem:[#allocation2 + $0xa0] sm:$0xf]
      %v1710 = vld [vmem:[#allocation2 + $0xa4] sm:$0x1]
      %v1711 = vld [vmem:[#allocation2 + $0xa8] sm:$0xe]
      %v1712 = vld [vmem:[#allocation2 + $0xac] sm:$0xf]
      %v1713 = vld [vmem:[#allocation2 + $0xb0] sm:$0x1]
      %v1714 = vld [vmem:[#allocation2 + $0xb4] sm:$0xe]
      %v1715 = vld [vmem:[#allocation2 + $0xb8] sm:$0xf]
      %v1716 = vld [vmem:[#allocation2 + $0xbc] sm:$0x1]
      %vm1765 = vcmask 1042432
      %vm1766 = vcmask 1046532
      %vm1767 = vmor %vm1765, %vm1766
      %v1768 = vrot.slane %v1669, 5
      %v1769 = vrot.slane %v1768, 4
      %v1770 = vrot.slane %v1670, 5
      %v1771 = vsel %vm1767, %v1769, %v1770
      %v1772 = vrot.slane %v1770, 4
      %v1773 = vrot.slane %v1671, 5
      %v1774 = vsel %vm1767, %v1772, %v1773
      %v1775 = vrot.slane %v1672, 5
      %v1776 = vrot.slane %v1775, 4
      %v1777 = vrot.slane %v1673, 5
      %v1778 = vsel %vm1767, %v1776, %v1777
      %v1779 = vrot.slane %v1777, 4
      %v1780 = vrot.slane %v1674, 5
      %v1781 = vsel %vm1767, %v1779, %v1780
      %v1782 = vrot.slane %v1675, 5
      %v1783 = vrot.slane %v1782, 4
      %v1784 = vrot.slane %v1676, 5
      %v1785 = vsel %vm1767, %v1783, %v1784
      %v1786 = vrot.slane %v1784, 4
      %v1787 = vrot.slane %v1677, 5
      %v1788 = vsel %vm1767, %v1786, %v1787
      %v1789 = vrot.slane %v1678, 5
      %v1790 = vrot.slane %v1789, 4
      %v1791 = vrot.slane %v1679, 5
      %v1792 = vsel %vm1767, %v1790, %v1791
      %v1793 = vrot.slane %v1791, 4
      %v1794 = vrot.slane %v1680, 5
      %v1795 = vsel %vm1767, %v1793, %v1794
      %v1796 = vrot.slane %v1681, 5
      %v1797 = vrot.slane %v1796, 4
      %v1798 = vrot.slane %v1682, 5
      %v1799 = vsel %vm1767, %v1797, %v1798
      %v1800 = vrot.slane %v1798, 4
      %v1801 = vrot.slane %v1683, 5
      %v1802 = vsel %vm1767, %v1800, %v1801
      %v1803 = vrot.slane %v1684, 5
      %v1804 = vrot.slane %v1803, 4
      %v1805 = vrot.slane %v1685, 5
      %v1806 = vsel %vm1767, %v1804, %v1805
      %v1807 = vrot.slane %v1805, 4
      %v1808 = vrot.slane %v1686, 5
      %v1809 = vsel %vm1767, %v1807, %v1808
      %v1810 = vrot.slane %v1687, 5
      %v1811 = vrot.slane %v1810, 4
      %v1812 = vrot.slane %v1688, 5
      %v1813 = vsel %vm1767, %v1811, %v1812
      %v1814 = vrot.slane %v1812, 4
      %v1815 = vrot.slane %v1689, 5
      %v1816 = vsel %vm1767, %v1814, %v1815
      %v1817 = vrot.slane %v1690, 5
      %v1818 = vrot.slane %v1817, 4
      %v1819 = vrot.slane %v1691, 5
      %v1820 = vsel %vm1767, %v1818, %v1819
      %v1821 = vrot.slane %v1819, 4
      %v1822 = vrot.slane %v1692, 5
      %v1823 = vsel %vm1767, %v1821, %v1822
      %v1824 = vrot.slane %v1693, 5
      %v1825 = vrot.slane %v1824, 4
      %v1826 = vrot.slane %v1694, 5
      %v1827 = vsel %vm1767, %v1825, %v1826
      %v1828 = vrot.slane %v1826, 4
      %v1829 = vrot.slane %v1695, 5
      %v1830 = vsel %vm1767, %v1828, %v1829
      %v1831 = vrot.slane %v1696, 5
      %v1832 = vrot.slane %v1831, 4
      %v1833 = vrot.slane %v1697, 5
      %v1834 = vsel %vm1767, %v1832, %v1833
      %v1835 = vrot.slane %v1833, 4
      %v1836 = vrot.slane %v1698, 5
      %v1837 = vsel %vm1767, %v1835, %v1836
      %v1838 = vrot.slane %v1699, 5
      %v1839 = vrot.slane %v1838, 4
      %v1840 = vrot.slane %v1700, 5
      %v1841 = vsel %vm1767, %v1839, %v1840
      %v1842 = vrot.slane %v1840, 4
      %v1843 = vrot.slane %v1701, 5
      %v1844 = vsel %vm1767, %v1842, %v1843
      %v1845 = vrot.slane %v1702, 5
      %v1846 = vrot.slane %v1845, 4
      %v1847 = vrot.slane %v1703, 5
      %v1848 = vsel %vm1767, %v1846, %v1847
      %v1849 = vrot.slane %v1847, 4
      %v1850 = vrot.slane %v1704, 5
      %v1851 = vsel %vm1767, %v1849, %v1850
      %v1852 = vrot.slane %v1705, 5
      %v1853 = vrot.slane %v1852, 4
      %v1854 = vrot.slane %v1706, 5
      %v1855 = vsel %vm1767, %v1853, %v1854
      %v1856 = vrot.slane %v1854, 4
      %v1857 = vrot.slane %v1707, 5
      %v1858 = vsel %vm1767, %v1856, %v1857
      %v1859 = vrot.slane %v1708, 5
      %v1860 = vrot.slane %v1859, 4
      %v1861 = vrot.slane %v1709, 5
      %v1862 = vsel %vm1767, %v1860, %v1861
      %v1863 = vrot.slane %v1861, 4
      %v1864 = vrot.slane %v1710, 5
      %v1865 = vsel %vm1767, %v1863, %v1864
      %v1866 = vrot.slane %v1711, 5
      %v1867 = vrot.slane %v1866, 4
      %v1868 = vrot.slane %v1712, 5
      %v1869 = vsel %vm1767, %v1867, %v1868
      %v1870 = vrot.slane %v1868, 4
      %v1871 = vrot.slane %v1713, 5
      %v1872 = vsel %vm1767, %v1870, %v1871
      %v1873 = vrot.slane %v1714, 5
      %v1874 = vrot.slane %v1873, 4
      %v1875 = vrot.slane %v1715, 5
      %v1876 = vsel %vm1767, %v1874, %v1875
      %v1877 = vrot.slane %v1875, 4
      %v1878 = vrot.slane %v1716, 5
      %v1879 = vsel %vm1767, %v1877, %v1878
      %v1880 = vunpack.c.l.b16 %v1771
      %v1881 = vunpack.c.l.b16 %v1774
      %v1882 = vunpack.c.l.b16 %v1778
      %v1883 = vunpack.c.l.b16 %v1781
      %v1884 = vunpack.c.l.b16 %v1785
      %v1885 = vunpack.c.l.b16 %v1788
      %v1886 = vunpack.c.l.b16 %v1792
      %v1887 = vunpack.c.l.b16 %v1795
      %v1888 = vunpack.c.l.b16 %v1799
      %v1889 = vunpack.c.l.b16 %v1802
      %v1890 = vunpack.c.l.b16 %v1806
      %v1891 = vunpack.c.l.b16 %v1809
      %v1892 = vunpack.c.l.b16 %v1813
      %v1893 = vunpack.c.l.b16 %v1816
      %v1894 = vunpack.c.l.b16 %v1820
      %v1895 = vunpack.c.l.b16 %v1823
      %v1896 = vunpack.c.l.b16 %v1827
      %v1897 = vunpack.c.l.b16 %v1830
      %v1898 = vunpack.c.l.b16 %v1834
      %v1899 = vunpack.c.l.b16 %v1837
      %v1900 = vunpack.c.l.b16 %v1841
      %v1901 = vunpack.c.l.b16 %v1844
      %v1902 = vunpack.c.l.b16 %v1848
      %v1903 = vunpack.c.l.b16 %v1851
      %v1904 = vunpack.c.l.b16 %v1855
      %v1905 = vunpack.c.l.b16 %v1858
      %v1906 = vunpack.c.l.b16 %v1862
      %v1907 = vunpack.c.l.b16 %v1865
      %v1908 = vunpack.c.l.b16 %v1869
      %v1909 = vunpack.c.l.b16 %v1872
      %v1910 = vunpack.c.l.b16 %v1876
      %v1911 = vunpack.c.l.b16 %v1879
      %v1912 = vpack.c.b16 %v1881, %v1880
      %v1913 = vpack.c.b16 %v1883, %v1882
      %v1914 = vpack.c.b16 %v1885, %v1884
      %v1915 = vpack.c.b16 %v1887, %v1886
      %v1916 = vpack.c.b16 %v1889, %v1888
      %v1917 = vpack.c.b16 %v1891, %v1890
      %v1918 = vpack.c.b16 %v1893, %v1892
      %v1919 = vpack.c.b16 %v1895, %v1894
      %v1920 = vpack.c.b16 %v1897, %v1896
      %v1921 = vpack.c.b16 %v1899, %v1898
      %v1922 = vpack.c.b16 %v1901, %v1900
      %v1923 = vpack.c.b16 %v1903, %v1902
      %v1924 = vpack.c.b16 %v1905, %v1904
      %v1925 = vpack.c.b16 %v1907, %v1906
      %v1926 = vpack.c.b16 %v1909, %v1908
      %v1927 = vpack.c.b16 %v1911, %v1910
      %1928 = vrot.lane.b32.xlu0 %v1912, 8
      %v1929 = vpop.permute.xlu0 %1928
      %1930 = vrot.lane.b32.xlu0 %v1913, 8
      %v1931 = vpop.permute.xlu0 %1930
      %1932 = vrot.lane.b32.xlu0 %v1914, 8
      %v1933 = vpop.permute.xlu0 %1932
      %1934 = vrot.lane.b32.xlu0 %v1915, 8
      %v1935 = vpop.permute.xlu0 %1934
      %1936 = vrot.lane.b32.xlu0 %v1916, 8
      %v1937 = vpop.permute.xlu0 %1936
      %1938 = vrot.lane.b32.xlu0 %v1917, 8
      %v1939 = vpop.permute.xlu0 %1938
      %1940 = vrot.lane.b32.xlu0 %v1918, 8
      %v1941 = vpop.permute.xlu0 %1940
      %1942 = vrot.lane.b32.xlu0 %v1919, 8
      %v1943 = vpop.permute.xlu0 %1942
      %1944 = vrot.lane.b32.xlu0 %v1920, 8
      %v1945 = vpop.permute.xlu0 %1944
      %1946 = vrot.lane.b32.xlu0 %v1921, 8
      %v1947 = vpop.permute.xlu0 %1946
      %1948 = vrot.lane.b32.xlu0 %v1922, 8
      %v1949 = vpop.permute.xlu0 %1948
      %1950 = vrot.lane.b32.xlu0 %v1923, 8
      %v1951 = vpop.permute.xlu0 %1950
      %1952 = vrot.lane.b32.xlu0 %v1924, 8
      %v1953 = vpop.permute.xlu0 %1952
      %1954 = vrot.lane.b32.xlu0 %v1925, 8
      %v1955 = vpop.permute.xlu0 %1954
      %1956 = vrot.lane.b32.xlu0 %v1926, 8
      %v1957 = vpop.permute.xlu0 %1956
      %1958 = vrot.lane.b32.xlu0 %v1927, 8
      %v1959 = vpop.permute.xlu0 %1958
      %vm1976 = vcmask 97344
      %1977 = vst.msk [vmem:[#allocation3] sm:$0xff] %vm1976, %v1929
      %1978 = vst.msk [vmem:[#allocation3 + $0x8] sm:$0xff] %vm1976, %v1931
      %1979 = vst.msk [vmem:[#allocation3 + $0x10] sm:$0xff] %vm1976, %v1933
      %1980 = vst.msk [vmem:[#allocation3 + $0x18] sm:$0xff] %vm1976, %v1935
      %1981 = vst.msk [vmem:[#allocation3 + $0x20] sm:$0xff] %vm1976, %v1937
      %1982 = vst.msk [vmem:[#allocation3 + $0x28] sm:$0xff] %vm1976, %v1939
      %1983 = vst.msk [vmem:[#allocation3 + $0x30] sm:$0xff] %vm1976, %v1941
      %1984 = vst.msk [vmem:[#allocation3 + $0x38] sm:$0xff] %vm1976, %v1943
      %1985 = vst.msk [vmem:[#allocation3 + $0x40] sm:$0xff] %vm1976, %v1945
      %1986 = vst.msk [vmem:[#allocation3 + $0x48] sm:$0xff] %vm1976, %v1947
      %1987 = vst.msk [vmem:[#allocation3 + $0x50] sm:$0xff] %vm1976, %v1949
      %1988 = vst.msk [vmem:[#allocation3 + $0x58] sm:$0xff] %vm1976, %v1951
      %1989 = vst.msk [vmem:[#allocation3 + $0x60] sm:$0xff] %vm1976, %v1953
      %1990 = vst.msk [vmem:[#allocation3 + $0x68] sm:$0xff] %vm1976, %v1955
      %1991 = vst.msk [vmem:[#allocation3 + $0x70] sm:$0xff] %vm1976, %v1957
      %1992 = vst.msk [vmem:[#allocation3 + $0x78] sm:$0xff] %vm1976, %v1959
      %v1993 = vld [vmem:[%s857] sm:$0xf]
      %v1994 = vld [vmem:[%s857 + $0x4] sm:$0xf]
      %v1995 = vld [vmem:[%s857 + $0xc] sm:$0xf]
      %v1996 = vld [vmem:[%s857 + $0x10] sm:$0xf]
      %v1997 = vld [vmem:[%s857 + $0x18] sm:$0xf]
      %v1998 = vld [vmem:[%s857 + $0x1c] sm:$0xf]
      %v1999 = vld [vmem:[%s857 + $0x24] sm:$0xf]
      %v2000 = vld [vmem:[%s857 + $0x28] sm:$0xf]
      %v2001 = vld [vmem:[%s857 + $0x30] sm:$0xf]
      %v2002 = vld [vmem:[%s857 + $0x34] sm:$0xf]
      %v2003 = vld [vmem:[%s857 + $0x3c] sm:$0xf]
      %v2004 = vld [vmem:[%s857 + $0x40] sm:$0xf]
      %v2005 = vld [vmem:[%s857 + $0x48] sm:$0xf]
      %v2006 = vld [vmem:[%s857 + $0x4c] sm:$0xf]
      %v2007 = vld [vmem:[%s857 + $0x54] sm:$0xf]
      %v2008 = vld [vmem:[%s857 + $0x58] sm:$0xf]
      %v2009 = vld [vmem:[%s857 + $0x60] sm:$0xf]
      %v2010 = vld [vmem:[%s857 + $0x64] sm:$0xf]
      %v2011 = vld [vmem:[%s857 + $0x6c] sm:$0xf]
      %v2012 = vld [vmem:[%s857 + $0x70] sm:$0xf]
      %v2013 = vld [vmem:[%s857 + $0x78] sm:$0xf]
      %v2014 = vld [vmem:[%s857 + $0x7c] sm:$0xf]
      %v2015 = vld [vmem:[%s857 + $0x84] sm:$0xf]
      %v2016 = vld [vmem:[%s857 + $0x88] sm:$0xf]
      %v2017 = vld [vmem:[%s857 + $0x90] sm:$0xf]
      %v2018 = vld [vmem:[%s857 + $0x94] sm:$0xf]
      %v2019 = vld [vmem:[%s857 + $0x9c] sm:$0xf]
      %v2020 = vld [vmem:[%s857 + $0xa0] sm:$0xf]
      %v2021 = vld [vmem:[%s857 + $0xa8] sm:$0xf]
      %v2022 = vld [vmem:[%s857 + $0xac] sm:$0xf]
      %v2023 = vld [vmem:[%s857 + $0xb4] sm:$0xf]
      %v2024 = vld [vmem:[%s857 + $0xb8] sm:$0xf]
      %v2057 = vunpack.c.l.b16 %v1993
      %v2058 = vunpack.c.l.b16 %v1994
      %v2059 = vunpack.c.l.b16 %v1995
      %v2060 = vunpack.c.l.b16 %v1996
      %v2061 = vunpack.c.l.b16 %v1997
      %v2062 = vunpack.c.l.b16 %v1998
      %v2063 = vunpack.c.l.b16 %v1999
      %v2064 = vunpack.c.l.b16 %v2000
      %v2065 = vunpack.c.l.b16 %v2001
      %v2066 = vunpack.c.l.b16 %v2002
      %v2067 = vunpack.c.l.b16 %v2003
      %v2068 = vunpack.c.l.b16 %v2004
      %v2069 = vunpack.c.l.b16 %v2005
      %v2070 = vunpack.c.l.b16 %v2006
      %v2071 = vunpack.c.l.b16 %v2007
      %v2072 = vunpack.c.l.b16 %v2008
      %v2073 = vunpack.c.l.b16 %v2009
      %v2074 = vunpack.c.l.b16 %v2010
      %v2075 = vunpack.c.l.b16 %v2011
      %v2076 = vunpack.c.l.b16 %v2012
      %v2077 = vunpack.c.l.b16 %v2013
      %v2078 = vunpack.c.l.b16 %v2014
      %v2079 = vunpack.c.l.b16 %v2015
      %v2080 = vunpack.c.l.b16 %v2016
      %v2081 = vunpack.c.l.b16 %v2017
      %v2082 = vunpack.c.l.b16 %v2018
      %v2083 = vunpack.c.l.b16 %v2019
      %v2084 = vunpack.c.l.b16 %v2020
      %v2085 = vunpack.c.l.b16 %v2021
      %v2086 = vunpack.c.l.b16 %v2022
      %v2087 = vunpack.c.l.b16 %v2023
      %v2088 = vunpack.c.l.b16 %v2024
      %v2089 = vpack.c.b16 %v2058, %v2057
      %v2090 = vpack.c.b16 %v2060, %v2059
      %v2091 = vpack.c.b16 %v2062, %v2061
      %v2092 = vpack.c.b16 %v2064, %v2063
      %v2093 = vpack.c.b16 %v2066, %v2065
      %v2094 = vpack.c.b16 %v2068, %v2067
      %v2095 = vpack.c.b16 %v2070, %v2069
      %v2096 = vpack.c.b16 %v2072, %v2071
      %v2097 = vpack.c.b16 %v2074, %v2073
      %v2098 = vpack.c.b16 %v2076, %v2075
      %v2099 = vpack.c.b16 %v2078, %v2077
      %v2100 = vpack.c.b16 %v2080, %v2079
      %v2101 = vpack.c.b16 %v2082, %v2081
      %v2102 = vpack.c.b16 %v2084, %v2083
      %v2103 = vpack.c.b16 %v2086, %v2085
      %v2104 = vpack.c.b16 %v2088, %v2087
      %2105 = vrot.lane.b32.xlu0 %v2089, 12
      %v2106 = vpop.permute.xlu0 %2105
      %2107 = vrot.lane.b32.xlu0 %v2090, 12
      %v2108 = vpop.permute.xlu0 %2107
      %2109 = vrot.lane.b32.xlu0 %v2091, 12
      %v2110 = vpop.permute.xlu0 %2109
      %2111 = vrot.lane.b32.xlu0 %v2092, 12
      %v2112 = vpop.permute.xlu0 %2111
      %2113 = vrot.lane.b32.xlu0 %v2093, 12
      %v2114 = vpop.permute.xlu0 %2113
      %2115 = vrot.lane.b32.xlu0 %v2094, 12
      %v2116 = vpop.permute.xlu0 %2115
      %2117 = vrot.lane.b32.xlu0 %v2095, 12
      %v2118 = vpop.permute.xlu0 %2117
      %2119 = vrot.lane.b32.xlu0 %v2096, 12
      %v2120 = vpop.permute.xlu0 %2119
      %2121 = vrot.lane.b32.xlu0 %v2097, 12
      %v2122 = vpop.permute.xlu0 %2121
      %2123 = vrot.lane.b32.xlu0 %v2098, 12
      %v2124 = vpop.permute.xlu0 %2123
      %2125 = vrot.lane.b32.xlu0 %v2099, 12
      %v2126 = vpop.permute.xlu0 %2125
      %2127 = vrot.lane.b32.xlu0 %v2100, 12
      %v2128 = vpop.permute.xlu0 %2127
      %2129 = vrot.lane.b32.xlu0 %v2101, 12
      %v2130 = vpop.permute.xlu0 %2129
      %2131 = vrot.lane.b32.xlu0 %v2102, 12
      %v2132 = vpop.permute.xlu0 %2131
      %2133 = vrot.lane.b32.xlu0 %v2103, 12
      %v2134 = vpop.permute.xlu0 %2133
      %2135 = vrot.lane.b32.xlu0 %v2104, 12
      %v2136 = vpop.permute.xlu0 %2135
      %vm2153 = vcmask 130144
      %2154 = vst.msk [vmem:[#allocation3] sm:$0xff] %vm2153, %v2106
      %2155 = vst.msk [vmem:[#allocation3 + $0x8] sm:$0xff] %vm2153, %v2108
      %2156 = vst.msk [vmem:[#allocation3 + $0x10] sm:$0xff] %vm2153, %v2110
      %2157 = vst.msk [vmem:[#allocation3 + $0x18] sm:$0xff] %vm2153, %v2112
      %2158 = vst.msk [vmem:[#allocation3 + $0x20] sm:$0xff] %vm2153, %v2114
      %2159 = vst.msk [vmem:[#allocation3 + $0x28] sm:$0xff] %vm2153, %v2116
      %2160 = vst.msk [vmem:[#allocation3 + $0x30] sm:$0xff] %vm2153, %v2118
      %2161 = vst.msk [vmem:[#allocation3 + $0x38] sm:$0xff] %vm2153, %v2120
      %2162 = vst.msk [vmem:[#allocation3 + $0x40] sm:$0xff] %vm2153, %v2122
      %2163 = vst.msk [vmem:[#allocation3 + $0x48] sm:$0xff] %vm2153, %v2124
      %2164 = vst.msk [vmem:[#allocation3 + $0x50] sm:$0xff] %vm2153, %v2126
      %2165 = vst.msk [vmem:[#allocation3 + $0x58] sm:$0xff] %vm2153, %v2128
      %2166 = vst.msk [vmem:[#allocation3 + $0x60] sm:$0xff] %vm2153, %v2130
      %2167 = vst.msk [vmem:[#allocation3 + $0x68] sm:$0xff] %vm2153, %v2132
      %2168 = vst.msk [vmem:[#allocation3 + $0x70] sm:$0xff] %vm2153, %v2134
      %2169 = vst.msk [vmem:[#allocation3 + $0x78] sm:$0xff] %vm2153, %v2136
      %v2170 = vld [vmem:[%s857] sm:$0xf]
      %v2171 = vld [vmem:[%s857 + $0x4] sm:$0xf]
      %v2172 = vld [vmem:[%s857 + $0x8] sm:$0x1]
      %v2173 = vld [vmem:[%s857 + $0xc] sm:$0xf]
      %v2174 = vld [vmem:[%s857 + $0x10] sm:$0xf]
      %v2175 = vld [vmem:[%s857 + $0x14] sm:$0x1]
      %v2176 = vld [vmem:[%s857 + $0x18] sm:$0xf]
      %v2177 = vld [vmem:[%s857 + $0x1c] sm:$0xf]
      %v2178 = vld [vmem:[%s857 + $0x20] sm:$0x1]
      %v2179 = vld [vmem:[%s857 + $0x24] sm:$0xf]
      %v2180 = vld [vmem:[%s857 + $0x28] sm:$0xf]
      %v2181 = vld [vmem:[%s857 + $0x2c] sm:$0x1]
      %v2182 = vld [vmem:[%s857 + $0x30] sm:$0xf]
      %v2183 = vld [vmem:[%s857 + $0x34] sm:$0xf]
      %v2184 = vld [vmem:[%s857 + $0x38] sm:$0x1]
      %v2185 = vld [vmem:[%s857 + $0x3c] sm:$0xf]
      %v2186 = vld [vmem:[%s857 + $0x40] sm:$0xf]
      %v2187 = vld [vmem:[%s857 + $0x44] sm:$0x1]
      %v2188 = vld [vmem:[%s857 + $0x48] sm:$0xf]
      %v2189 = vld [vmem:[%s857 + $0x4c] sm:$0xf]
      %v2190 = vld [vmem:[%s857 + $0x50] sm:$0x1]
      %v2191 = vld [vmem:[%s857 + $0x54] sm:$0xf]
      %v2192 = vld [vmem:[%s857 + $0x58] sm:$0xf]
      %v2193 = vld [vmem:[%s857 + $0x5c] sm:$0x1]
      %v2194 = vld [vmem:[%s857 + $0x60] sm:$0xf]
      %v2195 = vld [vmem:[%s857 + $0x64] sm:$0xf]
      %v2196 = vld [vmem:[%s857 + $0x68] sm:$0x1]
      %v2197 = vld [vmem:[%s857 + $0x6c] sm:$0xf]
      %v2198 = vld [vmem:[%s857 + $0x70] sm:$0xf]
      %v2199 = vld [vmem:[%s857 + $0x74] sm:$0x1]
      %v2200 = vld [vmem:[%s857 + $0x78] sm:$0xf]
      %v2201 = vld [vmem:[%s857 + $0x7c] sm:$0xf]
      %v2202 = vld [vmem:[%s857 + $0x80] sm:$0x1]
      %v2203 = vld [vmem:[%s857 + $0x84] sm:$0xf]
      %v2204 = vld [vmem:[%s857 + $0x88] sm:$0xf]
      %v2205 = vld [vmem:[%s857 + $0x8c] sm:$0x1]
      %v2206 = vld [vmem:[%s857 + $0x90] sm:$0xf]
      %v2207 = vld [vmem:[%s857 + $0x94] sm:$0xf]
      %v2208 = vld [vmem:[%s857 + $0x98] sm:$0x1]
      %v2209 = vld [vmem:[%s857 + $0x9c] sm:$0xf]
      %v2210 = vld [vmem:[%s857 + $0xa0] sm:$0xf]
      %v2211 = vld [vmem:[%s857 + $0xa4] sm:$0x1]
      %v2212 = vld [vmem:[%s857 + $0xa8] sm:$0xf]
      %v2213 = vld [vmem:[%s857 + $0xac] sm:$0xf]
      %v2214 = vld [vmem:[%s857 + $0xb0] sm:$0x1]
      %v2215 = vld [vmem:[%s857 + $0xb4] sm:$0xf]
      %v2216 = vld [vmem:[%s857 + $0xb8] sm:$0xf]
      %v2217 = vld [vmem:[%s857 + $0xbc] sm:$0x1]
      %v2219 = vshrl.u32 %v2170, 16
      %v2221 = vrot.slane %v2219, 4
      %v2222 = vshll.u32 %v2170, 16
      %v2224 = vrot.slane %v2222, 5
      %v2225 = vor.u32 %v2221, %v2224
      %v2226 = vrot.slane %v2225, 4
      %v2228 = vshll.u32 %v2171, 16
      %v2230 = vrot.slane %v2228, 5
      %v2231 = vsel %vm1171, %v2226, %v2230
      %v2232 = vshrl.u32 %v2171, 16
      %v2234 = vrot.slane %v2232, 4
      %v2235 = vor.u32 %v2234, %v2230
      %v2236 = vrot.slane %v2235, 4
      %v2238 = vshll.u32 %v2172, 16
      %v2240 = vrot.slane %v2238, 5
      %v2241 = vsel %vm1171, %v2236, %v2240
      %v2243 = vshrl.u32 %v2173, 16
      %v2245 = vrot.slane %v2243, 4
      %v2246 = vshll.u32 %v2173, 16
      %v2248 = vrot.slane %v2246, 5
      %v2249 = vor.u32 %v2245, %v2248
      %v2250 = vrot.slane %v2249, 4
      %v2252 = vshll.u32 %v2174, 16
      %v2254 = vrot.slane %v2252, 5
      %v2255 = vsel %vm1171, %v2250, %v2254
      %v2256 = vshrl.u32 %v2174, 16
      %v2258 = vrot.slane %v2256, 4
      %v2259 = vor.u32 %v2258, %v2254
      %v2260 = vrot.slane %v2259, 4
      %v2262 = vshll.u32 %v2175, 16
      %v2264 = vrot.slane %v2262, 5
      %v2265 = vsel %vm1171, %v2260, %v2264
      %v2267 = vshrl.u32 %v2176, 16
      %v2269 = vrot.slane %v2267, 4
      %v2270 = vshll.u32 %v2176, 16
      %v2272 = vrot.slane %v2270, 5
      %v2273 = vor.u32 %v2269, %v2272
      %v2274 = vrot.slane %v2273, 4
      %v2276 = vshll.u32 %v2177, 16
      %v2278 = vrot.slane %v2276, 5
      %v2279 = vsel %vm1171, %v2274, %v2278
      %v2280 = vshrl.u32 %v2177, 16
      %v2282 = vrot.slane %v2280, 4
      %v2283 = vor.u32 %v2282, %v2278
      %v2284 = vrot.slane %v2283, 4
      %v2286 = vshll.u32 %v2178, 16
      %v2288 = vrot.slane %v2286, 5
      %v2289 = vsel %vm1171, %v2284, %v2288
      %v2291 = vshrl.u32 %v2179, 16
      %v2293 = vrot.slane %v2291, 4
      %v2294 = vshll.u32 %v2179, 16
      %v2296 = vrot.slane %v2294, 5
      %v2297 = vor.u32 %v2293, %v2296
      %v2298 = vrot.slane %v2297, 4
      %v2300 = vshll.u32 %v2180, 16
      %v2302 = vrot.slane %v2300, 5
      %v2303 = vsel %vm1171, %v2298, %v2302
      %v2304 = vshrl.u32 %v2180, 16
      %v2306 = vrot.slane %v2304, 4
      %v2307 = vor.u32 %v2306, %v2302
      %v2308 = vrot.slane %v2307, 4
      %v2310 = vshll.u32 %v2181, 16
      %v2312 = vrot.slane %v2310, 5
      %v2313 = vsel %vm1171, %v2308, %v2312
      %v2315 = vshrl.u32 %v2182, 16
      %v2317 = vrot.slane %v2315, 4
      %v2318 = vshll.u32 %v2182, 16
      %v2320 = vrot.slane %v2318, 5
      %v2321 = vor.u32 %v2317, %v2320
      %v2322 = vrot.slane %v2321, 4
      %v2324 = vshll.u32 %v2183, 16
      %v2326 = vrot.slane %v2324, 5
      %v2327 = vsel %vm1171, %v2322, %v2326
      %v2328 = vshrl.u32 %v2183, 16
      %v2330 = vrot.slane %v2328, 4
      %v2331 = vor.u32 %v2330, %v2326
      %v2332 = vrot.slane %v2331, 4
      %v2334 = vshll.u32 %v2184, 16
      %v2336 = vrot.slane %v2334, 5
      %v2337 = vsel %vm1171, %v2332, %v2336
      %v2339 = vshrl.u32 %v2185, 16
      %v2341 = vrot.slane %v2339, 4
      %v2342 = vshll.u32 %v2185, 16
      %v2344 = vrot.slane %v2342, 5
      %v2345 = vor.u32 %v2341, %v2344
      %v2346 = vrot.slane %v2345, 4
      %v2348 = vshll.u32 %v2186, 16
      %v2350 = vrot.slane %v2348, 5
      %v2351 = vsel %vm1171, %v2346, %v2350
      %v2352 = vshrl.u32 %v2186, 16
      %v2354 = vrot.slane %v2352, 4
      %v2355 = vor.u32 %v2354, %v2350
      %v2356 = vrot.slane %v2355, 4
      %v2358 = vshll.u32 %v2187, 16
      %v2360 = vrot.slane %v2358, 5
      %v2361 = vsel %vm1171, %v2356, %v2360
      %v2363 = vshrl.u32 %v2188, 16
      %v2365 = vrot.slane %v2363, 4
      %v2366 = vshll.u32 %v2188, 16
      %v2368 = vrot.slane %v2366, 5
      %v2369 = vor.u32 %v2365, %v2368
      %v2370 = vrot.slane %v2369, 4
      %v2372 = vshll.u32 %v2189, 16
      %v2374 = vrot.slane %v2372, 5
      %v2375 = vsel %vm1171, %v2370, %v2374
      %v2376 = vshrl.u32 %v2189, 16
      %v2378 = vrot.slane %v2376, 4
      %v2379 = vor.u32 %v2378, %v2374
      %v2380 = vrot.slane %v2379, 4
      %v2382 = vshll.u32 %v2190, 16
      %v2384 = vrot.slane %v2382, 5
      %v2385 = vsel %vm1171, %v2380, %v2384
      %v2387 = vshrl.u32 %v2191, 16
      %v2389 = vrot.slane %v2387, 4
      %v2390 = vshll.u32 %v2191, 16
      %v2392 = vrot.slane %v2390, 5
      %v2393 = vor.u32 %v2389, %v2392
      %v2394 = vrot.slane %v2393, 4
      %v2396 = vshll.u32 %v2192, 16
      %v2398 = vrot.slane %v2396, 5
      %v2399 = vsel %vm1171, %v2394, %v2398
      %v2400 = vshrl.u32 %v2192, 16
      %v2402 = vrot.slane %v2400, 4
      %v2403 = vor.u32 %v2402, %v2398
      %v2404 = vrot.slane %v2403, 4
      %v2406 = vshll.u32 %v2193, 16
      %v2408 = vrot.slane %v2406, 5
      %v2409 = vsel %vm1171, %v2404, %v2408
      %v2411 = vshrl.u32 %v2194, 16
      %v2413 = vrot.slane %v2411, 4
      %v2414 = vshll.u32 %v2194, 16
      %v2416 = vrot.slane %v2414, 5
      %v2417 = vor.u32 %v2413, %v2416
      %v2418 = vrot.slane %v2417, 4
      %v2420 = vshll.u32 %v2195, 16
      %v2422 = vrot.slane %v2420, 5
      %v2423 = vsel %vm1171, %v2418, %v2422
      %v2424 = vshrl.u32 %v2195, 16
      %v2426 = vrot.slane %v2424, 4
      %v2427 = vor.u32 %v2426, %v2422
      %v2428 = vrot.slane %v2427, 4
      %v2430 = vshll.u32 %v2196, 16
      %v2432 = vrot.slane %v2430, 5
      %v2433 = vsel %vm1171, %v2428, %v2432
      %v2435 = vshrl.u32 %v2197, 16
      %v2437 = vrot.slane %v2435, 4
      %v2438 = vshll.u32 %v2197, 16
      %v2440 = vrot.slane %v2438, 5
      %v2441 = vor.u32 %v2437, %v2440
      %v2442 = vrot.slane %v2441, 4
      %v2444 = vshll.u32 %v2198, 16
      %v2446 = vrot.slane %v2444, 5
      %v2447 = vsel %vm1171, %v2442, %v2446
      %v2448 = vshrl.u32 %v2198, 16
      %v2450 = vrot.slane %v2448, 4
      %v2451 = vor.u32 %v2450, %v2446
      %v2452 = vrot.slane %v2451, 4
      %v2454 = vshll.u32 %v2199, 16
      %v2456 = vrot.slane %v2454, 5
      %v2457 = vsel %vm1171, %v2452, %v2456
      %v2459 = vshrl.u32 %v2200, 16
      %v2461 = vrot.slane %v2459, 4
      %v2462 = vshll.u32 %v2200, 16
      %v2464 = vrot.slane %v2462, 5
      %v2465 = vor.u32 %v2461, %v2464
      %v2466 = vrot.slane %v2465, 4
      %v2468 = vshll.u32 %v2201, 16
      %v2470 = vrot.slane %v2468, 5
      %v2471 = vsel %vm1171, %v2466, %v2470
      %v2472 = vshrl.u32 %v2201, 16
      %v2474 = vrot.slane %v2472, 4
      %v2475 = vor.u32 %v2474, %v2470
      %v2476 = vrot.slane %v2475, 4
      %v2478 = vshll.u32 %v2202, 16
      %v2480 = vrot.slane %v2478, 5
      %v2481 = vsel %vm1171, %v2476, %v2480
      %v2483 = vshrl.u32 %v2203, 16
      %v2485 = vrot.slane %v2483, 4
      %v2486 = vshll.u32 %v2203, 16
      %v2488 = vrot.slane %v2486, 5
      %v2489 = vor.u32 %v2485, %v2488
      %v2490 = vrot.slane %v2489, 4
      %v2492 = vshll.u32 %v2204, 16
      %v2494 = vrot.slane %v2492, 5
      %v2495 = vsel %vm1171, %v2490, %v2494
      %v2496 = vshrl.u32 %v2204, 16
      %v2498 = vrot.slane %v2496, 4
      %v2499 = vor.u32 %v2498, %v2494
      %v2500 = vrot.slane %v2499, 4
      %v2502 = vshll.u32 %v2205, 16
      %v2504 = vrot.slane %v2502, 5
      %v2505 = vsel %vm1171, %v2500, %v2504
      %v2507 = vshrl.u32 %v2206, 16
      %v2509 = vrot.slane %v2507, 4
      %v2510 = vshll.u32 %v2206, 16
      %v2512 = vrot.slane %v2510, 5
      %v2513 = vor.u32 %v2509, %v2512
      %v2514 = vrot.slane %v2513, 4
      %v2516 = vshll.u32 %v2207, 16
      %v2518 = vrot.slane %v2516, 5
      %v2519 = vsel %vm1171, %v2514, %v2518
      %v2520 = vshrl.u32 %v2207, 16
      %v2522 = vrot.slane %v2520, 4
      %v2523 = vor.u32 %v2522, %v2518
      %v2524 = vrot.slane %v2523, 4
      %v2526 = vshll.u32 %v2208, 16
      %v2528 = vrot.slane %v2526, 5
      %v2529 = vsel %vm1171, %v2524, %v2528
      %v2531 = vshrl.u32 %v2209, 16
      %v2533 = vrot.slane %v2531, 4
      %v2534 = vshll.u32 %v2209, 16
      %v2536 = vrot.slane %v2534, 5
      %v2537 = vor.u32 %v2533, %v2536
      %v2538 = vrot.slane %v2537, 4
      %v2540 = vshll.u32 %v2210, 16
      %v2542 = vrot.slane %v2540, 5
      %v2543 = vsel %vm1171, %v2538, %v2542
      %v2544 = vshrl.u32 %v2210, 16
      %v2546 = vrot.slane %v2544, 4
      %v2547 = vor.u32 %v2546, %v2542
      %v2548 = vrot.slane %v2547, 4
      %v2550 = vshll.u32 %v2211, 16
      %v2552 = vrot.slane %v2550, 5
      %v2553 = vsel %vm1171, %v2548, %v2552
      %v2555 = vshrl.u32 %v2212, 16
      %v2557 = vrot.slane %v2555, 4
      %v2558 = vshll.u32 %v2212, 16
      %v2560 = vrot.slane %v2558, 5
      %v2561 = vor.u32 %v2557, %v2560
      %v2562 = vrot.slane %v2561, 4
      %v2564 = vshll.u32 %v2213, 16
      %v2566 = vrot.slane %v2564, 5
      %v2567 = vsel %vm1171, %v2562, %v2566
      %v2568 = vshrl.u32 %v2213, 16
      %v2570 = vrot.slane %v2568, 4
      %v2571 = vor.u32 %v2570, %v2566
      %v2572 = vrot.slane %v2571, 4
      %v2574 = vshll.u32 %v2214, 16
      %v2576 = vrot.slane %v2574, 5
      %v2577 = vsel %vm1171, %v2572, %v2576
      %v2579 = vshrl.u32 %v2215, 16
      %v2581 = vrot.slane %v2579, 4
      %v2582 = vshll.u32 %v2215, 16
      %v2584 = vrot.slane %v2582, 5
      %v2585 = vor.u32 %v2581, %v2584
      %v2586 = vrot.slane %v2585, 4
      %v2588 = vshll.u32 %v2216, 16
      %v2590 = vrot.slane %v2588, 5
      %v2591 = vsel %vm1171, %v2586, %v2590
      %v2592 = vshrl.u32 %v2216, 16
      %v2594 = vrot.slane %v2592, 4
      %v2595 = vor.u32 %v2594, %v2590
      %v2596 = vrot.slane %v2595, 4
      %v2598 = vshll.u32 %v2217, 16
      %v2600 = vrot.slane %v2598, 5
      %v2601 = vsel %vm1171, %v2596, %v2600
      %v2602 = vunpack.c.l.b16 %v2231
      %v2603 = vunpack.c.l.b16 %v2241
      %v2604 = vunpack.c.l.b16 %v2255
      %v2605 = vunpack.c.l.b16 %v2265
      %v2606 = vunpack.c.l.b16 %v2279
      %v2607 = vunpack.c.l.b16 %v2289
      %v2608 = vunpack.c.l.b16 %v2303
      %v2609 = vunpack.c.l.b16 %v2313
      %v2610 = vunpack.c.l.b16 %v2327
      %v2611 = vunpack.c.l.b16 %v2337
      %v2612 = vunpack.c.l.b16 %v2351
      %v2613 = vunpack.c.l.b16 %v2361
      %v2614 = vunpack.c.l.b16 %v2375
      %v2615 = vunpack.c.l.b16 %v2385
      %v2616 = vunpack.c.l.b16 %v2399
      %v2617 = vunpack.c.l.b16 %v2409
      %v2618 = vunpack.c.l.b16 %v2423
      %v2619 = vunpack.c.l.b16 %v2433
      %v2620 = vunpack.c.l.b16 %v2447
      %v2621 = vunpack.c.l.b16 %v2457
      %v2622 = vunpack.c.l.b16 %v2471
      %v2623 = vunpack.c.l.b16 %v2481
      %v2624 = vunpack.c.l.b16 %v2495
      %v2625 = vunpack.c.l.b16 %v2505
      %v2626 = vunpack.c.l.b16 %v2519
      %v2627 = vunpack.c.l.b16 %v2529
      %v2628 = vunpack.c.l.b16 %v2543
      %v2629 = vunpack.c.l.b16 %v2553
      %v2630 = vunpack.c.l.b16 %v2567
      %v2631 = vunpack.c.l.b16 %v2577
      %v2632 = vunpack.c.l.b16 %v2591
      %v2633 = vunpack.c.l.b16 %v2601
      %v2634 = vpack.c.b16 %v2603, %v2602
      %v2635 = vpack.c.b16 %v2605, %v2604
      %v2636 = vpack.c.b16 %v2607, %v2606
      %v2637 = vpack.c.b16 %v2609, %v2608
      %v2638 = vpack.c.b16 %v2611, %v2610
      %v2639 = vpack.c.b16 %v2613, %v2612
      %v2640 = vpack.c.b16 %v2615, %v2614
      %v2641 = vpack.c.b16 %v2617, %v2616
      %v2642 = vpack.c.b16 %v2619, %v2618
      %v2643 = vpack.c.b16 %v2621, %v2620
      %v2644 = vpack.c.b16 %v2623, %v2622
      %v2645 = vpack.c.b16 %v2625, %v2624
      %v2646 = vpack.c.b16 %v2627, %v2626
      %v2647 = vpack.c.b16 %v2629, %v2628
      %v2648 = vpack.c.b16 %v2631, %v2630
      %v2649 = vpack.c.b16 %v2633, %v2632
      %2650 = vrot.lane.b32.xlu0 %v2634, 16
      %v2651 = vpop.permute.xlu0 %2650
      %2652 = vrot.lane.b32.xlu0 %v2635, 16
      %v2653 = vpop.permute.xlu0 %2652
      %2654 = vrot.lane.b32.xlu0 %v2636, 16
      %v2655 = vpop.permute.xlu0 %2654
      %2656 = vrot.lane.b32.xlu0 %v2637, 16
      %v2657 = vpop.permute.xlu0 %2656
      %2658 = vrot.lane.b32.xlu0 %v2638, 16
      %v2659 = vpop.permute.xlu0 %2658
      %2660 = vrot.lane.b32.xlu0 %v2639, 16
      %v2661 = vpop.permute.xlu0 %2660
      %2662 = vrot.lane.b32.xlu0 %v2640, 16
      %v2663 = vpop.permute.xlu0 %2662
      %2664 = vrot.lane.b32.xlu0 %v2641, 16
      %v2665 = vpop.permute.xlu0 %2664
      %2666 = vrot.lane.b32.xlu0 %v2642, 16
      %v2667 = vpop.permute.xlu0 %2666
      %2668 = vrot.lane.b32.xlu0 %v2643, 16
      %v2669 = vpop.permute.xlu0 %2668
      %2670 = vrot.lane.b32.xlu0 %v2644, 16
      %v2671 = vpop.permute.xlu0 %2670
      %2672 = vrot.lane.b32.xlu0 %v2645, 16
      %v2673 = vpop.permute.xlu0 %2672
      %2674 = vrot.lane.b32.xlu0 %v2646, 16
      %v2675 = vpop.permute.xlu0 %2674
      %2676 = vrot.lane.b32.xlu0 %v2647, 16
      %v2677 = vpop.permute.xlu0 %2676
      %2678 = vrot.lane.b32.xlu0 %v2648, 16
      %v2679 = vpop.permute.xlu0 %2678
      %2680 = vrot.lane.b32.xlu0 %v2649, 16
      %v2681 = vpop.permute.xlu0 %2680
      %vm2698 = vcmask 162944
      %2699 = vst.msk [vmem:[#allocation3] sm:$0xff] %vm2698, %v2651
      %2700 = vst.msk [vmem:[#allocation3 + $0x8] sm:$0xff] %vm2698, %v2653
      %2701 = vst.msk [vmem:[#allocation3 + $0x10] sm:$0xff] %vm2698, %v2655
      %2702 = vst.msk [vmem:[#allocation3 + $0x18] sm:$0xff] %vm2698, %v2657
      %2703 = vst.msk [vmem:[#allocation3 + $0x20] sm:$0xff] %vm2698, %v2659
      %2704 = vst.msk [vmem:[#allocation3 + $0x28] sm:$0xff] %vm2698, %v2661
      %2705 = vst.msk [vmem:[#allocation3 + $0x30] sm:$0xff] %vm2698, %v2663
      %2706 = vst.msk [vmem:[#allocation3 + $0x38] sm:$0xff] %vm2698, %v2665
      %2707 = vst.msk [vmem:[#allocation3 + $0x40] sm:$0xff] %vm2698, %v2667
      %2708 = vst.msk [vmem:[#allocation3 + $0x48] sm:$0xff] %vm2698, %v2669
      %2709 = vst.msk [vmem:[#allocation3 + $0x50] sm:$0xff] %vm2698, %v2671
      %2710 = vst.msk [vmem:[#allocation3 + $0x58] sm:$0xff] %vm2698, %v2673
      %2711 = vst.msk [vmem:[#allocation3 + $0x60] sm:$0xff] %vm2698, %v2675
      %2712 = vst.msk [vmem:[#allocation3 + $0x68] sm:$0xff] %vm2698, %v2677
      %2713 = vst.msk [vmem:[#allocation3 + $0x70] sm:$0xff] %vm2698, %v2679
      %2714 = vst.msk [vmem:[#allocation3 + $0x78] sm:$0xff] %vm2698, %v2681
      %v2715 = vld [vmem:[%s857] sm:$0xe]
      %v2716 = vld [vmem:[%s857 + $0x4] sm:$0xf]
      %v2717 = vld [vmem:[%s857 + $0x8] sm:$0x1]
      %v2718 = vld [vmem:[%s857 + $0xc] sm:$0xe]
      %v2719 = vld [vmem:[%s857 + $0x10] sm:$0xf]
      %v2720 = vld [vmem:[%s857 + $0x14] sm:$0x1]
      %v2721 = vld [vmem:[%s857 + $0x18] sm:$0xe]
      %v2722 = vld [vmem:[%s857 + $0x1c] sm:$0xf]
      %v2723 = vld [vmem:[%s857 + $0x20] sm:$0x1]
      %v2724 = vld [vmem:[%s857 + $0x24] sm:$0xe]
      %v2725 = vld [vmem:[%s857 + $0x28] sm:$0xf]
      %v2726 = vld [vmem:[%s857 + $0x2c] sm:$0x1]
      %v2727 = vld [vmem:[%s857 + $0x30] sm:$0xe]
      %v2728 = vld [vmem:[%s857 + $0x34] sm:$0xf]
      %v2729 = vld [vmem:[%s857 + $0x38] sm:$0x1]
      %v2730 = vld [vmem:[%s857 + $0x3c] sm:$0xe]
      %v2731 = vld [vmem:[%s857 + $0x40] sm:$0xf]
      %v2732 = vld [vmem:[%s857 + $0x44] sm:$0x1]
      %v2733 = vld [vmem:[%s857 + $0x48] sm:$0xe]
      %v2734 = vld [vmem:[%s857 + $0x4c] sm:$0xf]
      %v2735 = vld [vmem:[%s857 + $0x50] sm:$0x1]
      %v2736 = vld [vmem:[%s857 + $0x54] sm:$0xe]
      %v2737 = vld [vmem:[%s857 + $0x58] sm:$0xf]
      %v2738 = vld [vmem:[%s857 + $0x5c] sm:$0x1]
      %v2739 = vld [vmem:[%s857 + $0x60] sm:$0xe]
      %v2740 = vld [vmem:[%s857 + $0x64] sm:$0xf]
      %v2741 = vld [vmem:[%s857 + $0x68] sm:$0x1]
      %v2742 = vld [vmem:[%s857 + $0x6c] sm:$0xe]
      %v2743 = vld [vmem:[%s857 + $0x70] sm:$0xf]
      %v2744 = vld [vmem:[%s857 + $0x74] sm:$0x1]
      %v2745 = vld [vmem:[%s857 + $0x78] sm:$0xe]
      %v2746 = vld [vmem:[%s857 + $0x7c] sm:$0xf]
      %v2747 = vld [vmem:[%s857 + $0x80] sm:$0x1]
      %v2748 = vld [vmem:[%s857 + $0x84] sm:$0xe]
      %v2749 = vld [vmem:[%s857 + $0x88] sm:$0xf]
      %v2750 = vld [vmem:[%s857 + $0x8c] sm:$0x1]
      %v2751 = vld [vmem:[%s857 + $0x90] sm:$0xe]
      %v2752 = vld [vmem:[%s857 + $0x94] sm:$0xf]
      %v2753 = vld [vmem:[%s857 + $0x98] sm:$0x1]
      %v2754 = vld [vmem:[%s857 + $0x9c] sm:$0xe]
      %v2755 = vld [vmem:[%s857 + $0xa0] sm:$0xf]
      %v2756 = vld [vmem:[%s857 + $0xa4] sm:$0x1]
      %v2757 = vld [vmem:[%s857 + $0xa8] sm:$0xe]
      %v2758 = vld [vmem:[%s857 + $0xac] sm:$0xf]
      %v2759 = vld [vmem:[%s857 + $0xb0] sm:$0x1]
      %v2760 = vld [vmem:[%s857 + $0xb4] sm:$0xe]
      %v2761 = vld [vmem:[%s857 + $0xb8] sm:$0xf]
      %v2762 = vld [vmem:[%s857 + $0xbc] sm:$0x1]
      %v2811 = vrot.slane %v2715, 5
      %v2812 = vrot.slane %v2811, 4
      %v2813 = vrot.slane %v2716, 5
      %v2814 = vsel %vm1767, %v2812, %v2813
      %v2815 = vrot.slane %v2813, 4
      %v2816 = vrot.slane %v2717, 5
      %v2817 = vsel %vm1767, %v2815, %v2816
      %v2818 = vrot.slane %v2718, 5
      %v2819 = vrot.slane %v2818, 4
      %v2820 = vrot.slane %v2719, 5
      %v2821 = vsel %vm1767, %v2819, %v2820
      %v2822 = vrot.slane %v2820, 4
      %v2823 = vrot.slane %v2720, 5
      %v2824 = vsel %vm1767, %v2822, %v2823
      %v2825 = vrot.slane %v2721, 5
      %v2826 = vrot.slane %v2825, 4
      %v2827 = vrot.slane %v2722, 5
      %v2828 = vsel %vm1767, %v2826, %v2827
      %v2829 = vrot.slane %v2827, 4
      %v2830 = vrot.slane %v2723, 5
      %v2831 = vsel %vm1767, %v2829, %v2830
      %v2832 = vrot.slane %v2724, 5
      %v2833 = vrot.slane %v2832, 4
      %v2834 = vrot.slane %v2725, 5
      %v2835 = vsel %vm1767, %v2833, %v2834
      %v2836 = vrot.slane %v2834, 4
      %v2837 = vrot.slane %v2726, 5
      %v2838 = vsel %vm1767, %v2836, %v2837
      %v2839 = vrot.slane %v2727, 5
      %v2840 = vrot.slane %v2839, 4
      %v2841 = vrot.slane %v2728, 5
      %v2842 = vsel %vm1767, %v2840, %v2841
      %v2843 = vrot.slane %v2841, 4
      %v2844 = vrot.slane %v2729, 5
      %v2845 = vsel %vm1767, %v2843, %v2844
      %v2846 = vrot.slane %v2730, 5
      %v2847 = vrot.slane %v2846, 4
      %v2848 = vrot.slane %v2731, 5
      %v2849 = vsel %vm1767, %v2847, %v2848
      %v2850 = vrot.slane %v2848, 4
      %v2851 = vrot.slane %v2732, 5
      %v2852 = vsel %vm1767, %v2850, %v2851
      %v2853 = vrot.slane %v2733, 5
      %v2854 = vrot.slane %v2853, 4
      %v2855 = vrot.slane %v2734, 5
      %v2856 = vsel %vm1767, %v2854, %v2855
      %v2857 = vrot.slane %v2855, 4
      %v2858 = vrot.slane %v2735, 5
      %v2859 = vsel %vm1767, %v2857, %v2858
      %v2860 = vrot.slane %v2736, 5
      %v2861 = vrot.slane %v2860, 4
      %v2862 = vrot.slane %v2737, 5
      %v2863 = vsel %vm1767, %v2861, %v2862
      %v2864 = vrot.slane %v2862, 4
      %v2865 = vrot.slane %v2738, 5
      %v2866 = vsel %vm1767, %v2864, %v2865
      %v2867 = vrot.slane %v2739, 5
      %v2868 = vrot.slane %v2867, 4
      %v2869 = vrot.slane %v2740, 5
      %v2870 = vsel %vm1767, %v2868, %v2869
      %v2871 = vrot.slane %v2869, 4
      %v2872 = vrot.slane %v2741, 5
      %v2873 = vsel %vm1767, %v2871, %v2872
      %v2874 = vrot.slane %v2742, 5
      %v2875 = vrot.slane %v2874, 4
      %v2876 = vrot.slane %v2743, 5
      %v2877 = vsel %vm1767, %v2875, %v2876
      %v2878 = vrot.slane %v2876, 4
      %v2879 = vrot.slane %v2744, 5
      %v2880 = vsel %vm1767, %v2878, %v2879
      %v2881 = vrot.slane %v2745, 5
      %v2882 = vrot.slane %v2881, 4
      %v2883 = vrot.slane %v2746, 5
      %v2884 = vsel %vm1767, %v2882, %v2883
      %v2885 = vrot.slane %v2883, 4
      %v2886 = vrot.slane %v2747, 5
      %v2887 = vsel %vm1767, %v2885, %v2886
      %v2888 = vrot.slane %v2748, 5
      %v2889 = vrot.slane %v2888, 4
      %v2890 = vrot.slane %v2749, 5
      %v2891 = vsel %vm1767, %v2889, %v2890
      %v2892 = vrot.slane %v2890, 4
      %v2893 = vrot.slane %v2750, 5
      %v2894 = vsel %vm1767, %v2892, %v2893
      %v2895 = vrot.slane %v2751, 5
      %v2896 = vrot.slane %v2895, 4
      %v2897 = vrot.slane %v2752, 5
      %v2898 = vsel %vm1767, %v2896, %v2897
      %v2899 = vrot.slane %v2897, 4
      %v2900 = vrot.slane %v2753, 5
      %v2901 = vsel %vm1767, %v2899, %v2900
      %v2902 = vrot.slane %v2754, 5
      %v2903 = vrot.slane %v2902, 4
      %v2904 = vrot.slane %v2755, 5
      %v2905 = vsel %vm1767, %v2903, %v2904
      %v2906 = vrot.slane %v2904, 4
      %v2907 = vrot.slane %v2756, 5
      %v2908 = vsel %vm1767, %v2906, %v2907
      %v2909 = vrot.slane %v2757, 5
      %v2910 = vrot.slane %v2909, 4
      %v2911 = vrot.slane %v2758, 5
      %v2912 = vsel %vm1767, %v2910, %v2911
      %v2913 = vrot.slane %v2911, 4
      %v2914 = vrot.slane %v2759, 5
      %v2915 = vsel %vm1767, %v2913, %v2914
      %v2916 = vrot.slane %v2760, 5
      %v2917 = vrot.slane %v2916, 4
      %v2918 = vrot.slane %v2761, 5
      %v2919 = vsel %vm1767, %v2917, %v2918
      %v2920 = vrot.slane %v2918, 4
      %v2921 = vrot.slane %v2762, 5
      %v2922 = vsel %vm1767, %v2920, %v2921
      %v2923 = vunpack.c.l.b16 %v2814
      %v2924 = vunpack.c.l.b16 %v2817
      %v2925 = vunpack.c.l.b16 %v2821
      %v2926 = vunpack.c.l.b16 %v2824
      %v2927 = vunpack.c.l.b16 %v2828
      %v2928 = vunpack.c.l.b16 %v2831
      %v2929 = vunpack.c.l.b16 %v2835
      %v2930 = vunpack.c.l.b16 %v2838
      %v2931 = vunpack.c.l.b16 %v2842
      %v2932 = vunpack.c.l.b16 %v2845
      %v2933 = vunpack.c.l.b16 %v2849
      %v2934 = vunpack.c.l.b16 %v2852
      %v2935 = vunpack.c.l.b16 %v2856
      %v2936 = vunpack.c.l.b16 %v2859
      %v2937 = vunpack.c.l.b16 %v2863
      %v2938 = vunpack.c.l.b16 %v2866
      %v2939 = vunpack.c.l.b16 %v2870
      %v2940 = vunpack.c.l.b16 %v2873
      %v2941 = vunpack.c.l.b16 %v2877
      %v2942 = vunpack.c.l.b16 %v2880
      %v2943 = vunpack.c.l.b16 %v2884
      %v2944 = vunpack.c.l.b16 %v2887
      %v2945 = vunpack.c.l.b16 %v2891
      %v2946 = vunpack.c.l.b16 %v2894
      %v2947 = vunpack.c.l.b16 %v2898
      %v2948 = vunpack.c.l.b16 %v2901
      %v2949 = vunpack.c.l.b16 %v2905
      %v2950 = vunpack.c.l.b16 %v2908
      %v2951 = vunpack.c.l.b16 %v2912
      %v2952 = vunpack.c.l.b16 %v2915
      %v2953 = vunpack.c.l.b16 %v2919
      %v2954 = vunpack.c.l.b16 %v2922
      %v2955 = vpack.c.b16 %v2924, %v2923
      %v2956 = vpack.c.b16 %v2926, %v2925
      %v2957 = vpack.c.b16 %v2928, %v2927
      %v2958 = vpack.c.b16 %v2930, %v2929
      %v2959 = vpack.c.b16 %v2932, %v2931
      %v2960 = vpack.c.b16 %v2934, %v2933
      %v2961 = vpack.c.b16 %v2936, %v2935
      %v2962 = vpack.c.b16 %v2938, %v2937
      %v2963 = vpack.c.b16 %v2940, %v2939
      %v2964 = vpack.c.b16 %v2942, %v2941
      %v2965 = vpack.c.b16 %v2944, %v2943
      %v2966 = vpack.c.b16 %v2946, %v2945
      %v2967 = vpack.c.b16 %v2948, %v2947
      %v2968 = vpack.c.b16 %v2950, %v2949
      %v2969 = vpack.c.b16 %v2952, %v2951
      %v2970 = vpack.c.b16 %v2954, %v2953
      %2971 = vrot.lane.b32.xlu0 %v2955, 20
      %v2972 = vpop.permute.xlu0 %2971
      %2973 = vrot.lane.b32.xlu0 %v2956, 20
      %v2974 = vpop.permute.xlu0 %2973
      %2975 = vrot.lane.b32.xlu0 %v2957, 20
      %v2976 = vpop.permute.xlu0 %2975
      %2977 = vrot.lane.b32.xlu0 %v2958, 20
      %v2978 = vpop.permute.xlu0 %2977
      %2979 = vrot.lane.b32.xlu0 %v2959, 20
      %v2980 = vpop.permute.xlu0 %2979
      %2981 = vrot.lane.b32.xlu0 %v2960, 20
      %v2982 = vpop.permute.xlu0 %2981
      %2983 = vrot.lane.b32.xlu0 %v2961, 20
      %v2984 = vpop.permute.xlu0 %2983
      %2985 = vrot.lane.b32.xlu0 %v2962, 20
      %v2986 = vpop.permute.xlu0 %2985
      %2987 = vrot.lane.b32.xlu0 %v2963, 20
      %v2988 = vpop.permute.xlu0 %2987
      %2989 = vrot.lane.b32.xlu0 %v2964, 20
      %v2990 = vpop.permute.xlu0 %2989
      %2991 = vrot.lane.b32.xlu0 %v2965, 20
      %v2992 = vpop.permute.xlu0 %2991
      %2993 = vrot.lane.b32.xlu0 %v2966, 20
      %v2994 = vpop.permute.xlu0 %2993
      %2995 = vrot.lane.b32.xlu0 %v2967, 20
      %v2996 = vpop.permute.xlu0 %2995
      %2997 = vrot.lane.b32.xlu0 %v2968, 20
      %v2998 = vpop.permute.xlu0 %2997
      %2999 = vrot.lane.b32.xlu0 %v2969, 20
      %v3000 = vpop.permute.xlu0 %2999
      %3001 = vrot.lane.b32.xlu0 %v2970, 20
      %v3002 = vpop.permute.xlu0 %3001
      %vm3019 = vcmask 195744
      %3020 = vst.msk [vmem:[#allocation3] sm:$0xff] %vm3019, %v2972
      %3021 = vst.msk [vmem:[#allocation3 + $0x8] sm:$0xff] %vm3019, %v2974
      %3022 = vst.msk [vmem:[#allocation3 + $0x10] sm:$0xff] %vm3019, %v2976
      %3023 = vst.msk [vmem:[#allocation3 + $0x18] sm:$0xff] %vm3019, %v2978
      %3024 = vst.msk [vmem:[#allocation3 + $0x20] sm:$0xff] %vm3019, %v2980
      %3025 = vst.msk [vmem:[#allocation3 + $0x28] sm:$0xff] %vm3019, %v2982
      %3026 = vst.msk [vmem:[#allocation3 + $0x30] sm:$0xff] %vm3019, %v2984
      %3027 = vst.msk [vmem:[#allocation3 + $0x38] sm:$0xff] %vm3019, %v2986
      %3028 = vst.msk [vmem:[#allocation3 + $0x40] sm:$0xff] %vm3019, %v2988
      %3029 = vst.msk [vmem:[#allocation3 + $0x48] sm:$0xff] %vm3019, %v2990
      %3030 = vst.msk [vmem:[#allocation3 + $0x50] sm:$0xff] %vm3019, %v2992
      %3031 = vst.msk [vmem:[#allocation3 + $0x58] sm:$0xff] %vm3019, %v2994
      %3032 = vst.msk [vmem:[#allocation3 + $0x60] sm:$0xff] %vm3019, %v2996
      %3033 = vst.msk [vmem:[#allocation3 + $0x68] sm:$0xff] %vm3019, %v2998
      %3034 = vst.msk [vmem:[#allocation3 + $0x70] sm:$0xff] %vm3019, %v3000
      %3035 = vst.msk [vmem:[#allocation3 + $0x78] sm:$0xff] %vm3019, %v3002
      %s3036 = scalar_lea.vmem [#allocation2], 24
      %v3037 = vld [vmem:[%s3036] sm:$0xf]
      %v3038 = vld [vmem:[%s3036 + $0x4] sm:$0xf]
      %v3039 = vld [vmem:[%s3036 + $0xc] sm:$0xf]
      %v3040 = vld [vmem:[%s3036 + $0x10] sm:$0xf]
      %v3041 = vld [vmem:[%s3036 + $0x18] sm:$0xf]
      %v3042 = vld [vmem:[%s3036 + $0x1c] sm:$0xf]
      %v3043 = vld [vmem:[%s3036 + $0x24] sm:$0xf]
      %v3044 = vld [vmem:[%s3036 + $0x28] sm:$0xf]
      %v3045 = vld [vmem:[%s3036 + $0x30] sm:$0xf]
      %v3046 = vld [vmem:[%s3036 + $0x34] sm:$0xf]
      %v3047 = vld [vmem:[%s3036 + $0x3c] sm:$0xf]
      %v3048 = vld [vmem:[%s3036 + $0x40] sm:$0xf]
      %v3049 = vld [vmem:[%s3036 + $0x48] sm:$0xf]
      %v3050 = vld [vmem:[%s3036 + $0x4c] sm:$0xf]
      %v3051 = vld [vmem:[%s3036 + $0x54] sm:$0xf]
      %v3052 = vld [vmem:[%s3036 + $0x58] sm:$0xf]
      %v3053 = vld [vmem:[%s3036 + $0x60] sm:$0xf]
      %v3054 = vld [vmem:[%s3036 + $0x64] sm:$0xf]
      %v3055 = vld [vmem:[%s3036 + $0x6c] sm:$0xf]
      %v3056 = vld [vmem:[%s3036 + $0x70] sm:$0xf]
      %v3057 = vld [vmem:[%s3036 + $0x78] sm:$0xf]
      %v3058 = vld [vmem:[%s3036 + $0x7c] sm:$0xf]
      %v3059 = vld [vmem:[%s3036 + $0x84] sm:$0xf]
      %v3060 = vld [vmem:[%s3036 + $0x88] sm:$0xf]
      %v3061 = vld [vmem:[%s3036 + $0x90] sm:$0xf]
      %v3062 = vld [vmem:[%s3036 + $0x94] sm:$0xf]
      %v3063 = vld [vmem:[%s3036 + $0x9c] sm:$0xf]
      %v3064 = vld [vmem:[%s3036 + $0xa0] sm:$0xf]
      %v3065 = vld [vmem:[%s3036 + $0xa8] sm:$0xf]
      %v3066 = vld [vmem:[%s3036 + $0xac] sm:$0xf]
      %v3067 = vld [vmem:[%s3036 + $0xb4] sm:$0xf]
      %v3068 = vld [vmem:[%s3036 + $0xb8] sm:$0xf]
      %v3101 = vunpack.c.l.b16 %v3037
      %v3102 = vunpack.c.l.b16 %v3038
      %v3103 = vunpack.c.l.b16 %v3039
      %v3104 = vunpack.c.l.b16 %v3040
      %v3105 = vunpack.c.l.b16 %v3041
      %v3106 = vunpack.c.l.b16 %v3042
      %v3107 = vunpack.c.l.b16 %v3043
      %v3108 = vunpack.c.l.b16 %v3044
      %v3109 = vunpack.c.l.b16 %v3045
      %v3110 = vunpack.c.l.b16 %v3046
      %v3111 = vunpack.c.l.b16 %v3047
      %v3112 = vunpack.c.l.b16 %v3048
      %v3113 = vunpack.c.l.b16 %v3049
      %v3114 = vunpack.c.l.b16 %v3050
      %v3115 = vunpack.c.l.b16 %v3051
      %v3116 = vunpack.c.l.b16 %v3052
      %v3117 = vunpack.c.l.b16 %v3053
      %v3118 = vunpack.c.l.b16 %v3054
      %v3119 = vunpack.c.l.b16 %v3055
      %v3120 = vunpack.c.l.b16 %v3056
      %v3121 = vunpack.c.l.b16 %v3057
      %v3122 = vunpack.c.l.b16 %v3058
      %v3123 = vunpack.c.l.b16 %v3059
      %v3124 = vunpack.c.l.b16 %v3060
      %v3125 = vunpack.c.l.b16 %v3061
      %v3126 = vunpack.c.l.b16 %v3062
      %v3127 = vunpack.c.l.b16 %v3063
      %v3128 = vunpack.c.l.b16 %v3064
      %v3129 = vunpack.c.l.b16 %v3065
      %v3130 = vunpack.c.l.b16 %v3066
      %v3131 = vunpack.c.l.b16 %v3067
      %v3132 = vunpack.c.l.b16 %v3068
      %v3133 = vpack.c.b16 %v3102, %v3101
      %v3134 = vpack.c.b16 %v3104, %v3103
      %v3135 = vpack.c.b16 %v3106, %v3105
      %v3136 = vpack.c.b16 %v3108, %v3107
      %v3137 = vpack.c.b16 %v3110, %v3109
      %v3138 = vpack.c.b16 %v3112, %v3111
      %v3139 = vpack.c.b16 %v3114, %v3113
      %v3140 = vpack.c.b16 %v3116, %v3115
      %v3141 = vpack.c.b16 %v3118, %v3117
      %v3142 = vpack.c.b16 %v3120, %v3119
      %v3143 = vpack.c.b16 %v3122, %v3121
      %v3144 = vpack.c.b16 %v3124, %v3123
      %v3145 = vpack.c.b16 %v3126, %v3125
      %v3146 = vpack.c.b16 %v3128, %v3127
      %v3147 = vpack.c.b16 %v3130, %v3129
      %v3148 = vpack.c.b16 %v3132, %v3131
      %3149 = vrot.lane.b32.xlu0 %v3133, 24
      %v3150 = vpop.permute.xlu0 %3149
      %3151 = vrot.lane.b32.xlu0 %v3134, 24
      %v3152 = vpop.permute.xlu0 %3151
      %3153 = vrot.lane.b32.xlu0 %v3135, 24
      %v3154 = vpop.permute.xlu0 %3153
      %3155 = vrot.lane.b32.xlu0 %v3136, 24
      %v3156 = vpop.permute.xlu0 %3155
      %3157 = vrot.lane.b32.xlu0 %v3137, 24
      %v3158 = vpop.permute.xlu0 %3157
      %3159 = vrot.lane.b32.xlu0 %v3138, 24
      %v3160 = vpop.permute.xlu0 %3159
      %3161 = vrot.lane.b32.xlu0 %v3139, 24
      %v3162 = vpop.permute.xlu0 %3161
      %3163 = vrot.lane.b32.xlu0 %v3140, 24
      %v3164 = vpop.permute.xlu0 %3163
      %3165 = vrot.lane.b32.xlu0 %v3141, 24
      %v3166 = vpop.permute.xlu0 %3165
      %3167 = vrot.lane.b32.xlu0 %v3142, 24
      %v3168 = vpop.permute.xlu0 %3167
      %3169 = vrot.lane.b32.xlu0 %v3143, 24
      %v3170 = vpop.permute.xlu0 %3169
      %3171 = vrot.lane.b32.xlu0 %v3144, 24
      %v3172 = vpop.permute.xlu0 %3171
      %3173 = vrot.lane.b32.xlu0 %v3145, 24
      %v3174 = vpop.permute.xlu0 %3173
      %3175 = vrot.lane.b32.xlu0 %v3146, 24
      %v3176 = vpop.permute.xlu0 %3175
      %3177 = vrot.lane.b32.xlu0 %v3147, 24
      %v3178 = vpop.permute.xlu0 %3177
      %3179 = vrot.lane.b32.xlu0 %v3148, 24
      %v3180 = vpop.permute.xlu0 %3179
      %vm3197 = vcmask 228544
      %3198 = vst.msk [vmem:[#allocation3] sm:$0xff] %vm3197, %v3150
      %3199 = vst.msk [vmem:[#allocation3 + $0x8] sm:$0xff] %vm3197, %v3152
      %3200 = vst.msk [vmem:[#allocation3 + $0x10] sm:$0xff] %vm3197, %v3154
      %3201 = vst.msk [vmem:[#allocation3 + $0x18] sm:$0xff] %vm3197, %v3156
      %3202 = vst.msk [vmem:[#allocation3 + $0x20] sm:$0xff] %vm3197, %v3158
      %3203 = vst.msk [vmem:[#allocation3 + $0x28] sm:$0xff] %vm3197, %v3160
      %3204 = vst.msk [vmem:[#allocation3 + $0x30] sm:$0xff] %vm3197, %v3162
      %3205 = vst.msk [vmem:[#allocation3 + $0x38] sm:$0xff] %vm3197, %v3164
      %3206 = vst.msk [vmem:[#allocation3 + $0x40] sm:$0xff] %vm3197, %v3166
      %3207 = vst.msk [vmem:[#allocation3 + $0x48] sm:$0xff] %vm3197, %v3168
      %3208 = vst.msk [vmem:[#allocation3 + $0x50] sm:$0xff] %vm3197, %v3170
      %3209 = vst.msk [vmem:[#allocation3 + $0x58] sm:$0xff] %vm3197, %v3172
      %3210 = vst.msk [vmem:[#allocation3 + $0x60] sm:$0xff] %vm3197, %v3174
      %3211 = vst.msk [vmem:[#allocation3 + $0x68] sm:$0xff] %vm3197, %v3176
      %3212 = vst.msk [vmem:[#allocation3 + $0x70] sm:$0xff] %vm3197, %v3178
      %3213 = vst.msk [vmem:[#allocation3 + $0x78] sm:$0xff] %vm3197, %v3180
      %v3214 = vld [vmem:[%s3036] sm:$0xf]
      %v3215 = vld [vmem:[%s3036 + $0x4] sm:$0xf]
      %v3216 = vld [vmem:[%s3036 + $0x8] sm:$0x1]
      %v3217 = vld [vmem:[%s3036 + $0xc] sm:$0xf]
      %v3218 = vld [vmem:[%s3036 + $0x10] sm:$0xf]
      %v3219 = vld [vmem:[%s3036 + $0x14] sm:$0x1]
      %v3220 = vld [vmem:[%s3036 + $0x18] sm:$0xf]
      %v3221 = vld [vmem:[%s3036 + $0x1c] sm:$0xf]
      %v3222 = vld [vmem:[%s3036 + $0x20] sm:$0x1]
      %v3223 = vld [vmem:[%s3036 + $0x24] sm:$0xf]
      %v3224 = vld [vmem:[%s3036 + $0x28] sm:$0xf]
      %v3225 = vld [vmem:[%s3036 + $0x2c] sm:$0x1]
      %v3226 = vld [vmem:[%s3036 + $0x30] sm:$0xf]
      %v3227 = vld [vmem:[%s3036 + $0x34] sm:$0xf]
      %v3228 = vld [vmem:[%s3036 + $0x38] sm:$0x1]
      %v3229 = vld [vmem:[%s3036 + $0x3c] sm:$0xf]
      %v3230 = vld [vmem:[%s3036 + $0x40] sm:$0xf]
      %v3231 = vld [vmem:[%s3036 + $0x44] sm:$0x1]
      %v3232 = vld [vmem:[%s3036 + $0x48] sm:$0xf]
      %v3233 = vld [vmem:[%s3036 + $0x4c] sm:$0xf]
      %v3234 = vld [vmem:[%s3036 + $0x50] sm:$0x1]
      %v3235 = vld [vmem:[%s3036 + $0x54] sm:$0xf]
      %v3236 = vld [vmem:[%s3036 + $0x58] sm:$0xf]
      %v3237 = vld [vmem:[%s3036 + $0x5c] sm:$0x1]
      %v3238 = vld [vmem:[%s3036 + $0x60] sm:$0xf]
      %v3239 = vld [vmem:[%s3036 + $0x64] sm:$0xf]
      %v3240 = vld [vmem:[%s3036 + $0x68] sm:$0x1]
      %v3241 = vld [vmem:[%s3036 + $0x6c] sm:$0xf]
      %v3242 = vld [vmem:[%s3036 + $0x70] sm:$0xf]
      %v3243 = vld [vmem:[%s3036 + $0x74] sm:$0x1]
      %v3244 = vld [vmem:[%s3036 + $0x78] sm:$0xf]
      %v3245 = vld [vmem:[%s3036 + $0x7c] sm:$0xf]
      %v3246 = vld [vmem:[%s3036 + $0x80] sm:$0x1]
      %v3247 = vld [vmem:[%s3036 + $0x84] sm:$0xf]
      %v3248 = vld [vmem:[%s3036 + $0x88] sm:$0xf]
      %v3249 = vld [vmem:[%s3036 + $0x8c] sm:$0x1]
      %v3250 = vld [vmem:[%s3036 + $0x90] sm:$0xf]
      %v3251 = vld [vmem:[%s3036 + $0x94] sm:$0xf]
      %v3252 = vld [vmem:[%s3036 + $0x98] sm:$0x1]
      %v3253 = vld [vmem:[%s3036 + $0x9c] sm:$0xf]
      %v3254 = vld [vmem:[%s3036 + $0xa0] sm:$0xf]
      %v3255 = vld [vmem:[%s3036 + $0xa4] sm:$0x1]
      %v3256 = vld [vmem:[%s3036 + $0xa8] sm:$0xf]
      %v3257 = vld [vmem:[%s3036 + $0xac] sm:$0xf]
      %v3258 = vld [vmem:[%s3036 + $0xb0] sm:$0x1]
      %v3259 = vld [vmem:[%s3036 + $0xb4] sm:$0xf]
      %v3260 = vld [vmem:[%s3036 + $0xb8] sm:$0xf]
      %v3261 = vld [vmem:[%s3036 + $0xbc] sm:$0x1]
      %v3263 = vshrl.u32 %v3214, 16
      %v3265 = vrot.slane %v3263, 4
      %v3266 = vshll.u32 %v3214, 16
      %v3268 = vrot.slane %v3266, 5
      %v3269 = vor.u32 %v3265, %v3268
      %v3270 = vrot.slane %v3269, 4
      %v3272 = vshll.u32 %v3215, 16
      %v3274 = vrot.slane %v3272, 5
      %v3275 = vsel %vm1171, %v3270, %v3274
      %v3276 = vshrl.u32 %v3215, 16
      %v3278 = vrot.slane %v3276, 4
      %v3279 = vor.u32 %v3278, %v3274
      %v3280 = vrot.slane %v3279, 4
      %v3282 = vshll.u32 %v3216, 16
      %v3284 = vrot.slane %v3282, 5
      %v3285 = vsel %vm1171, %v3280, %v3284
      %v3287 = vshrl.u32 %v3217, 16
      %v3289 = vrot.slane %v3287, 4
      %v3290 = vshll.u32 %v3217, 16
      %v3292 = vrot.slane %v3290, 5
      %v3293 = vor.u32 %v3289, %v3292
      %v3294 = vrot.slane %v3293, 4
      %v3296 = vshll.u32 %v3218, 16
      %v3298 = vrot.slane %v3296, 5
      %v3299 = vsel %vm1171, %v3294, %v3298
      %v3300 = vshrl.u32 %v3218, 16
      %v3302 = vrot.slane %v3300, 4
      %v3303 = vor.u32 %v3302, %v3298
      %v3304 = vrot.slane %v3303, 4
      %v3306 = vshll.u32 %v3219, 16
      %v3308 = vrot.slane %v3306, 5
      %v3309 = vsel %vm1171, %v3304, %v3308
      %v3311 = vshrl.u32 %v3220, 16
      %v3313 = vrot.slane %v3311, 4
      %v3314 = vshll.u32 %v3220, 16
      %v3316 = vrot.slane %v3314, 5
      %v3317 = vor.u32 %v3313, %v3316
      %v3318 = vrot.slane %v3317, 4
      %v3320 = vshll.u32 %v3221, 16
      %v3322 = vrot.slane %v3320, 5
      %v3323 = vsel %vm1171, %v3318, %v3322
      %v3324 = vshrl.u32 %v3221, 16
      %v3326 = vrot.slane %v3324, 4
      %v3327 = vor.u32 %v3326, %v3322
      %v3328 = vrot.slane %v3327, 4
      %v3330 = vshll.u32 %v3222, 16
      %v3332 = vrot.slane %v3330, 5
      %v3333 = vsel %vm1171, %v3328, %v3332
      %v3335 = vshrl.u32 %v3223, 16
      %v3337 = vrot.slane %v3335, 4
      %v3338 = vshll.u32 %v3223, 16
      %v3340 = vrot.slane %v3338, 5
      %v3341 = vor.u32 %v3337, %v3340
      %v3342 = vrot.slane %v3341, 4
      %v3344 = vshll.u32 %v3224, 16
      %v3346 = vrot.slane %v3344, 5
      %v3347 = vsel %vm1171, %v3342, %v3346
      %v3348 = vshrl.u32 %v3224, 16
      %v3350 = vrot.slane %v3348, 4
      %v3351 = vor.u32 %v3350, %v3346
      %v3352 = vrot.slane %v3351, 4
      %v3354 = vshll.u32 %v3225, 16
      %v3356 = vrot.slane %v3354, 5
      %v3357 = vsel %vm1171, %v3352, %v3356
      %v3359 = vshrl.u32 %v3226, 16
      %v3361 = vrot.slane %v3359, 4
      %v3362 = vshll.u32 %v3226, 16
      %v3364 = vrot.slane %v3362, 5
      %v3365 = vor.u32 %v3361, %v3364
      %v3366 = vrot.slane %v3365, 4
      %v3368 = vshll.u32 %v3227, 16
      %v3370 = vrot.slane %v3368, 5
      %v3371 = vsel %vm1171, %v3366, %v3370
      %v3372 = vshrl.u32 %v3227, 16
      %v3374 = vrot.slane %v3372, 4
      %v3375 = vor.u32 %v3374, %v3370
      %v3376 = vrot.slane %v3375, 4
      %v3378 = vshll.u32 %v3228, 16
      %v3380 = vrot.slane %v3378, 5
      %v3381 = vsel %vm1171, %v3376, %v3380
      %v3383 = vshrl.u32 %v3229, 16
      %v3385 = vrot.slane %v3383, 4
      %v3386 = vshll.u32 %v3229, 16
      %v3388 = vrot.slane %v3386, 5
      %v3389 = vor.u32 %v3385, %v3388
      %v3390 = vrot.slane %v3389, 4
      %v3392 = vshll.u32 %v3230, 16
      %v3394 = vrot.slane %v3392, 5
      %v3395 = vsel %vm1171, %v3390, %v3394
      %v3396 = vshrl.u32 %v3230, 16
      %v3398 = vrot.slane %v3396, 4
      %v3399 = vor.u32 %v3398, %v3394
      %v3400 = vrot.slane %v3399, 4
      %v3402 = vshll.u32 %v3231, 16
      %v3404 = vrot.slane %v3402, 5
      %v3405 = vsel %vm1171, %v3400, %v3404
      %v3407 = vshrl.u32 %v3232, 16
      %v3409 = vrot.slane %v3407, 4
      %v3410 = vshll.u32 %v3232, 16
      %v3412 = vrot.slane %v3410, 5
      %v3413 = vor.u32 %v3409, %v3412
      %v3414 = vrot.slane %v3413, 4
      %v3416 = vshll.u32 %v3233, 16
      %v3418 = vrot.slane %v3416, 5
      %v3419 = vsel %vm1171, %v3414, %v3418
      %v3420 = vshrl.u32 %v3233, 16
      %v3422 = vrot.slane %v3420, 4
      %v3423 = vor.u32 %v3422, %v3418
      %v3424 = vrot.slane %v3423, 4
      %v3426 = vshll.u32 %v3234, 16
      %v3428 = vrot.slane %v3426, 5
      %v3429 = vsel %vm1171, %v3424, %v3428
      %v3431 = vshrl.u32 %v3235, 16
      %v3433 = vrot.slane %v3431, 4
      %v3434 = vshll.u32 %v3235, 16
      %v3436 = vrot.slane %v3434, 5
      %v3437 = vor.u32 %v3433, %v3436
      %v3438 = vrot.slane %v3437, 4
      %v3440 = vshll.u32 %v3236, 16
      %v3442 = vrot.slane %v3440, 5
      %v3443 = vsel %vm1171, %v3438, %v3442
      %v3444 = vshrl.u32 %v3236, 16
      %v3446 = vrot.slane %v3444, 4
      %v3447 = vor.u32 %v3446, %v3442
      %v3448 = vrot.slane %v3447, 4
      %v3450 = vshll.u32 %v3237, 16
      %v3452 = vrot.slane %v3450, 5
      %v3453 = vsel %vm1171, %v3448, %v3452
      %v3455 = vshrl.u32 %v3238, 16
      %v3457 = vrot.slane %v3455, 4
      %v3458 = vshll.u32 %v3238, 16
      %v3460 = vrot.slane %v3458, 5
      %v3461 = vor.u32 %v3457, %v3460
      %v3462 = vrot.slane %v3461, 4
      %v3464 = vshll.u32 %v3239, 16
      %v3466 = vrot.slane %v3464, 5
      %v3467 = vsel %vm1171, %v3462, %v3466
      %v3468 = vshrl.u32 %v3239, 16
      %v3470 = vrot.slane %v3468, 4
      %v3471 = vor.u32 %v3470, %v3466
      %v3472 = vrot.slane %v3471, 4
      %v3474 = vshll.u32 %v3240, 16
      %v3476 = vrot.slane %v3474, 5
      %v3477 = vsel %vm1171, %v3472, %v3476
      %v3479 = vshrl.u32 %v3241, 16
      %v3481 = vrot.slane %v3479, 4
      %v3482 = vshll.u32 %v3241, 16
      %v3484 = vrot.slane %v3482, 5
      %v3485 = vor.u32 %v3481, %v3484
      %v3486 = vrot.slane %v3485, 4
      %v3488 = vshll.u32 %v3242, 16
      %v3490 = vrot.slane %v3488, 5
      %v3491 = vsel %vm1171, %v3486, %v3490
      %v3492 = vshrl.u32 %v3242, 16
      %v3494 = vrot.slane %v3492, 4
      %v3495 = vor.u32 %v3494, %v3490
      %v3496 = vrot.slane %v3495, 4
      %v3498 = vshll.u32 %v3243, 16
      %v3500 = vrot.slane %v3498, 5
      %v3501 = vsel %vm1171, %v3496, %v3500
      %v3503 = vshrl.u32 %v3244, 16
      %v3505 = vrot.slane %v3503, 4
      %v3506 = vshll.u32 %v3244, 16
      %v3508 = vrot.slane %v3506, 5
      %v3509 = vor.u32 %v3505, %v3508
      %v3510 = vrot.slane %v3509, 4
      %v3512 = vshll.u32 %v3245, 16
      %v3514 = vrot.slane %v3512, 5
      %v3515 = vsel %vm1171, %v3510, %v3514
      %v3516 = vshrl.u32 %v3245, 16
      %v3518 = vrot.slane %v3516, 4
      %v3519 = vor.u32 %v3518, %v3514
      %v3520 = vrot.slane %v3519, 4
      %v3522 = vshll.u32 %v3246, 16
      %v3524 = vrot.slane %v3522, 5
      %v3525 = vsel %vm1171, %v3520, %v3524
      %v3527 = vshrl.u32 %v3247, 16
      %v3529 = vrot.slane %v3527, 4
      %v3530 = vshll.u32 %v3247, 16
      %v3532 = vrot.slane %v3530, 5
      %v3533 = vor.u32 %v3529, %v3532
      %v3534 = vrot.slane %v3533, 4
      %v3536 = vshll.u32 %v3248, 16
      %v3538 = vrot.slane %v3536, 5
      %v3539 = vsel %vm1171, %v3534, %v3538
      %v3540 = vshrl.u32 %v3248, 16
      %v3542 = vrot.slane %v3540, 4
      %v3543 = vor.u32 %v3542, %v3538
      %v3544 = vrot.slane %v3543, 4
      %v3546 = vshll.u32 %v3249, 16
      %v3548 = vrot.slane %v3546, 5
      %v3549 = vsel %vm1171, %v3544, %v3548
      %v3551 = vshrl.u32 %v3250, 16
      %v3553 = vrot.slane %v3551, 4
      %v3554 = vshll.u32 %v3250, 16
      %v3556 = vrot.slane %v3554, 5
      %v3557 = vor.u32 %v3553, %v3556
      %v3558 = vrot.slane %v3557, 4
      %v3560 = vshll.u32 %v3251, 16
      %v3562 = vrot.slane %v3560, 5
      %v3563 = vsel %vm1171, %v3558, %v3562
      %v3564 = vshrl.u32 %v3251, 16
      %v3566 = vrot.slane %v3564, 4
      %v3567 = vor.u32 %v3566, %v3562
      %v3568 = vrot.slane %v3567, 4
      %v3570 = vshll.u32 %v3252, 16
      %v3572 = vrot.slane %v3570, 5
      %v3573 = vsel %vm1171, %v3568, %v3572
      %v3575 = vshrl.u32 %v3253, 16
      %v3577 = vrot.slane %v3575, 4
      %v3578 = vshll.u32 %v3253, 16
      %v3580 = vrot.slane %v3578, 5
      %v3581 = vor.u32 %v3577, %v3580
      %v3582 = vrot.slane %v3581, 4
      %v3584 = vshll.u32 %v3254, 16
      %v3586 = vrot.slane %v3584, 5
      %v3587 = vsel %vm1171, %v3582, %v3586
      %v3588 = vshrl.u32 %v3254, 16
      %v3590 = vrot.slane %v3588, 4
      %v3591 = vor.u32 %v3590, %v3586
      %v3592 = vrot.slane %v3591, 4
      %v3594 = vshll.u32 %v3255, 16
      %v3596 = vrot.slane %v3594, 5
      %v3597 = vsel %vm1171, %v3592, %v3596
      %v3599 = vshrl.u32 %v3256, 16
      %v3601 = vrot.slane %v3599, 4
      %v3602 = vshll.u32 %v3256, 16
      %v3604 = vrot.slane %v3602, 5
      %v3605 = vor.u32 %v3601, %v3604
      %v3606 = vrot.slane %v3605, 4
      %v3608 = vshll.u32 %v3257, 16
      %v3610 = vrot.slane %v3608, 5
      %v3611 = vsel %vm1171, %v3606, %v3610
      %v3612 = vshrl.u32 %v3257, 16
      %v3614 = vrot.slane %v3612, 4
      %v3615 = vor.u32 %v3614, %v3610
      %v3616 = vrot.slane %v3615, 4
      %v3618 = vshll.u32 %v3258, 16
      %v3620 = vrot.slane %v3618, 5
      %v3621 = vsel %vm1171, %v3616, %v3620
      %v3623 = vshrl.u32 %v3259, 16
      %v3625 = vrot.slane %v3623, 4
      %v3626 = vshll.u32 %v3259, 16
      %v3628 = vrot.slane %v3626, 5
      %v3629 = vor.u32 %v3625, %v3628
      %v3630 = vrot.slane %v3629, 4
      %v3632 = vshll.u32 %v3260, 16
      %v3634 = vrot.slane %v3632, 5
      %v3635 = vsel %vm1171, %v3630, %v3634
      %v3636 = vshrl.u32 %v3260, 16
      %v3638 = vrot.slane %v3636, 4
      %v3639 = vor.u32 %v3638, %v3634
      %v3640 = vrot.slane %v3639, 4
      %v3642 = vshll.u32 %v3261, 16
      %v3644 = vrot.slane %v3642, 5
      %v3645 = vsel %vm1171, %v3640, %v3644
      %v3646 = vunpack.c.l.b16 %v3275
      %v3647 = vunpack.c.l.b16 %v3285
      %v3648 = vunpack.c.l.b16 %v3299
      %v3649 = vunpack.c.l.b16 %v3309
      %v3650 = vunpack.c.l.b16 %v3323
      %v3651 = vunpack.c.l.b16 %v3333
      %v3652 = vunpack.c.l.b16 %v3347
      %v3653 = vunpack.c.l.b16 %v3357
      %v3654 = vunpack.c.l.b16 %v3371
      %v3655 = vunpack.c.l.b16 %v3381
      %v3656 = vunpack.c.l.b16 %v3395
      %v3657 = vunpack.c.l.b16 %v3405
      %v3658 = vunpack.c.l.b16 %v3419
      %v3659 = vunpack.c.l.b16 %v3429
      %v3660 = vunpack.c.l.b16 %v3443
      %v3661 = vunpack.c.l.b16 %v3453
      %v3662 = vunpack.c.l.b16 %v3467
      %v3663 = vunpack.c.l.b16 %v3477
      %v3664 = vunpack.c.l.b16 %v3491
      %v3665 = vunpack.c.l.b16 %v3501
      %v3666 = vunpack.c.l.b16 %v3515
      %v3667 = vunpack.c.l.b16 %v3525
      %v3668 = vunpack.c.l.b16 %v3539
      %v3669 = vunpack.c.l.b16 %v3549
      %v3670 = vunpack.c.l.b16 %v3563
      %v3671 = vunpack.c.l.b16 %v3573
      %v3672 = vunpack.c.l.b16 %v3587
      %v3673 = vunpack.c.l.b16 %v3597
      %v3674 = vunpack.c.l.b16 %v3611
      %v3675 = vunpack.c.l.b16 %v3621
      %v3676 = vunpack.c.l.b16 %v3635
      %v3677 = vunpack.c.l.b16 %v3645
      %v3678 = vpack.c.b16 %v3647, %v3646
      %v3679 = vpack.c.b16 %v3649, %v3648
      %v3680 = vpack.c.b16 %v3651, %v3650
      %v3681 = vpack.c.b16 %v3653, %v3652
      %v3682 = vpack.c.b16 %v3655, %v3654
      %v3683 = vpack.c.b16 %v3657, %v3656
      %v3684 = vpack.c.b16 %v3659, %v3658
      %v3685 = vpack.c.b16 %v3661, %v3660
      %v3686 = vpack.c.b16 %v3663, %v3662
      %v3687 = vpack.c.b16 %v3665, %v3664
      %v3688 = vpack.c.b16 %v3667, %v3666
      %v3689 = vpack.c.b16 %v3669, %v3668
      %v3690 = vpack.c.b16 %v3671, %v3670
      %v3691 = vpack.c.b16 %v3673, %v3672
      %v3692 = vpack.c.b16 %v3675, %v3674
      %v3693 = vpack.c.b16 %v3677, %v3676
      %3694 = vrot.lane.b32.xlu0 %v3678, 28
      %v3695 = vpop.permute.xlu0 %3694
      %3696 = vrot.lane.b32.xlu0 %v3679, 28
      %v3697 = vpop.permute.xlu0 %3696
      %3698 = vrot.lane.b32.xlu0 %v3680, 28
      %v3699 = vpop.permute.xlu0 %3698
      %3700 = vrot.lane.b32.xlu0 %v3681, 28
      %v3701 = vpop.permute.xlu0 %3700
      %3702 = vrot.lane.b32.xlu0 %v3682, 28
      %v3703 = vpop.permute.xlu0 %3702
      %3704 = vrot.lane.b32.xlu0 %v3683, 28
      %v3705 = vpop.permute.xlu0 %3704
      %3706 = vrot.lane.b32.xlu0 %v3684, 28
      %v3707 = vpop.permute.xlu0 %3706
      %3708 = vrot.lane.b32.xlu0 %v3685, 28
      %v3709 = vpop.permute.xlu0 %3708
      %3710 = vrot.lane.b32.xlu0 %v3686, 28
      %v3711 = vpop.permute.xlu0 %3710
      %3712 = vrot.lane.b32.xlu0 %v3687, 28
      %v3713 = vpop.permute.xlu0 %3712
      %3714 = vrot.lane.b32.xlu0 %v3688, 28
      %v3715 = vpop.permute.xlu0 %3714
      %3716 = vrot.lane.b32.xlu0 %v3689, 28
      %v3717 = vpop.permute.xlu0 %3716
      %3718 = vrot.lane.b32.xlu0 %v3690, 28
      %v3719 = vpop.permute.xlu0 %3718
      %3720 = vrot.lane.b32.xlu0 %v3691, 28
      %v3721 = vpop.permute.xlu0 %3720
      %3722 = vrot.lane.b32.xlu0 %v3692, 28
      %v3723 = vpop.permute.xlu0 %3722
      %3724 = vrot.lane.b32.xlu0 %v3693, 28
      %v3725 = vpop.permute.xlu0 %3724
      %vm3742 = vcmask 261344
      %3743 = vst.msk [vmem:[#allocation3] sm:$0xff] %vm3742, %v3695
      %3744 = vst.msk [vmem:[#allocation3 + $0x8] sm:$0xff] %vm3742, %v3697
      %3745 = vst.msk [vmem:[#allocation3 + $0x10] sm:$0xff] %vm3742, %v3699
      %3746 = vst.msk [vmem:[#allocation3 + $0x18] sm:$0xff] %vm3742, %v3701
      %3747 = vst.msk [vmem:[#allocation3 + $0x20] sm:$0xff] %vm3742, %v3703
      %3748 = vst.msk [vmem:[#allocation3 + $0x28] sm:$0xff] %vm3742, %v3705
      %3749 = vst.msk [vmem:[#allocation3 + $0x30] sm:$0xff] %vm3742, %v3707
      %3750 = vst.msk [vmem:[#allocation3 + $0x38] sm:$0xff] %vm3742, %v3709
      %3751 = vst.msk [vmem:[#allocation3 + $0x40] sm:$0xff] %vm3742, %v3711
      %3752 = vst.msk [vmem:[#allocation3 + $0x48] sm:$0xff] %vm3742, %v3713
      %3753 = vst.msk [vmem:[#allocation3 + $0x50] sm:$0xff] %vm3742, %v3715
      %3754 = vst.msk [vmem:[#allocation3 + $0x58] sm:$0xff] %vm3742, %v3717
      %3755 = vst.msk [vmem:[#allocation3 + $0x60] sm:$0xff] %vm3742, %v3719
      %3756 = vst.msk [vmem:[#allocation3 + $0x68] sm:$0xff] %vm3742, %v3721
      %3757 = vst.msk [vmem:[#allocation3 + $0x70] sm:$0xff] %vm3742, %v3723
      %3758 = vst.msk [vmem:[#allocation3 + $0x78] sm:$0xff] %vm3742, %v3725
      %v3759 = vld [vmem:[%s3036] sm:$0xe]
      %v3760 = vld [vmem:[%s3036 + $0x4] sm:$0xf]
      %v3761 = vld [vmem:[%s3036 + $0x8] sm:$0x1]
      %v3762 = vld [vmem:[%s3036 + $0xc] sm:$0xe]
      %v3763 = vld [vmem:[%s3036 + $0x10] sm:$0xf]
      %v3764 = vld [vmem:[%s3036 + $0x14] sm:$0x1]
      %v3765 = vld [vmem:[%s3036 + $0x18] sm:$0xe]
      %v3766 = vld [vmem:[%s3036 + $0x1c] sm:$0xf]
      %v3767 = vld [vmem:[%s3036 + $0x20] sm:$0x1]
      %v3768 = vld [vmem:[%s3036 + $0x24] sm:$0xe]
      %v3769 = vld [vmem:[%s3036 + $0x28] sm:$0xf]
      %v3770 = vld [vmem:[%s3036 + $0x2c] sm:$0x1]
      %v3771 = vld [vmem:[%s3036 + $0x30] sm:$0xe]
      %v3772 = vld [vmem:[%s3036 + $0x34] sm:$0xf]
      %v3773 = vld [vmem:[%s3036 + $0x38] sm:$0x1]
      %v3774 = vld [vmem:[%s3036 + $0x3c] sm:$0xe]
      %v3775 = vld [vmem:[%s3036 + $0x40] sm:$0xf]
      %v3776 = vld [vmem:[%s3036 + $0x44] sm:$0x1]
      %v3777 = vld [vmem:[%s3036 + $0x48] sm:$0xe]
      %v3778 = vld [vmem:[%s3036 + $0x4c] sm:$0xf]
      %v3779 = vld [vmem:[%s3036 + $0x50] sm:$0x1]
      %v3780 = vld [vmem:[%s3036 + $0x54] sm:$0xe]
      %v3781 = vld [vmem:[%s3036 + $0x58] sm:$0xf]
      %v3782 = vld [vmem:[%s3036 + $0x5c] sm:$0x1]
      %v3783 = vld [vmem:[%s3036 + $0x60] sm:$0xe]
      %v3784 = vld [vmem:[%s3036 + $0x64] sm:$0xf]
      %v3785 = vld [vmem:[%s3036 + $0x68] sm:$0x1]
      %v3786 = vld [vmem:[%s3036 + $0x6c] sm:$0xe]
      %v3787 = vld [vmem:[%s3036 + $0x70] sm:$0xf]
      %v3788 = vld [vmem:[%s3036 + $0x74] sm:$0x1]
      %v3789 = vld [vmem:[%s3036 + $0x78] sm:$0xe]
      %v3790 = vld [vmem:[%s3036 + $0x7c] sm:$0xf]
      %v3791 = vld [vmem:[%s3036 + $0x80] sm:$0x1]
      %v3792 = vld [vmem:[%s3036 + $0x84] sm:$0xe]
      %v3793 = vld [vmem:[%s3036 + $0x88] sm:$0xf]
      %v3794 = vld [vmem:[%s3036 + $0x8c] sm:$0x1]
      %v3795 = vld [vmem:[%s3036 + $0x90] sm:$0xe]
      %v3796 = vld [vmem:[%s3036 + $0x94] sm:$0xf]
      %v3797 = vld [vmem:[%s3036 + $0x98] sm:$0x1]
      %v3798 = vld [vmem:[%s3036 + $0x9c] sm:$0xe]
      %v3799 = vld [vmem:[%s3036 + $0xa0] sm:$0xf]
      %v3800 = vld [vmem:[%s3036 + $0xa4] sm:$0x1]
      %v3801 = vld [vmem:[%s3036 + $0xa8] sm:$0xe]
      %v3802 = vld [vmem:[%s3036 + $0xac] sm:$0xf]
      %v3803 = vld [vmem:[%s3036 + $0xb0] sm:$0x1]
      %v3804 = vld [vmem:[%s3036 + $0xb4] sm:$0xe]
      %v3805 = vld [vmem:[%s3036 + $0xb8] sm:$0xf]
      %v3806 = vld [vmem:[%s3036 + $0xbc] sm:$0x1]
      %v3855 = vrot.slane %v3759, 5
      %v3856 = vrot.slane %v3855, 4
      %v3857 = vrot.slane %v3760, 5
      %v3858 = vsel %vm1767, %v3856, %v3857
      %v3859 = vrot.slane %v3857, 4
      %v3860 = vrot.slane %v3761, 5
      %v3861 = vsel %vm1767, %v3859, %v3860
      %v3862 = vrot.slane %v3762, 5
      %v3863 = vrot.slane %v3862, 4
      %v3864 = vrot.slane %v3763, 5
      %v3865 = vsel %vm1767, %v3863, %v3864
      %v3866 = vrot.slane %v3864, 4
      %v3867 = vrot.slane %v3764, 5
      %v3868 = vsel %vm1767, %v3866, %v3867
      %v3869 = vrot.slane %v3765, 5
      %v3870 = vrot.slane %v3869, 4
      %v3871 = vrot.slane %v3766, 5
      %v3872 = vsel %vm1767, %v3870, %v3871
      %v3873 = vrot.slane %v3871, 4
      %v3874 = vrot.slane %v3767, 5
      %v3875 = vsel %vm1767, %v3873, %v3874
      %v3876 = vrot.slane %v3768, 5
      %v3877 = vrot.slane %v3876, 4
      %v3878 = vrot.slane %v3769, 5
      %v3879 = vsel %vm1767, %v3877, %v3878
      %v3880 = vrot.slane %v3878, 4
      %v3881 = vrot.slane %v3770, 5
      %v3882 = vsel %vm1767, %v3880, %v3881
      %v3883 = vrot.slane %v3771, 5
      %v3884 = vrot.slane %v3883, 4
      %v3885 = vrot.slane %v3772, 5
      %v3886 = vsel %vm1767, %v3884, %v3885
      %v3887 = vrot.slane %v3885, 4
      %v3888 = vrot.slane %v3773, 5
      %v3889 = vsel %vm1767, %v3887, %v3888
      %v3890 = vrot.slane %v3774, 5
      %v3891 = vrot.slane %v3890, 4
      %v3892 = vrot.slane %v3775, 5
      %v3893 = vsel %vm1767, %v3891, %v3892
      %v3894 = vrot.slane %v3892, 4
      %v3895 = vrot.slane %v3776, 5
      %v3896 = vsel %vm1767, %v3894, %v3895
      %v3897 = vrot.slane %v3777, 5
      %v3898 = vrot.slane %v3897, 4
      %v3899 = vrot.slane %v3778, 5
      %v3900 = vsel %vm1767, %v3898, %v3899
      %v3901 = vrot.slane %v3899, 4
      %v3902 = vrot.slane %v3779, 5
      %v3903 = vsel %vm1767, %v3901, %v3902
      %v3904 = vrot.slane %v3780, 5
      %v3905 = vrot.slane %v3904, 4
      %v3906 = vrot.slane %v3781, 5
      %v3907 = vsel %vm1767, %v3905, %v3906
      %v3908 = vrot.slane %v3906, 4
      %v3909 = vrot.slane %v3782, 5
      %v3910 = vsel %vm1767, %v3908, %v3909
      %v3911 = vrot.slane %v3783, 5
      %v3912 = vrot.slane %v3911, 4
      %v3913 = vrot.slane %v3784, 5
      %v3914 = vsel %vm1767, %v3912, %v3913
      %v3915 = vrot.slane %v3913, 4
      %v3916 = vrot.slane %v3785, 5
      %v3917 = vsel %vm1767, %v3915, %v3916
      %v3918 = vrot.slane %v3786, 5
      %v3919 = vrot.slane %v3918, 4
      %v3920 = vrot.slane %v3787, 5
      %v3921 = vsel %vm1767, %v3919, %v3920
      %v3922 = vrot.slane %v3920, 4
      %v3923 = vrot.slane %v3788, 5
      %v3924 = vsel %vm1767, %v3922, %v3923
      %v3925 = vrot.slane %v3789, 5
      %v3926 = vrot.slane %v3925, 4
      %v3927 = vrot.slane %v3790, 5
      %v3928 = vsel %vm1767, %v3926, %v3927
      %v3929 = vrot.slane %v3927, 4
      %v3930 = vrot.slane %v3791, 5
      %v3931 = vsel %vm1767, %v3929, %v3930
      %v3932 = vrot.slane %v3792, 5
      %v3933 = vrot.slane %v3932, 4
      %v3934 = vrot.slane %v3793, 5
      %v3935 = vsel %vm1767, %v3933, %v3934
      %v3936 = vrot.slane %v3934, 4
      %v3937 = vrot.slane %v3794, 5
      %v3938 = vsel %vm1767, %v3936, %v3937
      %v3939 = vrot.slane %v3795, 5
      %v3940 = vrot.slane %v3939, 4
      %v3941 = vrot.slane %v3796, 5
      %v3942 = vsel %vm1767, %v3940, %v3941
      %v3943 = vrot.slane %v3941, 4
      %v3944 = vrot.slane %v3797, 5
      %v3945 = vsel %vm1767, %v3943, %v3944
      %v3946 = vrot.slane %v3798, 5
      %v3947 = vrot.slane %v3946, 4
      %v3948 = vrot.slane %v3799, 5
      %v3949 = vsel %vm1767, %v3947, %v3948
      %v3950 = vrot.slane %v3948, 4
      %v3951 = vrot.slane %v3800, 5
      %v3952 = vsel %vm1767, %v3950, %v3951
      %v3953 = vrot.slane %v3801, 5
      %v3954 = vrot.slane %v3953, 4
      %v3955 = vrot.slane %v3802, 5
      %v3956 = vsel %vm1767, %v3954, %v3955
      %v3957 = vrot.slane %v3955, 4
      %v3958 = vrot.slane %v3803, 5
      %v3959 = vsel %vm1767, %v3957, %v3958
      %v3960 = vrot.slane %v3804, 5
      %v3961 = vrot.slane %v3960, 4
      %v3962 = vrot.slane %v3805, 5
      %v3963 = vsel %vm1767, %v3961, %v3962
      %v3964 = vrot.slane %v3962, 4
      %v3965 = vrot.slane %v3806, 5
      %v3966 = vsel %vm1767, %v3964, %v3965
      %v3967 = vunpack.c.l.b16 %v3858
      %v3968 = vunpack.c.l.b16 %v3861
      %v3969 = vunpack.c.l.b16 %v3865
      %v3970 = vunpack.c.l.b16 %v3868
      %v3971 = vunpack.c.l.b16 %v3872
      %v3972 = vunpack.c.l.b16 %v3875
      %v3973 = vunpack.c.l.b16 %v3879
      %v3974 = vunpack.c.l.b16 %v3882
      %v3975 = vunpack.c.l.b16 %v3886
      %v3976 = vunpack.c.l.b16 %v3889
      %v3977 = vunpack.c.l.b16 %v3893
      %v3978 = vunpack.c.l.b16 %v3896
      %v3979 = vunpack.c.l.b16 %v3900
      %v3980 = vunpack.c.l.b16 %v3903
      %v3981 = vunpack.c.l.b16 %v3907
      %v3982 = vunpack.c.l.b16 %v3910
      %v3983 = vunpack.c.l.b16 %v3914
      %v3984 = vunpack.c.l.b16 %v3917
      %v3985 = vunpack.c.l.b16 %v3921
      %v3986 = vunpack.c.l.b16 %v3924
      %v3987 = vunpack.c.l.b16 %v3928
      %v3988 = vunpack.c.l.b16 %v3931
      %v3989 = vunpack.c.l.b16 %v3935
      %v3990 = vunpack.c.l.b16 %v3938
      %v3991 = vunpack.c.l.b16 %v3942
      %v3992 = vunpack.c.l.b16 %v3945
      %v3993 = vunpack.c.l.b16 %v3949
      %v3994 = vunpack.c.l.b16 %v3952
      %v3995 = vunpack.c.l.b16 %v3956
      %v3996 = vunpack.c.l.b16 %v3959
      %v3997 = vunpack.c.l.b16 %v3963
      %v3998 = vunpack.c.l.b16 %v3966
      %v3999 = vpack.c.b16 %v3968, %v3967
      %v4000 = vpack.c.b16 %v3970, %v3969
      %v4001 = vpack.c.b16 %v3972, %v3971
      %v4002 = vpack.c.b16 %v3974, %v3973
      %v4003 = vpack.c.b16 %v3976, %v3975
      %v4004 = vpack.c.b16 %v3978, %v3977
      %v4005 = vpack.c.b16 %v3980, %v3979
      %v4006 = vpack.c.b16 %v3982, %v3981
      %v4007 = vpack.c.b16 %v3984, %v3983
      %v4008 = vpack.c.b16 %v3986, %v3985
      %v4009 = vpack.c.b16 %v3988, %v3987
      %v4010 = vpack.c.b16 %v3990, %v3989
      %v4011 = vpack.c.b16 %v3992, %v3991
      %v4012 = vpack.c.b16 %v3994, %v3993
      %v4013 = vpack.c.b16 %v3996, %v3995
      %v4014 = vpack.c.b16 %v3998, %v3997
      %4015 = vrot.lane.b32.xlu0 %v3999, 32
      %v4016 = vpop.permute.xlu0 %4015
      %4017 = vrot.lane.b32.xlu0 %v4000, 32
      %v4018 = vpop.permute.xlu0 %4017
      %4019 = vrot.lane.b32.xlu0 %v4001, 32
      %v4020 = vpop.permute.xlu0 %4019
      %4021 = vrot.lane.b32.xlu0 %v4002, 32
      %v4022 = vpop.permute.xlu0 %4021
      %4023 = vrot.lane.b32.xlu0 %v4003, 32
      %v4024 = vpop.permute.xlu0 %4023
      %4025 = vrot.lane.b32.xlu0 %v4004, 32
      %v4026 = vpop.permute.xlu0 %4025
      %4027 = vrot.lane.b32.xlu0 %v4005, 32
      %v4028 = vpop.permute.xlu0 %4027
      %4029 = vrot.lane.b32.xlu0 %v4006, 32
      %v4030 = vpop.permute.xlu0 %4029
      %4031 = vrot.lane.b32.xlu0 %v4007, 32
      %v4032 = vpop.permute.xlu0 %4031
      %4033 = vrot.lane.b32.xlu0 %v4008, 32
      %v4034 = vpop.permute.xlu0 %4033
      %4035 = vrot.lane.b32.xlu0 %v4009, 32
      %v4036 = vpop.permute.xlu0 %4035
      %4037 = vrot.lane.b32.xlu0 %v4010, 32
      %v4038 = vpop.permute.xlu0 %4037
      %4039 = vrot.lane.b32.xlu0 %v4011, 32
      %v4040 = vpop.permute.xlu0 %4039
      %4041 = vrot.lane.b32.xlu0 %v4012, 32
      %v4042 = vpop.permute.xlu0 %4041
      %4043 = vrot.lane.b32.xlu0 %v4013, 32
      %v4044 = vpop.permute.xlu0 %4043
      %4045 = vrot.lane.b32.xlu0 %v4014, 32
      %v4046 = vpop.permute.xlu0 %4045
      %vm4063 = vcmask 294144
      %4064 = vst.msk [vmem:[#allocation3] sm:$0xff] %vm4063, %v4016
      %4065 = vst.msk [vmem:[#allocation3 + $0x8] sm:$0xff] %vm4063, %v4018
      %4066 = vst.msk [vmem:[#allocation3 + $0x10] sm:$0xff] %vm4063, %v4020
      %4067 = vst.msk [vmem:[#allocation3 + $0x18] sm:$0xff] %vm4063, %v4022
      %4068 = vst.msk [vmem:[#allocation3 + $0x20] sm:$0xff] %vm4063, %v4024
      %4069 = vst.msk [vmem:[#allocation3 + $0x28] sm:$0xff] %vm4063, %v4026
      %4070 = vst.msk [vmem:[#allocation3 + $0x30] sm:$0xff] %vm4063, %v4028
      %4071 = vst.msk [vmem:[#allocation3 + $0x38] sm:$0xff] %vm4063, %v4030
      %4072 = vst.msk [vmem:[#allocation3 + $0x40] sm:$0xff] %vm4063, %v4032
      %4073 = vst.msk [vmem:[#allocation3 + $0x48] sm:$0xff] %vm4063, %v4034
      %4074 = vst.msk [vmem:[#allocation3 + $0x50] sm:$0xff] %vm4063, %v4036
      %4075 = vst.msk [vmem:[#allocation3 + $0x58] sm:$0xff] %vm4063, %v4038
      %4076 = vst.msk [vmem:[#allocation3 + $0x60] sm:$0xff] %vm4063, %v4040
      %4077 = vst.msk [vmem:[#allocation3 + $0x68] sm:$0xff] %vm4063, %v4042
      %4078 = vst.msk [vmem:[#allocation3 + $0x70] sm:$0xff] %vm4063, %v4044
      %4079 = vst.msk [vmem:[#allocation3 + $0x78] sm:$0xff] %vm4063, %v4046
      %v4080 = vld [vmem:[#allocation3] sm:$0xff]
      %v4081 = vld [vmem:[#allocation3 + $0x8] sm:$0xff]
      %v4082 = vld [vmem:[#allocation3 + $0x10] sm:$0xff]
      %v4083 = vld [vmem:[#allocation3 + $0x18] sm:$0xff]
      %v4084 = vld [vmem:[#allocation3 + $0x20] sm:$0xff]
      %v4085 = vld [vmem:[#allocation3 + $0x28] sm:$0xff]
      %v4086 = vld [vmem:[#allocation3 + $0x30] sm:$0xff]
      %v4087 = vld [vmem:[#allocation3 + $0x38] sm:$0xff]
      %v4088 = vld [vmem:[#allocation3 + $0x40] sm:$0xff]
      %v4089 = vld [vmem:[#allocation3 + $0x48] sm:$0xff]
      %v4090 = vld [vmem:[#allocation3 + $0x50] sm:$0xff]
      %v4091 = vld [vmem:[#allocation3 + $0x58] sm:$0xff]
      %v4092 = vld [vmem:[#allocation3 + $0x60] sm:$0xff]
      %v4093 = vld [vmem:[#allocation3 + $0x68] sm:$0xff]
      %v4094 = vld [vmem:[#allocation3 + $0x70] sm:$0xff]
      %v4095 = vld [vmem:[#allocation3 + $0x78] sm:$0xff]
      %v4096 = vld [vmem:[%s1] sm:$0xf]
      %v4097 = vld [vmem:[%s1 + $0x4] sm:$0xf]
      %v4098 = vld [vmem:[%s1 + $0x8] sm:$0xf]
      %v4099 = vld [vmem:[%s1 + $0xc] sm:$0xf]
      %v4100 = vld [vmem:[%s1 + $0x10] sm:$0x3]
      %v4106 = vunpack.c.l.b16 %v4096
      %v4107 = vunpack.c.l.b16 %v4097
      %v4108 = vunpack.c.l.b16 %v4098
      %v4109 = vunpack.c.l.b16 %v4099
      %v4110 = vunpack.c.l.b16 %v4100
      %v4111 = vpack.c.b16 %v4107, %v4106
      %v4112 = vpack.c.b16 %v4109, %v4108
      %v4113 = vpack.c.b16 %v4110, %v4110
      %vm4116 = vcmask 293888
      %v4118 = vsel %vm4116, %v4080, 0
      %v4121 = vsel %vm4116, %v4081, 0
      %v4124 = vsel %vm4116, %v4082, 0
      %v4127 = vsel %vm4116, %v4083, 0
      %v4130 = vsel %vm4116, %v4084, 0
      %v4133 = vsel %vm4116, %v4085, 0
      %v4136 = vsel %vm4116, %v4086, 0
      %v4139 = vsel %vm4116, %v4087, 0
      %v4142 = vsel %vm4116, %v4088, 0
      %v4145 = vsel %vm4116, %v4089, 0
      %v4148 = vsel %vm4116, %v4090, 0
      %v4151 = vsel %vm4116, %v4091, 0
      %v4154 = vsel %vm4116, %v4092, 0
      %v4157 = vsel %vm4116, %v4093, 0
      %v4160 = vsel %vm4116, %v4094, 0
      %v4163 = vsel %vm4116, %v4095, 0
      %vm4165 = vcmask 1041408
      %v4167 = vsel %vm4165, %v4113, 0
      %4169 = vmatprep.subr.bf16.mxu0 0
      %4170 = vmatpush1.bf16.msra.mxu0 %v4111
      %4171 = vmatprep.subr.bf16.mxu0 0
      %4172 = vmatpush1.bf16.msra.mxu0 %v4112
      %4173 = vmatprep.subr.bf16.mxu0 0
      %4174 = vmatpush1.bf16.msra.mxu0 %v4167
      %4175 = vmatprep.subr.bf16.mxu0 0
      %4176 = vmatpush1.bf16.msra.mxu0 0
      %4177 = vmatprep.subr.bf16.mxu0 0
      %4178 = vmatpush1.bf16.msra.mxu0 0
      %4179 = vmatprep.subr.bf16.mxu0 0
      %4180 = vmatpush1.bf16.msra.mxu0 0
      %4181 = vmatprep.subr.bf16.mxu0 0
      %4182 = vmatpush1.bf16.msra.mxu0 0
      %4183 = vmatprep.subr.bf16.mxu0 0
      %4184 = vmatpush1.bf16.msra.mxu0 0
      %4185 = vmatprep.subr.bf16.mxu0 0
      %4186 = vmatpush1.bf16.msra.mxu0 0
      %4187 = vmatprep.subr.bf16.mxu0 0
      %4188 = vmatpush1.bf16.msra.mxu0 0
      %4189 = vmatprep.subr.bf16.mxu0 0
      %4190 = vmatpush1.bf16.msra.mxu0 0
      %4191 = vmatprep.subr.bf16.mxu0 0
      %4192 = vmatpush1.bf16.msra.mxu0 0
      %4193 = vmatprep.subr.bf16.mxu0 0
      %4194 = vmatpush1.bf16.msra.mxu0 0
      %4195 = vmatprep.subr.bf16.mxu0 0
      %4196 = vmatpush1.bf16.msra.mxu0 0
      %4197 = vmatprep.subr.bf16.mxu0 0
      %4198 = vmatpush1.bf16.msra.mxu0 0
      %4199 = vmatprep.subr.bf16.mxu0 0
      %4200 = vmatpush1.bf16.msra.mxu0 0
      %4201 = vmatprep.mubr.bf16.mxu0 0
      %4202 = vmatmul.mubr.bf16.gmra.mrb[0].mxu0 %v4118
      %v4203 = vpop.f32.mrb[0].mxu0
      %v4204 = vadd.f32 0.0, %v4203
      %v4205 = vpop.f32.mrb[0].mxu0
      %v4206 = vpop.f32.mrb[0].mxu0
      %v4207 = vadd.f32 0.0, %v4206
      %v4208 = vpop.f32.mrb[0].mxu0
      %4209 = vmatprep.mubr.bf16.mxu0 0
      %4210 = vmatmul.mubr.bf16.gmra.mrb[0].mxu0 %v4121
      %v4211 = vpop.f32.mrb[0].mxu0
      %v4212 = vadd.f32 0.0, %v4211
      %v4213 = vpop.f32.mrb[0].mxu0
      %v4214 = vpop.f32.mrb[0].mxu0
      %v4215 = vadd.f32 0.0, %v4214
      %v4216 = vpop.f32.mrb[0].mxu0
      %4217 = vmatprep.mubr.bf16.mxu0 0
      %4218 = vmatmul.mubr.bf16.gmra.mrb[0].mxu0 %v4124
      %v4219 = vpop.f32.mrb[0].mxu0
      %v4220 = vadd.f32 0.0, %v4219
      %v4221 = vpop.f32.mrb[0].mxu0
      %v4222 = vpop.f32.mrb[0].mxu0
      %v4223 = vadd.f32 0.0, %v4222
      %v4224 = vpop.f32.mrb[0].mxu0
      %4225 = vmatprep.mubr.bf16.mxu0 0
      %4226 = vmatmul.mubr.bf16.gmra.mrb[0].mxu0 %v4127
      %v4227 = vpop.f32.mrb[0].mxu0
      %v4228 = vadd.f32 0.0, %v4227
      %v4229 = vpop.f32.mrb[0].mxu0
      %v4230 = vpop.f32.mrb[0].mxu0
      %v4231 = vadd.f32 0.0, %v4230
      %v4232 = vpop.f32.mrb[0].mxu0
      %4233 = vmatprep.mubr.bf16.mxu0 0
      %4234 = vmatmul.mubr.bf16.gmra.mrb[0].mxu0 %v4130
      %v4235 = vpop.f32.mrb[0].mxu0
      %v4236 = vadd.f32 0.0, %v4235
      %v4237 = vpop.f32.mrb[0].mxu0
      %v4238 = vpop.f32.mrb[0].mxu0
      %v4239 = vadd.f32 0.0, %v4238
      %v4240 = vpop.f32.mrb[0].mxu0
      %4241 = vmatprep.mubr.bf16.mxu0 0
      %4242 = vmatmul.mubr.bf16.gmra.mrb[0].mxu0 %v4133
      %v4243 = vpop.f32.mrb[0].mxu0
      %v4244 = vadd.f32 0.0, %v4243
      %v4245 = vpop.f32.mrb[0].mxu0
      %v4246 = vpop.f32.mrb[0].mxu0
      %v4247 = vadd.f32 0.0, %v4246
      %v4248 = vpop.f32.mrb[0].mxu0
      %4249 = vmatprep.mubr.bf16.mxu0 0
      %4250 = vmatmul.mubr.bf16.gmra.mrb[0].mxu0 %v4136
      %v4251 = vpop.f32.mrb[0].mxu0
      %v4252 = vadd.f32 0.0, %v4251
      %v4253 = vpop.f32.mrb[0].mxu0
      %v4254 = vpop.f32.mrb[0].mxu0
      %v4255 = vadd.f32 0.0, %v4254
      %v4256 = vpop.f32.mrb[0].mxu0
      %4257 = vmatprep.mubr.bf16.mxu0 0
      %4258 = vmatmul.mubr.bf16.gmra.mrb[0].mxu0 %v4139
      %v4259 = vpop.f32.mrb[0].mxu0
      %v4260 = vadd.f32 0.0, %v4259
      %v4261 = vpop.f32.mrb[0].mxu0
      %v4262 = vpop.f32.mrb[0].mxu0
      %v4263 = vadd.f32 0.0, %v4262
      %v4264 = vpop.f32.mrb[0].mxu0
      %4265 = vmatprep.mubr.bf16.mxu0 0
      %4266 = vmatmul.mubr.bf16.gmra.mrb[0].mxu0 %v4142
      %v4267 = vpop.f32.mrb[0].mxu0
      %v4268 = vadd.f32 0.0, %v4267
      %v4269 = vpop.f32.mrb[0].mxu0
      %v4270 = vpop.f32.mrb[0].mxu0
      %v4271 = vadd.f32 0.0, %v4270
      %v4272 = vpop.f32.mrb[0].mxu0
      %4273 = vmatprep.mubr.bf16.mxu0 0
      %4274 = vmatmul.mubr.bf16.gmra.mrb[0].mxu0 %v4145
      %v4275 = vpop.f32.mrb[0].mxu0
      %v4276 = vadd.f32 0.0, %v4275
      %v4277 = vpop.f32.mrb[0].mxu0
      %v4278 = vpop.f32.mrb[0].mxu0
      %v4279 = vadd.f32 0.0, %v4278
      %v4280 = vpop.f32.mrb[0].mxu0
      %4281 = vmatprep.mubr.bf16.mxu0 0
      %4282 = vmatmul.mubr.bf16.gmra.mrb[0].mxu0 %v4148
      %v4283 = vpop.f32.mrb[0].mxu0
      %v4284 = vadd.f32 0.0, %v4283
      %v4285 = vpop.f32.mrb[0].mxu0
      %v4286 = vpop.f32.mrb[0].mxu0
      %v4287 = vadd.f32 0.0, %v4286
      %v4288 = vpop.f32.mrb[0].mxu0
      %4289 = vmatprep.mubr.bf16.mxu0 0
      %4290 = vmatmul.mubr.bf16.gmra.mrb[0].mxu0 %v4151
      %v4291 = vpop.f32.mrb[0].mxu0
      %v4292 = vadd.f32 0.0, %v4291
      %v4293 = vpop.f32.mrb[0].mxu0
      %v4294 = vpop.f32.mrb[0].mxu0
      %v4295 = vadd.f32 0.0, %v4294
      %v4296 = vpop.f32.mrb[0].mxu0
      %4297 = vmatprep.mubr.bf16.mxu0 0
      %4298 = vmatmul.mubr.bf16.gmra.mrb[0].mxu0 %v4154
      %v4299 = vpop.f32.mrb[0].mxu0
      %v4300 = vadd.f32 0.0, %v4299
      %v4301 = vpop.f32.mrb[0].mxu0
      %v4302 = vpop.f32.mrb[0].mxu0
      %v4303 = vadd.f32 0.0, %v4302
      %v4304 = vpop.f32.mrb[0].mxu0
      %4305 = vmatprep.mubr.bf16.mxu0 0
      %4306 = vmatmul.mubr.bf16.gmra.mrb[0].mxu0 %v4157
      %v4307 = vpop.f32.mrb[0].mxu0
      %v4308 = vadd.f32 0.0, %v4307
      %v4309 = vpop.f32.mrb[0].mxu0
      %v4310 = vpop.f32.mrb[0].mxu0
      %v4311 = vadd.f32 0.0, %v4310
      %v4312 = vpop.f32.mrb[0].mxu0
      %4313 = vmatprep.mubr.bf16.mxu0 0
      %4314 = vmatmul.mubr.bf16.gmra.mrb[0].mxu0 %v4160
      %v4315 = vpop.f32.mrb[0].mxu0
      %v4316 = vadd.f32 0.0, %v4315
      %v4317 = vpop.f32.mrb[0].mxu0
      %v4318 = vpop.f32.mrb[0].mxu0
      %v4319 = vadd.f32 0.0, %v4318
      %v4320 = vpop.f32.mrb[0].mxu0
      %4321 = vmatprep.mubr.bf16.mxu0 0
      %4322 = vmatmul.mubr.bf16.gmra.mrb[0].mxu0 %v4163
      %v4323 = vpop.f32.mrb[0].mxu0
      %v4324 = vadd.f32 0.0, %v4323
      %v4325 = vpop.f32.mrb[0].mxu0
      %v4326 = vpop.f32.mrb[0].mxu0
      %v4327 = vadd.f32 0.0, %v4326
      %v4328 = vpop.f32.mrb[0].mxu0
      %4329 = vdwg.mxu0
      %v4330 = vld [vmem:[%s2] sm:$0x1]
      %v4332 = vlaneseq
      %v4333 = vshrl.u32 %v4332, 7
      %v4334 = vsub.s32 0, %v4333
      %v4335 = vrot.slane %v4330, %v4334
      %v4337 = vmul.f32 %v4204, %v4335
      %v4338 = vmul.f32 %v4207, %v4335
      %v4339 = vmul.f32 %v4212, %v4335
      %v4340 = vmul.f32 %v4215, %v4335
      %v4341 = vmul.f32 %v4220, %v4335
      %v4342 = vmul.f32 %v4223, %v4335
      %v4343 = vmul.f32 %v4228, %v4335
      %v4344 = vmul.f32 %v4231, %v4335
      %v4345 = vmul.f32 %v4236, %v4335
      %v4346 = vmul.f32 %v4239, %v4335
      %v4347 = vmul.f32 %v4244, %v4335
      %v4348 = vmul.f32 %v4247, %v4335
      %v4349 = vmul.f32 %v4252, %v4335
      %v4350 = vmul.f32 %v4255, %v4335
      %v4351 = vmul.f32 %v4260, %v4335
      %v4352 = vmul.f32 %v4263, %v4335
      %v4353 = vmul.f32 %v4268, %v4335
      %v4354 = vmul.f32 %v4271, %v4335
      %v4355 = vmul.f32 %v4276, %v4335
      %v4356 = vmul.f32 %v4279, %v4335
      %v4357 = vmul.f32 %v4284, %v4335
      %v4358 = vmul.f32 %v4287, %v4335
      %v4359 = vmul.f32 %v4292, %v4335
      %v4360 = vmul.f32 %v4295, %v4335
      %v4361 = vmul.f32 %v4300, %v4335
      %v4362 = vmul.f32 %v4303, %v4335
      %v4363 = vmul.f32 %v4308, %v4335
      %v4364 = vmul.f32 %v4311, %v4335
      %v4365 = vmul.f32 %v4316, %v4335
      %v4366 = vmul.f32 %v4319, %v4335
      %v4367 = vmul.f32 %v4324, %v4335
      %v4368 = vmul.f32 %v4327, %v4335
      %v4369 = vld [vmem:[%s3] sm:$0x1]
      %v4371 = vlaneseq
      %v4372 = vshrl.u32 %v4371, 7
      %v4373 = vsub.s32 0, %v4372
      %v4374 = vrot.slane %v4369, %v4373
      %v4376 = vadd.f32 %v4337, %v4374
      %v4377 = vadd.f32 %v4338, %v4374
      %v4378 = vadd.f32 %v4339, %v4374
      %v4379 = vadd.f32 %v4340, %v4374
      %v4380 = vadd.f32 %v4341, %v4374
      %v4381 = vadd.f32 %v4342, %v4374
      %v4382 = vadd.f32 %v4343, %v4374
      %v4383 = vadd.f32 %v4344, %v4374
      %v4384 = vadd.f32 %v4345, %v4374
      %v4385 = vadd.f32 %v4346, %v4374
      %v4386 = vadd.f32 %v4347, %v4374
      %v4387 = vadd.f32 %v4348, %v4374
      %v4388 = vadd.f32 %v4349, %v4374
      %v4389 = vadd.f32 %v4350, %v4374
      %v4390 = vadd.f32 %v4351, %v4374
      %v4391 = vadd.f32 %v4352, %v4374
      %v4392 = vadd.f32 %v4353, %v4374
      %v4393 = vadd.f32 %v4354, %v4374
      %v4394 = vadd.f32 %v4355, %v4374
      %v4395 = vadd.f32 %v4356, %v4374
      %v4396 = vadd.f32 %v4357, %v4374
      %v4397 = vadd.f32 %v4358, %v4374
      %v4398 = vadd.f32 %v4359, %v4374
      %v4399 = vadd.f32 %v4360, %v4374
      %v4400 = vadd.f32 %v4361, %v4374
      %v4401 = vadd.f32 %v4362, %v4374
      %v4402 = vadd.f32 %v4363, %v4374
      %v4403 = vadd.f32 %v4364, %v4374
      %v4404 = vadd.f32 %v4365, %v4374
      %v4405 = vadd.f32 %v4366, %v4374
      %v4406 = vadd.f32 %v4367, %v4374
      %v4407 = vadd.f32 %v4368, %v4374
      %v4408 = vmax.f32 %v4376, 0.0
      %v4409 = vmax.f32 %v4377, 0.0
      %v4410 = vmax.f32 %v4378, 0.0
      %v4411 = vmax.f32 %v4379, 0.0
      %v4412 = vmax.f32 %v4380, 0.0
      %v4413 = vmax.f32 %v4381, 0.0
      %v4414 = vmax.f32 %v4382, 0.0
      %v4415 = vmax.f32 %v4383, 0.0
      %v4416 = vmax.f32 %v4384, 0.0
      %v4417 = vmax.f32 %v4385, 0.0
      %v4418 = vmax.f32 %v4386, 0.0
      %v4419 = vmax.f32 %v4387, 0.0
      %v4420 = vmax.f32 %v4388, 0.0
      %v4421 = vmax.f32 %v4389, 0.0
      %v4422 = vmax.f32 %v4390, 0.0
      %v4423 = vmax.f32 %v4391, 0.0
      %v4424 = vmax.f32 %v4392, 0.0
      %v4425 = vmax.f32 %v4393, 0.0
      %v4426 = vmax.f32 %v4394, 0.0
      %v4427 = vmax.f32 %v4395, 0.0
      %v4428 = vmax.f32 %v4396, 0.0
      %v4429 = vmax.f32 %v4397, 0.0
      %v4430 = vmax.f32 %v4398, 0.0
      %v4431 = vmax.f32 %v4399, 0.0
      %v4432 = vmax.f32 %v4400, 0.0
      %v4433 = vmax.f32 %v4401, 0.0
      %v4434 = vmax.f32 %v4402, 0.0
      %v4435 = vmax.f32 %v4403, 0.0
      %v4436 = vmax.f32 %v4404, 0.0
      %v4437 = vmax.f32 %v4405, 0.0
      %v4438 = vmax.f32 %v4406, 0.0
      %v4439 = vmax.f32 %v4407, 0.0
      %v4440 = vpack.c.bf16 %v4409, %v4408
      %v4441 = vpack.c.bf16 %v4411, %v4410
      %v4442 = vpack.c.bf16 %v4413, %v4412
      %v4443 = vpack.c.bf16 %v4415, %v4414
      %v4444 = vpack.c.bf16 %v4417, %v4416
      %v4445 = vpack.c.bf16 %v4419, %v4418
      %v4446 = vpack.c.bf16 %v4421, %v4420
      %v4447 = vpack.c.bf16 %v4423, %v4422
      %v4448 = vpack.c.bf16 %v4425, %v4424
      %v4449 = vpack.c.bf16 %v4427, %v4426
      %v4450 = vpack.c.bf16 %v4429, %v4428
      %v4451 = vpack.c.bf16 %v4431, %v4430
      %v4452 = vpack.c.bf16 %v4433, %v4432
      %v4453 = vpack.c.bf16 %v4435, %v4434
      %v4454 = vpack.c.bf16 %v4437, %v4436
      %v4455 = vpack.c.bf16 %v4439, %v4438
      %v4472 = vunpack.c.l.b16 %v4440
      %v4473 = vunpack.c.h.b16 %v4440
      %v4474 = vunpack.c.l.b16 %v4441
      %v4475 = vunpack.c.h.b16 %v4441
      %v4476 = vunpack.c.l.b16 %v4442
      %v4477 = vunpack.c.h.b16 %v4442
      %v4478 = vunpack.c.l.b16 %v4443
      %v4479 = vunpack.c.h.b16 %v4443
      %v4480 = vunpack.c.l.b16 %v4444
      %v4481 = vunpack.c.h.b16 %v4444
      %v4482 = vunpack.c.l.b16 %v4445
      %v4483 = vunpack.c.h.b16 %v4445
      %v4484 = vunpack.c.l.b16 %v4446
      %v4485 = vunpack.c.h.b16 %v4446
      %v4486 = vunpack.c.l.b16 %v4447
      %v4487 = vunpack.c.h.b16 %v4447
      %v4488 = vunpack.c.l.b16 %v4448
      %v4489 = vunpack.c.h.b16 %v4448
      %v4490 = vunpack.c.l.b16 %v4449
      %v4491 = vunpack.c.h.b16 %v4449
      %v4492 = vunpack.c.l.b16 %v4450
      %v4493 = vunpack.c.h.b16 %v4450
      %v4494 = vunpack.c.l.b16 %v4451
      %v4495 = vunpack.c.h.b16 %v4451
      %v4496 = vunpack.c.l.b16 %v4452
      %v4497 = vunpack.c.h.b16 %v4452
      %v4498 = vunpack.c.l.b16 %v4453
      %v4499 = vunpack.c.h.b16 %v4453
      %v4500 = vunpack.c.l.b16 %v4454
      %v4501 = vunpack.c.h.b16 %v4454
      %v4502 = vunpack.c.l.b16 %v4455
      %v4503 = vunpack.c.h.b16 %v4455
      %v4504 = vpack.c.b16 %v4472, %v4472
      %v4505 = vpack.c.b16 %v4473, %v4473
      %v4506 = vpack.c.b16 %v4474, %v4474
      %v4507 = vpack.c.b16 %v4475, %v4475
      %v4508 = vpack.c.b16 %v4476, %v4476
      %v4509 = vpack.c.b16 %v4477, %v4477
      %v4510 = vpack.c.b16 %v4478, %v4478
      %v4511 = vpack.c.b16 %v4479, %v4479
      %v4512 = vpack.c.b16 %v4480, %v4480
      %v4513 = vpack.c.b16 %v4481, %v4481
      %v4514 = vpack.c.b16 %v4482, %v4482
      %v4515 = vpack.c.b16 %v4483, %v4483
      %v4516 = vpack.c.b16 %v4484, %v4484
      %v4517 = vpack.c.b16 %v4485, %v4485
      %v4518 = vpack.c.b16 %v4486, %v4486
      %v4519 = vpack.c.b16 %v4487, %v4487
      %v4520 = vpack.c.b16 %v4488, %v4488
      %v4521 = vpack.c.b16 %v4489, %v4489
      %v4522 = vpack.c.b16 %v4490, %v4490
      %v4523 = vpack.c.b16 %v4491, %v4491
      %v4524 = vpack.c.b16 %v4492, %v4492
      %v4525 = vpack.c.b16 %v4493, %v4493
      %v4526 = vpack.c.b16 %v4494, %v4494
      %v4527 = vpack.c.b16 %v4495, %v4495
      %v4528 = vpack.c.b16 %v4496, %v4496
      %v4529 = vpack.c.b16 %v4497, %v4497
      %v4530 = vpack.c.b16 %v4498, %v4498
      %v4531 = vpack.c.b16 %v4499, %v4499
      %v4532 = vpack.c.b16 %v4500, %v4500
      %v4533 = vpack.c.b16 %v4501, %v4501
      %v4534 = vpack.c.b16 %v4502, %v4502
      %v4535 = vpack.c.b16 %v4503, %v4503
      %v4537 = vshrl.u32 %v4504, 16
      %v4539 = vrot.slane %v4537, 7
      %v4540 = vshll.u32 %v4504, 16
      %v4542 = vor.u32 %v4539, %v4540
      %v4543 = vrot.slane %v4539, 4
      %v4545 = vshrl.u32 %v4505, 16
      %v4547 = vrot.slane %v4545, 7
      %v4548 = vshll.u32 %v4505, 16
      %v4550 = vor.u32 %v4547, %v4548
      %v4551 = vsel %vm536, %v4543, %v4550
      %v4552 = vrot.slane %v4547, 4
      %v4554 = vshrl.u32 %v4506, 16
      %v4556 = vrot.slane %v4554, 7
      %v4557 = vshll.u32 %v4506, 16
      %v4559 = vor.u32 %v4556, %v4557
      %v4560 = vrot.slane %v4556, 4
      %v4562 = vshrl.u32 %v4507, 16
      %v4564 = vrot.slane %v4562, 7
      %v4565 = vshll.u32 %v4507, 16
      %v4567 = vor.u32 %v4564, %v4565
      %v4568 = vsel %vm536, %v4560, %v4567
      %v4569 = vrot.slane %v4564, 4
      %v4571 = vshrl.u32 %v4508, 16
      %v4573 = vrot.slane %v4571, 7
      %v4574 = vshll.u32 %v4508, 16
      %v4576 = vor.u32 %v4573, %v4574
      %v4577 = vrot.slane %v4573, 4
      %v4579 = vshrl.u32 %v4509, 16
      %v4581 = vrot.slane %v4579, 7
      %v4582 = vshll.u32 %v4509, 16
      %v4584 = vor.u32 %v4581, %v4582
      %v4585 = vsel %vm536, %v4577, %v4584
      %v4586 = vrot.slane %v4581, 4
      %v4588 = vshrl.u32 %v4510, 16
      %v4590 = vrot.slane %v4588, 7
      %v4591 = vshll.u32 %v4510, 16
      %v4593 = vor.u32 %v4590, %v4591
      %v4594 = vrot.slane %v4590, 4
      %v4596 = vshrl.u32 %v4511, 16
      %v4598 = vrot.slane %v4596, 7
      %v4599 = vshll.u32 %v4511, 16
      %v4601 = vor.u32 %v4598, %v4599
      %v4602 = vsel %vm536, %v4594, %v4601
      %v4603 = vrot.slane %v4598, 4
      %v4605 = vshrl.u32 %v4512, 16
      %v4607 = vrot.slane %v4605, 7
      %v4608 = vshll.u32 %v4512, 16
      %v4610 = vor.u32 %v4607, %v4608
      %v4611 = vrot.slane %v4607, 4
      %v4613 = vshrl.u32 %v4513, 16
      %v4615 = vrot.slane %v4613, 7
      %v4616 = vshll.u32 %v4513, 16
      %v4618 = vor.u32 %v4615, %v4616
      %v4619 = vsel %vm536, %v4611, %v4618
      %v4620 = vrot.slane %v4615, 4
      %v4622 = vshrl.u32 %v4514, 16
      %v4624 = vrot.slane %v4622, 7
      %v4625 = vshll.u32 %v4514, 16
      %v4627 = vor.u32 %v4624, %v4625
      %v4628 = vrot.slane %v4624, 4
      %v4630 = vshrl.u32 %v4515, 16
      %v4632 = vrot.slane %v4630, 7
      %v4633 = vshll.u32 %v4515, 16
      %v4635 = vor.u32 %v4632, %v4633
      %v4636 = vsel %vm536, %v4628, %v4635
      %v4637 = vrot.slane %v4632, 4
      %v4639 = vshrl.u32 %v4516, 16
      %v4641 = vrot.slane %v4639, 7
      %v4642 = vshll.u32 %v4516, 16
      %v4644 = vor.u32 %v4641, %v4642
      %v4645 = vrot.slane %v4641, 4
      %v4647 = vshrl.u32 %v4517, 16
      %v4649 = vrot.slane %v4647, 7
      %v4650 = vshll.u32 %v4517, 16
      %v4652 = vor.u32 %v4649, %v4650
      %v4653 = vsel %vm536, %v4645, %v4652
      %v4654 = vrot.slane %v4649, 4
      %v4656 = vshrl.u32 %v4518, 16
      %v4658 = vrot.slane %v4656, 7
      %v4659 = vshll.u32 %v4518, 16
      %v4661 = vor.u32 %v4658, %v4659
      %v4662 = vrot.slane %v4658, 4
      %v4664 = vshrl.u32 %v4519, 16
      %v4666 = vrot.slane %v4664, 7
      %v4667 = vshll.u32 %v4519, 16
      %v4669 = vor.u32 %v4666, %v4667
      %v4670 = vsel %vm536, %v4662, %v4669
      %v4671 = vrot.slane %v4666, 4
      %v4673 = vshrl.u32 %v4520, 16
      %v4675 = vrot.slane %v4673, 7
      %v4676 = vshll.u32 %v4520, 16
      %v4678 = vor.u32 %v4675, %v4676
      %v4679 = vrot.slane %v4675, 4
      %v4681 = vshrl.u32 %v4521, 16
      %v4683 = vrot.slane %v4681, 7
      %v4684 = vshll.u32 %v4521, 16
      %v4686 = vor.u32 %v4683, %v4684
      %v4687 = vsel %vm536, %v4679, %v4686
      %v4688 = vrot.slane %v4683, 4
      %v4690 = vshrl.u32 %v4522, 16
      %v4692 = vrot.slane %v4690, 7
      %v4693 = vshll.u32 %v4522, 16
      %v4695 = vor.u32 %v4692, %v4693
      %v4696 = vrot.slane %v4692, 4
      %v4698 = vshrl.u32 %v4523, 16
      %v4700 = vrot.slane %v4698, 7
      %v4701 = vshll.u32 %v4523, 16
      %v4703 = vor.u32 %v4700, %v4701
      %v4704 = vsel %vm536, %v4696, %v4703
      %v4705 = vrot.slane %v4700, 4
      %v4707 = vshrl.u32 %v4524, 16
      %v4709 = vrot.slane %v4707, 7
      %v4710 = vshll.u32 %v4524, 16
      %v4712 = vor.u32 %v4709, %v4710
      %v4713 = vrot.slane %v4709, 4
      %v4715 = vshrl.u32 %v4525, 16
      %v4717 = vrot.slane %v4715, 7
      %v4718 = vshll.u32 %v4525, 16
      %v4720 = vor.u32 %v4717, %v4718
      %v4721 = vsel %vm536, %v4713, %v4720
      %v4722 = vrot.slane %v4717, 4
      %v4724 = vshrl.u32 %v4526, 16
      %v4726 = vrot.slane %v4724, 7
      %v4727 = vshll.u32 %v4526, 16
      %v4729 = vor.u32 %v4726, %v4727
      %v4730 = vrot.slane %v4726, 4
      %v4732 = vshrl.u32 %v4527, 16
      %v4734 = vrot.slane %v4732, 7
      %v4735 = vshll.u32 %v4527, 16
      %v4737 = vor.u32 %v4734, %v4735
      %v4738 = vsel %vm536, %v4730, %v4737
      %v4739 = vrot.slane %v4734, 4
      %v4741 = vshrl.u32 %v4528, 16
      %v4743 = vrot.slane %v4741, 7
      %v4744 = vshll.u32 %v4528, 16
      %v4746 = vor.u32 %v4743, %v4744
      %v4747 = vrot.slane %v4743, 4
      %v4749 = vshrl.u32 %v4529, 16
      %v4751 = vrot.slane %v4749, 7
      %v4752 = vshll.u32 %v4529, 16
      %v4754 = vor.u32 %v4751, %v4752
      %v4755 = vsel %vm536, %v4747, %v4754
      %v4756 = vrot.slane %v4751, 4
      %v4758 = vshrl.u32 %v4530, 16
      %v4760 = vrot.slane %v4758, 7
      %v4761 = vshll.u32 %v4530, 16
      %v4763 = vor.u32 %v4760, %v4761
      %v4764 = vrot.slane %v4760, 4
      %v4766 = vshrl.u32 %v4531, 16
      %v4768 = vrot.slane %v4766, 7
      %v4769 = vshll.u32 %v4531, 16
      %v4771 = vor.u32 %v4768, %v4769
      %v4772 = vsel %vm536, %v4764, %v4771
      %v4773 = vrot.slane %v4768, 4
      %v4775 = vshrl.u32 %v4532, 16
      %v4777 = vrot.slane %v4775, 7
      %v4778 = vshll.u32 %v4532, 16
      %v4780 = vor.u32 %v4777, %v4778
      %v4781 = vrot.slane %v4777, 4
      %v4783 = vshrl.u32 %v4533, 16
      %v4785 = vrot.slane %v4783, 7
      %v4786 = vshll.u32 %v4533, 16
      %v4788 = vor.u32 %v4785, %v4786
      %v4789 = vsel %vm536, %v4781, %v4788
      %v4790 = vrot.slane %v4785, 4
      %v4792 = vshrl.u32 %v4534, 16
      %v4794 = vrot.slane %v4792, 7
      %v4795 = vshll.u32 %v4534, 16
      %v4797 = vor.u32 %v4794, %v4795
      %v4798 = vrot.slane %v4794, 4
      %v4800 = vshrl.u32 %v4535, 16
      %v4802 = vrot.slane %v4800, 7
      %v4803 = vshll.u32 %v4535, 16
      %v4805 = vor.u32 %v4802, %v4803
      %v4806 = vsel %vm536, %v4798, %v4805
      %v4807 = vrot.slane %v4802, 4
      %v4856 = vld [vmem:[%s857] sm:$0xf]
      %v4857 = vsel %vm860, %v4542, %v4856
      %4858 = vst [vmem:[%s857] sm:$0xf] %v4857
      %4859 = vst.msk [vmem:[%s857 + $0x4] sm:$0xf] %vm864, %v4551
      %v4860 = vld [vmem:[%s857 + $0x8] sm:$0x1]
      %v4861 = vsel %vm867, %v4552, %v4860
      %4862 = vst [vmem:[%s857 + $0x8] sm:$0x1] %v4861
      %v4863 = vld [vmem:[%s857 + $0xc] sm:$0xf]
      %v4864 = vsel %vm860, %v4559, %v4863
      %4865 = vst [vmem:[%s857 + $0xc] sm:$0xf] %v4864
      %4866 = vst.msk [vmem:[%s857 + $0x10] sm:$0xf] %vm864, %v4568
      %v4867 = vld [vmem:[%s857 + $0x14] sm:$0x1]
      %v4868 = vsel %vm867, %v4569, %v4867
      %4869 = vst [vmem:[%s857 + $0x14] sm:$0x1] %v4868
      %v4870 = vld [vmem:[%s857 + $0x18] sm:$0xf]
      %v4871 = vsel %vm860, %v4576, %v4870
      %4872 = vst [vmem:[%s857 + $0x18] sm:$0xf] %v4871
      %4873 = vst.msk [vmem:[%s857 + $0x1c] sm:$0xf] %vm864, %v4585
      %v4874 = vld [vmem:[%s857 + $0x20] sm:$0x1]
      %v4875 = vsel %vm867, %v4586, %v4874
      %4876 = vst [vmem:[%s857 + $0x20] sm:$0x1] %v4875
      %v4877 = vld [vmem:[%s857 + $0x24] sm:$0xf]
      %v4878 = vsel %vm860, %v4593, %v4877
      %4879 = vst [vmem:[%s857 + $0x24] sm:$0xf] %v4878
      %4880 = vst.msk [vmem:[%s857 + $0x28] sm:$0xf] %vm864, %v4602
      %v4881 = vld [vmem:[%s857 + $0x2c] sm:$0x1]
      %v4882 = vsel %vm867, %v4603, %v4881
      %4883 = vst [vmem:[%s857 + $0x2c] sm:$0x1] %v4882
      %v4884 = vld [vmem:[%s857 + $0x30] sm:$0xf]
      %v4885 = vsel %vm860, %v4610, %v4884
      %4886 = vst [vmem:[%s857 + $0x30] sm:$0xf] %v4885
      %4887 = vst.msk [vmem:[%s857 + $0x34] sm:$0xf] %vm864, %v4619
      %v4888 = vld [vmem:[%s857 + $0x38] sm:$0x1]
      %v4889 = vsel %vm867, %v4620, %v4888
      %4890 = vst [vmem:[%s857 + $0x38] sm:$0x1] %v4889
      %v4891 = vld [vmem:[%s857 + $0x3c] sm:$0xf]
      %v4892 = vsel %vm860, %v4627, %v4891
      %4893 = vst [vmem:[%s857 + $0x3c] sm:$0xf] %v4892
      %4894 = vst.msk [vmem:[%s857 + $0x40] sm:$0xf] %vm864, %v4636
      %v4895 = vld [vmem:[%s857 + $0x44] sm:$0x1]
      %v4896 = vsel %vm867, %v4637, %v4895
      %4897 = vst [vmem:[%s857 + $0x44] sm:$0x1] %v4896
      %v4898 = vld [vmem:[%s857 + $0x48] sm:$0xf]
      %v4899 = vsel %vm860, %v4644, %v4898
      %4900 = vst [vmem:[%s857 + $0x48] sm:$0xf] %v4899
      %4901 = vst.msk [vmem:[%s857 + $0x4c] sm:$0xf] %vm864, %v4653
      %v4902 = vld [vmem:[%s857 + $0x50] sm:$0x1]
      %v4903 = vsel %vm867, %v4654, %v4902
      %4904 = vst [vmem:[%s857 + $0x50] sm:$0x1] %v4903
      %v4905 = vld [vmem:[%s857 + $0x54] sm:$0xf]
      %v4906 = vsel %vm860, %v4661, %v4905
      %4907 = vst [vmem:[%s857 + $0x54] sm:$0xf] %v4906
      %4908 = vst.msk [vmem:[%s857 + $0x58] sm:$0xf] %vm864, %v4670
      %v4909 = vld [vmem:[%s857 + $0x5c] sm:$0x1]
      %v4910 = vsel %vm867, %v4671, %v4909
      %4911 = vst [vmem:[%s857 + $0x5c] sm:$0x1] %v4910
      %v4912 = vld [vmem:[%s857 + $0x60] sm:$0xf]
      %v4913 = vsel %vm860, %v4678, %v4912
      %4914 = vst [vmem:[%s857 + $0x60] sm:$0xf] %v4913
      %4915 = vst.msk [vmem:[%s857 + $0x64] sm:$0xf] %vm864, %v4687
      %v4916 = vld [vmem:[%s857 + $0x68] sm:$0x1]
      %v4917 = vsel %vm867, %v4688, %v4916
      %4918 = vst [vmem:[%s857 + $0x68] sm:$0x1] %v4917
      %v4919 = vld [vmem:[%s857 + $0x6c] sm:$0xf]
      %v4920 = vsel %vm860, %v4695, %v4919
      %4921 = vst [vmem:[%s857 + $0x6c] sm:$0xf] %v4920
      %4922 = vst.msk [vmem:[%s857 + $0x70] sm:$0xf] %vm864, %v4704
      %v4923 = vld [vmem:[%s857 + $0x74] sm:$0x1]
      %v4924 = vsel %vm867, %v4705, %v4923
      %4925 = vst [vmem:[%s857 + $0x74] sm:$0x1] %v4924
      %v4926 = vld [vmem:[%s857 + $0x78] sm:$0xf]
      %v4927 = vsel %vm860, %v4712, %v4926
      %4928 = vst [vmem:[%s857 + $0x78] sm:$0xf] %v4927
      %4929 = vst.msk [vmem:[%s857 + $0x7c] sm:$0xf] %vm864, %v4721
      %v4930 = vld [vmem:[%s857 + $0x80] sm:$0x1]
      %v4931 = vsel %vm867, %v4722, %v4930
      %4932 = vst [vmem:[%s857 + $0x80] sm:$0x1] %v4931
      %v4933 = vld [vmem:[%s857 + $0x84] sm:$0xf]
      %v4934 = vsel %vm860, %v4729, %v4933
      %4935 = vst [vmem:[%s857 + $0x84] sm:$0xf] %v4934
      %4936 = vst.msk [vmem:[%s857 + $0x88] sm:$0xf] %vm864, %v4738
      %v4937 = vld [vmem:[%s857 + $0x8c] sm:$0x1]
      %v4938 = vsel %vm867, %v4739, %v4937
      %4939 = vst [vmem:[%s857 + $0x8c] sm:$0x1] %v4938
      %v4940 = vld [vmem:[%s857 + $0x90] sm:$0xf]
      %v4941 = vsel %vm860, %v4746, %v4940
      %4942 = vst [vmem:[%s857 + $0x90] sm:$0xf] %v4941
      %4943 = vst.msk [vmem:[%s857 + $0x94] sm:$0xf] %vm864, %v4755
      %v4944 = vld [vmem:[%s857 + $0x98] sm:$0x1]
      %v4945 = vsel %vm867, %v4756, %v4944
      %4946 = vst [vmem:[%s857 + $0x98] sm:$0x1] %v4945
      %v4947 = vld [vmem:[%s857 + $0x9c] sm:$0xf]
      %v4948 = vsel %vm860, %v4763, %v4947
      %4949 = vst [vmem:[%s857 + $0x9c] sm:$0xf] %v4948
      %4950 = vst.msk [vmem:[%s857 + $0xa0] sm:$0xf] %vm864, %v4772
      %v4951 = vld [vmem:[%s857 + $0xa4] sm:$0x1]
      %v4952 = vsel %vm867, %v4773, %v4951
      %4953 = vst [vmem:[%s857 + $0xa4] sm:$0x1] %v4952
      %v4954 = vld [vmem:[%s857 + $0xa8] sm:$0xf]
      %v4955 = vsel %vm860, %v4780, %v4954
      %4956 = vst [vmem:[%s857 + $0xa8] sm:$0xf] %v4955
      %4957 = vst.msk [vmem:[%s857 + $0xac] sm:$0xf] %vm864, %v4789
      %v4958 = vld [vmem:[%s857 + $0xb0] sm:$0x1]
      %v4959 = vsel %vm867, %v4790, %v4958
      %4960 = vst [vmem:[%s857 + $0xb0] sm:$0x1] %v4959
      %v4961 = vld [vmem:[%s857 + $0xb4] sm:$0xf]
      %v4962 = vsel %vm860, %v4797, %v4961
      %4963 = vst [vmem:[%s857 + $0xb4] sm:$0xf] %v4962
      %4964 = vst.msk [vmem:[%s857 + $0xb8] sm:$0xf] %vm864, %v4806
      %v4965 = vld [vmem:[%s857 + $0xbc] sm:$0x1]
      %v4966 = vsel %vm867, %v4807, %v4965
      %4967 = vst [vmem:[%s857 + $0xbc] sm:$0x1] %v4966
      %v4968 = vld [vmem:[#allocation2] sm:$0xf]
      %v4969 = vld [vmem:[#allocation2 + $0x4] sm:$0xf]
      %v4970 = vld [vmem:[#allocation2 + $0xc] sm:$0xf]
      %v4971 = vld [vmem:[#allocation2 + $0x10] sm:$0xf]
      %v4972 = vld [vmem:[#allocation2 + $0x18] sm:$0xf]
      %v4973 = vld [vmem:[#allocation2 + $0x1c] sm:$0xf]
      %v4974 = vld [vmem:[#allocation2 + $0x24] sm:$0xf]
      %v4975 = vld [vmem:[#allocation2 + $0x28] sm:$0xf]
      %v4976 = vld [vmem:[#allocation2 + $0x30] sm:$0xf]
      %v4977 = vld [vmem:[#allocation2 + $0x34] sm:$0xf]
      %v4978 = vld [vmem:[#allocation2 + $0x3c] sm:$0xf]
      %v4979 = vld [vmem:[#allocation2 + $0x40] sm:$0xf]
      %v4980 = vld [vmem:[#allocation2 + $0x48] sm:$0xf]
      %v4981 = vld [vmem:[#allocation2 + $0x4c] sm:$0xf]
      %v4982 = vld [vmem:[#allocation2 + $0x54] sm:$0xf]
      %v4983 = vld [vmem:[#allocation2 + $0x58] sm:$0xf]
      %v4984 = vld [vmem:[#allocation2 + $0x60] sm:$0xf]
      %v4985 = vld [vmem:[#allocation2 + $0x64] sm:$0xf]
      %v4986 = vld [vmem:[#allocation2 + $0x6c] sm:$0xf]
      %v4987 = vld [vmem:[#allocation2 + $0x70] sm:$0xf]
      %v4988 = vld [vmem:[#allocation2 + $0x78] sm:$0xf]
      %v4989 = vld [vmem:[#allocation2 + $0x7c] sm:$0xf]
      %v4990 = vld [vmem:[#allocation2 + $0x84] sm:$0xf]
      %v4991 = vld [vmem:[#allocation2 + $0x88] sm:$0xf]
      %v4992 = vld [vmem:[#allocation2 + $0x90] sm:$0xf]
      %v4993 = vld [vmem:[#allocation2 + $0x94] sm:$0xf]
      %v4994 = vld [vmem:[#allocation2 + $0x9c] sm:$0xf]
      %v4995 = vld [vmem:[#allocation2 + $0xa0] sm:$0xf]
      %v4996 = vld [vmem:[#allocation2 + $0xa8] sm:$0xf]
      %v4997 = vld [vmem:[#allocation2 + $0xac] sm:$0xf]
      %v4998 = vld [vmem:[#allocation2 + $0xb4] sm:$0xf]
      %v4999 = vld [vmem:[#allocation2 + $0xb8] sm:$0xf]
      %v5032 = vunpack.c.l.b16 %v4968
      %v5033 = vunpack.c.l.b16 %v4969
      %v5034 = vunpack.c.l.b16 %v4970
      %v5035 = vunpack.c.l.b16 %v4971
      %v5036 = vunpack.c.l.b16 %v4972
      %v5037 = vunpack.c.l.b16 %v4973
      %v5038 = vunpack.c.l.b16 %v4974
      %v5039 = vunpack.c.l.b16 %v4975
      %v5040 = vunpack.c.l.b16 %v4976
      %v5041 = vunpack.c.l.b16 %v4977
      %v5042 = vunpack.c.l.b16 %v4978
      %v5043 = vunpack.c.l.b16 %v4979
      %v5044 = vunpack.c.l.b16 %v4980
      %v5045 = vunpack.c.l.b16 %v4981
      %v5046 = vunpack.c.l.b16 %v4982
      %v5047 = vunpack.c.l.b16 %v4983
      %v5048 = vunpack.c.l.b16 %v4984
      %v5049 = vunpack.c.l.b16 %v4985
      %v5050 = vunpack.c.l.b16 %v4986
      %v5051 = vunpack.c.l.b16 %v4987
      %v5052 = vunpack.c.l.b16 %v4988
      %v5053 = vunpack.c.l.b16 %v4989
      %v5054 = vunpack.c.l.b16 %v4990
      %v5055 = vunpack.c.l.b16 %v4991
      %v5056 = vunpack.c.l.b16 %v4992
      %v5057 = vunpack.c.l.b16 %v4993
      %v5058 = vunpack.c.l.b16 %v4994
      %v5059 = vunpack.c.l.b16 %v4995
      %v5060 = vunpack.c.l.b16 %v4996
      %v5061 = vunpack.c.l.b16 %v4997
      %v5062 = vunpack.c.l.b16 %v4998
      %v5063 = vunpack.c.l.b16 %v4999
      %v5064 = vpack.c.b16 %v5033, %v5032
      %v5065 = vpack.c.b16 %v5035, %v5034
      %v5066 = vpack.c.b16 %v5037, %v5036
      %v5067 = vpack.c.b16 %v5039, %v5038
      %v5068 = vpack.c.b16 %v5041, %v5040
      %v5069 = vpack.c.b16 %v5043, %v5042
      %v5070 = vpack.c.b16 %v5045, %v5044
      %v5071 = vpack.c.b16 %v5047, %v5046
      %v5072 = vpack.c.b16 %v5049, %v5048
      %v5073 = vpack.c.b16 %v5051, %v5050
      %v5074 = vpack.c.b16 %v5053, %v5052
      %v5075 = vpack.c.b16 %v5055, %v5054
      %v5076 = vpack.c.b16 %v5057, %v5056
      %v5077 = vpack.c.b16 %v5059, %v5058
      %v5078 = vpack.c.b16 %v5061, %v5060
      %v5079 = vpack.c.b16 %v5063, %v5062
      %5096 = vst.msk [vmem:[#allocation3] sm:$0xff] %vm1104, %v5064
      %5097 = vst.msk [vmem:[#allocation3 + $0x8] sm:$0xff] %vm1104, %v5065
      %5098 = vst.msk [vmem:[#allocation3 + $0x10] sm:$0xff] %vm1104, %v5066
      %5099 = vst.msk [vmem:[#allocation3 + $0x18] sm:$0xff] %vm1104, %v5067
      %5100 = vst.msk [vmem:[#allocation3 + $0x20] sm:$0xff] %vm1104, %v5068
      %5101 = vst.msk [vmem:[#allocation3 + $0x28] sm:$0xff] %vm1104, %v5069
      %5102 = vst.msk [vmem:[#allocation3 + $0x30] sm:$0xff] %vm1104, %v5070
      %5103 = vst.msk [vmem:[#allocation3 + $0x38] sm:$0xff] %vm1104, %v5071
      %5104 = vst.msk [vmem:[#allocation3 + $0x40] sm:$0xff] %vm1104, %v5072
      %5105 = vst.msk [vmem:[#allocation3 + $0x48] sm:$0xff] %vm1104, %v5073
      %5106 = vst.msk [vmem:[#allocation3 + $0x50] sm:$0xff] %vm1104, %v5074
      %5107 = vst.msk [vmem:[#allocation3 + $0x58] sm:$0xff] %vm1104, %v5075
      %5108 = vst.msk [vmem:[#allocation3 + $0x60] sm:$0xff] %vm1104, %v5076
      %5109 = vst.msk [vmem:[#allocation3 + $0x68] sm:$0xff] %vm1104, %v5077
      %5110 = vst.msk [vmem:[#allocation3 + $0x70] sm:$0xff] %vm1104, %v5078
      %5111 = vst.msk [vmem:[#allocation3 + $0x78] sm:$0xff] %vm1104, %v5079
      %v5112 = vld [vmem:[#allocation2] sm:$0xf]
      %v5113 = vld [vmem:[#allocation2 + $0x4] sm:$0xf]
      %v5114 = vld [vmem:[#allocation2 + $0x8] sm:$0x1]
      %v5115 = vld [vmem:[#allocation2 + $0xc] sm:$0xf]
      %v5116 = vld [vmem:[#allocation2 + $0x10] sm:$0xf]
      %v5117 = vld [vmem:[#allocation2 + $0x14] sm:$0x1]
      %v5118 = vld [vmem:[#allocation2 + $0x18] sm:$0xf]
      %v5119 = vld [vmem:[#allocation2 + $0x1c] sm:$0xf]
      %v5120 = vld [vmem:[#allocation2 + $0x20] sm:$0x1]
      %v5121 = vld [vmem:[#allocation2 + $0x24] sm:$0xf]
      %v5122 = vld [vmem:[#allocation2 + $0x28] sm:$0xf]
      %v5123 = vld [vmem:[#allocation2 + $0x2c] sm:$0x1]
      %v5124 = vld [vmem:[#allocation2 + $0x30] sm:$0xf]
      %v5125 = vld [vmem:[#allocation2 + $0x34] sm:$0xf]
      %v5126 = vld [vmem:[#allocation2 + $0x38] sm:$0x1]
      %v5127 = vld [vmem:[#allocation2 + $0x3c] sm:$0xf]
      %v5128 = vld [vmem:[#allocation2 + $0x40] sm:$0xf]
      %v5129 = vld [vmem:[#allocation2 + $0x44] sm:$0x1]
      %v5130 = vld [vmem:[#allocation2 + $0x48] sm:$0xf]
      %v5131 = vld [vmem:[#allocation2 + $0x4c] sm:$0xf]
      %v5132 = vld [vmem:[#allocation2 + $0x50] sm:$0x1]
      %v5133 = vld [vmem:[#allocation2 + $0x54] sm:$0xf]
      %v5134 = vld [vmem:[#allocation2 + $0x58] sm:$0xf]
      %v5135 = vld [vmem:[#allocation2 + $0x5c] sm:$0x1]
      %v5136 = vld [vmem:[#allocation2 + $0x60] sm:$0xf]
      %v5137 = vld [vmem:[#allocation2 + $0x64] sm:$0xf]
      %v5138 = vld [vmem:[#allocation2 + $0x68] sm:$0x1]
      %v5139 = vld [vmem:[#allocation2 + $0x6c] sm:$0xf]
      %v5140 = vld [vmem:[#allocation2 + $0x70] sm:$0xf]
      %v5141 = vld [vmem:[#allocation2 + $0x74] sm:$0x1]
      %v5142 = vld [vmem:[#allocation2 + $0x78] sm:$0xf]
      %v5143 = vld [vmem:[#allocation2 + $0x7c] sm:$0xf]
      %v5144 = vld [vmem:[#allocation2 + $0x80] sm:$0x1]
      %v5145 = vld [vmem:[#allocation2 + $0x84] sm:$0xf]
      %v5146 = vld [vmem:[#allocation2 + $0x88] sm:$0xf]
      %v5147 = vld [vmem:[#allocation2 + $0x8c] sm:$0x1]
      %v5148 = vld [vmem:[#allocation2 + $0x90] sm:$0xf]
      %v5149 = vld [vmem:[#allocation2 + $0x94] sm:$0xf]
      %v5150 = vld [vmem:[#allocation2 + $0x98] sm:$0x1]
      %v5151 = vld [vmem:[#allocation2 + $0x9c] sm:$0xf]
      %v5152 = vld [vmem:[#allocation2 + $0xa0] sm:$0xf]
      %v5153 = vld [vmem:[#allocation2 + $0xa4] sm:$0x1]
      %v5154 = vld [vmem:[#allocation2 + $0xa8] sm:$0xf]
      %v5155 = vld [vmem:[#allocation2 + $0xac] sm:$0xf]
      %v5156 = vld [vmem:[#allocation2 + $0xb0] sm:$0x1]
      %v5157 = vld [vmem:[#allocation2 + $0xb4] sm:$0xf]
      %v5158 = vld [vmem:[#allocation2 + $0xb8] sm:$0xf]
      %v5159 = vld [vmem:[#allocation2 + $0xbc] sm:$0x1]
      %v5161 = vshrl.u32 %v5112, 16
      %v5163 = vrot.slane %v5161, 4
      %v5164 = vshll.u32 %v5112, 16
      %v5166 = vrot.slane %v5164, 5
      %v5167 = vor.u32 %v5163, %v5166
      %v5168 = vrot.slane %v5167, 4
      %v5170 = vshll.u32 %v5113, 16
      %v5172 = vrot.slane %v5170, 5
      %v5173 = vsel %vm1171, %v5168, %v5172
      %v5174 = vshrl.u32 %v5113, 16
      %v5176 = vrot.slane %v5174, 4
      %v5177 = vor.u32 %v5176, %v5172
      %v5178 = vrot.slane %v5177, 4
      %v5180 = vshll.u32 %v5114, 16
      %v5182 = vrot.slane %v5180, 5
      %v5183 = vsel %vm1171, %v5178, %v5182
      %v5185 = vshrl.u32 %v5115, 16
      %v5187 = vrot.slane %v5185, 4
      %v5188 = vshll.u32 %v5115, 16
      %v5190 = vrot.slane %v5188, 5
      %v5191 = vor.u32 %v5187, %v5190
      %v5192 = vrot.slane %v5191, 4
      %v5194 = vshll.u32 %v5116, 16
      %v5196 = vrot.slane %v5194, 5
      %v5197 = vsel %vm1171, %v5192, %v5196
      %v5198 = vshrl.u32 %v5116, 16
      %v5200 = vrot.slane %v5198, 4
      %v5201 = vor.u32 %v5200, %v5196
      %v5202 = vrot.slane %v5201, 4
      %v5204 = vshll.u32 %v5117, 16
      %v5206 = vrot.slane %v5204, 5
      %v5207 = vsel %vm1171, %v5202, %v5206
      %v5209 = vshrl.u32 %v5118, 16
      %v5211 = vrot.slane %v5209, 4
      %v5212 = vshll.u32 %v5118, 16
      %v5214 = vrot.slane %v5212, 5
      %v5215 = vor.u32 %v5211, %v5214
      %v5216 = vrot.slane %v5215, 4
      %v5218 = vshll.u32 %v5119, 16
      %v5220 = vrot.slane %v5218, 5
      %v5221 = vsel %vm1171, %v5216, %v5220
      %v5222 = vshrl.u32 %v5119, 16
      %v5224 = vrot.slane %v5222, 4
      %v5225 = vor.u32 %v5224, %v5220
      %v5226 = vrot.slane %v5225, 4
      %v5228 = vshll.u32 %v5120, 16
      %v5230 = vrot.slane %v5228, 5
      %v5231 = vsel %vm1171, %v5226, %v5230
      %v5233 = vshrl.u32 %v5121, 16
      %v5235 = vrot.slane %v5233, 4
      %v5236 = vshll.u32 %v5121, 16
      %v5238 = vrot.slane %v5236, 5
      %v5239 = vor.u32 %v5235, %v5238
      %v5240 = vrot.slane %v5239, 4
      %v5242 = vshll.u32 %v5122, 16
      %v5244 = vrot.slane %v5242, 5
      %v5245 = vsel %vm1171, %v5240, %v5244
      %v5246 = vshrl.u32 %v5122, 16
      %v5248 = vrot.slane %v5246, 4
      %v5249 = vor.u32 %v5248, %v5244
      %v5250 = vrot.slane %v5249, 4
      %v5252 = vshll.u32 %v5123, 16
      %v5254 = vrot.slane %v5252, 5
      %v5255 = vsel %vm1171, %v5250, %v5254
      %v5257 = vshrl.u32 %v5124, 16
      %v5259 = vrot.slane %v5257, 4
      %v5260 = vshll.u32 %v5124, 16
      %v5262 = vrot.slane %v5260, 5
      %v5263 = vor.u32 %v5259, %v5262
      %v5264 = vrot.slane %v5263, 4
      %v5266 = vshll.u32 %v5125, 16
      %v5268 = vrot.slane %v5266, 5
      %v5269 = vsel %vm1171, %v5264, %v5268
      %v5270 = vshrl.u32 %v5125, 16
      %v5272 = vrot.slane %v5270, 4
      %v5273 = vor.u32 %v5272, %v5268
      %v5274 = vrot.slane %v5273, 4
      %v5276 = vshll.u32 %v5126, 16
      %v5278 = vrot.slane %v5276, 5
      %v5279 = vsel %vm1171, %v5274, %v5278
      %v5281 = vshrl.u32 %v5127, 16
      %v5283 = vrot.slane %v5281, 4
      %v5284 = vshll.u32 %v5127, 16
      %v5286 = vrot.slane %v5284, 5
      %v5287 = vor.u32 %v5283, %v5286
      %v5288 = vrot.slane %v5287, 4
      %v5290 = vshll.u32 %v5128, 16
      %v5292 = vrot.slane %v5290, 5
      %v5293 = vsel %vm1171, %v5288, %v5292
      %v5294 = vshrl.u32 %v5128, 16
      %v5296 = vrot.slane %v5294, 4
      %v5297 = vor.u32 %v5296, %v5292
      %v5298 = vrot.slane %v5297, 4
      %v5300 = vshll.u32 %v5129, 16
      %v5302 = vrot.slane %v5300, 5
      %v5303 = vsel %vm1171, %v5298, %v5302
      %v5305 = vshrl.u32 %v5130, 16
      %v5307 = vrot.slane %v5305, 4
      %v5308 = vshll.u32 %v5130, 16
      %v5310 = vrot.slane %v5308, 5
      %v5311 = vor.u32 %v5307, %v5310
      %v5312 = vrot.slane %v5311, 4
      %v5314 = vshll.u32 %v5131, 16
      %v5316 = vrot.slane %v5314, 5
      %v5317 = vsel %vm1171, %v5312, %v5316
      %v5318 = vshrl.u32 %v5131, 16
      %v5320 = vrot.slane %v5318, 4
      %v5321 = vor.u32 %v5320, %v5316
      %v5322 = vrot.slane %v5321, 4
      %v5324 = vshll.u32 %v5132, 16
      %v5326 = vrot.slane %v5324, 5
      %v5327 = vsel %vm1171, %v5322, %v5326
      %v5329 = vshrl.u32 %v5133, 16
      %v5331 = vrot.slane %v5329, 4
      %v5332 = vshll.u32 %v5133, 16
      %v5334 = vrot.slane %v5332, 5
      %v5335 = vor.u32 %v5331, %v5334
      %v5336 = vrot.slane %v5335, 4
      %v5338 = vshll.u32 %v5134, 16
      %v5340 = vrot.slane %v5338, 5
      %v5341 = vsel %vm1171, %v5336, %v5340
      %v5342 = vshrl.u32 %v5134, 16
      %v5344 = vrot.slane %v5342, 4
      %v5345 = vor.u32 %v5344, %v5340
      %v5346 = vrot.slane %v5345, 4
      %v5348 = vshll.u32 %v5135, 16
      %v5350 = vrot.slane %v5348, 5
      %v5351 = vsel %vm1171, %v5346, %v5350
      %v5353 = vshrl.u32 %v5136, 16
      %v5355 = vrot.slane %v5353, 4
      %v5356 = vshll.u32 %v5136, 16
      %v5358 = vrot.slane %v5356, 5
      %v5359 = vor.u32 %v5355, %v5358
      %v5360 = vrot.slane %v5359, 4
      %v5362 = vshll.u32 %v5137, 16
      %v5364 = vrot.slane %v5362, 5
      %v5365 = vsel %vm1171, %v5360, %v5364
      %v5366 = vshrl.u32 %v5137, 16
      %v5368 = vrot.slane %v5366, 4
      %v5369 = vor.u32 %v5368, %v5364
      %v5370 = vrot.slane %v5369, 4
      %v5372 = vshll.u32 %v5138, 16
      %v5374 = vrot.slane %v5372, 5
      %v5375 = vsel %vm1171, %v5370, %v5374
      %v5377 = vshrl.u32 %v5139, 16
      %v5379 = vrot.slane %v5377, 4
      %v5380 = vshll.u32 %v5139, 16
      %v5382 = vrot.slane %v5380, 5
      %v5383 = vor.u32 %v5379, %v5382
      %v5384 = vrot.slane %v5383, 4
      %v5386 = vshll.u32 %v5140, 16
      %v5388 = vrot.slane %v5386, 5
      %v5389 = vsel %vm1171, %v5384, %v5388
      %v5390 = vshrl.u32 %v5140, 16
      %v5392 = vrot.slane %v5390, 4
      %v5393 = vor.u32 %v5392, %v5388
      %v5394 = vrot.slane %v5393, 4
      %v5396 = vshll.u32 %v5141, 16
      %v5398 = vrot.slane %v5396, 5
      %v5399 = vsel %vm1171, %v5394, %v5398
      %v5401 = vshrl.u32 %v5142, 16
      %v5403 = vrot.slane %v5401, 4
      %v5404 = vshll.u32 %v5142, 16
      %v5406 = vrot.slane %v5404, 5
      %v5407 = vor.u32 %v5403, %v5406
      %v5408 = vrot.slane %v5407, 4
      %v5410 = vshll.u32 %v5143, 16
      %v5412 = vrot.slane %v5410, 5
      %v5413 = vsel %vm1171, %v5408, %v5412
      %v5414 = vshrl.u32 %v5143, 16
      %v5416 = vrot.slane %v5414, 4
      %v5417 = vor.u32 %v5416, %v5412
      %v5418 = vrot.slane %v5417, 4
      %v5420 = vshll.u32 %v5144, 16
      %v5422 = vrot.slane %v5420, 5
      %v5423 = vsel %vm1171, %v5418, %v5422
      %v5425 = vshrl.u32 %v5145, 16
      %v5427 = vrot.slane %v5425, 4
      %v5428 = vshll.u32 %v5145, 16
      %v5430 = vrot.slane %v5428, 5
      %v5431 = vor.u32 %v5427, %v5430
      %v5432 = vrot.slane %v5431, 4
      %v5434 = vshll.u32 %v5146, 16
      %v5436 = vrot.slane %v5434, 5
      %v5437 = vsel %vm1171, %v5432, %v5436
      %v5438 = vshrl.u32 %v5146, 16
      %v5440 = vrot.slane %v5438, 4
      %v5441 = vor.u32 %v5440, %v5436
      %v5442 = vrot.slane %v5441, 4
      %v5444 = vshll.u32 %v5147, 16
      %v5446 = vrot.slane %v5444, 5
      %v5447 = vsel %vm1171, %v5442, %v5446
      %v5449 = vshrl.u32 %v5148, 16
      %v5451 = vrot.slane %v5449, 4
      %v5452 = vshll.u32 %v5148, 16
      %v5454 = vrot.slane %v5452, 5
      %v5455 = vor.u32 %v5451, %v5454
      %v5456 = vrot.slane %v5455, 4
      %v5458 = vshll.u32 %v5149, 16
      %v5460 = vrot.slane %v5458, 5
      %v5461 = vsel %vm1171, %v5456, %v5460
      %v5462 = vshrl.u32 %v5149, 16
      %v5464 = vrot.slane %v5462, 4
      %v5465 = vor.u32 %v5464, %v5460
      %v5466 = vrot.slane %v5465, 4
      %v5468 = vshll.u32 %v5150, 16
      %v5470 = vrot.slane %v5468, 5
      %v5471 = vsel %vm1171, %v5466, %v5470
      %v5473 = vshrl.u32 %v5151, 16
      %v5475 = vrot.slane %v5473, 4
      %v5476 = vshll.u32 %v5151, 16
      %v5478 = vrot.slane %v5476, 5
      %v5479 = vor.u32 %v5475, %v5478
      %v5480 = vrot.slane %v5479, 4
      %v5482 = vshll.u32 %v5152, 16
      %v5484 = vrot.slane %v5482, 5
      %v5485 = vsel %vm1171, %v5480, %v5484
      %v5486 = vshrl.u32 %v5152, 16
      %v5488 = vrot.slane %v5486, 4
      %v5489 = vor.u32 %v5488, %v5484
      %v5490 = vrot.slane %v5489, 4
      %v5492 = vshll.u32 %v5153, 16
      %v5494 = vrot.slane %v5492, 5
      %v5495 = vsel %vm1171, %v5490, %v5494
      %v5497 = vshrl.u32 %v5154, 16
      %v5499 = vrot.slane %v5497, 4
      %v5500 = vshll.u32 %v5154, 16
      %v5502 = vrot.slane %v5500, 5
      %v5503 = vor.u32 %v5499, %v5502
      %v5504 = vrot.slane %v5503, 4
      %v5506 = vshll.u32 %v5155, 16
      %v5508 = vrot.slane %v5506, 5
      %v5509 = vsel %vm1171, %v5504, %v5508
      %v5510 = vshrl.u32 %v5155, 16
      %v5512 = vrot.slane %v5510, 4
      %v5513 = vor.u32 %v5512, %v5508
      %v5514 = vrot.slane %v5513, 4
      %v5516 = vshll.u32 %v5156, 16
      %v5518 = vrot.slane %v5516, 5
      %v5519 = vsel %vm1171, %v5514, %v5518
      %v5521 = vshrl.u32 %v5157, 16
      %v5523 = vrot.slane %v5521, 4
      %v5524 = vshll.u32 %v5157, 16
      %v5526 = vrot.slane %v5524, 5
      %v5527 = vor.u32 %v5523, %v5526
      %v5528 = vrot.slane %v5527, 4
      %v5530 = vshll.u32 %v5158, 16
      %v5532 = vrot.slane %v5530, 5
      %v5533 = vsel %vm1171, %v5528, %v5532
      %v5534 = vshrl.u32 %v5158, 16
      %v5536 = vrot.slane %v5534, 4
      %v5537 = vor.u32 %v5536, %v5532
      %v5538 = vrot.slane %v5537, 4
      %v5540 = vshll.u32 %v5159, 16
      %v5542 = vrot.slane %v5540, 5
      %v5543 = vsel %vm1171, %v5538, %v5542
      %v5544 = vunpack.c.l.b16 %v5173
      %v5545 = vunpack.c.l.b16 %v5183
      %v5546 = vunpack.c.l.b16 %v5197
      %v5547 = vunpack.c.l.b16 %v5207
      %v5548 = vunpack.c.l.b16 %v5221
      %v5549 = vunpack.c.l.b16 %v5231
      %v5550 = vunpack.c.l.b16 %v5245
      %v5551 = vunpack.c.l.b16 %v5255
      %v5552 = vunpack.c.l.b16 %v5269
      %v5553 = vunpack.c.l.b16 %v5279
      %v5554 = vunpack.c.l.b16 %v5293
      %v5555 = vunpack.c.l.b16 %v5303
      %v5556 = vunpack.c.l.b16 %v5317
      %v5557 = vunpack.c.l.b16 %v5327
      %v5558 = vunpack.c.l.b16 %v5341
      %v5559 = vunpack.c.l.b16 %v5351
      %v5560 = vunpack.c.l.b16 %v5365
      %v5561 = vunpack.c.l.b16 %v5375
      %v5562 = vunpack.c.l.b16 %v5389
      %v5563 = vunpack.c.l.b16 %v5399
      %v5564 = vunpack.c.l.b16 %v5413
      %v5565 = vunpack.c.l.b16 %v5423
      %v5566 = vunpack.c.l.b16 %v5437
      %v5567 = vunpack.c.l.b16 %v5447
      %v5568 = vunpack.c.l.b16 %v5461
      %v5569 = vunpack.c.l.b16 %v5471
      %v5570 = vunpack.c.l.b16 %v5485
      %v5571 = vunpack.c.l.b16 %v5495
      %v5572 = vunpack.c.l.b16 %v5509
      %v5573 = vunpack.c.l.b16 %v5519
      %v5574 = vunpack.c.l.b16 %v5533
      %v5575 = vunpack.c.l.b16 %v5543
      %v5576 = vpack.c.b16 %v5545, %v5544
      %v5577 = vpack.c.b16 %v5547, %v5546
      %v5578 = vpack.c.b16 %v5549, %v5548
      %v5579 = vpack.c.b16 %v5551, %v5550
      %v5580 = vpack.c.b16 %v5553, %v5552
      %v5581 = vpack.c.b16 %v5555, %v5554
      %v5582 = vpack.c.b16 %v5557, %v5556
      %v5583 = vpack.c.b16 %v5559, %v5558
      %v5584 = vpack.c.b16 %v5561, %v5560
      %v5585 = vpack.c.b16 %v5563, %v5562
      %v5586 = vpack.c.b16 %v5565, %v5564
      %v5587 = vpack.c.b16 %v5567, %v5566
      %v5588 = vpack.c.b16 %v5569, %v5568
      %v5589 = vpack.c.b16 %v5571, %v5570
      %v5590 = vpack.c.b16 %v5573, %v5572
      %v5591 = vpack.c.b16 %v5575, %v5574
      %5592 = vrot.lane.b32.xlu0 %v5576, 4
      %v5593 = vpop.permute.xlu0 %5592
      %5594 = vrot.lane.b32.xlu0 %v5577, 4
      %v5595 = vpop.permute.xlu0 %5594
      %5596 = vrot.lane.b32.xlu0 %v5578, 4
      %v5597 = vpop.permute.xlu0 %5596
      %5598 = vrot.lane.b32.xlu0 %v5579, 4
      %v5599 = vpop.permute.xlu0 %5598
      %5600 = vrot.lane.b32.xlu0 %v5580, 4
      %v5601 = vpop.permute.xlu0 %5600
      %5602 = vrot.lane.b32.xlu0 %v5581, 4
      %v5603 = vpop.permute.xlu0 %5602
      %5604 = vrot.lane.b32.xlu0 %v5582, 4
      %v5605 = vpop.permute.xlu0 %5604
      %5606 = vrot.lane.b32.xlu0 %v5583, 4
      %v5607 = vpop.permute.xlu0 %5606
      %5608 = vrot.lane.b32.xlu0 %v5584, 4
      %v5609 = vpop.permute.xlu0 %5608
      %5610 = vrot.lane.b32.xlu0 %v5585, 4
      %v5611 = vpop.permute.xlu0 %5610
      %5612 = vrot.lane.b32.xlu0 %v5586, 4
      %v5613 = vpop.permute.xlu0 %5612
      %5614 = vrot.lane.b32.xlu0 %v5587, 4
      %v5615 = vpop.permute.xlu0 %5614
      %5616 = vrot.lane.b32.xlu0 %v5588, 4
      %v5617 = vpop.permute.xlu0 %5616
      %5618 = vrot.lane.b32.xlu0 %v5589, 4
      %v5619 = vpop.permute.xlu0 %5618
      %5620 = vrot.lane.b32.xlu0 %v5590, 4
      %v5621 = vpop.permute.xlu0 %5620
      %5622 = vrot.lane.b32.xlu0 %v5591, 4
      %v5623 = vpop.permute.xlu0 %5622
      %5640 = vst.msk [vmem:[#allocation3] sm:$0xff] %vm1652, %v5593
      %5641 = vst.msk [vmem:[#allocation3 + $0x8] sm:$0xff] %vm1652, %v5595
      %5642 = vst.msk [vmem:[#allocation3 + $0x10] sm:$0xff] %vm1652, %v5597
      %5643 = vst.msk [vmem:[#allocation3 + $0x18] sm:$0xff] %vm1652, %v5599
      %5644 = vst.msk [vmem:[#allocation3 + $0x20] sm:$0xff] %vm1652, %v5601
      %5645 = vst.msk [vmem:[#allocation3 + $0x28] sm:$0xff] %vm1652, %v5603
      %5646 = vst.msk [vmem:[#allocation3 + $0x30] sm:$0xff] %vm1652, %v5605
      %5647 = vst.msk [vmem:[#allocation3 + $0x38] sm:$0xff] %vm1652, %v5607
      %5648 = vst.msk [vmem:[#allocation3 + $0x40] sm:$0xff] %vm1652, %v5609
      %5649 = vst.msk [vmem:[#allocation3 + $0x48] sm:$0xff] %vm1652, %v5611
      %5650 = vst.msk [vmem:[#allocation3 + $0x50] sm:$0xff] %vm1652, %v5613
      %5651 = vst.msk [vmem:[#allocation3 + $0x58] sm:$0xff] %vm1652, %v5615
      %5652 = vst.msk [vmem:[#allocation3 + $0x60] sm:$0xff] %vm1652, %v5617
      %5653 = vst.msk [vmem:[#allocation3 + $0x68] sm:$0xff] %vm1652, %v5619
      %5654 = vst.msk [vmem:[#allocation3 + $0x70] sm:$0xff] %vm1652, %v5621
      %5655 = vst.msk [vmem:[#allocation3 + $0x78] sm:$0xff] %vm1652, %v5623
      %v5656 = vld [vmem:[#allocation2] sm:$0xe]
      %v5657 = vld [vmem:[#allocation2 + $0x4] sm:$0xf]
      %v5658 = vld [vmem:[#allocation2 + $0x8] sm:$0x1]
      %v5659 = vld [vmem:[#allocation2 + $0xc] sm:$0xe]
      %v5660 = vld [vmem:[#allocation2 + $0x10] sm:$0xf]
      %v5661 = vld [vmem:[#allocation2 + $0x14] sm:$0x1]
      %v5662 = vld [vmem:[#allocation2 + $0x18] sm:$0xe]
      %v5663 = vld [vmem:[#allocation2 + $0x1c] sm:$0xf]
      %v5664 = vld [vmem:[#allocation2 + $0x20] sm:$0x1]
      %v5665 = vld [vmem:[#allocation2 + $0x24] sm:$0xe]
      %v5666 = vld [vmem:[#allocation2 + $0x28] sm:$0xf]
      %v5667 = vld [vmem:[#allocation2 + $0x2c] sm:$0x1]
      %v5668 = vld [vmem:[#allocation2 + $0x30] sm:$0xe]
      %v5669 = vld [vmem:[#allocation2 + $0x34] sm:$0xf]
      %v5670 = vld [vmem:[#allocation2 + $0x38] sm:$0x1]
      %v5671 = vld [vmem:[#allocation2 + $0x3c] sm:$0xe]
      %v5672 = vld [vmem:[#allocation2 + $0x40] sm:$0xf]
      %v5673 = vld [vmem:[#allocation2 + $0x44] sm:$0x1]
      %v5674 = vld [vmem:[#allocation2 + $0x48] sm:$0xe]
      %v5675 = vld [vmem:[#allocation2 + $0x4c] sm:$0xf]
      %v5676 = vld [vmem:[#allocation2 + $0x50] sm:$0x1]
      %v5677 = vld [vmem:[#allocation2 + $0x54] sm:$0xe]
      %v5678 = vld [vmem:[#allocation2 + $0x58] sm:$0xf]
      %v5679 = vld [vmem:[#allocation2 + $0x5c] sm:$0x1]
      %v5680 = vld [vmem:[#allocation2 + $0x60] sm:$0xe]
      %v5681 = vld [vmem:[#allocation2 + $0x64] sm:$0xf]
      %v5682 = vld [vmem:[#allocation2 + $0x68] sm:$0x1]
      %v5683 = vld [vmem:[#allocation2 + $0x6c] sm:$0xe]
      %v5684 = vld [vmem:[#allocation2 + $0x70] sm:$0xf]
      %v5685 = vld [vmem:[#allocation2 + $0x74] sm:$0x1]
      %v5686 = vld [vmem:[#allocation2 + $0x78] sm:$0xe]
      %v5687 = vld [vmem:[#allocation2 + $0x7c] sm:$0xf]
      %v5688 = vld [vmem:[#allocation2 + $0x80] sm:$0x1]
      %v5689 = vld [vmem:[#allocation2 + $0x84] sm:$0xe]
      %v5690 = vld [vmem:[#allocation2 + $0x88] sm:$0xf]
      %v5691 = vld [vmem:[#allocation2 + $0x8c] sm:$0x1]
      %v5692 = vld [vmem:[#allocation2 + $0x90] sm:$0xe]
      %v5693 = vld [vmem:[#allocation2 + $0x94] sm:$0xf]
      %v5694 = vld [vmem:[#allocation2 + $0x98] sm:$0x1]
      %v5695 = vld [vmem:[#allocation2 + $0x9c] sm:$0xe]
      %v5696 = vld [vmem:[#allocation2 + $0xa0] sm:$0xf]
      %v5697 = vld [vmem:[#allocation2 + $0xa4] sm:$0x1]
      %v5698 = vld [vmem:[#allocation2 + $0xa8] sm:$0xe]
      %v5699 = vld [vmem:[#allocation2 + $0xac] sm:$0xf]
      %v5700 = vld [vmem:[#allocation2 + $0xb0] sm:$0x1]
      %v5701 = vld [vmem:[#allocation2 + $0xb4] sm:$0xe]
      %v5702 = vld [vmem:[#allocation2 + $0xb8] sm:$0xf]
      %v5703 = vld [vmem:[#allocation2 + $0xbc] sm:$0x1]
      %v5752 = vrot.slane %v5656, 5
      %v5753 = vrot.slane %v5752, 4
      %v5754 = vrot.slane %v5657, 5
      %v5755 = vsel %vm1767, %v5753, %v5754
      %v5756 = vrot.slane %v5754, 4
      %v5757 = vrot.slane %v5658, 5
      %v5758 = vsel %vm1767, %v5756, %v5757
      %v5759 = vrot.slane %v5659, 5
      %v5760 = vrot.slane %v5759, 4
      %v5761 = vrot.slane %v5660, 5
      %v5762 = vsel %vm1767, %v5760, %v5761
      %v5763 = vrot.slane %v5761, 4
      %v5764 = vrot.slane %v5661, 5
      %v5765 = vsel %vm1767, %v5763, %v5764
      %v5766 = vrot.slane %v5662, 5
      %v5767 = vrot.slane %v5766, 4
      %v5768 = vrot.slane %v5663, 5
      %v5769 = vsel %vm1767, %v5767, %v5768
      %v5770 = vrot.slane %v5768, 4
      %v5771 = vrot.slane %v5664, 5
      %v5772 = vsel %vm1767, %v5770, %v5771
      %v5773 = vrot.slane %v5665, 5
      %v5774 = vrot.slane %v5773, 4
      %v5775 = vrot.slane %v5666, 5
      %v5776 = vsel %vm1767, %v5774, %v5775
      %v5777 = vrot.slane %v5775, 4
      %v5778 = vrot.slane %v5667, 5
      %v5779 = vsel %vm1767, %v5777, %v5778
      %v5780 = vrot.slane %v5668, 5
      %v5781 = vrot.slane %v5780, 4
      %v5782 = vrot.slane %v5669, 5
      %v5783 = vsel %vm1767, %v5781, %v5782
      %v5784 = vrot.slane %v5782, 4
      %v5785 = vrot.slane %v5670, 5
      %v5786 = vsel %vm1767, %v5784, %v5785
      %v5787 = vrot.slane %v5671, 5
      %v5788 = vrot.slane %v5787, 4
      %v5789 = vrot.slane %v5672, 5
      %v5790 = vsel %vm1767, %v5788, %v5789
      %v5791 = vrot.slane %v5789, 4
      %v5792 = vrot.slane %v5673, 5
      %v5793 = vsel %vm1767, %v5791, %v5792
      %v5794 = vrot.slane %v5674, 5
      %v5795 = vrot.slane %v5794, 4
      %v5796 = vrot.slane %v5675, 5
      %v5797 = vsel %vm1767, %v5795, %v5796
      %v5798 = vrot.slane %v5796, 4
      %v5799 = vrot.slane %v5676, 5
      %v5800 = vsel %vm1767, %v5798, %v5799
      %v5801 = vrot.slane %v5677, 5
      %v5802 = vrot.slane %v5801, 4
      %v5803 = vrot.slane %v5678, 5
      %v5804 = vsel %vm1767, %v5802, %v5803
      %v5805 = vrot.slane %v5803, 4
      %v5806 = vrot.slane %v5679, 5
      %v5807 = vsel %vm1767, %v5805, %v5806
      %v5808 = vrot.slane %v5680, 5
      %v5809 = vrot.slane %v5808, 4
      %v5810 = vrot.slane %v5681, 5
      %v5811 = vsel %vm1767, %v5809, %v5810
      %v5812 = vrot.slane %v5810, 4
      %v5813 = vrot.slane %v5682, 5
      %v5814 = vsel %vm1767, %v5812, %v5813
      %v5815 = vrot.slane %v5683, 5
      %v5816 = vrot.slane %v5815, 4
      %v5817 = vrot.slane %v5684, 5
      %v5818 = vsel %vm1767, %v5816, %v5817
      %v5819 = vrot.slane %v5817, 4
      %v5820 = vrot.slane %v5685, 5
      %v5821 = vsel %vm1767, %v5819, %v5820
      %v5822 = vrot.slane %v5686, 5
      %v5823 = vrot.slane %v5822, 4
      %v5824 = vrot.slane %v5687, 5
      %v5825 = vsel %vm1767, %v5823, %v5824
      %v5826 = vrot.slane %v5824, 4
      %v5827 = vrot.slane %v5688, 5
      %v5828 = vsel %vm1767, %v5826, %v5827
      %v5829 = vrot.slane %v5689, 5
      %v5830 = vrot.slane %v5829, 4
      %v5831 = vrot.slane %v5690, 5
      %v5832 = vsel %vm1767, %v5830, %v5831
      %v5833 = vrot.slane %v5831, 4
      %v5834 = vrot.slane %v5691, 5
      %v5835 = vsel %vm1767, %v5833, %v5834
      %v5836 = vrot.slane %v5692, 5
      %v5837 = vrot.slane %v5836, 4
      %v5838 = vrot.slane %v5693, 5
      %v5839 = vsel %vm1767, %v5837, %v5838
      %v5840 = vrot.slane %v5838, 4
      %v5841 = vrot.slane %v5694, 5
      %v5842 = vsel %vm1767, %v5840, %v5841
      %v5843 = vrot.slane %v5695, 5
      %v5844 = vrot.slane %v5843, 4
      %v5845 = vrot.slane %v5696, 5
      %v5846 = vsel %vm1767, %v5844, %v5845
      %v5847 = vrot.slane %v5845, 4
      %v5848 = vrot.slane %v5697, 5
      %v5849 = vsel %vm1767, %v5847, %v5848
      %v5850 = vrot.slane %v5698, 5
      %v5851 = vrot.slane %v5850, 4
      %v5852 = vrot.slane %v5699, 5
      %v5853 = vsel %vm1767, %v5851, %v5852
      %v5854 = vrot.slane %v5852, 4
      %v5855 = vrot.slane %v5700, 5
      %v5856 = vsel %vm1767, %v5854, %v5855
      %v5857 = vrot.slane %v5701, 5
      %v5858 = vrot.slane %v5857, 4
      %v5859 = vrot.slane %v5702, 5
      %v5860 = vsel %vm1767, %v5858, %v5859
      %v5861 = vrot.slane %v5859, 4
      %v5862 = vrot.slane %v5703, 5
      %v5863 = vsel %vm1767, %v5861, %v5862
      %v5864 = vunpack.c.l.b16 %v5755
      %v5865 = vunpack.c.l.b16 %v5758
      %v5866 = vunpack.c.l.b16 %v5762
      %v5867 = vunpack.c.l.b16 %v5765
      %v5868 = vunpack.c.l.b16 %v5769
      %v5869 = vunpack.c.l.b16 %v5772
      %v5870 = vunpack.c.l.b16 %v5776
      %v5871 = vunpack.c.l.b16 %v5779
      %v5872 = vunpack.c.l.b16 %v5783
      %v5873 = vunpack.c.l.b16 %v5786
      %v5874 = vunpack.c.l.b16 %v5790
      %v5875 = vunpack.c.l.b16 %v5793
      %v5876 = vunpack.c.l.b16 %v5797
      %v5877 = vunpack.c.l.b16 %v5800
      %v5878 = vunpack.c.l.b16 %v5804
      %v5879 = vunpack.c.l.b16 %v5807
      %v5880 = vunpack.c.l.b16 %v5811
      %v5881 = vunpack.c.l.b16 %v5814
      %v5882 = vunpack.c.l.b16 %v5818
      %v5883 = vunpack.c.l.b16 %v5821
      %v5884 = vunpack.c.l.b16 %v5825
      %v5885 = vunpack.c.l.b16 %v5828
      %v5886 = vunpack.c.l.b16 %v5832
      %v5887 = vunpack.c.l.b16 %v5835
      %v5888 = vunpack.c.l.b16 %v5839
      %v5889 = vunpack.c.l.b16 %v5842
      %v5890 = vunpack.c.l.b16 %v5846
      %v5891 = vunpack.c.l.b16 %v5849
      %v5892 = vunpack.c.l.b16 %v5853
      %v5893 = vunpack.c.l.b16 %v5856
      %v5894 = vunpack.c.l.b16 %v5860
      %v5895 = vunpack.c.l.b16 %v5863
      %v5896 = vpack.c.b16 %v5865, %v5864
      %v5897 = vpack.c.b16 %v5867, %v5866
      %v5898 = vpack.c.b16 %v5869, %v5868
      %v5899 = vpack.c.b16 %v5871, %v5870
      %v5900 = vpack.c.b16 %v5873, %v5872
      %v5901 = vpack.c.b16 %v5875, %v5874
      %v5902 = vpack.c.b16 %v5877, %v5876
      %v5903 = vpack.c.b16 %v5879, %v5878
      %v5904 = vpack.c.b16 %v5881, %v5880
      %v5905 = vpack.c.b16 %v5883, %v5882
      %v5906 = vpack.c.b16 %v5885, %v5884
      %v5907 = vpack.c.b16 %v5887, %v5886
      %v5908 = vpack.c.b16 %v5889, %v5888
      %v5909 = vpack.c.b16 %v5891, %v5890
      %v5910 = vpack.c.b16 %v5893, %v5892
      %v5911 = vpack.c.b16 %v5895, %v5894
      %5912 = vrot.lane.b32.xlu0 %v5896, 8
      %v5913 = vpop.permute.xlu0 %5912
      %5914 = vrot.lane.b32.xlu0 %v5897, 8
      %v5915 = vpop.permute.xlu0 %5914
      %5916 = vrot.lane.b32.xlu0 %v5898, 8
      %v5917 = vpop.permute.xlu0 %5916
      %5918 = vrot.lane.b32.xlu0 %v5899, 8
      %v5919 = vpop.permute.xlu0 %5918
      %5920 = vrot.lane.b32.xlu0 %v5900, 8
      %v5921 = vpop.permute.xlu0 %5920
      %5922 = vrot.lane.b32.xlu0 %v5901, 8
      %v5923 = vpop.permute.xlu0 %5922
      %5924 = vrot.lane.b32.xlu0 %v5902, 8
      %v5925 = vpop.permute.xlu0 %5924
      %5926 = vrot.lane.b32.xlu0 %v5903, 8
      %v5927 = vpop.permute.xlu0 %5926
      %5928 = vrot.lane.b32.xlu0 %v5904, 8
      %v5929 = vpop.permute.xlu0 %5928
      %5930 = vrot.lane.b32.xlu0 %v5905, 8
      %v5931 = vpop.permute.xlu0 %5930
      %5932 = vrot.lane.b32.xlu0 %v5906, 8
      %v5933 = vpop.permute.xlu0 %5932
      %5934 = vrot.lane.b32.xlu0 %v5907, 8
      %v5935 = vpop.permute.xlu0 %5934
      %5936 = vrot.lane.b32.xlu0 %v5908, 8
      %v5937 = vpop.permute.xlu0 %5936
      %5938 = vrot.lane.b32.xlu0 %v5909, 8
      %v5939 = vpop.permute.xlu0 %5938
      %5940 = vrot.lane.b32.xlu0 %v5910, 8
      %v5941 = vpop.permute.xlu0 %5940
      %5942 = vrot.lane.b32.xlu0 %v5911, 8
      %v5943 = vpop.permute.xlu0 %5942
      %5960 = vst.msk [vmem:[#allocation3] sm:$0xff] %vm1976, %v5913
      %5961 = vst.msk [vmem:[#allocation3 + $0x8] sm:$0xff] %vm1976, %v5915
      %5962 = vst.msk [vmem:[#allocation3 + $0x10] sm:$0xff] %vm1976, %v5917
      %5963 = vst.msk [vmem:[#allocation3 + $0x18] sm:$0xff] %vm1976, %v5919
      %5964 = vst.msk [vmem:[#allocation3 + $0x20] sm:$0xff] %vm1976, %v5921
      %5965 = vst.msk [vmem:[#allocation3 + $0x28] sm:$0xff] %vm1976, %v5923
      %5966 = vst.msk [vmem:[#allocation3 + $0x30] sm:$0xff] %vm1976, %v5925
      %5967 = vst.msk [vmem:[#allocation3 + $0x38] sm:$0xff] %vm1976, %v5927
      %5968 = vst.msk [vmem:[#allocation3 + $0x40] sm:$0xff] %vm1976, %v5929
      %5969 = vst.msk [vmem:[#allocation3 + $0x48] sm:$0xff] %vm1976, %v5931
      %5970 = vst.msk [vmem:[#allocation3 + $0x50] sm:$0xff] %vm1976, %v5933
      %5971 = vst.msk [vmem:[#allocation3 + $0x58] sm:$0xff] %vm1976, %v5935
      %5972 = vst.msk [vmem:[#allocation3 + $0x60] sm:$0xff] %vm1976, %v5937
      %5973 = vst.msk [vmem:[#allocation3 + $0x68] sm:$0xff] %vm1976, %v5939
      %5974 = vst.msk [vmem:[#allocation3 + $0x70] sm:$0xff] %vm1976, %v5941
      %5975 = vst.msk [vmem:[#allocation3 + $0x78] sm:$0xff] %vm1976, %v5943
      %v5976 = vld [vmem:[%s857] sm:$0xf]
      %v5977 = vld [vmem:[%s857 + $0x4] sm:$0xf]
      %v5978 = vld [vmem:[%s857 + $0xc] sm:$0xf]
      %v5979 = vld [vmem:[%s857 + $0x10] sm:$0xf]
      %v5980 = vld [vmem:[%s857 + $0x18] sm:$0xf]
      %v5981 = vld [vmem:[%s857 + $0x1c] sm:$0xf]
      %v5982 = vld [vmem:[%s857 + $0x24] sm:$0xf]
      %v5983 = vld [vmem:[%s857 + $0x28] sm:$0xf]
      %v5984 = vld [vmem:[%s857 + $0x30] sm:$0xf]
      %v5985 = vld [vmem:[%s857 + $0x34] sm:$0xf]
      %v5986 = vld [vmem:[%s857 + $0x3c] sm:$0xf]
      %v5987 = vld [vmem:[%s857 + $0x40] sm:$0xf]
      %v5988 = vld [vmem:[%s857 + $0x48] sm:$0xf]
      %v5989 = vld [vmem:[%s857 + $0x4c] sm:$0xf]
      %v5990 = vld [vmem:[%s857 + $0x54] sm:$0xf]
      %v5991 = vld [vmem:[%s857 + $0x58] sm:$0xf]
      %v5992 = vld [vmem:[%s857 + $0x60] sm:$0xf]
      %v5993 = vld [vmem:[%s857 + $0x64] sm:$0xf]
      %v5994 = vld [vmem:[%s857 + $0x6c] sm:$0xf]
      %v5995 = vld [vmem:[%s857 + $0x70] sm:$0xf]
      %v5996 = vld [vmem:[%s857 + $0x78] sm:$0xf]
      %v5997 = vld [vmem:[%s857 + $0x7c] sm:$0xf]
      %v5998 = vld [vmem:[%s857 + $0x84] sm:$0xf]
      %v5999 = vld [vmem:[%s857 + $0x88] sm:$0xf]
      %v6000 = vld [vmem:[%s857 + $0x90] sm:$0xf]
      %v6001 = vld [vmem:[%s857 + $0x94] sm:$0xf]
      %v6002 = vld [vmem:[%s857 + $0x9c] sm:$0xf]
      %v6003 = vld [vmem:[%s857 + $0xa0] sm:$0xf]
      %v6004 = vld [vmem:[%s857 + $0xa8] sm:$0xf]
      %v6005 = vld [vmem:[%s857 + $0xac] sm:$0xf]
      %v6006 = vld [vmem:[%s857 + $0xb4] sm:$0xf]
      %v6007 = vld [vmem:[%s857 + $0xb8] sm:$0xf]
      %v6040 = vunpack.c.l.b16 %v5976
      %v6041 = vunpack.c.l.b16 %v5977
      %v6042 = vunpack.c.l.b16 %v5978
      %v6043 = vunpack.c.l.b16 %v5979
      %v6044 = vunpack.c.l.b16 %v5980
      %v6045 = vunpack.c.l.b16 %v5981
      %v6046 = vunpack.c.l.b16 %v5982
      %v6047 = vunpack.c.l.b16 %v5983
      %v6048 = vunpack.c.l.b16 %v5984
      %v6049 = vunpack.c.l.b16 %v5985
      %v6050 = vunpack.c.l.b16 %v5986
      %v6051 = vunpack.c.l.b16 %v5987
      %v6052 = vunpack.c.l.b16 %v5988
      %v6053 = vunpack.c.l.b16 %v5989
      %v6054 = vunpack.c.l.b16 %v5990
      %v6055 = vunpack.c.l.b16 %v5991
      %v6056 = vunpack.c.l.b16 %v5992
      %v6057 = vunpack.c.l.b16 %v5993
      %v6058 = vunpack.c.l.b16 %v5994
      %v6059 = vunpack.c.l.b16 %v5995
      %v6060 = vunpack.c.l.b16 %v5996
      %v6061 = vunpack.c.l.b16 %v5997
      %v6062 = vunpack.c.l.b16 %v5998
      %v6063 = vunpack.c.l.b16 %v5999
      %v6064 = vunpack.c.l.b16 %v6000
      %v6065 = vunpack.c.l.b16 %v6001
      %v6066 = vunpack.c.l.b16 %v6002
      %v6067 = vunpack.c.l.b16 %v6003
      %v6068 = vunpack.c.l.b16 %v6004
      %v6069 = vunpack.c.l.b16 %v6005
      %v6070 = vunpack.c.l.b16 %v6006
      %v6071 = vunpack.c.l.b16 %v6007
      %v6072 = vpack.c.b16 %v6041, %v6040
      %v6073 = vpack.c.b16 %v6043, %v6042
      %v6074 = vpack.c.b16 %v6045, %v6044
      %v6075 = vpack.c.b16 %v6047, %v6046
      %v6076 = vpack.c.b16 %v6049, %v6048
      %v6077 = vpack.c.b16 %v6051, %v6050
      %v6078 = vpack.c.b16 %v6053, %v6052
      %v6079 = vpack.c.b16 %v6055, %v6054
      %v6080 = vpack.c.b16 %v6057, %v6056
      %v6081 = vpack.c.b16 %v6059, %v6058
      %v6082 = vpack.c.b16 %v6061, %v6060
      %v6083 = vpack.c.b16 %v6063, %v6062
      %v6084 = vpack.c.b16 %v6065, %v6064
      %v6085 = vpack.c.b16 %v6067, %v6066
      %v6086 = vpack.c.b16 %v6069, %v6068
      %v6087 = vpack.c.b16 %v6071, %v6070
      %6088 = vrot.lane.b32.xlu0 %v6072, 12
      %v6089 = vpop.permute.xlu0 %6088
      %6090 = vrot.lane.b32.xlu0 %v6073, 12
      %v6091 = vpop.permute.xlu0 %6090
      %6092 = vrot.lane.b32.xlu0 %v6074, 12
      %v6093 = vpop.permute.xlu0 %6092
      %6094 = vrot.lane.b32.xlu0 %v6075, 12
      %v6095 = vpop.permute.xlu0 %6094
      %6096 = vrot.lane.b32.xlu0 %v6076, 12
      %v6097 = vpop.permute.xlu0 %6096
      %6098 = vrot.lane.b32.xlu0 %v6077, 12
      %v6099 = vpop.permute.xlu0 %6098
      %6100 = vrot.lane.b32.xlu0 %v6078, 12
      %v6101 = vpop.permute.xlu0 %6100
      %6102 = vrot.lane.b32.xlu0 %v6079, 12
      %v6103 = vpop.permute.xlu0 %6102
      %6104 = vrot.lane.b32.xlu0 %v6080, 12
      %v6105 = vpop.permute.xlu0 %6104
      %6106 = vrot.lane.b32.xlu0 %v6081, 12
      %v6107 = vpop.permute.xlu0 %6106
      %6108 = vrot.lane.b32.xlu0 %v6082, 12
      %v6109 = vpop.permute.xlu0 %6108
      %6110 = vrot.lane.b32.xlu0 %v6083, 12
      %v6111 = vpop.permute.xlu0 %6110
      %6112 = vrot.lane.b32.xlu0 %v6084, 12
      %v6113 = vpop.permute.xlu0 %6112
      %6114 = vrot.lane.b32.xlu0 %v6085, 12
      %v6115 = vpop.permute.xlu0 %6114
      %6116 = vrot.lane.b32.xlu0 %v6086, 12
      %v6117 = vpop.permute.xlu0 %6116
      %6118 = vrot.lane.b32.xlu0 %v6087, 12
      %v6119 = vpop.permute.xlu0 %6118
      %6136 = vst.msk [vmem:[#allocation3] sm:$0xff] %vm2153, %v6089
      %6137 = vst.msk [vmem:[#allocation3 + $0x8] sm:$0xff] %vm2153, %v6091
      %6138 = vst.msk [vmem:[#allocation3 + $0x10] sm:$0xff] %vm2153, %v6093
      %6139 = vst.msk [vmem:[#allocation3 + $0x18] sm:$0xff] %vm2153, %v6095
      %6140 = vst.msk [vmem:[#allocation3 + $0x20] sm:$0xff] %vm2153, %v6097
      %6141 = vst.msk [vmem:[#allocation3 + $0x28] sm:$0xff] %vm2153, %v6099
      %6142 = vst.msk [vmem:[#allocation3 + $0x30] sm:$0xff] %vm2153, %v6101
      %6143 = vst.msk [vmem:[#allocation3 + $0x38] sm:$0xff] %vm2153, %v6103
      %6144 = vst.msk [vmem:[#allocation3 + $0x40] sm:$0xff] %vm2153, %v6105
      %6145 = vst.msk [vmem:[#allocation3 + $0x48] sm:$0xff] %vm2153, %v6107
      %6146 = vst.msk [vmem:[#allocation3 + $0x50] sm:$0xff] %vm2153, %v6109
      %6147 = vst.msk [vmem:[#allocation3 + $0x58] sm:$0xff] %vm2153, %v6111
      %6148 = vst.msk [vmem:[#allocation3 + $0x60] sm:$0xff] %vm2153, %v6113
      %6149 = vst.msk [vmem:[#allocation3 + $0x68] sm:$0xff] %vm2153, %v6115
      %6150 = vst.msk [vmem:[#allocation3 + $0x70] sm:$0xff] %vm2153, %v6117
      %6151 = vst.msk [vmem:[#allocation3 + $0x78] sm:$0xff] %vm2153, %v6119
      %v6152 = vld [vmem:[%s857] sm:$0xf]
      %v6153 = vld [vmem:[%s857 + $0x4] sm:$0xf]
      %v6154 = vld [vmem:[%s857 + $0x8] sm:$0x1]
      %v6155 = vld [vmem:[%s857 + $0xc] sm:$0xf]
      %v6156 = vld [vmem:[%s857 + $0x10] sm:$0xf]
      %v6157 = vld [vmem:[%s857 + $0x14] sm:$0x1]
      %v6158 = vld [vmem:[%s857 + $0x18] sm:$0xf]
      %v6159 = vld [vmem:[%s857 + $0x1c] sm:$0xf]
      %v6160 = vld [vmem:[%s857 + $0x20] sm:$0x1]
      %v6161 = vld [vmem:[%s857 + $0x24] sm:$0xf]
      %v6162 = vld [vmem:[%s857 + $0x28] sm:$0xf]
      %v6163 = vld [vmem:[%s857 + $0x2c] sm:$0x1]
      %v6164 = vld [vmem:[%s857 + $0x30] sm:$0xf]
      %v6165 = vld [vmem:[%s857 + $0x34] sm:$0xf]
      %v6166 = vld [vmem:[%s857 + $0x38] sm:$0x1]
      %v6167 = vld [vmem:[%s857 + $0x3c] sm:$0xf]
      %v6168 = vld [vmem:[%s857 + $0x40] sm:$0xf]
      %v6169 = vld [vmem:[%s857 + $0x44] sm:$0x1]
      %v6170 = vld [vmem:[%s857 + $0x48] sm:$0xf]
      %v6171 = vld [vmem:[%s857 + $0x4c] sm:$0xf]
      %v6172 = vld [vmem:[%s857 + $0x50] sm:$0x1]
      %v6173 = vld [vmem:[%s857 + $0x54] sm:$0xf]
      %v6174 = vld [vmem:[%s857 + $0x58] sm:$0xf]
      %v6175 = vld [vmem:[%s857 + $0x5c] sm:$0x1]
      %v6176 = vld [vmem:[%s857 + $0x60] sm:$0xf]
      %v6177 = vld [vmem:[%s857 + $0x64] sm:$0xf]
      %v6178 = vld [vmem:[%s857 + $0x68] sm:$0x1]
      %v6179 = vld [vmem:[%s857 + $0x6c] sm:$0xf]
      %v6180 = vld [vmem:[%s857 + $0x70] sm:$0xf]
      %v6181 = vld [vmem:[%s857 + $0x74] sm:$0x1]
      %v6182 = vld [vmem:[%s857 + $0x78] sm:$0xf]
      %v6183 = vld [vmem:[%s857 + $0x7c] sm:$0xf]
      %v6184 = vld [vmem:[%s857 + $0x80] sm:$0x1]
      %v6185 = vld [vmem:[%s857 + $0x84] sm:$0xf]
      %v6186 = vld [vmem:[%s857 + $0x88] sm:$0xf]
      %v6187 = vld [vmem:[%s857 + $0x8c] sm:$0x1]
      %v6188 = vld [vmem:[%s857 + $0x90] sm:$0xf]
      %v6189 = vld [vmem:[%s857 + $0x94] sm:$0xf]
      %v6190 = vld [vmem:[%s857 + $0x98] sm:$0x1]
      %v6191 = vld [vmem:[%s857 + $0x9c] sm:$0xf]
      %v6192 = vld [vmem:[%s857 + $0xa0] sm:$0xf]
      %v6193 = vld [vmem:[%s857 + $0xa4] sm:$0x1]
      %v6194 = vld [vmem:[%s857 + $0xa8] sm:$0xf]
      %v6195 = vld [vmem:[%s857 + $0xac] sm:$0xf]
      %v6196 = vld [vmem:[%s857 + $0xb0] sm:$0x1]
      %v6197 = vld [vmem:[%s857 + $0xb4] sm:$0xf]
      %v6198 = vld [vmem:[%s857 + $0xb8] sm:$0xf]
      %v6199 = vld [vmem:[%s857 + $0xbc] sm:$0x1]
      %v6201 = vshrl.u32 %v6152, 16
      %v6203 = vrot.slane %v6201, 4
      %v6204 = vshll.u32 %v6152, 16
      %v6206 = vrot.slane %v6204, 5
      %v6207 = vor.u32 %v6203, %v6206
      %v6208 = vrot.slane %v6207, 4
      %v6210 = vshll.u32 %v6153, 16
      %v6212 = vrot.slane %v6210, 5
      %v6213 = vsel %vm1171, %v6208, %v6212
      %v6214 = vshrl.u32 %v6153, 16
      %v6216 = vrot.slane %v6214, 4
      %v6217 = vor.u32 %v6216, %v6212
      %v6218 = vrot.slane %v6217, 4
      %v6220 = vshll.u32 %v6154, 16
      %v6222 = vrot.slane %v6220, 5
      %v6223 = vsel %vm1171, %v6218, %v6222
      %v6225 = vshrl.u32 %v6155, 16
      %v6227 = vrot.slane %v6225, 4
      %v6228 = vshll.u32 %v6155, 16
      %v6230 = vrot.slane %v6228, 5
      %v6231 = vor.u32 %v6227, %v6230
      %v6232 = vrot.slane %v6231, 4
      %v6234 = vshll.u32 %v6156, 16
      %v6236 = vrot.slane %v6234, 5
      %v6237 = vsel %vm1171, %v6232, %v6236
      %v6238 = vshrl.u32 %v6156, 16
      %v6240 = vrot.slane %v6238, 4
      %v6241 = vor.u32 %v6240, %v6236
      %v6242 = vrot.slane %v6241, 4
      %v6244 = vshll.u32 %v6157, 16
      %v6246 = vrot.slane %v6244, 5
      %v6247 = vsel %vm1171, %v6242, %v6246
      %v6249 = vshrl.u32 %v6158, 16
      %v6251 = vrot.slane %v6249, 4
      %v6252 = vshll.u32 %v6158, 16
      %v6254 = vrot.slane %v6252, 5
      %v6255 = vor.u32 %v6251, %v6254
      %v6256 = vrot.slane %v6255, 4
      %v6258 = vshll.u32 %v6159, 16
      %v6260 = vrot.slane %v6258, 5
      %v6261 = vsel %vm1171, %v6256, %v6260
      %v6262 = vshrl.u32 %v6159, 16
      %v6264 = vrot.slane %v6262, 4
      %v6265 = vor.u32 %v6264, %v6260
      %v6266 = vrot.slane %v6265, 4
      %v6268 = vshll.u32 %v6160, 16
      %v6270 = vrot.slane %v6268, 5
      %v6271 = vsel %vm1171, %v6266, %v6270
      %v6273 = vshrl.u32 %v6161, 16
      %v6275 = vrot.slane %v6273, 4
      %v6276 = vshll.u32 %v6161, 16
      %v6278 = vrot.slane %v6276, 5
      %v6279 = vor.u32 %v6275, %v6278
      %v6280 = vrot.slane %v6279, 4
      %v6282 = vshll.u32 %v6162, 16
      %v6284 = vrot.slane %v6282, 5
      %v6285 = vsel %vm1171, %v6280, %v6284
      %v6286 = vshrl.u32 %v6162, 16
      %v6288 = vrot.slane %v6286, 4
      %v6289 = vor.u32 %v6288, %v6284
      %v6290 = vrot.slane %v6289, 4
      %v6292 = vshll.u32 %v6163, 16
      %v6294 = vrot.slane %v6292, 5
      %v6295 = vsel %vm1171, %v6290, %v6294
      %v6297 = vshrl.u32 %v6164, 16
      %v6299 = vrot.slane %v6297, 4
      %v6300 = vshll.u32 %v6164, 16
      %v6302 = vrot.slane %v6300, 5
      %v6303 = vor.u32 %v6299, %v6302
      %v6304 = vrot.slane %v6303, 4
      %v6306 = vshll.u32 %v6165, 16
      %v6308 = vrot.slane %v6306, 5
      %v6309 = vsel %vm1171, %v6304, %v6308
      %v6310 = vshrl.u32 %v6165, 16
      %v6312 = vrot.slane %v6310, 4
      %v6313 = vor.u32 %v6312, %v6308
      %v6314 = vrot.slane %v6313, 4
      %v6316 = vshll.u32 %v6166, 16
      %v6318 = vrot.slane %v6316, 5
      %v6319 = vsel %vm1171, %v6314, %v6318
      %v6321 = vshrl.u32 %v6167, 16
      %v6323 = vrot.slane %v6321, 4
      %v6324 = vshll.u32 %v6167, 16
      %v6326 = vrot.slane %v6324, 5
      %v6327 = vor.u32 %v6323, %v6326
      %v6328 = vrot.slane %v6327, 4
      %v6330 = vshll.u32 %v6168, 16
      %v6332 = vrot.slane %v6330, 5
      %v6333 = vsel %vm1171, %v6328, %v6332
      %v6334 = vshrl.u32 %v6168, 16
      %v6336 = vrot.slane %v6334, 4
      %v6337 = vor.u32 %v6336, %v6332
      %v6338 = vrot.slane %v6337, 4
      %v6340 = vshll.u32 %v6169, 16
      %v6342 = vrot.slane %v6340, 5
      %v6343 = vsel %vm1171, %v6338, %v6342
      %v6345 = vshrl.u32 %v6170, 16
      %v6347 = vrot.slane %v6345, 4
      %v6348 = vshll.u32 %v6170, 16
      %v6350 = vrot.slane %v6348, 5
      %v6351 = vor.u32 %v6347, %v6350
      %v6352 = vrot.slane %v6351, 4
      %v6354 = vshll.u32 %v6171, 16
      %v6356 = vrot.slane %v6354, 5
      %v6357 = vsel %vm1171, %v6352, %v6356
      %v6358 = vshrl.u32 %v6171, 16
      %v6360 = vrot.slane %v6358, 4
      %v6361 = vor.u32 %v6360, %v6356
      %v6362 = vrot.slane %v6361, 4
      %v6364 = vshll.u32 %v6172, 16
      %v6366 = vrot.slane %v6364, 5
      %v6367 = vsel %vm1171, %v6362, %v6366
      %v6369 = vshrl.u32 %v6173, 16
      %v6371 = vrot.slane %v6369, 4
      %v6372 = vshll.u32 %v6173, 16
      %v6374 = vrot.slane %v6372, 5
      %v6375 = vor.u32 %v6371, %v6374
      %v6376 = vrot.slane %v6375, 4
      %v6378 = vshll.u32 %v6174, 16
      %v6380 = vrot.slane %v6378, 5
      %v6381 = vsel %vm1171, %v6376, %v6380
      %v6382 = vshrl.u32 %v6174, 16
      %v6384 = vrot.slane %v6382, 4
      %v6385 = vor.u32 %v6384, %v6380
      %v6386 = vrot.slane %v6385, 4
      %v6388 = vshll.u32 %v6175, 16
      %v6390 = vrot.slane %v6388, 5
      %v6391 = vsel %vm1171, %v6386, %v6390
      %v6393 = vshrl.u32 %v6176, 16
      %v6395 = vrot.slane %v6393, 4
      %v6396 = vshll.u32 %v6176, 16
      %v6398 = vrot.slane %v6396, 5
      %v6399 = vor.u32 %v6395, %v6398
      %v6400 = vrot.slane %v6399, 4
      %v6402 = vshll.u32 %v6177, 16
      %v6404 = vrot.slane %v6402, 5
      %v6405 = vsel %vm1171, %v6400, %v6404
      %v6406 = vshrl.u32 %v6177, 16
      %v6408 = vrot.slane %v6406, 4
      %v6409 = vor.u32 %v6408, %v6404
      %v6410 = vrot.slane %v6409, 4
      %v6412 = vshll.u32 %v6178, 16
      %v6414 = vrot.slane %v6412, 5
      %v6415 = vsel %vm1171, %v6410, %v6414
      %v6417 = vshrl.u32 %v6179, 16
      %v6419 = vrot.slane %v6417, 4
      %v6420 = vshll.u32 %v6179, 16
      %v6422 = vrot.slane %v6420, 5
      %v6423 = vor.u32 %v6419, %v6422
      %v6424 = vrot.slane %v6423, 4
      %v6426 = vshll.u32 %v6180, 16
      %v6428 = vrot.slane %v6426, 5
      %v6429 = vsel %vm1171, %v6424, %v6428
      %v6430 = vshrl.u32 %v6180, 16
      %v6432 = vrot.slane %v6430, 4
      %v6433 = vor.u32 %v6432, %v6428
      %v6434 = vrot.slane %v6433, 4
      %v6436 = vshll.u32 %v6181, 16
      %v6438 = vrot.slane %v6436, 5
      %v6439 = vsel %vm1171, %v6434, %v6438
      %v6441 = vshrl.u32 %v6182, 16
      %v6443 = vrot.slane %v6441, 4
      %v6444 = vshll.u32 %v6182, 16
      %v6446 = vrot.slane %v6444, 5
      %v6447 = vor.u32 %v6443, %v6446
      %v6448 = vrot.slane %v6447, 4
      %v6450 = vshll.u32 %v6183, 16
      %v6452 = vrot.slane %v6450, 5
      %v6453 = vsel %vm1171, %v6448, %v6452
      %v6454 = vshrl.u32 %v6183, 16
      %v6456 = vrot.slane %v6454, 4
      %v6457 = vor.u32 %v6456, %v6452
      %v6458 = vrot.slane %v6457, 4
      %v6460 = vshll.u32 %v6184, 16
      %v6462 = vrot.slane %v6460, 5
      %v6463 = vsel %vm1171, %v6458, %v6462
      %v6465 = vshrl.u32 %v6185, 16
      %v6467 = vrot.slane %v6465, 4
      %v6468 = vshll.u32 %v6185, 16
      %v6470 = vrot.slane %v6468, 5
      %v6471 = vor.u32 %v6467, %v6470
      %v6472 = vrot.slane %v6471, 4
      %v6474 = vshll.u32 %v6186, 16
      %v6476 = vrot.slane %v6474, 5
      %v6477 = vsel %vm1171, %v6472, %v6476
      %v6478 = vshrl.u32 %v6186, 16
      %v6480 = vrot.slane %v6478, 4
      %v6481 = vor.u32 %v6480, %v6476
      %v6482 = vrot.slane %v6481, 4
      %v6484 = vshll.u32 %v6187, 16
      %v6486 = vrot.slane %v6484, 5
      %v6487 = vsel %vm1171, %v6482, %v6486
      %v6489 = vshrl.u32 %v6188, 16
      %v6491 = vrot.slane %v6489, 4
      %v6492 = vshll.u32 %v6188, 16
      %v6494 = vrot.slane %v6492, 5
      %v6495 = vor.u32 %v6491, %v6494
      %v6496 = vrot.slane %v6495, 4
      %v6498 = vshll.u32 %v6189, 16
      %v6500 = vrot.slane %v6498, 5
      %v6501 = vsel %vm1171, %v6496, %v6500
      %v6502 = vshrl.u32 %v6189, 16
      %v6504 = vrot.slane %v6502, 4
      %v6505 = vor.u32 %v6504, %v6500
      %v6506 = vrot.slane %v6505, 4
      %v6508 = vshll.u32 %v6190, 16
      %v6510 = vrot.slane %v6508, 5
      %v6511 = vsel %vm1171, %v6506, %v6510
      %v6513 = vshrl.u32 %v6191, 16
      %v6515 = vrot.slane %v6513, 4
      %v6516 = vshll.u32 %v6191, 16
      %v6518 = vrot.slane %v6516, 5
      %v6519 = vor.u32 %v6515, %v6518
      %v6520 = vrot.slane %v6519, 4
      %v6522 = vshll.u32 %v6192, 16
      %v6524 = vrot.slane %v6522, 5
      %v6525 = vsel %vm1171, %v6520, %v6524
      %v6526 = vshrl.u32 %v6192, 16
      %v6528 = vrot.slane %v6526, 4
      %v6529 = vor.u32 %v6528, %v6524
      %v6530 = vrot.slane %v6529, 4
      %v6532 = vshll.u32 %v6193, 16
      %v6534 = vrot.slane %v6532, 5
      %v6535 = vsel %vm1171, %v6530, %v6534
      %v6537 = vshrl.u32 %v6194, 16
      %v6539 = vrot.slane %v6537, 4
      %v6540 = vshll.u32 %v6194, 16
      %v6542 = vrot.slane %v6540, 5
      %v6543 = vor.u32 %v6539, %v6542
      %v6544 = vrot.slane %v6543, 4
      %v6546 = vshll.u32 %v6195, 16
      %v6548 = vrot.slane %v6546, 5
      %v6549 = vsel %vm1171, %v6544, %v6548
      %v6550 = vshrl.u32 %v6195, 16
      %v6552 = vrot.slane %v6550, 4
      %v6553 = vor.u32 %v6552, %v6548
      %v6554 = vrot.slane %v6553, 4
      %v6556 = vshll.u32 %v6196, 16
      %v6558 = vrot.slane %v6556, 5
      %v6559 = vsel %vm1171, %v6554, %v6558
      %v6561 = vshrl.u32 %v6197, 16
      %v6563 = vrot.slane %v6561, 4
      %v6564 = vshll.u32 %v6197, 16
      %v6566 = vrot.slane %v6564, 5
      %v6567 = vor.u32 %v6563, %v6566
      %v6568 = vrot.slane %v6567, 4
      %v6570 = vshll.u32 %v6198, 16
      %v6572 = vrot.slane %v6570, 5
      %v6573 = vsel %vm1171, %v6568, %v6572
      %v6574 = vshrl.u32 %v6198, 16
      %v6576 = vrot.slane %v6574, 4
      %v6577 = vor.u32 %v6576, %v6572
      %v6578 = vrot.slane %v6577, 4
      %v6580 = vshll.u32 %v6199, 16
      %v6582 = vrot.slane %v6580, 5
      %v6583 = vsel %vm1171, %v6578, %v6582
      %v6584 = vunpack.c.l.b16 %v6213
      %v6585 = vunpack.c.l.b16 %v6223
      %v6586 = vunpack.c.l.b16 %v6237
      %v6587 = vunpack.c.l.b16 %v6247
      %v6588 = vunpack.c.l.b16 %v6261
      %v6589 = vunpack.c.l.b16 %v6271
      %v6590 = vunpack.c.l.b16 %v6285
      %v6591 = vunpack.c.l.b16 %v6295
      %v6592 = vunpack.c.l.b16 %v6309
      %v6593 = vunpack.c.l.b16 %v6319
      %v6594 = vunpack.c.l.b16 %v6333
      %v6595 = vunpack.c.l.b16 %v6343
      %v6596 = vunpack.c.l.b16 %v6357
      %v6597 = vunpack.c.l.b16 %v6367
      %v6598 = vunpack.c.l.b16 %v6381
      %v6599 = vunpack.c.l.b16 %v6391
      %v6600 = vunpack.c.l.b16 %v6405
      %v6601 = vunpack.c.l.b16 %v6415
      %v6602 = vunpack.c.l.b16 %v6429
      %v6603 = vunpack.c.l.b16 %v6439
      %v6604 = vunpack.c.l.b16 %v6453
      %v6605 = vunpack.c.l.b16 %v6463
      %v6606 = vunpack.c.l.b16 %v6477
      %v6607 = vunpack.c.l.b16 %v6487
      %v6608 = vunpack.c.l.b16 %v6501
      %v6609 = vunpack.c.l.b16 %v6511
      %v6610 = vunpack.c.l.b16 %v6525
      %v6611 = vunpack.c.l.b16 %v6535
      %v6612 = vunpack.c.l.b16 %v6549
      %v6613 = vunpack.c.l.b16 %v6559
      %v6614 = vunpack.c.l.b16 %v6573
      %v6615 = vunpack.c.l.b16 %v6583
      %v6616 = vpack.c.b16 %v6585, %v6584
      %v6617 = vpack.c.b16 %v6587, %v6586
      %v6618 = vpack.c.b16 %v6589, %v6588
      %v6619 = vpack.c.b16 %v6591, %v6590
      %v6620 = vpack.c.b16 %v6593, %v6592
      %v6621 = vpack.c.b16 %v6595, %v6594
      %v6622 = vpack.c.b16 %v6597, %v6596
      %v6623 = vpack.c.b16 %v6599, %v6598
      %v6624 = vpack.c.b16 %v6601, %v6600
      %v6625 = vpack.c.b16 %v6603, %v6602
      %v6626 = vpack.c.b16 %v6605, %v6604
      %v6627 = vpack.c.b16 %v6607, %v6606
      %v6628 = vpack.c.b16 %v6609, %v6608
      %v6629 = vpack.c.b16 %v6611, %v6610
      %v6630 = vpack.c.b16 %v6613, %v6612
      %v6631 = vpack.c.b16 %v6615, %v6614
      %6632 = vrot.lane.b32.xlu0 %v6616, 16
      %v6633 = vpop.permute.xlu0 %6632
      %6634 = vrot.lane.b32.xlu0 %v6617, 16
      %v6635 = vpop.permute.xlu0 %6634
      %6636 = vrot.lane.b32.xlu0 %v6618, 16
      %v6637 = vpop.permute.xlu0 %6636
      %6638 = vrot.lane.b32.xlu0 %v6619, 16
      %v6639 = vpop.permute.xlu0 %6638
      %6640 = vrot.lane.b32.xlu0 %v6620, 16
      %v6641 = vpop.permute.xlu0 %6640
      %6642 = vrot.lane.b32.xlu0 %v6621, 16
      %v6643 = vpop.permute.xlu0 %6642
      %6644 = vrot.lane.b32.xlu0 %v6622, 16
      %v6645 = vpop.permute.xlu0 %6644
      %6646 = vrot.lane.b32.xlu0 %v6623, 16
      %v6647 = vpop.permute.xlu0 %6646
      %6648 = vrot.lane.b32.xlu0 %v6624, 16
      %v6649 = vpop.permute.xlu0 %6648
      %6650 = vrot.lane.b32.xlu0 %v6625, 16
      %v6651 = vpop.permute.xlu0 %6650
      %6652 = vrot.lane.b32.xlu0 %v6626, 16
      %v6653 = vpop.permute.xlu0 %6652
      %6654 = vrot.lane.b32.xlu0 %v6627, 16
      %v6655 = vpop.permute.xlu0 %6654
      %6656 = vrot.lane.b32.xlu0 %v6628, 16
      %v6657 = vpop.permute.xlu0 %6656
      %6658 = vrot.lane.b32.xlu0 %v6629, 16
      %v6659 = vpop.permute.xlu0 %6658
      %6660 = vrot.lane.b32.xlu0 %v6630, 16
      %v6661 = vpop.permute.xlu0 %6660
      %6662 = vrot.lane.b32.xlu0 %v6631, 16
      %v6663 = vpop.permute.xlu0 %6662
      %6680 = vst.msk [vmem:[#allocation3] sm:$0xff] %vm2698, %v6633
      %6681 = vst.msk [vmem:[#allocation3 + $0x8] sm:$0xff] %vm2698, %v6635
      %6682 = vst.msk [vmem:[#allocation3 + $0x10] sm:$0xff] %vm2698, %v6637
      %6683 = vst.msk [vmem:[#allocation3 + $0x18] sm:$0xff] %vm2698, %v6639
      %6684 = vst.msk [vmem:[#allocation3 + $0x20] sm:$0xff] %vm2698, %v6641
      %6685 = vst.msk [vmem:[#allocation3 + $0x28] sm:$0xff] %vm2698, %v6643
      %6686 = vst.msk [vmem:[#allocation3 + $0x30] sm:$0xff] %vm2698, %v6645
      %6687 = vst.msk [vmem:[#allocation3 + $0x38] sm:$0xff] %vm2698, %v6647
      %6688 = vst.msk [vmem:[#allocation3 + $0x40] sm:$0xff] %vm2698, %v6649
      %6689 = vst.msk [vmem:[#allocation3 + $0x48] sm:$0xff] %vm2698, %v6651
      %6690 = vst.msk [vmem:[#allocation3 + $0x50] sm:$0xff] %vm2698, %v6653
      %6691 = vst.msk [vmem:[#allocation3 + $0x58] sm:$0xff] %vm2698, %v6655
      %6692 = vst.msk [vmem:[#allocation3 + $0x60] sm:$0xff] %vm2698, %v6657
      %6693 = vst.msk [vmem:[#allocation3 + $0x68] sm:$0xff] %vm2698, %v6659
      %6694 = vst.msk [vmem:[#allocation3 + $0x70] sm:$0xff] %vm2698, %v6661
      %6695 = vst.msk [vmem:[#allocation3 + $0x78] sm:$0xff] %vm2698, %v6663
      %v6696 = vld [vmem:[%s857] sm:$0xe]
      %v6697 = vld [vmem:[%s857 + $0x4] sm:$0xf]
      %v6698 = vld [vmem:[%s857 + $0x8] sm:$0x1]
      %v6699 = vld [vmem:[%s857 + $0xc] sm:$0xe]
      %v6700 = vld [vmem:[%s857 + $0x10] sm:$0xf]
      %v6701 = vld [vmem:[%s857 + $0x14] sm:$0x1]
      %v6702 = vld [vmem:[%s857 + $0x18] sm:$0xe]
      %v6703 = vld [vmem:[%s857 + $0x1c] sm:$0xf]
      %v6704 = vld [vmem:[%s857 + $0x20] sm:$0x1]
      %v6705 = vld [vmem:[%s857 + $0x24] sm:$0xe]
      %v6706 = vld [vmem:[%s857 + $0x28] sm:$0xf]
      %v6707 = vld [vmem:[%s857 + $0x2c] sm:$0x1]
      %v6708 = vld [vmem:[%s857 + $0x30] sm:$0xe]
      %v6709 = vld [vmem:[%s857 + $0x34] sm:$0xf]
      %v6710 = vld [vmem:[%s857 + $0x38] sm:$0x1]
      %v6711 = vld [vmem:[%s857 + $0x3c] sm:$0xe]
      %v6712 = vld [vmem:[%s857 + $0x40] sm:$0xf]
      %v6713 = vld [vmem:[%s857 + $0x44] sm:$0x1]
      %v6714 = vld [vmem:[%s857 + $0x48] sm:$0xe]
      %v6715 = vld [vmem:[%s857 + $0x4c] sm:$0xf]
      %v6716 = vld [vmem:[%s857 + $0x50] sm:$0x1]
      %v6717 = vld [vmem:[%s857 + $0x54] sm:$0xe]
      %v6718 = vld [vmem:[%s857 + $0x58] sm:$0xf]
      %v6719 = vld [vmem:[%s857 + $0x5c] sm:$0x1]
      %v6720 = vld [vmem:[%s857 + $0x60] sm:$0xe]
      %v6721 = vld [vmem:[%s857 + $0x64] sm:$0xf]
      %v6722 = vld [vmem:[%s857 + $0x68] sm:$0x1]
      %v6723 = vld [vmem:[%s857 + $0x6c] sm:$0xe]
      %v6724 = vld [vmem:[%s857 + $0x70] sm:$0xf]
      %v6725 = vld [vmem:[%s857 + $0x74] sm:$0x1]
      %v6726 = vld [vmem:[%s857 + $0x78] sm:$0xe]
      %v6727 = vld [vmem:[%s857 + $0x7c] sm:$0xf]
      %v6728 = vld [vmem:[%s857 + $0x80] sm:$0x1]
      %v6729 = vld [vmem:[%s857 + $0x84] sm:$0xe]
      %v6730 = vld [vmem:[%s857 + $0x88] sm:$0xf]
      %v6731 = vld [vmem:[%s857 + $0x8c] sm:$0x1]
      %v6732 = vld [vmem:[%s857 + $0x90] sm:$0xe]
      %v6733 = vld [vmem:[%s857 + $0x94] sm:$0xf]
      %v6734 = vld [vmem:[%s857 + $0x98] sm:$0x1]
      %v6735 = vld [vmem:[%s857 + $0x9c] sm:$0xe]
      %v6736 = vld [vmem:[%s857 + $0xa0] sm:$0xf]
      %v6737 = vld [vmem:[%s857 + $0xa4] sm:$0x1]
      %v6738 = vld [vmem:[%s857 + $0xa8] sm:$0xe]
      %v6739 = vld [vmem:[%s857 + $0xac] sm:$0xf]
      %v6740 = vld [vmem:[%s857 + $0xb0] sm:$0x1]
      %v6741 = vld [vmem:[%s857 + $0xb4] sm:$0xe]
      %v6742 = vld [vmem:[%s857 + $0xb8] sm:$0xf]
      %v6743 = vld [vmem:[%s857 + $0xbc] sm:$0x1]
      %v6792 = vrot.slane %v6696, 5
      %v6793 = vrot.slane %v6792, 4
      %v6794 = vrot.slane %v6697, 5
      %v6795 = vsel %vm1767, %v6793, %v6794
      %v6796 = vrot.slane %v6794, 4
      %v6797 = vrot.slane %v6698, 5
      %v6798 = vsel %vm1767, %v6796, %v6797
      %v6799 = vrot.slane %v6699, 5
      %v6800 = vrot.slane %v6799, 4
      %v6801 = vrot.slane %v6700, 5
      %v6802 = vsel %vm1767, %v6800, %v6801
      %v6803 = vrot.slane %v6801, 4
      %v6804 = vrot.slane %v6701, 5
      %v6805 = vsel %vm1767, %v6803, %v6804
      %v6806 = vrot.slane %v6702, 5
      %v6807 = vrot.slane %v6806, 4
      %v6808 = vrot.slane %v6703, 5
      %v6809 = vsel %vm1767, %v6807, %v6808
      %v6810 = vrot.slane %v6808, 4
      %v6811 = vrot.slane %v6704, 5
      %v6812 = vsel %vm1767, %v6810, %v6811
      %v6813 = vrot.slane %v6705, 5
      %v6814 = vrot.slane %v6813, 4
      %v6815 = vrot.slane %v6706, 5
      %v6816 = vsel %vm1767, %v6814, %v6815
      %v6817 = vrot.slane %v6815, 4
      %v6818 = vrot.slane %v6707, 5
      %v6819 = vsel %vm1767, %v6817, %v6818
      %v6820 = vrot.slane %v6708, 5
      %v6821 = vrot.slane %v6820, 4
      %v6822 = vrot.slane %v6709, 5
      %v6823 = vsel %vm1767, %v6821, %v6822
      %v6824 = vrot.slane %v6822, 4
      %v6825 = vrot.slane %v6710, 5
      %v6826 = vsel %vm1767, %v6824, %v6825
      %v6827 = vrot.slane %v6711, 5
      %v6828 = vrot.slane %v6827, 4
      %v6829 = vrot.slane %v6712, 5
      %v6830 = vsel %vm1767, %v6828, %v6829
      %v6831 = vrot.slane %v6829, 4
      %v6832 = vrot.slane %v6713, 5
      %v6833 = vsel %vm1767, %v6831, %v6832
      %v6834 = vrot.slane %v6714, 5
      %v6835 = vrot.slane %v6834, 4
      %v6836 = vrot.slane %v6715, 5
      %v6837 = vsel %vm1767, %v6835, %v6836
      %v6838 = vrot.slane %v6836, 4
      %v6839 = vrot.slane %v6716, 5
      %v6840 = vsel %vm1767, %v6838, %v6839
      %v6841 = vrot.slane %v6717, 5
      %v6842 = vrot.slane %v6841, 4
      %v6843 = vrot.slane %v6718, 5
      %v6844 = vsel %vm1767, %v6842, %v6843
      %v6845 = vrot.slane %v6843, 4
      %v6846 = vrot.slane %v6719, 5
      %v6847 = vsel %vm1767, %v6845, %v6846
      %v6848 = vrot.slane %v6720, 5
      %v6849 = vrot.slane %v6848, 4
      %v6850 = vrot.slane %v6721, 5
      %v6851 = vsel %vm1767, %v6849, %v6850
      %v6852 = vrot.slane %v6850, 4
      %v6853 = vrot.slane %v6722, 5
      %v6854 = vsel %vm1767, %v6852, %v6853
      %v6855 = vrot.slane %v6723, 5
      %v6856 = vrot.slane %v6855, 4
      %v6857 = vrot.slane %v6724, 5
      %v6858 = vsel %vm1767, %v6856, %v6857
      %v6859 = vrot.slane %v6857, 4
      %v6860 = vrot.slane %v6725, 5
      %v6861 = vsel %vm1767, %v6859, %v6860
      %v6862 = vrot.slane %v6726, 5
      %v6863 = vrot.slane %v6862, 4
      %v6864 = vrot.slane %v6727, 5
      %v6865 = vsel %vm1767, %v6863, %v6864
      %v6866 = vrot.slane %v6864, 4
      %v6867 = vrot.slane %v6728, 5
      %v6868 = vsel %vm1767, %v6866, %v6867
      %v6869 = vrot.slane %v6729, 5
      %v6870 = vrot.slane %v6869, 4
      %v6871 = vrot.slane %v6730, 5
      %v6872 = vsel %vm1767, %v6870, %v6871
      %v6873 = vrot.slane %v6871, 4
      %v6874 = vrot.slane %v6731, 5
      %v6875 = vsel %vm1767, %v6873, %v6874
      %v6876 = vrot.slane %v6732, 5
      %v6877 = vrot.slane %v6876, 4
      %v6878 = vrot.slane %v6733, 5
      %v6879 = vsel %vm1767, %v6877, %v6878
      %v6880 = vrot.slane %v6878, 4
      %v6881 = vrot.slane %v6734, 5
      %v6882 = vsel %vm1767, %v6880, %v6881
      %v6883 = vrot.slane %v6735, 5
      %v6884 = vrot.slane %v6883, 4
      %v6885 = vrot.slane %v6736, 5
      %v6886 = vsel %vm1767, %v6884, %v6885
      %v6887 = vrot.slane %v6885, 4
      %v6888 = vrot.slane %v6737, 5
      %v6889 = vsel %vm1767, %v6887, %v6888
      %v6890 = vrot.slane %v6738, 5
      %v6891 = vrot.slane %v6890, 4
      %v6892 = vrot.slane %v6739, 5
      %v6893 = vsel %vm1767, %v6891, %v6892
      %v6894 = vrot.slane %v6892, 4
      %v6895 = vrot.slane %v6740, 5
      %v6896 = vsel %vm1767, %v6894, %v6895
      %v6897 = vrot.slane %v6741, 5
      %v6898 = vrot.slane %v6897, 4
      %v6899 = vrot.slane %v6742, 5
      %v6900 = vsel %vm1767, %v6898, %v6899
      %v6901 = vrot.slane %v6899, 4
      %v6902 = vrot.slane %v6743, 5
      %v6903 = vsel %vm1767, %v6901, %v6902
      %v6904 = vunpack.c.l.b16 %v6795
      %v6905 = vunpack.c.l.b16 %v6798
      %v6906 = vunpack.c.l.b16 %v6802
      %v6907 = vunpack.c.l.b16 %v6805
      %v6908 = vunpack.c.l.b16 %v6809
      %v6909 = vunpack.c.l.b16 %v6812
      %v6910 = vunpack.c.l.b16 %v6816
      %v6911 = vunpack.c.l.b16 %v6819
      %v6912 = vunpack.c.l.b16 %v6823
      %v6913 = vunpack.c.l.b16 %v6826
      %v6914 = vunpack.c.l.b16 %v6830
      %v6915 = vunpack.c.l.b16 %v6833
      %v6916 = vunpack.c.l.b16 %v6837
      %v6917 = vunpack.c.l.b16 %v6840
      %v6918 = vunpack.c.l.b16 %v6844
      %v6919 = vunpack.c.l.b16 %v6847
      %v6920 = vunpack.c.l.b16 %v6851
      %v6921 = vunpack.c.l.b16 %v6854
      %v6922 = vunpack.c.l.b16 %v6858
      %v6923 = vunpack.c.l.b16 %v6861
      %v6924 = vunpack.c.l.b16 %v6865
      %v6925 = vunpack.c.l.b16 %v6868
      %v6926 = vunpack.c.l.b16 %v6872
      %v6927 = vunpack.c.l.b16 %v6875
      %v6928 = vunpack.c.l.b16 %v6879
      %v6929 = vunpack.c.l.b16 %v6882
      %v6930 = vunpack.c.l.b16 %v6886
      %v6931 = vunpack.c.l.b16 %v6889
      %v6932 = vunpack.c.l.b16 %v6893
      %v6933 = vunpack.c.l.b16 %v6896
      %v6934 = vunpack.c.l.b16 %v6900
      %v6935 = vunpack.c.l.b16 %v6903
      %v6936 = vpack.c.b16 %v6905, %v6904
      %v6937 = vpack.c.b16 %v6907, %v6906
      %v6938 = vpack.c.b16 %v6909, %v6908
      %v6939 = vpack.c.b16 %v6911, %v6910
      %v6940 = vpack.c.b16 %v6913, %v6912
      %v6941 = vpack.c.b16 %v6915, %v6914
      %v6942 = vpack.c.b16 %v6917, %v6916
      %v6943 = vpack.c.b16 %v6919, %v6918
      %v6944 = vpack.c.b16 %v6921, %v6920
      %v6945 = vpack.c.b16 %v6923, %v6922
      %v6946 = vpack.c.b16 %v6925, %v6924
      %v6947 = vpack.c.b16 %v6927, %v6926
      %v6948 = vpack.c.b16 %v6929, %v6928
      %v6949 = vpack.c.b16 %v6931, %v6930
      %v6950 = vpack.c.b16 %v6933, %v6932
      %v6951 = vpack.c.b16 %v6935, %v6934
      %6952 = vrot.lane.b32.xlu0 %v6936, 20
      %v6953 = vpop.permute.xlu0 %6952
      %6954 = vrot.lane.b32.xlu0 %v6937, 20
      %v6955 = vpop.permute.xlu0 %6954
      %6956 = vrot.lane.b32.xlu0 %v6938, 20
      %v6957 = vpop.permute.xlu0 %6956
      %6958 = vrot.lane.b32.xlu0 %v6939, 20
      %v6959 = vpop.permute.xlu0 %6958
      %6960 = vrot.lane.b32.xlu0 %v6940, 20
      %v6961 = vpop.permute.xlu0 %6960
      %6962 = vrot.lane.b32.xlu0 %v6941, 20
      %v6963 = vpop.permute.xlu0 %6962
      %6964 = vrot.lane.b32.xlu0 %v6942, 20
      %v6965 = vpop.permute.xlu0 %6964
      %6966 = vrot.lane.b32.xlu0 %v6943, 20
      %v6967 = vpop.permute.xlu0 %6966
      %6968 = vrot.lane.b32.xlu0 %v6944, 20
      %v6969 = vpop.permute.xlu0 %6968
      %6970 = vrot.lane.b32.xlu0 %v6945, 20
      %v6971 = vpop.permute.xlu0 %6970
      %6972 = vrot.lane.b32.xlu0 %v6946, 20
      %v6973 = vpop.permute.xlu0 %6972
      %6974 = vrot.lane.b32.xlu0 %v6947, 20
      %v6975 = vpop.permute.xlu0 %6974
      %6976 = vrot.lane.b32.xlu0 %v6948, 20
      %v6977 = vpop.permute.xlu0 %6976
      %6978 = vrot.lane.b32.xlu0 %v6949, 20
      %v6979 = vpop.permute.xlu0 %6978
      %6980 = vrot.lane.b32.xlu0 %v6950, 20
      %v6981 = vpop.permute.xlu0 %6980
      %6982 = vrot.lane.b32.xlu0 %v6951, 20
      %v6983 = vpop.permute.xlu0 %6982
      %7000 = vst.msk [vmem:[#allocation3] sm:$0xff] %vm3019, %v6953
      %7001 = vst.msk [vmem:[#allocation3 + $0x8] sm:$0xff] %vm3019, %v6955
      %7002 = vst.msk [vmem:[#allocation3 + $0x10] sm:$0xff] %vm3019, %v6957
      %7003 = vst.msk [vmem:[#allocation3 + $0x18] sm:$0xff] %vm3019, %v6959
      %7004 = vst.msk [vmem:[#allocation3 + $0x20] sm:$0xff] %vm3019, %v6961
      %7005 = vst.msk [vmem:[#allocation3 + $0x28] sm:$0xff] %vm3019, %v6963
      %7006 = vst.msk [vmem:[#allocation3 + $0x30] sm:$0xff] %vm3019, %v6965
      %7007 = vst.msk [vmem:[#allocation3 + $0x38] sm:$0xff] %vm3019, %v6967
      %7008 = vst.msk [vmem:[#allocation3 + $0x40] sm:$0xff] %vm3019, %v6969
      %7009 = vst.msk [vmem:[#allocation3 + $0x48] sm:$0xff] %vm3019, %v6971
      %7010 = vst.msk [vmem:[#allocation3 + $0x50] sm:$0xff] %vm3019, %v6973
      %7011 = vst.msk [vmem:[#allocation3 + $0x58] sm:$0xff] %vm3019, %v6975
      %7012 = vst.msk [vmem:[#allocation3 + $0x60] sm:$0xff] %vm3019, %v6977
      %7013 = vst.msk [vmem:[#allocation3 + $0x68] sm:$0xff] %vm3019, %v6979
      %7014 = vst.msk [vmem:[#allocation3 + $0x70] sm:$0xff] %vm3019, %v6981
      %7015 = vst.msk [vmem:[#allocation3 + $0x78] sm:$0xff] %vm3019, %v6983
      %v7016 = vld [vmem:[%s3036] sm:$0xf]
      %v7017 = vld [vmem:[%s3036 + $0x4] sm:$0xf]
      %v7018 = vld [vmem:[%s3036 + $0xc] sm:$0xf]
      %v7019 = vld [vmem:[%s3036 + $0x10] sm:$0xf]
      %v7020 = vld [vmem:[%s3036 + $0x18] sm:$0xf]
      %v7021 = vld [vmem:[%s3036 + $0x1c] sm:$0xf]
      %v7022 = vld [vmem:[%s3036 + $0x24] sm:$0xf]
      %v7023 = vld [vmem:[%s3036 + $0x28] sm:$0xf]
      %v7024 = vld [vmem:[%s3036 + $0x30] sm:$0xf]
      %v7025 = vld [vmem:[%s3036 + $0x34] sm:$0xf]
      %v7026 = vld [vmem:[%s3036 + $0x3c] sm:$0xf]
      %v7027 = vld [vmem:[%s3036 + $0x40] sm:$0xf]
      %v7028 = vld [vmem:[%s3036 + $0x48] sm:$0xf]
      %v7029 = vld [vmem:[%s3036 + $0x4c] sm:$0xf]
      %v7030 = vld [vmem:[%s3036 + $0x54] sm:$0xf]
      %v7031 = vld [vmem:[%s3036 + $0x58] sm:$0xf]
      %v7032 = vld [vmem:[%s3036 + $0x60] sm:$0xf]
      %v7033 = vld [vmem:[%s3036 + $0x64] sm:$0xf]
      %v7034 = vld [vmem:[%s3036 + $0x6c] sm:$0xf]
      %v7035 = vld [vmem:[%s3036 + $0x70] sm:$0xf]
      %v7036 = vld [vmem:[%s3036 + $0x78] sm:$0xf]
      %v7037 = vld [vmem:[%s3036 + $0x7c] sm:$0xf]
      %v7038 = vld [vmem:[%s3036 + $0x84] sm:$0xf]
      %v7039 = vld [vmem:[%s3036 + $0x88] sm:$0xf]
      %v7040 = vld [vmem:[%s3036 + $0x90] sm:$0xf]
      %v7041 = vld [vmem:[%s3036 + $0x94] sm:$0xf]
      %v7042 = vld [vmem:[%s3036 + $0x9c] sm:$0xf]
      %v7043 = vld [vmem:[%s3036 + $0xa0] sm:$0xf]
      %v7044 = vld [vmem:[%s3036 + $0xa8] sm:$0xf]
      %v7045 = vld [vmem:[%s3036 + $0xac] sm:$0xf]
      %v7046 = vld [vmem:[%s3036 + $0xb4] sm:$0xf]
      %v7047 = vld [vmem:[%s3036 + $0xb8] sm:$0xf]
      %v7080 = vunpack.c.l.b16 %v7016
      %v7081 = vunpack.c.l.b16 %v7017
      %v7082 = vunpack.c.l.b16 %v7018
      %v7083 = vunpack.c.l.b16 %v7019
      %v7084 = vunpack.c.l.b16 %v7020
      %v7085 = vunpack.c.l.b16 %v7021
      %v7086 = vunpack.c.l.b16 %v7022
      %v7087 = vunpack.c.l.b16 %v7023
      %v7088 = vunpack.c.l.b16 %v7024
      %v7089 = vunpack.c.l.b16 %v7025
      %v7090 = vunpack.c.l.b16 %v7026
      %v7091 = vunpack.c.l.b16 %v7027
      %v7092 = vunpack.c.l.b16 %v7028
      %v7093 = vunpack.c.l.b16 %v7029
      %v7094 = vunpack.c.l.b16 %v7030
      %v7095 = vunpack.c.l.b16 %v7031
      %v7096 = vunpack.c.l.b16 %v7032
      %v7097 = vunpack.c.l.b16 %v7033
      %v7098 = vunpack.c.l.b16 %v7034
      %v7099 = vunpack.c.l.b16 %v7035
      %v7100 = vunpack.c.l.b16 %v7036
      %v7101 = vunpack.c.l.b16 %v7037
      %v7102 = vunpack.c.l.b16 %v7038
      %v7103 = vunpack.c.l.b16 %v7039
      %v7104 = vunpack.c.l.b16 %v7040
      %v7105 = vunpack.c.l.b16 %v7041
      %v7106 = vunpack.c.l.b16 %v7042
      %v7107 = vunpack.c.l.b16 %v7043
      %v7108 = vunpack.c.l.b16 %v7044
      %v7109 = vunpack.c.l.b16 %v7045
      %v7110 = vunpack.c.l.b16 %v7046
      %v7111 = vunpack.c.l.b16 %v7047
      %v7112 = vpack.c.b16 %v7081, %v7080
      %v7113 = vpack.c.b16 %v7083, %v7082
      %v7114 = vpack.c.b16 %v7085, %v7084
      %v7115 = vpack.c.b16 %v7087, %v7086
      %v7116 = vpack.c.b16 %v7089, %v7088
      %v7117 = vpack.c.b16 %v7091, %v7090
      %v7118 = vpack.c.b16 %v7093, %v7092
      %v7119 = vpack.c.b16 %v7095, %v7094
      %v7120 = vpack.c.b16 %v7097, %v7096
      %v7121 = vpack.c.b16 %v7099, %v7098
      %v7122 = vpack.c.b16 %v7101, %v7100
      %v7123 = vpack.c.b16 %v7103, %v7102
      %v7124 = vpack.c.b16 %v7105, %v7104
      %v7125 = vpack.c.b16 %v7107, %v7106
      %v7126 = vpack.c.b16 %v7109, %v7108
      %v7127 = vpack.c.b16 %v7111, %v7110
      %7128 = vrot.lane.b32.xlu0 %v7112, 24
      %v7129 = vpop.permute.xlu0 %7128
      %7130 = vrot.lane.b32.xlu0 %v7113, 24
      %v7131 = vpop.permute.xlu0 %7130
      %7132 = vrot.lane.b32.xlu0 %v7114, 24
      %v7133 = vpop.permute.xlu0 %7132
      %7134 = vrot.lane.b32.xlu0 %v7115, 24
      %v7135 = vpop.permute.xlu0 %7134
      %7136 = vrot.lane.b32.xlu0 %v7116, 24
      %v7137 = vpop.permute.xlu0 %7136
      %7138 = vrot.lane.b32.xlu0 %v7117, 24
      %v7139 = vpop.permute.xlu0 %7138
      %7140 = vrot.lane.b32.xlu0 %v7118, 24
      %v7141 = vpop.permute.xlu0 %7140
      %7142 = vrot.lane.b32.xlu0 %v7119, 24
      %v7143 = vpop.permute.xlu0 %7142
      %7144 = vrot.lane.b32.xlu0 %v7120, 24
      %v7145 = vpop.permute.xlu0 %7144
      %7146 = vrot.lane.b32.xlu0 %v7121, 24
      %v7147 = vpop.permute.xlu0 %7146
      %7148 = vrot.lane.b32.xlu0 %v7122, 24
      %v7149 = vpop.permute.xlu0 %7148
      %7150 = vrot.lane.b32.xlu0 %v7123, 24
      %v7151 = vpop.permute.xlu0 %7150
      %7152 = vrot.lane.b32.xlu0 %v7124, 24
      %v7153 = vpop.permute.xlu0 %7152
      %7154 = vrot.lane.b32.xlu0 %v7125, 24
      %v7155 = vpop.permute.xlu0 %7154
      %7156 = vrot.lane.b32.xlu0 %v7126, 24
      %v7157 = vpop.permute.xlu0 %7156
      %7158 = vrot.lane.b32.xlu0 %v7127, 24
      %v7159 = vpop.permute.xlu0 %7158
      %7176 = vst.msk [vmem:[#allocation3] sm:$0xff] %vm3197, %v7129
      %7177 = vst.msk [vmem:[#allocation3 + $0x8] sm:$0xff] %vm3197, %v7131
      %7178 = vst.msk [vmem:[#allocation3 + $0x10] sm:$0xff] %vm3197, %v7133
      %7179 = vst.msk [vmem:[#allocation3 + $0x18] sm:$0xff] %vm3197, %v7135
      %7180 = vst.msk [vmem:[#allocation3 + $0x20] sm:$0xff] %vm3197, %v7137
      %7181 = vst.msk [vmem:[#allocation3 + $0x28] sm:$0xff] %vm3197, %v7139
      %7182 = vst.msk [vmem:[#allocation3 + $0x30] sm:$0xff] %vm3197, %v7141
      %7183 = vst.msk [vmem:[#allocation3 + $0x38] sm:$0xff] %vm3197, %v7143
      %7184 = vst.msk [vmem:[#allocation3 + $0x40] sm:$0xff] %vm3197, %v7145
      %7185 = vst.msk [vmem:[#allocation3 + $0x48] sm:$0xff] %vm3197, %v7147
      %7186 = vst.msk [vmem:[#allocation3 + $0x50] sm:$0xff] %vm3197, %v7149
      %7187 = vst.msk [vmem:[#allocation3 + $0x58] sm:$0xff] %vm3197, %v7151
      %7188 = vst.msk [vmem:[#allocation3 + $0x60] sm:$0xff] %vm3197, %v7153
      %7189 = vst.msk [vmem:[#allocation3 + $0x68] sm:$0xff] %vm3197, %v7155
      %7190 = vst.msk [vmem:[#allocation3 + $0x70] sm:$0xff] %vm3197, %v7157
      %7191 = vst.msk [vmem:[#allocation3 + $0x78] sm:$0xff] %vm3197, %v7159
      %v7192 = vld [vmem:[%s3036] sm:$0xf]
      %v7193 = vld [vmem:[%s3036 + $0x4] sm:$0xf]
      %v7194 = vld [vmem:[%s3036 + $0x8] sm:$0x1]
      %v7195 = vld [vmem:[%s3036 + $0xc] sm:$0xf]
      %v7196 = vld [vmem:[%s3036 + $0x10] sm:$0xf]
      %v7197 = vld [vmem:[%s3036 + $0x14] sm:$0x1]
      %v7198 = vld [vmem:[%s3036 + $0x18] sm:$0xf]
      %v7199 = vld [vmem:[%s3036 + $0x1c] sm:$0xf]
      %v7200 = vld [vmem:[%s3036 + $0x20] sm:$0x1]
      %v7201 = vld [vmem:[%s3036 + $0x24] sm:$0xf]
      %v7202 = vld [vmem:[%s3036 + $0x28] sm:$0xf]
      %v7203 = vld [vmem:[%s3036 + $0x2c] sm:$0x1]
      %v7204 = vld [vmem:[%s3036 + $0x30] sm:$0xf]
      %v7205 = vld [vmem:[%s3036 + $0x34] sm:$0xf]
      %v7206 = vld [vmem:[%s3036 + $0x38] sm:$0x1]
      %v7207 = vld [vmem:[%s3036 + $0x3c] sm:$0xf]
      %v7208 = vld [vmem:[%s3036 + $0x40] sm:$0xf]
      %v7209 = vld [vmem:[%s3036 + $0x44] sm:$0x1]
      %v7210 = vld [vmem:[%s3036 + $0x48] sm:$0xf]
      %v7211 = vld [vmem:[%s3036 + $0x4c] sm:$0xf]
      %v7212 = vld [vmem:[%s3036 + $0x50] sm:$0x1]
      %v7213 = vld [vmem:[%s3036 + $0x54] sm:$0xf]
      %v7214 = vld [vmem:[%s3036 + $0x58] sm:$0xf]
      %v7215 = vld [vmem:[%s3036 + $0x5c] sm:$0x1]
      %v7216 = vld [vmem:[%s3036 + $0x60] sm:$0xf]
      %v7217 = vld [vmem:[%s3036 + $0x64] sm:$0xf]
      %v7218 = vld [vmem:[%s3036 + $0x68] sm:$0x1]
      %v7219 = vld [vmem:[%s3036 + $0x6c] sm:$0xf]
      %v7220 = vld [vmem:[%s3036 + $0x70] sm:$0xf]
      %v7221 = vld [vmem:[%s3036 + $0x74] sm:$0x1]
      %v7222 = vld [vmem:[%s3036 + $0x78] sm:$0xf]
      %v7223 = vld [vmem:[%s3036 + $0x7c] sm:$0xf]
      %v7224 = vld [vmem:[%s3036 + $0x80] sm:$0x1]
      %v7225 = vld [vmem:[%s3036 + $0x84] sm:$0xf]
      %v7226 = vld [vmem:[%s3036 + $0x88] sm:$0xf]
      %v7227 = vld [vmem:[%s3036 + $0x8c] sm:$0x1]
      %v7228 = vld [vmem:[%s3036 + $0x90] sm:$0xf]
      %v7229 = vld [vmem:[%s3036 + $0x94] sm:$0xf]
      %v7230 = vld [vmem:[%s3036 + $0x98] sm:$0x1]
      %v7231 = vld [vmem:[%s3036 + $0x9c] sm:$0xf]
      %v7232 = vld [vmem:[%s3036 + $0xa0] sm:$0xf]
      %v7233 = vld [vmem:[%s3036 + $0xa4] sm:$0x1]
      %v7234 = vld [vmem:[%s3036 + $0xa8] sm:$0xf]
      %v7235 = vld [vmem:[%s3036 + $0xac] sm:$0xf]
      %v7236 = vld [vmem:[%s3036 + $0xb0] sm:$0x1]
      %v7237 = vld [vmem:[%s3036 + $0xb4] sm:$0xf]
      %v7238 = vld [vmem:[%s3036 + $0xb8] sm:$0xf]
      %v7239 = vld [vmem:[%s3036 + $0xbc] sm:$0x1]
      %v7241 = vshrl.u32 %v7192, 16
      %v7243 = vrot.slane %v7241, 4
      %v7244 = vshll.u32 %v7192, 16
      %v7246 = vrot.slane %v7244, 5
      %v7247 = vor.u32 %v7243, %v7246
      %v7248 = vrot.slane %v7247, 4
      %v7250 = vshll.u32 %v7193, 16
      %v7252 = vrot.slane %v7250, 5
      %v7253 = vsel %vm1171, %v7248, %v7252
      %v7254 = vshrl.u32 %v7193, 16
      %v7256 = vrot.slane %v7254, 4
      %v7257 = vor.u32 %v7256, %v7252
      %v7258 = vrot.slane %v7257, 4
      %v7260 = vshll.u32 %v7194, 16
      %v7262 = vrot.slane %v7260, 5
      %v7263 = vsel %vm1171, %v7258, %v7262
      %v7265 = vshrl.u32 %v7195, 16
      %v7267 = vrot.slane %v7265, 4
      %v7268 = vshll.u32 %v7195, 16
      %v7270 = vrot.slane %v7268, 5
      %v7271 = vor.u32 %v7267, %v7270
      %v7272 = vrot.slane %v7271, 4
      %v7274 = vshll.u32 %v7196, 16
      %v7276 = vrot.slane %v7274, 5
      %v7277 = vsel %vm1171, %v7272, %v7276
      %v7278 = vshrl.u32 %v7196, 16
      %v7280 = vrot.slane %v7278, 4
      %v7281 = vor.u32 %v7280, %v7276
      %v7282 = vrot.slane %v7281, 4
      %v7284 = vshll.u32 %v7197, 16
      %v7286 = vrot.slane %v7284, 5
      %v7287 = vsel %vm1171, %v7282, %v7286
      %v7289 = vshrl.u32 %v7198, 16
      %v7291 = vrot.slane %v7289, 4
      %v7292 = vshll.u32 %v7198, 16
      %v7294 = vrot.slane %v7292, 5
      %v7295 = vor.u32 %v7291, %v7294
      %v7296 = vrot.slane %v7295, 4
      %v7298 = vshll.u32 %v7199, 16
      %v7300 = vrot.slane %v7298, 5
      %v7301 = vsel %vm1171, %v7296, %v7300
      %v7302 = vshrl.u32 %v7199, 16
      %v7304 = vrot.slane %v7302, 4
      %v7305 = vor.u32 %v7304, %v7300
      %v7306 = vrot.slane %v7305, 4
      %v7308 = vshll.u32 %v7200, 16
      %v7310 = vrot.slane %v7308, 5
      %v7311 = vsel %vm1171, %v7306, %v7310
      %v7313 = vshrl.u32 %v7201, 16
      %v7315 = vrot.slane %v7313, 4
      %v7316 = vshll.u32 %v7201, 16
      %v7318 = vrot.slane %v7316, 5
      %v7319 = vor.u32 %v7315, %v7318
      %v7320 = vrot.slane %v7319, 4
      %v7322 = vshll.u32 %v7202, 16
      %v7324 = vrot.slane %v7322, 5
      %v7325 = vsel %vm1171, %v7320, %v7324
      %v7326 = vshrl.u32 %v7202, 16
      %v7328 = vrot.slane %v7326, 4
      %v7329 = vor.u32 %v7328, %v7324
      %v7330 = vrot.slane %v7329, 4
      %v7332 = vshll.u32 %v7203, 16
      %v7334 = vrot.slane %v7332, 5
      %v7335 = vsel %vm1171, %v7330, %v7334
      %v7337 = vshrl.u32 %v7204, 16
      %v7339 = vrot.slane %v7337, 4
      %v7340 = vshll.u32 %v7204, 16
      %v7342 = vrot.slane %v7340, 5
      %v7343 = vor.u32 %v7339, %v7342
      %v7344 = vrot.slane %v7343, 4
      %v7346 = vshll.u32 %v7205, 16
      %v7348 = vrot.slane %v7346, 5
      %v7349 = vsel %vm1171, %v7344, %v7348
      %v7350 = vshrl.u32 %v7205, 16
      %v7352 = vrot.slane %v7350, 4
      %v7353 = vor.u32 %v7352, %v7348
      %v7354 = vrot.slane %v7353, 4
      %v7356 = vshll.u32 %v7206, 16
      %v7358 = vrot.slane %v7356, 5
      %v7359 = vsel %vm1171, %v7354, %v7358
      %v7361 = vshrl.u32 %v7207, 16
      %v7363 = vrot.slane %v7361, 4
      %v7364 = vshll.u32 %v7207, 16
      %v7366 = vrot.slane %v7364, 5
      %v7367 = vor.u32 %v7363, %v7366
      %v7368 = vrot.slane %v7367, 4
      %v7370 = vshll.u32 %v7208, 16
      %v7372 = vrot.slane %v7370, 5
      %v7373 = vsel %vm1171, %v7368, %v7372
      %v7374 = vshrl.u32 %v7208, 16
      %v7376 = vrot.slane %v7374, 4
      %v7377 = vor.u32 %v7376, %v7372
      %v7378 = vrot.slane %v7377, 4
      %v7380 = vshll.u32 %v7209, 16
      %v7382 = vrot.slane %v7380, 5
      %v7383 = vsel %vm1171, %v7378, %v7382
      %v7385 = vshrl.u32 %v7210, 16
      %v7387 = vrot.slane %v7385, 4
      %v7388 = vshll.u32 %v7210, 16
      %v7390 = vrot.slane %v7388, 5
      %v7391 = vor.u32 %v7387, %v7390
      %v7392 = vrot.slane %v7391, 4
      %v7394 = vshll.u32 %v7211, 16
      %v7396 = vrot.slane %v7394, 5
      %v7397 = vsel %vm1171, %v7392, %v7396
      %v7398 = vshrl.u32 %v7211, 16
      %v7400 = vrot.slane %v7398, 4
      %v7401 = vor.u32 %v7400, %v7396
      %v7402 = vrot.slane %v7401, 4
      %v7404 = vshll.u32 %v7212, 16
      %v7406 = vrot.slane %v7404, 5
      %v7407 = vsel %vm1171, %v7402, %v7406
      %v7409 = vshrl.u32 %v7213, 16
      %v7411 = vrot.slane %v7409, 4
      %v7412 = vshll.u32 %v7213, 16
      %v7414 = vrot.slane %v7412, 5
      %v7415 = vor.u32 %v7411, %v7414
      %v7416 = vrot.slane %v7415, 4
      %v7418 = vshll.u32 %v7214, 16
      %v7420 = vrot.slane %v7418, 5
      %v7421 = vsel %vm1171, %v7416, %v7420
      %v7422 = vshrl.u32 %v7214, 16
      %v7424 = vrot.slane %v7422, 4
      %v7425 = vor.u32 %v7424, %v7420
      %v7426 = vrot.slane %v7425, 4
      %v7428 = vshll.u32 %v7215, 16
      %v7430 = vrot.slane %v7428, 5
      %v7431 = vsel %vm1171, %v7426, %v7430
      %v7433 = vshrl.u32 %v7216, 16
      %v7435 = vrot.slane %v7433, 4
      %v7436 = vshll.u32 %v7216, 16
      %v7438 = vrot.slane %v7436, 5
      %v7439 = vor.u32 %v7435, %v7438
      %v7440 = vrot.slane %v7439, 4
      %v7442 = vshll.u32 %v7217, 16
      %v7444 = vrot.slane %v7442, 5
      %v7445 = vsel %vm1171, %v7440, %v7444
      %v7446 = vshrl.u32 %v7217, 16
      %v7448 = vrot.slane %v7446, 4
      %v7449 = vor.u32 %v7448, %v7444
      %v7450 = vrot.slane %v7449, 4
      %v7452 = vshll.u32 %v7218, 16
      %v7454 = vrot.slane %v7452, 5
      %v7455 = vsel %vm1171, %v7450, %v7454
      %v7457 = vshrl.u32 %v7219, 16
      %v7459 = vrot.slane %v7457, 4
      %v7460 = vshll.u32 %v7219, 16
      %v7462 = vrot.slane %v7460, 5
      %v7463 = vor.u32 %v7459, %v7462
      %v7464 = vrot.slane %v7463, 4
      %v7466 = vshll.u32 %v7220, 16
      %v7468 = vrot.slane %v7466, 5
      %v7469 = vsel %vm1171, %v7464, %v7468
      %v7470 = vshrl.u32 %v7220, 16
      %v7472 = vrot.slane %v7470, 4
      %v7473 = vor.u32 %v7472, %v7468
      %v7474 = vrot.slane %v7473, 4
      %v7476 = vshll.u32 %v7221, 16
      %v7478 = vrot.slane %v7476, 5
      %v7479 = vsel %vm1171, %v7474, %v7478
      %v7481 = vshrl.u32 %v7222, 16
      %v7483 = vrot.slane %v7481, 4
      %v7484 = vshll.u32 %v7222, 16
      %v7486 = vrot.slane %v7484, 5
      %v7487 = vor.u32 %v7483, %v7486
      %v7488 = vrot.slane %v7487, 4
      %v7490 = vshll.u32 %v7223, 16
      %v7492 = vrot.slane %v7490, 5
      %v7493 = vsel %vm1171, %v7488, %v7492
      %v7494 = vshrl.u32 %v7223, 16
      %v7496 = vrot.slane %v7494, 4
      %v7497 = vor.u32 %v7496, %v7492
      %v7498 = vrot.slane %v7497, 4
      %v7500 = vshll.u32 %v7224, 16
      %v7502 = vrot.slane %v7500, 5
      %v7503 = vsel %vm1171, %v7498, %v7502
      %v7505 = vshrl.u32 %v7225, 16
      %v7507 = vrot.slane %v7505, 4
      %v7508 = vshll.u32 %v7225, 16
      %v7510 = vrot.slane %v7508, 5
      %v7511 = vor.u32 %v7507, %v7510
      %v7512 = vrot.slane %v7511, 4
      %v7514 = vshll.u32 %v7226, 16
      %v7516 = vrot.slane %v7514, 5
      %v7517 = vsel %vm1171, %v7512, %v7516
      %v7518 = vshrl.u32 %v7226, 16
      %v7520 = vrot.slane %v7518, 4
      %v7521 = vor.u32 %v7520, %v7516
      %v7522 = vrot.slane %v7521, 4
      %v7524 = vshll.u32 %v7227, 16
      %v7526 = vrot.slane %v7524, 5
      %v7527 = vsel %vm1171, %v7522, %v7526
      %v7529 = vshrl.u32 %v7228, 16
      %v7531 = vrot.slane %v7529, 4
      %v7532 = vshll.u32 %v7228, 16
      %v7534 = vrot.slane %v7532, 5
      %v7535 = vor.u32 %v7531, %v7534
      %v7536 = vrot.slane %v7535, 4
      %v7538 = vshll.u32 %v7229, 16
      %v7540 = vrot.slane %v7538, 5
      %v7541 = vsel %vm1171, %v7536, %v7540
      %v7542 = vshrl.u32 %v7229, 16
      %v7544 = vrot.slane %v7542, 4
      %v7545 = vor.u32 %v7544, %v7540
      %v7546 = vrot.slane %v7545, 4
      %v7548 = vshll.u32 %v7230, 16
      %v7550 = vrot.slane %v7548, 5
      %v7551 = vsel %vm1171, %v7546, %v7550
      %v7553 = vshrl.u32 %v7231, 16
      %v7555 = vrot.slane %v7553, 4
      %v7556 = vshll.u32 %v7231, 16
      %v7558 = vrot.slane %v7556, 5
      %v7559 = vor.u32 %v7555, %v7558
      %v7560 = vrot.slane %v7559, 4
      %v7562 = vshll.u32 %v7232, 16
      %v7564 = vrot.slane %v7562, 5
      %v7565 = vsel %vm1171, %v7560, %v7564
      %v7566 = vshrl.u32 %v7232, 16
      %v7568 = vrot.slane %v7566, 4
      %v7569 = vor.u32 %v7568, %v7564
      %v7570 = vrot.slane %v7569, 4
      %v7572 = vshll.u32 %v7233, 16
      %v7574 = vrot.slane %v7572, 5
      %v7575 = vsel %vm1171, %v7570, %v7574
      %v7577 = vshrl.u32 %v7234, 16
      %v7579 = vrot.slane %v7577, 4
      %v7580 = vshll.u32 %v7234, 16
      %v7582 = vrot.slane %v7580, 5
      %v7583 = vor.u32 %v7579, %v7582
      %v7584 = vrot.slane %v7583, 4
      %v7586 = vshll.u32 %v7235, 16
      %v7588 = vrot.slane %v7586, 5
      %v7589 = vsel %vm1171, %v7584, %v7588
      %v7590 = vshrl.u32 %v7235, 16
      %v7592 = vrot.slane %v7590, 4
      %v7593 = vor.u32 %v7592, %v7588
      %v7594 = vrot.slane %v7593, 4
      %v7596 = vshll.u32 %v7236, 16
      %v7598 = vrot.slane %v7596, 5
      %v7599 = vsel %vm1171, %v7594, %v7598
      %v7601 = vshrl.u32 %v7237, 16
      %v7603 = vrot.slane %v7601, 4
      %v7604 = vshll.u32 %v7237, 16
      %v7606 = vrot.slane %v7604, 5
      %v7607 = vor.u32 %v7603, %v7606
      %v7608 = vrot.slane %v7607, 4
      %v7610 = vshll.u32 %v7238, 16
      %v7612 = vrot.slane %v7610, 5
      %v7613 = vsel %vm1171, %v7608, %v7612
      %v7614 = vshrl.u32 %v7238, 16
      %v7616 = vrot.slane %v7614, 4
      %v7617 = vor.u32 %v7616, %v7612
      %v7618 = vrot.slane %v7617, 4
      %v7620 = vshll.u32 %v7239, 16
      %v7622 = vrot.slane %v7620, 5
      %v7623 = vsel %vm1171, %v7618, %v7622
      %v7624 = vunpack.c.l.b16 %v7253
      %v7625 = vunpack.c.l.b16 %v7263
      %v7626 = vunpack.c.l.b16 %v7277
      %v7627 = vunpack.c.l.b16 %v7287
      %v7628 = vunpack.c.l.b16 %v7301
      %v7629 = vunpack.c.l.b16 %v7311
      %v7630 = vunpack.c.l.b16 %v7325
      %v7631 = vunpack.c.l.b16 %v7335
      %v7632 = vunpack.c.l.b16 %v7349
      %v7633 = vunpack.c.l.b16 %v7359
      %v7634 = vunpack.c.l.b16 %v7373
      %v7635 = vunpack.c.l.b16 %v7383
      %v7636 = vunpack.c.l.b16 %v7397
      %v7637 = vunpack.c.l.b16 %v7407
      %v7638 = vunpack.c.l.b16 %v7421
      %v7639 = vunpack.c.l.b16 %v7431
      %v7640 = vunpack.c.l.b16 %v7445
      %v7641 = vunpack.c.l.b16 %v7455
      %v7642 = vunpack.c.l.b16 %v7469
      %v7643 = vunpack.c.l.b16 %v7479
      %v7644 = vunpack.c.l.b16 %v7493
      %v7645 = vunpack.c.l.b16 %v7503
      %v7646 = vunpack.c.l.b16 %v7517
      %v7647 = vunpack.c.l.b16 %v7527
      %v7648 = vunpack.c.l.b16 %v7541
      %v7649 = vunpack.c.l.b16 %v7551
      %v7650 = vunpack.c.l.b16 %v7565
      %v7651 = vunpack.c.l.b16 %v7575
      %v7652 = vunpack.c.l.b16 %v7589
      %v7653 = vunpack.c.l.b16 %v7599
      %v7654 = vunpack.c.l.b16 %v7613
      %v7655 = vunpack.c.l.b16 %v7623
      %v7656 = vpack.c.b16 %v7625, %v7624
      %v7657 = vpack.c.b16 %v7627, %v7626
      %v7658 = vpack.c.b16 %v7629, %v7628
      %v7659 = vpack.c.b16 %v7631, %v7630
      %v7660 = vpack.c.b16 %v7633, %v7632
      %v7661 = vpack.c.b16 %v7635, %v7634
      %v7662 = vpack.c.b16 %v7637, %v7636
      %v7663 = vpack.c.b16 %v7639, %v7638
      %v7664 = vpack.c.b16 %v7641, %v7640
      %v7665 = vpack.c.b16 %v7643, %v7642
      %v7666 = vpack.c.b16 %v7645, %v7644
      %v7667 = vpack.c.b16 %v7647, %v7646
      %v7668 = vpack.c.b16 %v7649, %v7648
      %v7669 = vpack.c.b16 %v7651, %v7650
      %v7670 = vpack.c.b16 %v7653, %v7652
      %v7671 = vpack.c.b16 %v7655, %v7654
      %7672 = vrot.lane.b32.xlu0 %v7656, 28
      %v7673 = vpop.permute.xlu0 %7672
      %7674 = vrot.lane.b32.xlu0 %v7657, 28
      %v7675 = vpop.permute.xlu0 %7674
      %7676 = vrot.lane.b32.xlu0 %v7658, 28
      %v7677 = vpop.permute.xlu0 %7676
      %7678 = vrot.lane.b32.xlu0 %v7659, 28
      %v7679 = vpop.permute.xlu0 %7678
      %7680 = vrot.lane.b32.xlu0 %v7660, 28
      %v7681 = vpop.permute.xlu0 %7680
      %7682 = vrot.lane.b32.xlu0 %v7661, 28
      %v7683 = vpop.permute.xlu0 %7682
      %7684 = vrot.lane.b32.xlu0 %v7662, 28
      %v7685 = vpop.permute.xlu0 %7684
      %7686 = vrot.lane.b32.xlu0 %v7663, 28
      %v7687 = vpop.permute.xlu0 %7686
      %7688 = vrot.lane.b32.xlu0 %v7664, 28
      %v7689 = vpop.permute.xlu0 %7688
      %7690 = vrot.lane.b32.xlu0 %v7665, 28
      %v7691 = vpop.permute.xlu0 %7690
      %7692 = vrot.lane.b32.xlu0 %v7666, 28
      %v7693 = vpop.permute.xlu0 %7692
      %7694 = vrot.lane.b32.xlu0 %v7667, 28
      %v7695 = vpop.permute.xlu0 %7694
      %7696 = vrot.lane.b32.xlu0 %v7668, 28
      %v7697 = vpop.permute.xlu0 %7696
      %7698 = vrot.lane.b32.xlu0 %v7669, 28
      %v7699 = vpop.permute.xlu0 %7698
      %7700 = vrot.lane.b32.xlu0 %v7670, 28
      %v7701 = vpop.permute.xlu0 %7700
      %7702 = vrot.lane.b32.xlu0 %v7671, 28
      %v7703 = vpop.permute.xlu0 %7702
      %7720 = vst.msk [vmem:[#allocation3] sm:$0xff] %vm3742, %v7673
      %7721 = vst.msk [vmem:[#allocation3 + $0x8] sm:$0xff] %vm3742, %v7675
      %7722 = vst.msk [vmem:[#allocation3 + $0x10] sm:$0xff] %vm3742, %v7677
      %7723 = vst.msk [vmem:[#allocation3 + $0x18] sm:$0xff] %vm3742, %v7679
      %7724 = vst.msk [vmem:[#allocation3 + $0x20] sm:$0xff] %vm3742, %v7681
      %7725 = vst.msk [vmem:[#allocation3 + $0x28] sm:$0xff] %vm3742, %v7683
      %7726 = vst.msk [vmem:[#allocation3 + $0x30] sm:$0xff] %vm3742, %v7685
      %7727 = vst.msk [vmem:[#allocation3 + $0x38] sm:$0xff] %vm3742, %v7687
      %7728 = vst.msk [vmem:[#allocation3 + $0x40] sm:$0xff] %vm3742, %v7689
      %7729 = vst.msk [vmem:[#allocation3 + $0x48] sm:$0xff] %vm3742, %v7691
      %7730 = vst.msk [vmem:[#allocation3 + $0x50] sm:$0xff] %vm3742, %v7693
      %7731 = vst.msk [vmem:[#allocation3 + $0x58] sm:$0xff] %vm3742, %v7695
      %7732 = vst.msk [vmem:[#allocation3 + $0x60] sm:$0xff] %vm3742, %v7697
      %7733 = vst.msk [vmem:[#allocation3 + $0x68] sm:$0xff] %vm3742, %v7699
      %7734 = vst.msk [vmem:[#allocation3 + $0x70] sm:$0xff] %vm3742, %v7701
      %7735 = vst.msk [vmem:[#allocation3 + $0x78] sm:$0xff] %vm3742, %v7703
      %v7736 = vld [vmem:[%s3036] sm:$0xe]
      %v7737 = vld [vmem:[%s3036 + $0x4] sm:$0xf]
      %v7738 = vld [vmem:[%s3036 + $0x8] sm:$0x1]
      %v7739 = vld [vmem:[%s3036 + $0xc] sm:$0xe]
      %v7740 = vld [vmem:[%s3036 + $0x10] sm:$0xf]
      %v7741 = vld [vmem:[%s3036 + $0x14] sm:$0x1]
      %v7742 = vld [vmem:[%s3036 + $0x18] sm:$0xe]
      %v7743 = vld [vmem:[%s3036 + $0x1c] sm:$0xf]
      %v7744 = vld [vmem:[%s3036 + $0x20] sm:$0x1]
      %v7745 = vld [vmem:[%s3036 + $0x24] sm:$0xe]
      %v7746 = vld [vmem:[%s3036 + $0x28] sm:$0xf]
      %v7747 = vld [vmem:[%s3036 + $0x2c] sm:$0x1]
      %v7748 = vld [vmem:[%s3036 + $0x30] sm:$0xe]
      %v7749 = vld [vmem:[%s3036 + $0x34] sm:$0xf]
      %v7750 = vld [vmem:[%s3036 + $0x38] sm:$0x1]
      %v7751 = vld [vmem:[%s3036 + $0x3c] sm:$0xe]
      %v7752 = vld [vmem:[%s3036 + $0x40] sm:$0xf]
      %v7753 = vld [vmem:[%s3036 + $0x44] sm:$0x1]
      %v7754 = vld [vmem:[%s3036 + $0x48] sm:$0xe]
      %v7755 = vld [vmem:[%s3036 + $0x4c] sm:$0xf]
      %v7756 = vld [vmem:[%s3036 + $0x50] sm:$0x1]
      %v7757 = vld [vmem:[%s3036 + $0x54] sm:$0xe]
      %v7758 = vld [vmem:[%s3036 + $0x58] sm:$0xf]
      %v7759 = vld [vmem:[%s3036 + $0x5c] sm:$0x1]
      %v7760 = vld [vmem:[%s3036 + $0x60] sm:$0xe]
      %v7761 = vld [vmem:[%s3036 + $0x64] sm:$0xf]
      %v7762 = vld [vmem:[%s3036 + $0x68] sm:$0x1]
      %v7763 = vld [vmem:[%s3036 + $0x6c] sm:$0xe]
      %v7764 = vld [vmem:[%s3036 + $0x70] sm:$0xf]
      %v7765 = vld [vmem:[%s3036 + $0x74] sm:$0x1]
      %v7766 = vld [vmem:[%s3036 + $0x78] sm:$0xe]
      %v7767 = vld [vmem:[%s3036 + $0x7c] sm:$0xf]
      %v7768 = vld [vmem:[%s3036 + $0x80] sm:$0x1]
      %v7769 = vld [vmem:[%s3036 + $0x84] sm:$0xe]
      %v7770 = vld [vmem:[%s3036 + $0x88] sm:$0xf]
      %v7771 = vld [vmem:[%s3036 + $0x8c] sm:$0x1]
      %v7772 = vld [vmem:[%s3036 + $0x90] sm:$0xe]
      %v7773 = vld [vmem:[%s3036 + $0x94] sm:$0xf]
      %v7774 = vld [vmem:[%s3036 + $0x98] sm:$0x1]
      %v7775 = vld [vmem:[%s3036 + $0x9c] sm:$0xe]
      %v7776 = vld [vmem:[%s3036 + $0xa0] sm:$0xf]
      %v7777 = vld [vmem:[%s3036 + $0xa4] sm:$0x1]
      %v7778 = vld [vmem:[%s3036 + $0xa8] sm:$0xe]
      %v7779 = vld [vmem:[%s3036 + $0xac] sm:$0xf]
      %v7780 = vld [vmem:[%s3036 + $0xb0] sm:$0x1]
      %v7781 = vld [vmem:[%s3036 + $0xb4] sm:$0xe]
      %v7782 = vld [vmem:[%s3036 + $0xb8] sm:$0xf]
      %v7783 = vld [vmem:[%s3036 + $0xbc] sm:$0x1]
      %v7832 = vrot.slane %v7736, 5
      %v7833 = vrot.slane %v7832, 4
      %v7834 = vrot.slane %v7737, 5
      %v7835 = vsel %vm1767, %v7833, %v7834
      %v7836 = vrot.slane %v7834, 4
      %v7837 = vrot.slane %v7738, 5
      %v7838 = vsel %vm1767, %v7836, %v7837
      %v7839 = vrot.slane %v7739, 5
      %v7840 = vrot.slane %v7839, 4
      %v7841 = vrot.slane %v7740, 5
      %v7842 = vsel %vm1767, %v7840, %v7841
      %v7843 = vrot.slane %v7841, 4
      %v7844 = vrot.slane %v7741, 5
      %v7845 = vsel %vm1767, %v7843, %v7844
      %v7846 = vrot.slane %v7742, 5
      %v7847 = vrot.slane %v7846, 4
      %v7848 = vrot.slane %v7743, 5
      %v7849 = vsel %vm1767, %v7847, %v7848
      %v7850 = vrot.slane %v7848, 4
      %v7851 = vrot.slane %v7744, 5
      %v7852 = vsel %vm1767, %v7850, %v7851
      %v7853 = vrot.slane %v7745, 5
      %v7854 = vrot.slane %v7853, 4
      %v7855 = vrot.slane %v7746, 5
      %v7856 = vsel %vm1767, %v7854, %v7855
      %v7857 = vrot.slane %v7855, 4
      %v7858 = vrot.slane %v7747, 5
      %v7859 = vsel %vm1767, %v7857, %v7858
      %v7860 = vrot.slane %v7748, 5
      %v7861 = vrot.slane %v7860, 4
      %v7862 = vrot.slane %v7749, 5
      %v7863 = vsel %vm1767, %v7861, %v7862
      %v7864 = vrot.slane %v7862, 4
      %v7865 = vrot.slane %v7750, 5
      %v7866 = vsel %vm1767, %v7864, %v7865
      %v7867 = vrot.slane %v7751, 5
      %v7868 = vrot.slane %v7867, 4
      %v7869 = vrot.slane %v7752, 5
      %v7870 = vsel %vm1767, %v7868, %v7869
      %v7871 = vrot.slane %v7869, 4
      %v7872 = vrot.slane %v7753, 5
      %v7873 = vsel %vm1767, %v7871, %v7872
      %v7874 = vrot.slane %v7754, 5
      %v7875 = vrot.slane %v7874, 4
      %v7876 = vrot.slane %v7755, 5
      %v7877 = vsel %vm1767, %v7875, %v7876
      %v7878 = vrot.slane %v7876, 4
      %v7879 = vrot.slane %v7756, 5
      %v7880 = vsel %vm1767, %v7878, %v7879
      %v7881 = vrot.slane %v7757, 5
      %v7882 = vrot.slane %v7881, 4
      %v7883 = vrot.slane %v7758, 5
      %v7884 = vsel %vm1767, %v7882, %v7883
      %v7885 = vrot.slane %v7883, 4
      %v7886 = vrot.slane %v7759, 5
      %v7887 = vsel %vm1767, %v7885, %v7886
      %v7888 = vrot.slane %v7760, 5
      %v7889 = vrot.slane %v7888, 4
      %v7890 = vrot.slane %v7761, 5
      %v7891 = vsel %vm1767, %v7889, %v7890
      %v7892 = vrot.slane %v7890, 4
      %v7893 = vrot.slane %v7762, 5
      %v7894 = vsel %vm1767, %v7892, %v7893
      %v7895 = vrot.slane %v7763, 5
      %v7896 = vrot.slane %v7895, 4
      %v7897 = vrot.slane %v7764, 5
      %v7898 = vsel %vm1767, %v7896, %v7897
      %v7899 = vrot.slane %v7897, 4
      %v7900 = vrot.slane %v7765, 5
      %v7901 = vsel %vm1767, %v7899, %v7900
      %v7902 = vrot.slane %v7766, 5
      %v7903 = vrot.slane %v7902, 4
      %v7904 = vrot.slane %v7767, 5
      %v7905 = vsel %vm1767, %v7903, %v7904
      %v7906 = vrot.slane %v7904, 4
      %v7907 = vrot.slane %v7768, 5
      %v7908 = vsel %vm1767, %v7906, %v7907
      %v7909 = vrot.slane %v7769, 5
      %v7910 = vrot.slane %v7909, 4
      %v7911 = vrot.slane %v7770, 5
      %v7912 = vsel %vm1767, %v7910, %v7911
      %v7913 = vrot.slane %v7911, 4
      %v7914 = vrot.slane %v7771, 5
      %v7915 = vsel %vm1767, %v7913, %v7914
      %v7916 = vrot.slane %v7772, 5
      %v7917 = vrot.slane %v7916, 4
      %v7918 = vrot.slane %v7773, 5
      %v7919 = vsel %vm1767, %v7917, %v7918
      %v7920 = vrot.slane %v7918, 4
      %v7921 = vrot.slane %v7774, 5
      %v7922 = vsel %vm1767, %v7920, %v7921
      %v7923 = vrot.slane %v7775, 5
      %v7924 = vrot.slane %v7923, 4
      %v7925 = vrot.slane %v7776, 5
      %v7926 = vsel %vm1767, %v7924, %v7925
      %v7927 = vrot.slane %v7925, 4
      %v7928 = vrot.slane %v7777, 5
      %v7929 = vsel %vm1767, %v7927, %v7928
      %v7930 = vrot.slane %v7778, 5
      %v7931 = vrot.slane %v7930, 4
      %v7932 = vrot.slane %v7779, 5
      %v7933 = vsel %vm1767, %v7931, %v7932
      %v7934 = vrot.slane %v7932, 4
      %v7935 = vrot.slane %v7780, 5
      %v7936 = vsel %vm1767, %v7934, %v7935
      %v7937 = vrot.slane %v7781, 5
      %v7938 = vrot.slane %v7937, 4
      %v7939 = vrot.slane %v7782, 5
      %v7940 = vsel %vm1767, %v7938, %v7939
      %v7941 = vrot.slane %v7939, 4
      %v7942 = vrot.slane %v7783, 5
      %v7943 = vsel %vm1767, %v7941, %v7942
      %v7944 = vunpack.c.l.b16 %v7835
      %v7945 = vunpack.c.l.b16 %v7838
      %v7946 = vunpack.c.l.b16 %v7842
      %v7947 = vunpack.c.l.b16 %v7845
      %v7948 = vunpack.c.l.b16 %v7849
      %v7949 = vunpack.c.l.b16 %v7852
      %v7950 = vunpack.c.l.b16 %v7856
      %v7951 = vunpack.c.l.b16 %v7859
      %v7952 = vunpack.c.l.b16 %v7863
      %v7953 = vunpack.c.l.b16 %v7866
      %v7954 = vunpack.c.l.b16 %v7870
      %v7955 = vunpack.c.l.b16 %v7873
      %v7956 = vunpack.c.l.b16 %v7877
      %v7957 = vunpack.c.l.b16 %v7880
      %v7958 = vunpack.c.l.b16 %v7884
      %v7959 = vunpack.c.l.b16 %v7887
      %v7960 = vunpack.c.l.b16 %v7891
      %v7961 = vunpack.c.l.b16 %v7894
      %v7962 = vunpack.c.l.b16 %v7898
      %v7963 = vunpack.c.l.b16 %v7901
      %v7964 = vunpack.c.l.b16 %v7905
      %v7965 = vunpack.c.l.b16 %v7908
      %v7966 = vunpack.c.l.b16 %v7912
      %v7967 = vunpack.c.l.b16 %v7915
      %v7968 = vunpack.c.l.b16 %v7919
      %v7969 = vunpack.c.l.b16 %v7922
      %v7970 = vunpack.c.l.b16 %v7926
      %v7971 = vunpack.c.l.b16 %v7929
      %v7972 = vunpack.c.l.b16 %v7933
      %v7973 = vunpack.c.l.b16 %v7936
      %v7974 = vunpack.c.l.b16 %v7940
      %v7975 = vunpack.c.l.b16 %v7943
      %v7976 = vpack.c.b16 %v7945, %v7944
      %v7977 = vpack.c.b16 %v7947, %v7946
      %v7978 = vpack.c.b16 %v7949, %v7948
      %v7979 = vpack.c.b16 %v7951, %v7950
      %v7980 = vpack.c.b16 %v7953, %v7952
      %v7981 = vpack.c.b16 %v7955, %v7954
      %v7982 = vpack.c.b16 %v7957, %v7956
      %v7983 = vpack.c.b16 %v7959, %v7958
      %v7984 = vpack.c.b16 %v7961, %v7960
      %v7985 = vpack.c.b16 %v7963, %v7962
      %v7986 = vpack.c.b16 %v7965, %v7964
      %v7987 = vpack.c.b16 %v7967, %v7966
      %v7988 = vpack.c.b16 %v7969, %v7968
      %v7989 = vpack.c.b16 %v7971, %v7970
      %v7990 = vpack.c.b16 %v7973, %v7972
      %v7991 = vpack.c.b16 %v7975, %v7974
      %7992 = vrot.lane.b32.xlu0 %v7976, 32
      %v7993 = vpop.permute.xlu0 %7992
      %7994 = vrot.lane.b32.xlu0 %v7977, 32
      %v7995 = vpop.permute.xlu0 %7994
      %7996 = vrot.lane.b32.xlu0 %v7978, 32
      %v7997 = vpop.permute.xlu0 %7996
      %7998 = vrot.lane.b32.xlu0 %v7979, 32
      %v7999 = vpop.permute.xlu0 %7998
      %8000 = vrot.lane.b32.xlu0 %v7980, 32
      %v8001 = vpop.permute.xlu0 %8000
      %8002 = vrot.lane.b32.xlu0 %v7981, 32
      %v8003 = vpop.permute.xlu0 %8002
      %8004 = vrot.lane.b32.xlu0 %v7982, 32
      %v8005 = vpop.permute.xlu0 %8004
      %8006 = vrot.lane.b32.xlu0 %v7983, 32
      %v8007 = vpop.permute.xlu0 %8006
      %8008 = vrot.lane.b32.xlu0 %v7984, 32
      %v8009 = vpop.permute.xlu0 %8008
      %8010 = vrot.lane.b32.xlu0 %v7985, 32
      %v8011 = vpop.permute.xlu0 %8010
      %8012 = vrot.lane.b32.xlu0 %v7986, 32
      %v8013 = vpop.permute.xlu0 %8012
      %8014 = vrot.lane.b32.xlu0 %v7987, 32
      %v8015 = vpop.permute.xlu0 %8014
      %8016 = vrot.lane.b32.xlu0 %v7988, 32
      %v8017 = vpop.permute.xlu0 %8016
      %8018 = vrot.lane.b32.xlu0 %v7989, 32
      %v8019 = vpop.permute.xlu0 %8018
      %8020 = vrot.lane.b32.xlu0 %v7990, 32
      %v8021 = vpop.permute.xlu0 %8020
      %8022 = vrot.lane.b32.xlu0 %v7991, 32
      %v8023 = vpop.permute.xlu0 %8022
      %8040 = vst.msk [vmem:[#allocation3] sm:$0xff] %vm4063, %v7993
      %8041 = vst.msk [vmem:[#allocation3 + $0x8] sm:$0xff] %vm4063, %v7995
      %8042 = vst.msk [vmem:[#allocation3 + $0x10] sm:$0xff] %vm4063, %v7997
      %8043 = vst.msk [vmem:[#allocation3 + $0x18] sm:$0xff] %vm4063, %v7999
      %8044 = vst.msk [vmem:[#allocation3 + $0x20] sm:$0xff] %vm4063, %v8001
      %8045 = vst.msk [vmem:[#allocation3 + $0x28] sm:$0xff] %vm4063, %v8003
      %8046 = vst.msk [vmem:[#allocation3 + $0x30] sm:$0xff] %vm4063, %v8005
      %8047 = vst.msk [vmem:[#allocation3 + $0x38] sm:$0xff] %vm4063, %v8007
      %8048 = vst.msk [vmem:[#allocation3 + $0x40] sm:$0xff] %vm4063, %v8009
      %8049 = vst.msk [vmem:[#allocation3 + $0x48] sm:$0xff] %vm4063, %v8011
      %8050 = vst.msk [vmem:[#allocation3 + $0x50] sm:$0xff] %vm4063, %v8013
      %8051 = vst.msk [vmem:[#allocation3 + $0x58] sm:$0xff] %vm4063, %v8015
      %8052 = vst.msk [vmem:[#allocation3 + $0x60] sm:$0xff] %vm4063, %v8017
      %8053 = vst.msk [vmem:[#allocation3 + $0x68] sm:$0xff] %vm4063, %v8019
      %8054 = vst.msk [vmem:[#allocation3 + $0x70] sm:$0xff] %vm4063, %v8021
      %8055 = vst.msk [vmem:[#allocation3 + $0x78] sm:$0xff] %vm4063, %v8023
      %v8056 = vld [vmem:[#allocation3] sm:$0xff]
      %v8057 = vld [vmem:[#allocation3 + $0x8] sm:$0xff]
      %v8058 = vld [vmem:[#allocation3 + $0x10] sm:$0xff]
      %v8059 = vld [vmem:[#allocation3 + $0x18] sm:$0xff]
      %v8060 = vld [vmem:[#allocation3 + $0x20] sm:$0xff]
      %v8061 = vld [vmem:[#allocation3 + $0x28] sm:$0xff]
      %v8062 = vld [vmem:[#allocation3 + $0x30] sm:$0xff]
      %v8063 = vld [vmem:[#allocation3 + $0x38] sm:$0xff]
      %v8064 = vld [vmem:[#allocation3 + $0x40] sm:$0xff]
      %v8065 = vld [vmem:[#allocation3 + $0x48] sm:$0xff]
      %v8066 = vld [vmem:[#allocation3 + $0x50] sm:$0xff]
      %v8067 = vld [vmem:[#allocation3 + $0x58] sm:$0xff]
      %v8068 = vld [vmem:[#allocation3 + $0x60] sm:$0xff]
      %v8069 = vld [vmem:[#allocation3 + $0x68] sm:$0xff]
      %v8070 = vld [vmem:[#allocation3 + $0x70] sm:$0xff]
      %v8071 = vld [vmem:[#allocation3 + $0x78] sm:$0xff]
      %v8072 = vld [vmem:[%s4] sm:$0xf]
      %v8073 = vld [vmem:[%s4 + $0x4] sm:$0xf]
      %v8074 = vld [vmem:[%s4 + $0x8] sm:$0xf]
      %v8075 = vld [vmem:[%s4 + $0xc] sm:$0xf]
      %v8076 = vld [vmem:[%s4 + $0x10] sm:$0x3]
      %v8082 = vunpack.c.l.b16 %v8072
      %v8083 = vunpack.c.l.b16 %v8073
      %v8084 = vunpack.c.l.b16 %v8074
      %v8085 = vunpack.c.l.b16 %v8075
      %v8086 = vunpack.c.l.b16 %v8076
      %v8087 = vpack.c.b16 %v8083, %v8082
      %v8088 = vpack.c.b16 %v8085, %v8084
      %v8089 = vpack.c.b16 %v8086, %v8086
      %v8093 = vsel %vm4116, %v8056, 0
      %v8096 = vsel %vm4116, %v8057, 0
      %v8099 = vsel %vm4116, %v8058, 0
      %v8102 = vsel %vm4116, %v8059, 0
      %v8105 = vsel %vm4116, %v8060, 0
      %v8108 = vsel %vm4116, %v8061, 0
      %v8111 = vsel %vm4116, %v8062, 0
      %v8114 = vsel %vm4116, %v8063, 0
      %v8117 = vsel %vm4116, %v8064, 0
      %v8120 = vsel %vm4116, %v8065, 0
      %v8123 = vsel %vm4116, %v8066, 0
      %v8126 = vsel %vm4116, %v8067, 0
      %v8129 = vsel %vm4116, %v8068, 0
      %v8132 = vsel %vm4116, %v8069, 0
      %v8135 = vsel %vm4116, %v8070, 0
      %v8138 = vsel %vm4116, %v8071, 0
      %v8141 = vsel %vm4165, %v8089, 0
      %8143 = vmatprep.subr.bf16.mxu0 0
      %8144 = vmatpush1.bf16.msra.mxu0 %v8087
      %8145 = vmatprep.subr.bf16.mxu0 0
      %8146 = vmatpush1.bf16.msra.mxu0 %v8088
      %8147 = vmatprep.subr.bf16.mxu0 0
      %8148 = vmatpush1.bf16.msra.mxu0 %v8141
      %8149 = vmatprep.subr.bf16.mxu0 0
      %8150 = vmatpush1.bf16.msra.mxu0 0
      %8151 = vmatprep.subr.bf16.mxu0 0
      %8152 = vmatpush1.bf16.msra.mxu0 0
      %8153 = vmatprep.subr.bf16.mxu0 0
      %8154 = vmatpush1.bf16.msra.mxu0 0
      %8155 = vmatprep.subr.bf16.mxu0 0
      %8156 = vmatpush1.bf16.msra.mxu0 0
      %8157 = vmatprep.subr.bf16.mxu0 0
      %8158 = vmatpush1.bf16.msra.mxu0 0
      %8159 = vmatprep.subr.bf16.mxu0 0
      %8160 = vmatpush1.bf16.msra.mxu0 0
      %8161 = vmatprep.subr.bf16.mxu0 0
      %8162 = vmatpush1.bf16.msra.mxu0 0
      %8163 = vmatprep.subr.bf16.mxu0 0
      %8164 = vmatpush1.bf16.msra.mxu0 0
      %8165 = vmatprep.subr.bf16.mxu0 0
      %8166 = vmatpush1.bf16.msra.mxu0 0
      %8167 = vmatprep.subr.bf16.mxu0 0
      %8168 = vmatpush1.bf16.msra.mxu0 0
      %8169 = vmatprep.subr.bf16.mxu0 0
      %8170 = vmatpush1.bf16.msra.mxu0 0
      %8171 = vmatprep.subr.bf16.mxu0 0
      %8172 = vmatpush1.bf16.msra.mxu0 0
      %8173 = vmatprep.subr.bf16.mxu0 0
      %8174 = vmatpush1.bf16.msra.mxu0 0
      %8175 = vmatprep.mubr.bf16.mxu0 0
      %8176 = vmatmul.mubr.bf16.gmra.mrb[0].mxu0 %v8093
      %v8177 = vpop.f32.mrb[0].mxu0
      %v8178 = vadd.f32 0.0, %v8177
      %v8179 = vpop.f32.mrb[0].mxu0
      %v8180 = vpop.f32.mrb[0].mxu0
      %v8181 = vadd.f32 0.0, %v8180
      %v8182 = vpop.f32.mrb[0].mxu0
      %8183 = vmatprep.mubr.bf16.mxu0 0
      %8184 = vmatmul.mubr.bf16.gmra.mrb[0].mxu0 %v8096
      %v8185 = vpop.f32.mrb[0].mxu0
      %v8186 = vadd.f32 0.0, %v8185
      %v8187 = vpop.f32.mrb[0].mxu0
      %v8188 = vpop.f32.mrb[0].mxu0
      %v8189 = vadd.f32 0.0, %v8188
      %v8190 = vpop.f32.mrb[0].mxu0
      %8191 = vmatprep.mubr.bf16.mxu0 0
      %8192 = vmatmul.mubr.bf16.gmra.mrb[0].mxu0 %v8099
      %v8193 = vpop.f32.mrb[0].mxu0
      %v8194 = vadd.f32 0.0, %v8193
      %v8195 = vpop.f32.mrb[0].mxu0
      %v8196 = vpop.f32.mrb[0].mxu0
      %v8197 = vadd.f32 0.0, %v8196
      %v8198 = vpop.f32.mrb[0].mxu0
      %8199 = vmatprep.mubr.bf16.mxu0 0
      %8200 = vmatmul.mubr.bf16.gmra.mrb[0].mxu0 %v8102
      %v8201 = vpop.f32.mrb[0].mxu0
      %v8202 = vadd.f32 0.0, %v8201
      %v8203 = vpop.f32.mrb[0].mxu0
      %v8204 = vpop.f32.mrb[0].mxu0
      %v8205 = vadd.f32 0.0, %v8204
      %v8206 = vpop.f32.mrb[0].mxu0
      %8207 = vmatprep.mubr.bf16.mxu0 0
      %8208 = vmatmul.mubr.bf16.gmra.mrb[0].mxu0 %v8105
      %v8209 = vpop.f32.mrb[0].mxu0
      %v8210 = vadd.f32 0.0, %v8209
      %v8211 = vpop.f32.mrb[0].mxu0
      %v8212 = vpop.f32.mrb[0].mxu0
      %v8213 = vadd.f32 0.0, %v8212
      %v8214 = vpop.f32.mrb[0].mxu0
      %8215 = vmatprep.mubr.bf16.mxu0 0
      %8216 = vmatmul.mubr.bf16.gmra.mrb[0].mxu0 %v8108
      %v8217 = vpop.f32.mrb[0].mxu0
      %v8218 = vadd.f32 0.0, %v8217
      %v8219 = vpop.f32.mrb[0].mxu0
      %v8220 = vpop.f32.mrb[0].mxu0
      %v8221 = vadd.f32 0.0, %v8220
      %v8222 = vpop.f32.mrb[0].mxu0
      %8223 = vmatprep.mubr.bf16.mxu0 0
      %8224 = vmatmul.mubr.bf16.gmra.mrb[0].mxu0 %v8111
      %v8225 = vpop.f32.mrb[0].mxu0
      %v8226 = vadd.f32 0.0, %v8225
      %v8227 = vpop.f32.mrb[0].mxu0
      %v8228 = vpop.f32.mrb[0].mxu0
      %v8229 = vadd.f32 0.0, %v8228
      %v8230 = vpop.f32.mrb[0].mxu0
      %8231 = vmatprep.mubr.bf16.mxu0 0
      %8232 = vmatmul.mubr.bf16.gmra.mrb[0].mxu0 %v8114
      %v8233 = vpop.f32.mrb[0].mxu0
      %v8234 = vadd.f32 0.0, %v8233
      %v8235 = vpop.f32.mrb[0].mxu0
      %v8236 = vpop.f32.mrb[0].mxu0
      %v8237 = vadd.f32 0.0, %v8236
      %v8238 = vpop.f32.mrb[0].mxu0
      %8239 = vmatprep.mubr.bf16.mxu0 0
      %8240 = vmatmul.mubr.bf16.gmra.mrb[0].mxu0 %v8117
      %v8241 = vpop.f32.mrb[0].mxu0
      %v8242 = vadd.f32 0.0, %v8241
      %v8243 = vpop.f32.mrb[0].mxu0
      %v8244 = vpop.f32.mrb[0].mxu0
      %v8245 = vadd.f32 0.0, %v8244
      %v8246 = vpop.f32.mrb[0].mxu0
      %8247 = vmatprep.mubr.bf16.mxu0 0
      %8248 = vmatmul.mubr.bf16.gmra.mrb[0].mxu0 %v8120
      %v8249 = vpop.f32.mrb[0].mxu0
      %v8250 = vadd.f32 0.0, %v8249
      %v8251 = vpop.f32.mrb[0].mxu0
      %v8252 = vpop.f32.mrb[0].mxu0
      %v8253 = vadd.f32 0.0, %v8252
      %v8254 = vpop.f32.mrb[0].mxu0
      %8255 = vmatprep.mubr.bf16.mxu0 0
      %8256 = vmatmul.mubr.bf16.gmra.mrb[0].mxu0 %v8123
      %v8257 = vpop.f32.mrb[0].mxu0
      %v8258 = vadd.f32 0.0, %v8257
      %v8259 = vpop.f32.mrb[0].mxu0
      %v8260 = vpop.f32.mrb[0].mxu0
      %v8261 = vadd.f32 0.0, %v8260
      %v8262 = vpop.f32.mrb[0].mxu0
      %8263 = vmatprep.mubr.bf16.mxu0 0
      %8264 = vmatmul.mubr.bf16.gmra.mrb[0].mxu0 %v8126
      %v8265 = vpop.f32.mrb[0].mxu0
      %v8266 = vadd.f32 0.0, %v8265
      %v8267 = vpop.f32.mrb[0].mxu0
      %v8268 = vpop.f32.mrb[0].mxu0
      %v8269 = vadd.f32 0.0, %v8268
      %v8270 = vpop.f32.mrb[0].mxu0
      %8271 = vmatprep.mubr.bf16.mxu0 0
      %8272 = vmatmul.mubr.bf16.gmra.mrb[0].mxu0 %v8129
      %v8273 = vpop.f32.mrb[0].mxu0
      %v8274 = vadd.f32 0.0, %v8273
      %v8275 = vpop.f32.mrb[0].mxu0
      %v8276 = vpop.f32.mrb[0].mxu0
      %v8277 = vadd.f32 0.0, %v8276
      %v8278 = vpop.f32.mrb[0].mxu0
      %8279 = vmatprep.mubr.bf16.mxu0 0
      %8280 = vmatmul.mubr.bf16.gmra.mrb[0].mxu0 %v8132
      %v8281 = vpop.f32.mrb[0].mxu0
      %v8282 = vadd.f32 0.0, %v8281
      %v8283 = vpop.f32.mrb[0].mxu0
      %v8284 = vpop.f32.mrb[0].mxu0
      %v8285 = vadd.f32 0.0, %v8284
      %v8286 = vpop.f32.mrb[0].mxu0
      %8287 = vmatprep.mubr.bf16.mxu0 0
      %8288 = vmatmul.mubr.bf16.gmra.mrb[0].mxu0 %v8135
      %v8289 = vpop.f32.mrb[0].mxu0
      %v8290 = vadd.f32 0.0, %v8289
      %v8291 = vpop.f32.mrb[0].mxu0
      %v8292 = vpop.f32.mrb[0].mxu0
      %v8293 = vadd.f32 0.0, %v8292
      %v8294 = vpop.f32.mrb[0].mxu0
      %8295 = vmatprep.mubr.bf16.mxu0 0
      %8296 = vmatmul.mubr.bf16.gmra.mrb[0].mxu0 %v8138
      %v8297 = vpop.f32.mrb[0].mxu0
      %v8298 = vadd.f32 0.0, %v8297
      %v8299 = vpop.f32.mrb[0].mxu0
      %v8300 = vpop.f32.mrb[0].mxu0
      %v8301 = vadd.f32 0.0, %v8300
      %v8302 = vpop.f32.mrb[0].mxu0
      %8303 = vdwg.mxu0
      %v8304 = vld [vmem:[%s5] sm:$0x1]
      %v8306 = vlaneseq
      %v8307 = vshrl.u32 %v8306, 7
      %v8308 = vsub.s32 0, %v8307
      %v8309 = vrot.slane %v8304, %v8308
      %v8311 = vmul.f32 %v8178, %v8309
      %v8312 = vmul.f32 %v8181, %v8309
      %v8313 = vmul.f32 %v8186, %v8309
      %v8314 = vmul.f32 %v8189, %v8309
      %v8315 = vmul.f32 %v8194, %v8309
      %v8316 = vmul.f32 %v8197, %v8309
      %v8317 = vmul.f32 %v8202, %v8309
      %v8318 = vmul.f32 %v8205, %v8309
      %v8319 = vmul.f32 %v8210, %v8309
      %v8320 = vmul.f32 %v8213, %v8309
      %v8321 = vmul.f32 %v8218, %v8309
      %v8322 = vmul.f32 %v8221, %v8309
      %v8323 = vmul.f32 %v8226, %v8309
      %v8324 = vmul.f32 %v8229, %v8309
      %v8325 = vmul.f32 %v8234, %v8309
      %v8326 = vmul.f32 %v8237, %v8309
      %v8327 = vmul.f32 %v8242, %v8309
      %v8328 = vmul.f32 %v8245, %v8309
      %v8329 = vmul.f32 %v8250, %v8309
      %v8330 = vmul.f32 %v8253, %v8309
      %v8331 = vmul.f32 %v8258, %v8309
      %v8332 = vmul.f32 %v8261, %v8309
      %v8333 = vmul.f32 %v8266, %v8309
      %v8334 = vmul.f32 %v8269, %v8309
      %v8335 = vmul.f32 %v8274, %v8309
      %v8336 = vmul.f32 %v8277, %v8309
      %v8337 = vmul.f32 %v8282, %v8309
      %v8338 = vmul.f32 %v8285, %v8309
      %v8339 = vmul.f32 %v8290, %v8309
      %v8340 = vmul.f32 %v8293, %v8309
      %v8341 = vmul.f32 %v8298, %v8309
      %v8342 = vmul.f32 %v8301, %v8309
      %v8343 = vld [vmem:[%s6] sm:$0x1]
      %v8345 = vlaneseq
      %v8346 = vshrl.u32 %v8345, 7
      %v8347 = vsub.s32 0, %v8346
      %v8348 = vrot.slane %v8343, %v8347
      %v8350 = vadd.f32 %v8311, %v8348
      %v8351 = vadd.f32 %v8312, %v8348
      %v8352 = vadd.f32 %v8313, %v8348
      %v8353 = vadd.f32 %v8314, %v8348
      %v8354 = vadd.f32 %v8315, %v8348
      %v8355 = vadd.f32 %v8316, %v8348
      %v8356 = vadd.f32 %v8317, %v8348
      %v8357 = vadd.f32 %v8318, %v8348
      %v8358 = vadd.f32 %v8319, %v8348
      %v8359 = vadd.f32 %v8320, %v8348
      %v8360 = vadd.f32 %v8321, %v8348
      %v8361 = vadd.f32 %v8322, %v8348
      %v8362 = vadd.f32 %v8323, %v8348
      %v8363 = vadd.f32 %v8324, %v8348
      %v8364 = vadd.f32 %v8325, %v8348
      %v8365 = vadd.f32 %v8326, %v8348
      %v8366 = vadd.f32 %v8327, %v8348
      %v8367 = vadd.f32 %v8328, %v8348
      %v8368 = vadd.f32 %v8329, %v8348
      %v8369 = vadd.f32 %v8330, %v8348
      %v8370 = vadd.f32 %v8331, %v8348
      %v8371 = vadd.f32 %v8332, %v8348
      %v8372 = vadd.f32 %v8333, %v8348
      %v8373 = vadd.f32 %v8334, %v8348
      %v8374 = vadd.f32 %v8335, %v8348
      %v8375 = vadd.f32 %v8336, %v8348
      %v8376 = vadd.f32 %v8337, %v8348
      %v8377 = vadd.f32 %v8338, %v8348
      %v8378 = vadd.f32 %v8339, %v8348
      %v8379 = vadd.f32 %v8340, %v8348
      %v8380 = vadd.f32 %v8341, %v8348
      %v8381 = vadd.f32 %v8342, %v8348
      %v8382 = vadd.f32 %v8350, %v406
      %v8383 = vadd.f32 %v8351, %v407
      %v8384 = vadd.f32 %v8352, %v408
      %v8385 = vadd.f32 %v8353, %v409
      %v8386 = vadd.f32 %v8354, %v410
      %v8387 = vadd.f32 %v8355, %v411
      %v8388 = vadd.f32 %v8356, %v412
      %v8389 = vadd.f32 %v8357, %v413
      %v8390 = vadd.f32 %v8358, %v414
      %v8391 = vadd.f32 %v8359, %v415
      %v8392 = vadd.f32 %v8360, %v416
      %v8393 = vadd.f32 %v8361, %v417
      %v8394 = vadd.f32 %v8362, %v418
      %v8395 = vadd.f32 %v8363, %v419
      %v8396 = vadd.f32 %v8364, %v420
      %v8397 = vadd.f32 %v8365, %v421
      %v8398 = vadd.f32 %v8366, %v422
      %v8399 = vadd.f32 %v8367, %v423
      %v8400 = vadd.f32 %v8368, %v424
      %v8401 = vadd.f32 %v8369, %v425
      %v8402 = vadd.f32 %v8370, %v426
      %v8403 = vadd.f32 %v8371, %v427
      %v8404 = vadd.f32 %v8372, %v428
      %v8405 = vadd.f32 %v8373, %v429
      %v8406 = vadd.f32 %v8374, %v430
      %v8407 = vadd.f32 %v8375, %v431
      %v8408 = vadd.f32 %v8376, %v432
      %v8409 = vadd.f32 %v8377, %v433
      %v8410 = vadd.f32 %v8378, %v434
      %v8411 = vadd.f32 %v8379, %v435
      %v8412 = vadd.f32 %v8380, %v436
      %v8413 = vadd.f32 %v8381, %v437
      %v8414 = vmax.f32 %v8382, 0.0
      %v8415 = vmax.f32 %v8383, 0.0
      %v8416 = vmax.f32 %v8384, 0.0
      %v8417 = vmax.f32 %v8385, 0.0
      %v8418 = vmax.f32 %v8386, 0.0
      %v8419 = vmax.f32 %v8387, 0.0
      %v8420 = vmax.f32 %v8388, 0.0
      %v8421 = vmax.f32 %v8389, 0.0
      %v8422 = vmax.f32 %v8390, 0.0
      %v8423 = vmax.f32 %v8391, 0.0
      %v8424 = vmax.f32 %v8392, 0.0
      %v8425 = vmax.f32 %v8393, 0.0
      %v8426 = vmax.f32 %v8394, 0.0
      %v8427 = vmax.f32 %v8395, 0.0
      %v8428 = vmax.f32 %v8396, 0.0
      %v8429 = vmax.f32 %v8397, 0.0
      %v8430 = vmax.f32 %v8398, 0.0
      %v8431 = vmax.f32 %v8399, 0.0
      %v8432 = vmax.f32 %v8400, 0.0
      %v8433 = vmax.f32 %v8401, 0.0
      %v8434 = vmax.f32 %v8402, 0.0
      %v8435 = vmax.f32 %v8403, 0.0
      %v8436 = vmax.f32 %v8404, 0.0
      %v8437 = vmax.f32 %v8405, 0.0
      %v8438 = vmax.f32 %v8406, 0.0
      %v8439 = vmax.f32 %v8407, 0.0
      %v8440 = vmax.f32 %v8408, 0.0
      %v8441 = vmax.f32 %v8409, 0.0
      %v8442 = vmax.f32 %v8410, 0.0
      %v8443 = vmax.f32 %v8411, 0.0
      %v8444 = vmax.f32 %v8412, 0.0
      %v8445 = vmax.f32 %v8413, 0.0
      %8446 = vst.msk [vmem:[%s278] sm:$0xff] %vm1104, %v8414
      %8447 = vst.msk [vmem:[%s278 + $0x8] sm:$0xff] %vm1104, %v8415
      %8448 = vst.msk [vmem:[%s278 + $0x10] sm:$0xff] %vm1104, %v8416
      %8449 = vst.msk [vmem:[%s278 + $0x18] sm:$0xff] %vm1104, %v8417
      %8450 = vst.msk [vmem:[%s278 + $0x20] sm:$0xff] %vm1104, %v8418
      %8451 = vst.msk [vmem:[%s278 + $0x28] sm:$0xff] %vm1104, %v8419
      %8452 = vst.msk [vmem:[%s278 + $0x30] sm:$0xff] %vm1104, %v8420
      %8453 = vst.msk [vmem:[%s278 + $0x38] sm:$0xff] %vm1104, %v8421
      %8454 = vst.msk [vmem:[%s278 + $0x40] sm:$0xff] %vm1104, %v8422
      %8455 = vst.msk [vmem:[%s278 + $0x48] sm:$0xff] %vm1104, %v8423
      %8456 = vst.msk [vmem:[%s278 + $0x50] sm:$0xff] %vm1104, %v8424
      %8457 = vst.msk [vmem:[%s278 + $0x58] sm:$0xff] %vm1104, %v8425
      %8458 = vst.msk [vmem:[%s278 + $0x60] sm:$0xff] %vm1104, %v8426
      %8459 = vst.msk [vmem:[%s278 + $0x68] sm:$0xff] %vm1104, %v8427
      %8460 = vst.msk [vmem:[%s278 + $0x70] sm:$0xff] %vm1104, %v8428
      %8461 = vst.msk [vmem:[%s278 + $0x78] sm:$0xff] %vm1104, %v8429
      %8462 = vst.msk [vmem:[%s278 + $0x80] sm:$0xff] %vm1104, %v8430
      %8463 = vst.msk [vmem:[%s278 + $0x88] sm:$0xff] %vm1104, %v8431
      %8464 = vst.msk [vmem:[%s278 + $0x90] sm:$0xff] %vm1104, %v8432
      %8465 = vst.msk [vmem:[%s278 + $0x98] sm:$0xff] %vm1104, %v8433
      %8466 = vst.msk [vmem:[%s278 + $0xa0] sm:$0xff] %vm1104, %v8434
      %8467 = vst.msk [vmem:[%s278 + $0xa8] sm:$0xff] %vm1104, %v8435
      %8468 = vst.msk [vmem:[%s278 + $0xb0] sm:$0xff] %vm1104, %v8436
      %8469 = vst.msk [vmem:[%s278 + $0xb8] sm:$0xff] %vm1104, %v8437
      %8470 = vst.msk [vmem:[%s278 + $0xc0] sm:$0xff] %vm1104, %v8438
      %8471 = vst.msk [vmem:[%s278 + $0xc8] sm:$0xff] %vm1104, %v8439
      %8472 = vst.msk [vmem:[%s278 + $0xd0] sm:$0xff] %vm1104, %v8440
      %8473 = vst.msk [vmem:[%s278 + $0xd8] sm:$0xff] %vm1104, %v8441
      %8474 = vst.msk [vmem:[%s278 + $0xe0] sm:$0xff] %vm1104, %v8442
      %8475 = vst.msk [vmem:[%s278 + $0xe8] sm:$0xff] %vm1104, %v8443
      %8476 = vst.msk [vmem:[%s278 + $0xf0] sm:$0xff] %vm1104, %v8444
      %8477 = vst.msk [vmem:[%s278 + $0xf8] sm:$0xff] %vm1104, %v8445
      %p8478 = scmp.lt.s32.totalorder %s18, 1
      %s8479 = scalar_select %p8478, %s18, 1
      %s8480 = smul.addr %s8479, 32
      %s8481 = smul.addr %s8480, 8
      %s8482 = scalar_lea.vmem %s7, %s8481
      // Predicated region
      $region53: #{basic_block_forward.1} parent=47 // pred_check
        %p8483 = pneg %p188
      $region54: #{basic_block_forward.1} parent=47 // pred_check_branch
        %8485 = sbr.rel (%p8483) target = $region56
      $region55: #{basic_block_forward.1} parent=47 // pred_region
        _
      $region56: #{basic_block_forward.1} parent=47 // pred_fallthru
        _
    $region48: #{basic_block_forward.1} parent=5 // pred_fallthru
      _
    %p8486 = scmp.le.s32.totalorder 2, %s13
    // Predicated region
    $region57: #{basic_block_forward.1} parent=5 // pred_check
      %p8487 = pneg %p8486
    $region58: #{basic_block_forward.1} parent=5 // pred_check_branch
      %8489 = sbr.rel (%p8487) target = $region60
    $region59: #{basic_block_forward.1} parent=5 // pred_region
      %s8490 = ssub.s32 %s13, 2
      // Predicated region
      $region61: #{basic_block_forward.1} parent=59 // pred_check
        %p8491 = pneg %p194
      $region62: #{basic_block_forward.1} parent=59 // pred_check_branch
        %8493 = sbr.rel (%p8491) target = $region64
      $region63: #{basic_block_forward.1} parent=59 // pred_region
        %p8494 = scmp.lt.s32.totalorder %s19, 1
        %s8495 = scalar_select %p8494, %s19, 1
        %s8496 = smul.addr %s8495, 32
        %s8497 = smul.addr %s8496, 8
        %s8498 = scalar_lea.vmem %s7, %s8497
      $region64: #{basic_block_forward.1} parent=59 // pred_fallthru
        _
    $region60: #{basic_block_forward.1} parent=5 // pred_fallthru
      _
  $region6: #{basic_block_forward.1} parent=0 // loop_footer
    %s17 = sadd.s32 1, %s13
  $region7: #{basic_block_forward.1} parent=0 // loop_footer_branch
    %12 = sbr.rel target = $region3
  $region8: #{basic_block_forward.1} parent=0 // loop_exit
    _

</llo_original>
